<compile_context>
chip_gen: v5e
topology: v5e:2x2
jax: 0.10.0
libtpu: 0.0.40
codegen_flags: <defaults>
</compile_context>

<pallas_src>
import jax
import jax.numpy as jnp
from jax.experimental import pallas as pl
from jax.experimental.pallas import tpu as pltpu


# ----------------------------- fused Pallas kernel ---------------------------

def _build_kernel(batch, dims, k_size, stride, pad, hidden):
    """dims: list of (cin, cout, lin, lout) for each conv layer (static)."""
    n = len(dims)
    c_last, l_last = dims[-1][1], dims[-1][3]
    f_dim = c_last * l_last

    def kernel(*refs):
        x_ref = refs[0]                              # (B*(L0+2p), Cin0) padded input
        wcs = refs[1:1 + n]                          # (K*Cin, Cout), tap-major
        gms = refs[1 + n:1 + 2 * n]                  # (1, Cout) BN gamma
        bts = refs[1 + 2 * n:1 + 3 * n]              # (1, Cout) BN beta
        w1_hbm, b1_ref, w2_ref, b2_ref = refs[1 + 3 * n:5 + 3 * n]
        o_ref = refs[5 + 3 * n]                      # (B, 1)
        acts = refs[6 + 3 * n:5 + 4 * n]             # n-1 padded activation scratches
        w1_vmem = refs[5 + 4 * n]                    # (F, hidden) bf16 scratch
        sem = refs[6 + 4 * n]                        # DMA semaphores (2,)

        # Kick off the classifier-weight DMA first (two concurrent
        # row-contiguous streams) so it overlaps the entire conv stack.
        half = f_dim // 2
        cp0 = pltpu.make_async_copy(w1_hbm.at[pl.ds(0, half), :],
                                    w1_vmem.at[pl.ds(0, half), :], sem.at[0])
        cp1 = pltpu.make_async_copy(w1_hbm.at[pl.ds(half, f_dim - half), :],
                                    w1_vmem.at[pl.ds(half, f_dim - half), :],
                                    sem.at[1])
        cp0.start()
        cp1.start()

        # Zero only the pad/halo rows of the activation scratches; interior
        # rows are fully overwritten every layer.
        for i in range(n - 1):
            cout_i, lout_i = dims[i][1], dims[i][3]
            lpo = lout_i + 2 * pad
            zrow = jnp.zeros((pad, cout_i), jnp.float32)
            for b in range(batch):
                acts[i][b * lpo:b * lpo + pad, :] = zrow
                acts[i][b * lpo + pad + lout_i:(b + 1) * lpo, :] = zrow

        def bn_lrelu(yv, gamma, beta):
            # BatchNorm1d training mode: biased batch stats per out-channel
            # over (batch, length) == rows; affine folded to scale/shift.
            mean = jnp.mean(yv, axis=0, keepdims=True)
            var = jnp.mean(jnp.square(yv - mean), axis=0, keepdims=True)
            scale = gamma * jax.lax.rsqrt(var + 1e-5)
            shift = beta - mean * scale
            yv = yv * scale + shift
            return jnp.maximum(yv, 0.1 * yv)         # LeakyReLU(0.1)

        y = None
        src = x_ref
        for i in range(n):
            cin, cout, lin, lout = dims[i]
            lp = lin + 2 * pad
            wc = wcs[i]
            if cin == 1:
                # Degenerate K*Cin == k_size: stay on the VPU (broadcast FMAs),
                # accumulator initialised by the first tap's product.
                accs = []
                for b in range(batch):
                    taps = [src[pl.ds(b * lp + t, lout, stride=stride), :]
                            for t in range(k_size)]
                    acc_b = taps[0] * wc[0:1, :]
                    for t in range(1, k_size):
                        acc_b = acc_b + taps[t] * wc[t:t + 1, :]
                    accs.append(acc_b)
                acc = jnp.concatenate(accs, axis=0) if batch > 1 else accs[0]
            else:
                # im2col: taps concatenated along lanes -> ONE MXU matmul per
                # layer against the tap-major (K*Cin, Cout) weight.
                # (Taps 0/2 and 1/3 share even/odd streams; kept as 4 strided
                #  ref loads per batch for lowering robustness.)
                xbs = []
                for b in range(batch):
                    taps = [src[pl.ds(b * lp + t, lout, stride=stride), :]
                            for t in range(k_size)]
                    xbs.append(jnp.concatenate(taps, axis=-1))  # (lout, K*Cin)
                xmat = jnp.concatenate(xbs, axis=0) if batch > 1 else xbs[0]
                acc = jnp.dot(xmat, wc[...],
                              preferred_element_type=jnp.float32)
            # Conv bias omitted: it cancels exactly under training-mode BN.
            y = bn_lrelu(acc, gms[i][...], bts[i][...])
            if i + 1 < n:
                # Scatter into the next layer's zero-halo activation scratch.
                dst = acts[i]
                lpo = lout + 2 * pad
                for b in range(batch):
                    dst[b * lpo + pad:b * lpo + pad + lout, :] = (
                        y[b * lout:(b + 1) * lout, :])
                src = dst

        # ------- classifier: Linear(F,H) -> ReLU -> Linear(H,1) -> Sigmoid --
        # PyTorch's channel-major flatten (f = c*L + l) is matched by the
        # pre-reordered w1 rows (l, c): flatten each batch's (l_last, c_last)
        # block l-major via lane-aligned concats -> (B, F), then ONE matmul.
        rows = []
        for b in range(batch):
            pieces = [y[b * l_last + l:b * l_last + l + 1, :]
                      for l in range(l_last)]
            rows.append(jnp.concatenate(pieces, axis=-1))         # (1, F)
        x_cls = jnp.concatenate(rows, axis=0) if batch > 1 else rows[0]
        x_cls = x_cls.astype(jnp.bfloat16)                        # (B, F)

        cp0.wait()
        cp1.wait()
        h = jnp.dot(x_cls, w1_vmem[...], preferred_element_type=jnp.float32)
        h = jnp.maximum(h + b1_ref[...], 0.0)                     # ReLU
        # (H -> 1): broadcast multiply + lane reduction (avoid N=1 MXU push).
        z = jnp.sum(h * w2_ref[...], axis=-1, keepdims=True) + b2_ref[...]
        o_ref[...] = 1.0 / (1.0 + jnp.exp(-z))                    # Sigmoid

    return kernel


# ------------------------------ forward wrapper -------------------------------

def discriminator_forward(x, prep, *, k_size=4, stride=2, pad=1):
    """x: (B, in_channel, in_dim) f32; prep: output of prepare_params."""
    batch, cin0, l0 = x.shape
    hidden = prep["w1"].shape[1]

    # Static per-layer dims (cin, cout, lin, lout).
    dims = []
    cin, length = cin0, l0
    for (w_tap, _, _) in prep["convs"]:
        cout = w_tap.shape[1]
        lout = (length + 2 * pad - k_size) // stride + 1
        dims.append((cin, cout, length, lout))
        cin, length = cout, lout
    c_last, l_last = dims[-1][1], dims[-1][3]
    f_dim = c_last * l_last

    # Tiny input prep: NCL -> zero-padded (B*(L+2p), Cin) for in-kernel im2col.
    xp = jnp.pad(jnp.transpose(x, (0, 2, 1)), ((0, 0), (pad, pad), (0, 0)))
    xp = xp.reshape(batch * (l0 + 2 * pad), cin0)

    vmem = pl.BlockSpec(memory_space=pltpu.MemorySpace.VMEM)
    any_ = pl.BlockSpec(memory_space=pl.ANY)          # w1 stays in HBM

    inputs = ([xp]
              + [w for (w, _, _) in prep["convs"]]
              + [g for (_, g, _) in prep["convs"]]
              + [b for (_, _, b) in prep["convs"]]
              + [prep["w1"], prep["b1"], prep["w2"], prep["b2"]])
    in_specs = [vmem] * (1 + 3 * len(dims)) + [any_, vmem, vmem, vmem]

    scratch = [pltpu.VMEM((batch * (lout + 2 * pad), cout), jnp.float32)
               for (_, cout, _, lout) in dims[:-1]]
    scratch += [pltpu.VMEM((f_dim, hidden), jnp.bfloat16),
                pltpu.SemaphoreType.DMA((2,))]

    # Advisory cost estimate (conv stack + classifier).
    flops = 0
    for (ci, co, _, lo) in dims:
        flops += 2 * batch * lo * (k_size * ci) * co
    flops += 2 * batch * f_dim * hidden + 2 * batch * hidden
    transcendentals = batch + sum(co for (_, co, _, _) in dims)
    bytes_accessed = sum(int(a.size) * a.dtype.itemsize for a in inputs)
    bytes_accessed += batch * 4

    kernel = _build_kernel(batch, dims, k_size, stride, pad, hidden)
    return pl.pallas_call(
        kernel,
        out_shape=jax.ShapeDtypeStruct((batch, 1), jnp.float32),
        in_specs=in_specs,
        out_specs=vmem,
        scratch_shapes=scratch,
        compiler_params=pltpu.CompilerParams(
            vmem_limit_bytes=16 * 1024 * 1024),
        cost_estimate=pl.CostEstimate(flops=int(flops),
                                      transcendentals=int(transcendentals),
                                      bytes_accessed=int(bytes_accessed)),
    )(*inputs)


# ------------------- one-time weight re-layout (outside jit) ------------------

def prepare_params(params, *, in_dim, k_size=4, stride=2, pad=1):
    convs = []
    length = in_dim
    for (w, _bias, gamma, beta) in params["convs"]:
        cout, cin, k = w.shape
        # Conv bias dropped: exactly cancelled by training-mode BatchNorm.
        # Tap-major (K*Cin, Cout) rows so tap t = rows [t*Cin, (t+1)*Cin).
        w_tap = jnp.transpose(w, (2, 1, 0)).reshape(k * cin, cout)
        convs.append((w_tap, gamma.reshape(1, cout), beta.reshape(1, cout)))
        length = (length + 2 * pad - k_size) // stride + 1
    c_last = params["convs"][-1][0].shape[0]
    l_last = length
    w1, b1, w2, b2 = params["classifier"]
    hidden = w1.shape[0]
    # PyTorch flattens (B,C,L) channel-major (f = c*L + l); kernel activation
    # rows are flattened l-major with lanes = c, so re-order w1 rows to (l,c)
    # and cast bf16 (halves the dominant HBM stream).
    w1_r = (w1.reshape(hidden, c_last, l_last).transpose(2, 1, 0)
            .reshape(l_last * c_last, hidden).astype(jnp.bfloat16))
    return {
        "convs": convs,
        "w1": w1_r,
        "b1": b1.reshape(1, hidden).astype(jnp.float32),
        "w2": w2.reshape(1, hidden).astype(jnp.float32),
        "b2": b2.reshape(1, 1).astype(jnp.float32),
    }


# ------------------------- deterministic parameters ---------------------------

def init_params(key, in_dim=64, base_channel=32, in_channel=1, k_size=4):
    chans = [in_channel, base_channel, 2 * base_channel,
             4 * base_channel, 8 * base_channel]
    keys = jax.random.split(key, 17)
    ki = 0
    convs = []
    for i in range(4):
        cin, cout = chans[i], chans[i + 1]
        w = 0.05 * jax.random.normal(keys[ki], (cout, cin, k_size), jnp.float32); ki += 1
        bias = 0.05 * jax.random.normal(keys[ki], (cout,), jnp.float32); ki += 1
        gamma = 1.0 + 0.1 * jax.random.normal(keys[ki], (cout,), jnp.float32); ki += 1
        beta = 0.05 * jax.random.normal(keys[ki], (cout,), jnp.float32); ki += 1
        convs.append((w, bias, gamma, beta))
    l = in_dim
    for _ in range(4):
        l = (l + 2 - k_size) // 2 + 1
    classifier_in = chans[-1] * l            # == _get_classifier_in_dim()
    kk = jax.random.split(keys[16], 4)
    w1 = 0.02 * jax.random.normal(kk[0], (2048, classifier_in), jnp.float32)
    b1 = 0.02 * jax.random.normal(kk[1], (2048,), jnp.float32)
    w2 = 0.02 * jax.random.normal(kk[2], (1, 2048), jnp.float32)
    b2 = 0.02 * jax.random.normal(kk[3], (1,), jnp.float32)
    return {"convs": convs, "classifier": (w1, b1, w2, b2)}


# ----------------------------------- main --------------------------------------

if __name__ == "__main__":
    in_dim = 64
    batch = 2
    in_channel = 1

    key = jax.random.PRNGKey(0)
    k_params, k_x = jax.random.split(key)
    params = init_params(k_params, in_dim=in_dim, base_channel=32,
                         in_channel=in_channel, k_size=4)
    prep = prepare_params(params, in_dim=in_dim, k_size=4, stride=2, pad=1)
    x = jax.random.normal(k_x, (batch, in_channel, in_dim), jnp.float32)

    fwd = jax.jit(discriminator_forward)
    out = fwd(x, prep)
    jax.block_until_ready(out)
    assert out.shape == (batch, 1)
    assert bool(jnp.all(jnp.isfinite(out)))
    assert bool(jnp.all((out >= 0.0) & (out <= 1.0)))
    print("KERNEL_OK")
</pallas_src>

<mosaic_0001>
module attributes {stable_mosaic.version = 11 : i64} {
  func.func @kernel(%arg0: memref<132x1xf32, #tpu.memory_space<vmem>>, %arg1: memref<4x32xf32, #tpu.memory_space<vmem>>, %arg2: memref<128x64xf32, #tpu.memory_space<vmem>>, %arg3: memref<256x128xf32, #tpu.memory_space<vmem>>, %arg4: memref<512x256xf32, #tpu.memory_space<vmem>>, %arg5: memref<1x32xf32, #tpu.memory_space<vmem>>, %arg6: memref<1x64xf32, #tpu.memory_space<vmem>>, %arg7: memref<1x128xf32, #tpu.memory_space<vmem>>, %arg8: memref<1x256xf32, #tpu.memory_space<vmem>>, %arg9: memref<1x32xf32, #tpu.memory_space<vmem>>, %arg10: memref<1x64xf32, #tpu.memory_space<vmem>>, %arg11: memref<1x128xf32, #tpu.memory_space<vmem>>, %arg12: memref<1x256xf32, #tpu.memory_space<vmem>>, %arg13: memref<1024x2048xbf16, #tpu.memory_space<any>>, %arg14: memref<1x2048xf32, #tpu.memory_space<vmem>>, %arg15: memref<1x2048xf32, #tpu.memory_space<vmem>>, %arg16: memref<1x1xf32, #tpu.memory_space<vmem>>, %arg17: memref<2x1xf32, #tpu.memory_space<vmem>>, %arg18: memref<68x32xf32, #tpu.memory_space<vmem>>, %arg19: memref<36x64xf32, #tpu.memory_space<vmem>>, %arg20: memref<20x128xf32, #tpu.memory_space<vmem>>, %arg21: memref<1024x2048xbf16, #tpu.memory_space<vmem>>, %arg22: memref<2x!tpu.dma_semaphore, #tpu.memory_space<semaphore_mem>>) attributes {dimension_semantics = [], scalar_prefetch = 0 : i64, scratch_operands = 5 : i64, tpu.core_type = #tpu.core_type<tc>} {
    %c0_i32 = arith.constant 0 : i32
    %c0_i32_0 = arith.constant 0 : i32
    %c0_i32_1 = arith.constant 0 : i32
    %0 = tpu.memref_slice %arg13[%c0_i32_0, %c0_i32_1] : memref<1024x2048xbf16, #tpu.memory_space<any>> -> memref<512x2048xbf16, #tpu.memory_space<any>>
    %c0_i32_2 = arith.constant 0 : i32
    %c0_i32_3 = arith.constant 0 : i32
    %1 = tpu.memref_slice %arg21[%c0_i32_2, %c0_i32_3] : memref<1024x2048xbf16, #tpu.memory_space<vmem>> -> memref<512x2048xbf16, #tpu.memory_space<vmem>>
    %2 = tpu.memref_slice %arg22[%c0_i32] : memref<2x!tpu.dma_semaphore, #tpu.memory_space<semaphore_mem>> -> memref<1x!tpu.dma_semaphore, #tpu.memory_space<semaphore_mem>>
    %3 = tpu.memref_squeeze %2 : memref<1x!tpu.dma_semaphore, #tpu.memory_space<semaphore_mem>> -> memref<!tpu.dma_semaphore, #tpu.memory_space<semaphore_mem>>
    tpu.enqueue_dma source(%0 : memref<512x2048xbf16, #tpu.memory_space<any>>) target(%1 : memref<512x2048xbf16, #tpu.memory_space<vmem>>) target_semaphore(%3 : memref<!tpu.dma_semaphore, #tpu.memory_space<semaphore_mem>>)
    %c1_i32 = arith.constant 1 : i32
    %c512_i32 = arith.constant 512 : i32
    %c0_i32_4 = arith.constant 0 : i32
    %4 = tpu.memref_slice %arg13[%c512_i32, %c0_i32_4] : memref<1024x2048xbf16, #tpu.memory_space<any>> -> memref<512x2048xbf16, #tpu.memory_space<any>>
    %c512_i32_5 = arith.constant 512 : i32
    %c0_i32_6 = arith.constant 0 : i32
    %5 = tpu.memref_slice %arg21[%c512_i32_5, %c0_i32_6] : memref<1024x2048xbf16, #tpu.memory_space<vmem>> -> memref<512x2048xbf16, #tpu.memory_space<vmem>>
    %6 = tpu.memref_slice %arg22[%c1_i32] : memref<2x!tpu.dma_semaphore, #tpu.memory_space<semaphore_mem>> -> memref<1x!tpu.dma_semaphore, #tpu.memory_space<semaphore_mem>>
    %7 = tpu.memref_squeeze %6 : memref<1x!tpu.dma_semaphore, #tpu.memory_space<semaphore_mem>> -> memref<!tpu.dma_semaphore, #tpu.memory_space<semaphore_mem>>
    tpu.enqueue_dma source(%4 : memref<512x2048xbf16, #tpu.memory_space<any>>) target(%5 : memref<512x2048xbf16, #tpu.memory_space<vmem>>) target_semaphore(%7 : memref<!tpu.dma_semaphore, #tpu.memory_space<semaphore_mem>>)
    %cst = arith.constant 0.000000e+00 : f32
    %8 = vector.broadcast %cst : f32 to vector<1x32xf32>
    %c0 = arith.constant 0 : index
    %c0_7 = arith.constant 0 : index
    %9 = vector.load %arg18[%c0, %c0_7] : memref<68x32xf32, #tpu.memory_space<vmem>>, vector<1x32xf32>
    tpu.vector_store %arg18[%c0, %c0_7], %8 {strides = array<i32>} : memref<68x32xf32, #tpu.memory_space<vmem>>, vector<1x32xf32>,
    %c33 = arith.constant 33 : index
    %c0_8 = arith.constant 0 : index
    %10 = vector.load %arg18[%c33, %c0_8] : memref<68x32xf32, #tpu.memory_space<vmem>>, vector<1x32xf32>
    tpu.vector_store %arg18[%c33, %c0_8], %8 {strides = array<i32>} : memref<68x32xf32, #tpu.memory_space<vmem>>, vector<1x32xf32>,
    %c34 = arith.constant 34 : index
    %c0_9 = arith.constant 0 : index
    %11 = vector.load %arg18[%c34, %c0_9] : memref<68x32xf32, #tpu.memory_space<vmem>>, vector<1x32xf32>
    tpu.vector_store %arg18[%c34, %c0_9], %8 {strides = array<i32>} : memref<68x32xf32, #tpu.memory_space<vmem>>, vector<1x32xf32>,
    %c67 = arith.constant 67 : index
    %c0_10 = arith.constant 0 : index
    %12 = vector.load %arg18[%c67, %c0_10] : memref<68x32xf32, #tpu.memory_space<vmem>>, vector<1x32xf32>
    tpu.vector_store %arg18[%c67, %c0_10], %8 {strides = array<i32>} : memref<68x32xf32, #tpu.memory_space<vmem>>, vector<1x32xf32>,
    %cst_11 = arith.constant 0.000000e+00 : f32
    %13 = vector.broadcast %cst_11 : f32 to vector<1x64xf32>
    %c0_12 = arith.constant 0 : index
    %c0_13 = arith.constant 0 : index
    %14 = vector.load %arg19[%c0_12, %c0_13] : memref<36x64xf32, #tpu.memory_space<vmem>>, vector<1x64xf32>
    tpu.vector_store %arg19[%c0_12, %c0_13], %13 {strides = array<i32>} : memref<36x64xf32, #tpu.memory_space<vmem>>, vector<1x64xf32>,
    %c17 = arith.constant 17 : index
    %c0_14 = arith.constant 0 : index
    %15 = vector.load %arg19[%c17, %c0_14] : memref<36x64xf32, #tpu.memory_space<vmem>>, vector<1x64xf32>
    tpu.vector_store %arg19[%c17, %c0_14], %13 {strides = array<i32>} : memref<36x64xf32, #tpu.memory_space<vmem>>, vector<1x64xf32>,
    %c18 = arith.constant 18 : index
    %c0_15 = arith.constant 0 : index
    %16 = vector.load %arg19[%c18, %c0_15] : memref<36x64xf32, #tpu.memory_space<vmem>>, vector<1x64xf32>
    tpu.vector_store %arg19[%c18, %c0_15], %13 {strides = array<i32>} : memref<36x64xf32, #tpu.memory_space<vmem>>, vector<1x64xf32>,
    %c35 = arith.constant 35 : index
    %c0_16 = arith.constant 0 : index
    %17 = vector.load %arg19[%c35, %c0_16] : memref<36x64xf32, #tpu.memory_space<vmem>>, vector<1x64xf32>
    tpu.vector_store %arg19[%c35, %c0_16], %13 {strides = array<i32>} : memref<36x64xf32, #tpu.memory_space<vmem>>, vector<1x64xf32>,
    %cst_17 = arith.constant 0.000000e+00 : f32
    %18 = vector.broadcast %cst_17 : f32 to vector<1x128xf32>
    %c0_18 = arith.constant 0 : index
    %c0_19 = arith.constant 0 : index
    %19 = vector.load %arg20[%c0_18, %c0_19] : memref<20x128xf32, #tpu.memory_space<vmem>>, vector<1x128xf32>
    tpu.vector_store %arg20[%c0_18, %c0_19], %18 {strides = array<i32>} : memref<20x128xf32, #tpu.memory_space<vmem>>, vector<1x128xf32>,
    %c9 = arith.constant 9 : index
    %c0_20 = arith.constant 0 : index
    %20 = vector.load %arg20[%c9, %c0_20] : memref<20x128xf32, #tpu.memory_space<vmem>>, vector<1x128xf32>
    tpu.vector_store %arg20[%c9, %c0_20], %18 {strides = array<i32>} : memref<20x128xf32, #tpu.memory_space<vmem>>, vector<1x128xf32>,
    %c10 = arith.constant 10 : index
    %c0_21 = arith.constant 0 : index
    %21 = vector.load %arg20[%c10, %c0_21] : memref<20x128xf32, #tpu.memory_space<vmem>>, vector<1x128xf32>
    tpu.vector_store %arg20[%c10, %c0_21], %18 {strides = array<i32>} : memref<20x128xf32, #tpu.memory_space<vmem>>, vector<1x128xf32>,
    %c19 = arith.constant 19 : index
    %c0_22 = arith.constant 0 : index
    %22 = vector.load %arg20[%c19, %c0_22] : memref<20x128xf32, #tpu.memory_space<vmem>>, vector<1x128xf32>
    tpu.vector_store %arg20[%c19, %c0_22], %18 {strides = array<i32>} : memref<20x128xf32, #tpu.memory_space<vmem>>, vector<1x128xf32>,
    %c0_23 = arith.constant 0 : index
    %c0_24 = arith.constant 0 : index
    %23 = tpu.strided_load %arg0[%c0_23, %c0_24] {strides = array<i32: 2, 1>} : memref<132x1xf32, #tpu.memory_space<vmem>>, vector<32x1xf32>
    %c1 = arith.constant 1 : index
    %c0_25 = arith.constant 0 : index
    %24 = tpu.strided_load %arg0[%c1, %c0_25] {strides = array<i32: 2, 1>} : memref<132x1xf32, #tpu.memory_space<vmem>>, vector<32x1xf32>
    %c2 = arith.constant 2 : index
    %c0_26 = arith.constant 0 : index
    %25 = tpu.strided_load %arg0[%c2, %c0_26] {strides = array<i32: 2, 1>} : memref<132x1xf32, #tpu.memory_space<vmem>>, vector<32x1xf32>
    %c3 = arith.constant 3 : index
    %c0_27 = arith.constant 0 : index
    %26 = tpu.strided_load %arg0[%c3, %c0_27] {strides = array<i32: 2, 1>} : memref<132x1xf32, #tpu.memory_space<vmem>>, vector<32x1xf32>
    %c0_28 = arith.constant 0 : index
    %c0_29 = arith.constant 0 : index
    %27 = vector.load %arg1[%c0_28, %c0_29] : memref<4x32xf32, #tpu.memory_space<vmem>>, vector<1x32xf32>
    %28 = vector.broadcast %23 : vector<32x1xf32> to vector<32x32xf32>
    %29 = vector.broadcast %27 : vector<1x32xf32> to vector<32x32xf32>
    %30 = arith.mulf %28, %29 : vector<32x32xf32>
    %c1_30 = arith.constant 1 : index
    %c0_31 = arith.constant 0 : index
    %31 = vector.load %arg1[%c1_30, %c0_31] : memref<4x32xf32, #tpu.memory_space<vmem>>, vector<1x32xf32>
    %32 = vector.broadcast %24 : vector<32x1xf32> to vector<32x32xf32>
    %33 = vector.broadcast %31 : vector<1x32xf32> to vector<32x32xf32>
    %34 = arith.mulf %32, %33 : vector<32x32xf32>
    %35 = arith.addf %30, %34 : vector<32x32xf32>
    %c2_32 = arith.constant 2 : index
    %c0_33 = arith.constant 0 : index
    %36 = vector.load %arg1[%c2_32, %c0_33] : memref<4x32xf32, #tpu.memory_space<vmem>>, vector<1x32xf32>
    %37 = vector.broadcast %25 : vector<32x1xf32> to vector<32x32xf32>
    %38 = vector.broadcast %36 : vector<1x32xf32> to vector<32x32xf32>
    %39 = arith.mulf %37, %38 : vector<32x32xf32>
    %40 = arith.addf %35, %39 : vector<32x32xf32>
    %c3_34 = arith.constant 3 : index
    %c0_35 = arith.constant 0 : index
    %41 = vector.load %arg1[%c3_34, %c0_35] : memref<4x32xf32, #tpu.memory_space<vmem>>, vector<1x32xf32>
    %42 = vector.broadcast %26 : vector<32x1xf32> to vector<32x32xf32>
    %43 = vector.broadcast %41 : vector<1x32xf32> to vector<32x32xf32>
    %44 = arith.mulf %42, %43 : vector<32x32xf32>
    %45 = arith.addf %40, %44 : vector<32x32xf32>
    %c66 = arith.constant 66 : index
    %c0_36 = arith.constant 0 : index
    %46 = tpu.strided_load %arg0[%c66, %c0_36] {strides = array<i32: 2, 1>} : memref<132x1xf32, #tpu.memory_space<vmem>>, vector<32x1xf32>
    %c67_37 = arith.constant 67 : index
    %c0_38 = arith.constant 0 : index
    %47 = tpu.strided_load %arg0[%c67_37, %c0_38] {strides = array<i32: 2, 1>} : memref<132x1xf32, #tpu.memory_space<vmem>>, vector<32x1xf32>
    %c68 = arith.constant 68 : index
    %c0_39 = arith.constant 0 : index
    %48 = tpu.strided_load %arg0[%c68, %c0_39] {strides = array<i32: 2, 1>} : memref<132x1xf32, #tpu.memory_space<vmem>>, vector<32x1xf32>
    %c69 = arith.constant 69 : index
    %c0_40 = arith.constant 0 : index
    %49 = tpu.strided_load %arg0[%c69, %c0_40] {strides = array<i32: 2, 1>} : memref<132x1xf32, #tpu.memory_space<vmem>>, vector<32x1xf32>
    %c0_41 = arith.constant 0 : index
    %c0_42 = arith.constant 0 : index
    %50 = vector.load %arg1[%c0_41, %c0_42] : memref<4x32xf32, #tpu.memory_space<vmem>>, vector<1x32xf32>
    %51 = vector.broadcast %46 : vector<32x1xf32> to vector<32x32xf32>
    %52 = vector.broadcast %50 : vector<1x32xf32> to vector<32x32xf32>
    %53 = arith.mulf %51, %52 : vector<32x32xf32>
    %c1_43 = arith.constant 1 : index
    %c0_44 = arith.constant 0 : index
    %54 = vector.load %arg1[%c1_43, %c0_44] : memref<4x32xf32, #tpu.memory_space<vmem>>, vector<1x32xf32>
    %55 = vector.broadcast %47 : vector<32x1xf32> to vector<32x32xf32>
    %56 = vector.broadcast %54 : vector<1x32xf32> to vector<32x32xf32>
    %57 = arith.mulf %55, %56 : vector<32x32xf32>
    %58 = arith.addf %53, %57 : vector<32x32xf32>
    %c2_45 = arith.constant 2 : index
    %c0_46 = arith.constant 0 : index
    %59 = vector.load %arg1[%c2_45, %c0_46] : memref<4x32xf32, #tpu.memory_space<vmem>>, vector<1x32xf32>
    %60 = vector.broadcast %48 : vector<32x1xf32> to vector<32x32xf32>
    %61 = vector.broadcast %59 : vector<1x32xf32> to vector<32x32xf32>
    %62 = arith.mulf %60, %61 : vector<32x32xf32>
    %63 = arith.addf %58, %62 : vector<32x32xf32>
    %c3_47 = arith.constant 3 : index
    %c0_48 = arith.constant 0 : index
    %64 = vector.load %arg1[%c3_47, %c0_48] : memref<4x32xf32, #tpu.memory_space<vmem>>, vector<1x32xf32>
    %65 = vector.broadcast %49 : vector<32x1xf32> to vector<32x32xf32>
    %66 = vector.broadcast %64 : vector<1x32xf32> to vector<32x32xf32>
    %67 = arith.mulf %65, %66 : vector<32x32xf32>
    %68 = arith.addf %63, %67 : vector<32x32xf32>
    %69 = tpu.concatenate %45, %68 in 0 : vector<32x32xf32>, vector<32x32xf32> -> vector<64x32xf32>
    %c0_49 = arith.constant 0 : index
    %c0_50 = arith.constant 0 : index
    %70 = vector.load %arg5[%c0_49, %c0_50] : memref<1x32xf32, #tpu.memory_space<vmem>>, vector<1x32xf32>
    %c0_51 = arith.constant 0 : index
    %c0_52 = arith.constant 0 : index
    %71 = vector.load %arg9[%c0_51, %c0_52] : memref<1x32xf32, #tpu.memory_space<vmem>>, vector<1x32xf32>
    %cst_53 = arith.constant dense<0.000000e+00> : vector<32xf32>
    %72 = vector.multi_reduction <add>, %69, %cst_53 [0] : vector<64x32xf32> to vector<32xf32>
    %73 = vector.shape_cast %72 : vector<32xf32> to vector<1x32xf32>
    %cst_54 = arith.constant 6.400000e+01 : f32
    %74 = vector.broadcast %cst_54 : f32 to vector<1x32xf32>
    %75 = arith.divf %73, %74 : vector<1x32xf32>
    %76 = vector.broadcast %75 : vector<1x32xf32> to vector<64x32xf32>
    %77 = arith.subf %69, %76 : vector<64x32xf32>
    %78 = arith.mulf %77, %77 : vector<64x32xf32>
    %cst_55 = arith.constant dense<0.000000e+00> : vector<32xf32>
    %79 = vector.multi_reduction <add>, %78, %cst_55 [0] : vector<64x32xf32> to vector<32xf32>
    %80 = vector.shape_cast %79 : vector<32xf32> to vector<1x32xf32>
    %cst_56 = arith.constant 6.400000e+01 : f32
    %81 = vector.broadcast %cst_56 : f32 to vector<1x32xf32>
    %82 = arith.divf %80, %81 : vector<1x32xf32>
    %cst_57 = arith.constant 9.99999974E-6 : f32
    %83 = vector.broadcast %cst_57 : f32 to vector<1x32xf32>
    %84 = arith.addf %82, %83 : vector<1x32xf32>
    %85 = math.rsqrt %84 : vector<1x32xf32>
    %86 = arith.mulf %70, %85 : vector<1x32xf32>
    %87 = arith.mulf %75, %86 : vector<1x32xf32>
    %88 = arith.subf %71, %87 : vector<1x32xf32>
    %89 = vector.broadcast %86 : vector<1x32xf32> to vector<64x32xf32>
    %90 = arith.mulf %69, %89 : vector<64x32xf32>
    %91 = vector.broadcast %88 : vector<1x32xf32> to vector<64x32xf32>
    %92 = arith.addf %90, %91 : vector<64x32xf32>
    %cst_58 = arith.constant 1.000000e-01 : f32
    %93 = vector.broadcast %cst_58 : f32 to vector<64x32xf32>
    %94 = arith.mulf %93, %92 : vector<64x32xf32>
    %95 = arith.maximumf %92, %94 : vector<64x32xf32>
    %96 = vector.extract_strided_slice %95 {offsets = [0, 0], sizes = [32, 32], strides = [1, 1]} : vector<64x32xf32> to vector<32x32xf32>
    %c1_59 = arith.constant 1 : index
    %c0_60 = arith.constant 0 : index
    %97 = vector.load %arg18[%c1_59, %c0_60] : memref<68x32xf32, #tpu.memory_space<vmem>>, vector<32x32xf32>
    tpu.vector_store %arg18[%c1_59, %c0_60], %96 {strides = array<i32>} : memref<68x32xf32, #tpu.memory_space<vmem>>, vector<32x32xf32>,
    %98 = vector.extract_strided_slice %95 {offsets = [32, 0], sizes = [32, 32], strides = [1, 1]} : vector<64x32xf32> to vector<32x32xf32>
    %c35_61 = arith.constant 35 : index
    %c0_62 = arith.constant 0 : index
    %99 = vector.load %arg18[%c35_61, %c0_62] : memref<68x32xf32, #tpu.memory_space<vmem>>, vector<32x32xf32>
    tpu.vector_store %arg18[%c35_61, %c0_62], %98 {strides = array<i32>} : memref<68x32xf32, #tpu.memory_space<vmem>>, vector<32x32xf32>,
    %c0_63 = arith.constant 0 : index
    %c0_64 = arith.constant 0 : index
    %100 = tpu.strided_load %arg18[%c0_63, %c0_64] {strides = array<i32: 2, 1>} : memref<68x32xf32, #tpu.memory_space<vmem>>, vector<16x32xf32>
    %c1_65 = arith.constant 1 : index
    %c0_66 = arith.constant 0 : index
    %101 = tpu.strided_load %arg18[%c1_65, %c0_66] {strides = array<i32: 2, 1>} : memref<68x32xf32, #tpu.memory_space<vmem>>, vector<16x32xf32>
    %c2_67 = arith.constant 2 : index
    %c0_68 = arith.constant 0 : index
    %102 = tpu.strided_load %arg18[%c2_67, %c0_68] {strides = array<i32: 2, 1>} : memref<68x32xf32, #tpu.memory_space<vmem>>, vector<16x32xf32>
    %c3_69 = arith.constant 3 : index
    %c0_70 = arith.constant 0 : index
    %103 = tpu.strided_load %arg18[%c3_69, %c0_70] {strides = array<i32: 2, 1>} : memref<68x32xf32, #tpu.memory_space<vmem>>, vector<16x32xf32>
    %104 = tpu.concatenate %100, %101, %102, %103 in 1 : vector<16x32xf32>, vector<16x32xf32>, vector<16x32xf32>, vector<16x32xf32> -> vector<16x128xf32>
    %c34_71 = arith.constant 34 : index
    %c0_72 = arith.constant 0 : index
    %105 = tpu.strided_load %arg18[%c34_71, %c0_72] {strides = array<i32: 2, 1>} : memref<68x32xf32, #tpu.memory_space<vmem>>, vector<16x32xf32>
    %c35_73 = arith.constant 35 : index
    %c0_74 = arith.constant 0 : index
    %106 = tpu.strided_load %arg18[%c35_73, %c0_74] {strides = array<i32: 2, 1>} : memref<68x32xf32, #tpu.memory_space<vmem>>, vector<16x32xf32>
    %c36 = arith.constant 36 : index
    %c0_75 = arith.constant 0 : index
    %107 = tpu.strided_load %arg18[%c36, %c0_75] {strides = array<i32: 2, 1>} : memref<68x32xf32, #tpu.memory_space<vmem>>, vector<16x32xf32>
    %c37 = arith.constant 37 : index
    %c0_76 = arith.constant 0 : index
    %108 = tpu.strided_load %arg18[%c37, %c0_76] {strides = array<i32: 2, 1>} : memref<68x32xf32, #tpu.memory_space<vmem>>, vector<16x32xf32>
    %109 = tpu.concatenate %105, %106, %107, %108 in 1 : vector<16x32xf32>, vector<16x32xf32>, vector<16x32xf32>, vector<16x32xf32> -> vector<16x128xf32>
    %110 = tpu.concatenate %104, %109 in 0 : vector<16x128xf32>, vector<16x128xf32> -> vector<32x128xf32>
    %c0_77 = arith.constant 0 : index
    %c0_78 = arith.constant 0 : index
    %111 = vector.load %arg2[%c0_77, %c0_78] : memref<128x64xf32, #tpu.memory_space<vmem>>, vector<128x64xf32>
    %cst_79 = arith.constant dense<0.000000e+00> : vector<32x64xf32>
    %112 = tpu.matmul %110, %111, %cst_79 {dimension_numbers = #tpu.dot_dimension_numbers<[1], [0], [0], [1], [0, 0, 1, 1], [], []>} : vector<32x128xf32>, vector<128x64xf32>, vector<32x64xf32> -> vector<32x64xf32>
    %c0_80 = arith.constant 0 : index
    %c0_81 = arith.constant 0 : index
    %113 = vector.load %arg6[%c0_80, %c0_81] : memref<1x64xf32, #tpu.memory_space<vmem>>, vector<1x64xf32>
    %c0_82 = arith.constant 0 : index
    %c0_83 = arith.constant 0 : index
    %114 = vector.load %arg10[%c0_82, %c0_83] : memref<1x64xf32, #tpu.memory_space<vmem>>, vector<1x64xf32>
    %cst_84 = arith.constant dense<0.000000e+00> : vector<64xf32>
    %115 = vector.multi_reduction <add>, %112, %cst_84 [0] : vector<32x64xf32> to vector<64xf32>
    %116 = vector.shape_cast %115 : vector<64xf32> to vector<1x64xf32>
    %cst_85 = arith.constant 3.200000e+01 : f32
    %117 = vector.broadcast %cst_85 : f32 to vector<1x64xf32>
    %118 = arith.divf %116, %117 : vector<1x64xf32>
    %119 = vector.broadcast %118 : vector<1x64xf32> to vector<32x64xf32>
    %120 = arith.subf %112, %119 : vector<32x64xf32>
    %121 = arith.mulf %120, %120 : vector<32x64xf32>
    %cst_86 = arith.constant dense<0.000000e+00> : vector<64xf32>
    %122 = vector.multi_reduction <add>, %121, %cst_86 [0] : vector<32x64xf32> to vector<64xf32>
    %123 = vector.shape_cast %122 : vector<64xf32> to vector<1x64xf32>
    %cst_87 = arith.constant 3.200000e+01 : f32
    %124 = vector.broadcast %cst_87 : f32 to vector<1x64xf32>
    %125 = arith.divf %123, %124 : vector<1x64xf32>
    %cst_88 = arith.constant 9.99999974E-6 : f32
    %126 = vector.broadcast %cst_88 : f32 to vector<1x64xf32>
    %127 = arith.addf %125, %126 : vector<1x64xf32>
    %128 = math.rsqrt %127 : vector<1x64xf32>
    %129 = arith.mulf %113, %128 : vector<1x64xf32>
    %130 = arith.mulf %118, %129 : vector<1x64xf32>
    %131 = arith.subf %114, %130 : vector<1x64xf32>
    %132 = vector.broadcast %129 : vector<1x64xf32> to vector<32x64xf32>
    %133 = arith.mulf %112, %132 : vector<32x64xf32>
    %134 = vector.broadcast %131 : vector<1x64xf32> to vector<32x64xf32>
    %135 = arith.addf %133, %134 : vector<32x64xf32>
    %cst_89 = arith.constant 1.000000e-01 : f32
    %136 = vector.broadcast %cst_89 : f32 to vector<32x64xf32>
    %137 = arith.mulf %136, %135 : vector<32x64xf32>
    %138 = arith.maximumf %135, %137 : vector<32x64xf32>
    %139 = vector.extract_strided_slice %138 {offsets = [0, 0], sizes = [16, 64], strides = [1, 1]} : vector<32x64xf32> to vector<16x64xf32>
    %c1_90 = arith.constant 1 : index
    %c0_91 = arith.constant 0 : index
    %140 = vector.load %arg19[%c1_90, %c0_91] : memref<36x64xf32, #tpu.memory_space<vmem>>, vector<16x64xf32>
    tpu.vector_store %arg19[%c1_90, %c0_91], %139 {strides = array<i32>} : memref<36x64xf32, #tpu.memory_space<vmem>>, vector<16x64xf32>,
    %141 = vector.extract_strided_slice %138 {offsets = [16, 0], sizes = [16, 64], strides = [1, 1]} : vector<32x64xf32> to vector<16x64xf32>
    %c19_92 = arith.constant 19 : index
    %c0_93 = arith.constant 0 : index
    %142 = vector.load %arg19[%c19_92, %c0_93] : memref<36x64xf32, #tpu.memory_space<vmem>>, vector<16x64xf32>
    tpu.vector_store %arg19[%c19_92, %c0_93], %141 {strides = array<i32>} : memref<36x64xf32, #tpu.memory_space<vmem>>, vector<16x64xf32>,
    %c0_94 = arith.constant 0 : index
    %c0_95 = arith.constant 0 : index
    %143 = tpu.strided_load %arg19[%c0_94, %c0_95] {strides = array<i32: 2, 1>} : memref<36x64xf32, #tpu.memory_space<vmem>>, vector<8x64xf32>
    %c1_96 = arith.constant 1 : index
    %c0_97 = arith.constant 0 : index
    %144 = tpu.strided_load %arg19[%c1_96, %c0_97] {strides = array<i32: 2, 1>} : memref<36x64xf32, #tpu.memory_space<vmem>>, vector<8x64xf32>
    %c2_98 = arith.constant 2 : index
    %c0_99 = arith.constant 0 : index
    %145 = tpu.strided_load %arg19[%c2_98, %c0_99] {strides = array<i32: 2, 1>} : memref<36x64xf32, #tpu.memory_space<vmem>>, vector<8x64xf32>
    %c3_100 = arith.constant 3 : index
    %c0_101 = arith.constant 0 : index
    %146 = tpu.strided_load %arg19[%c3_100, %c0_101] {strides = array<i32: 2, 1>} : memref<36x64xf32, #tpu.memory_space<vmem>>, vector<8x64xf32>
    %147 = tpu.concatenate %143, %144, %145, %146 in 1 : vector<8x64xf32>, vector<8x64xf32>, vector<8x64xf32>, vector<8x64xf32> -> vector<8x256xf32>
    %c18_102 = arith.constant 18 : index
    %c0_103 = arith.constant 0 : index
    %148 = tpu.strided_load %arg19[%c18_102, %c0_103] {strides = array<i32: 2, 1>} : memref<36x64xf32, #tpu.memory_space<vmem>>, vector<8x64xf32>
    %c19_104 = arith.constant 19 : index
    %c0_105 = arith.constant 0 : index
    %149 = tpu.strided_load %arg19[%c19_104, %c0_105] {strides = array<i32: 2, 1>} : memref<36x64xf32, #tpu.memory_space<vmem>>, vector<8x64xf32>
    %c20 = arith.constant 20 : index
    %c0_106 = arith.constant 0 : index
    %150 = tpu.strided_load %arg19[%c20, %c0_106] {strides = array<i32: 2, 1>} : memref<36x64xf32, #tpu.memory_space<vmem>>, vector<8x64xf32>
    %c21 = arith.constant 21 : index
    %c0_107 = arith.constant 0 : index
    %151 = tpu.strided_load %arg19[%c21, %c0_107] {strides = array<i32: 2, 1>} : memref<36x64xf32, #tpu.memory_space<vmem>>, vector<8x64xf32>
    %152 = tpu.concatenate %148, %149, %150, %151 in 1 : vector<8x64xf32>, vector<8x64xf32>, vector<8x64xf32>, vector<8x64xf32> -> vector<8x256xf32>
    %153 = tpu.concatenate %147, %152 in 0 : vector<8x256xf32>, vector<8x256xf32> -> vector<16x256xf32>
    %c0_108 = arith.constant 0 : index
    %c0_109 = arith.constant 0 : index
    %154 = vector.load %arg3[%c0_108, %c0_109] : memref<256x128xf32, #tpu.memory_space<vmem>>, vector<256x128xf32>
    %cst_110 = arith.constant dense<0.000000e+00> : vector<16x128xf32>
    %155 = tpu.matmul %153, %154, %cst_110 {dimension_numbers = #tpu.dot_dimension_numbers<[1], [0], [0], [1], [0, 0, 1, 1], [], []>} : vector<16x256xf32>, vector<256x128xf32>, vector<16x128xf32> -> vector<16x128xf32>
    %c0_111 = arith.constant 0 : index
    %c0_112 = arith.constant 0 : index
    %156 = vector.load %arg7[%c0_111, %c0_112] : memref<1x128xf32, #tpu.memory_space<vmem>>, vector<1x128xf32>
    %c0_113 = arith.constant 0 : index
    %c0_114 = arith.constant 0 : index
    %157 = vector.load %arg11[%c0_113, %c0_114] : memref<1x128xf32, #tpu.memory_space<vmem>>, vector<1x128xf32>
    %cst_115 = arith.constant dense<0.000000e+00> : vector<128xf32>
    %158 = vector.multi_reduction <add>, %155, %cst_115 [0] : vector<16x128xf32> to vector<128xf32>
    %159 = vector.shape_cast %158 : vector<128xf32> to vector<1x128xf32>
    %cst_116 = arith.constant 1.600000e+01 : f32
    %160 = vector.broadcast %cst_116 : f32 to vector<1x128xf32>
    %161 = arith.divf %159, %160 : vector<1x128xf32>
    %162 = vector.broadcast %161 : vector<1x128xf32> to vector<16x128xf32>
    %163 = arith.subf %155, %162 : vector<16x128xf32>
    %164 = arith.mulf %163, %163 : vector<16x128xf32>
    %cst_117 = arith.constant dense<0.000000e+00> : vector<128xf32>
    %165 = vector.multi_reduction <add>, %164, %cst_117 [0] : vector<16x128xf32> to vector<128xf32>
    %166 = vector.shape_cast %165 : vector<128xf32> to vector<1x128xf32>
    %cst_118 = arith.constant 1.600000e+01 : f32
    %167 = vector.broadcast %cst_118 : f32 to vector<1x128xf32>
    %168 = arith.divf %166, %167 : vector<1x128xf32>
    %cst_119 = arith.constant 9.99999974E-6 : f32
    %169 = vector.broadcast %cst_119 : f32 to vector<1x128xf32>
    %170 = arith.addf %168, %169 : vector<1x128xf32>
    %171 = math.rsqrt %170 : vector<1x128xf32>
    %172 = arith.mulf %156, %171 : vector<1x128xf32>
    %173 = arith.mulf %161, %172 : vector<1x128xf32>
    %174 = arith.subf %157, %173 : vector<1x128xf32>
    %175 = vector.broadcast %172 : vector<1x128xf32> to vector<16x128xf32>
    %176 = arith.mulf %155, %175 : vector<16x128xf32>
    %177 = vector.broadcast %174 : vector<1x128xf32> to vector<16x128xf32>
    %178 = arith.addf %176, %177 : vector<16x128xf32>
    %cst_120 = arith.constant 1.000000e-01 : f32
    %179 = vector.broadcast %cst_120 : f32 to vector<16x128xf32>
    %180 = arith.mulf %179, %178 : vector<16x128xf32>
    %181 = arith.maximumf %178, %180 : vector<16x128xf32>
    %182 = vector.extract_strided_slice %181 {offsets = [0, 0], sizes = [8, 128], strides = [1, 1]} : vector<16x128xf32> to vector<8x128xf32>
    %c1_121 = arith.constant 1 : index
    %c0_122 = arith.constant 0 : index
    %183 = vector.load %arg20[%c1_121, %c0_122] : memref<20x128xf32, #tpu.memory_space<vmem>>, vector<8x128xf32>
    tpu.vector_store %arg20[%c1_121, %c0_122], %182 {strides = array<i32>} : memref<20x128xf32, #tpu.memory_space<vmem>>, vector<8x128xf32>,
    %184 = vector.extract_strided_slice %181 {offsets = [8, 0], sizes = [8, 128], strides = [1, 1]} : vector<16x128xf32> to vector<8x128xf32>
    %c11 = arith.constant 11 : index
    %c0_123 = arith.constant 0 : index
    %185 = vector.load %arg20[%c11, %c0_123] : memref<20x128xf32, #tpu.memory_space<vmem>>, vector<8x128xf32>
    tpu.vector_store %arg20[%c11, %c0_123], %184 {strides = array<i32>} : memref<20x128xf32, #tpu.memory_space<vmem>>, vector<8x128xf32>,
    %c0_124 = arith.constant 0 : index
    %c0_125 = arith.constant 0 : index
    %186 = tpu.strided_load %arg20[%c0_124, %c0_125] {strides = array<i32: 2, 1>} : memref<20x128xf32, #tpu.memory_space<vmem>>, vector<4x128xf32>
    %c1_126 = arith.constant 1 : index
    %c0_127 = arith.constant 0 : index
    %187 = tpu.strided_load %arg20[%c1_126, %c0_127] {strides = array<i32: 2, 1>} : memref<20x128xf32, #tpu.memory_space<vmem>>, vector<4x128xf32>
    %c2_128 = arith.constant 2 : index
    %c0_129 = arith.constant 0 : index
    %188 = tpu.strided_load %arg20[%c2_128, %c0_129] {strides = array<i32: 2, 1>} : memref<20x128xf32, #tpu.memory_space<vmem>>, vector<4x128xf32>
    %c3_130 = arith.constant 3 : index
    %c0_131 = arith.constant 0 : index
    %189 = tpu.strided_load %arg20[%c3_130, %c0_131] {strides = array<i32: 2, 1>} : memref<20x128xf32, #tpu.memory_space<vmem>>, vector<4x128xf32>
    %190 = tpu.concatenate %186, %187, %188, %189 in 1 : vector<4x128xf32>, vector<4x128xf32>, vector<4x128xf32>, vector<4x128xf32> -> vector<4x512xf32>
    %c10_132 = arith.constant 10 : index
    %c0_133 = arith.constant 0 : index
    %191 = tpu.strided_load %arg20[%c10_132, %c0_133] {strides = array<i32: 2, 1>} : memref<20x128xf32, #tpu.memory_space<vmem>>, vector<4x128xf32>
    %c11_134 = arith.constant 11 : index
    %c0_135 = arith.constant 0 : index
    %192 = tpu.strided_load %arg20[%c11_134, %c0_135] {strides = array<i32: 2, 1>} : memref<20x128xf32, #tpu.memory_space<vmem>>, vector<4x128xf32>
    %c12 = arith.constant 12 : index
    %c0_136 = arith.constant 0 : index
    %193 = tpu.strided_load %arg20[%c12, %c0_136] {strides = array<i32: 2, 1>} : memref<20x128xf32, #tpu.memory_space<vmem>>, vector<4x128xf32>
    %c13 = arith.constant 13 : index
    %c0_137 = arith.constant 0 : index
    %194 = tpu.strided_load %arg20[%c13, %c0_137] {strides = array<i32: 2, 1>} : memref<20x128xf32, #tpu.memory_space<vmem>>, vector<4x128xf32>
    %195 = tpu.concatenate %191, %192, %193, %194 in 1 : vector<4x128xf32>, vector<4x128xf32>, vector<4x128xf32>, vector<4x128xf32> -> vector<4x512xf32>
    %196 = tpu.concatenate %190, %195 in 0 : vector<4x512xf32>, vector<4x512xf32> -> vector<8x512xf32>
    %c0_138 = arith.constant 0 : index
    %c0_139 = arith.constant 0 : index
    %197 = vector.load %arg4[%c0_138, %c0_139] : memref<512x256xf32, #tpu.memory_space<vmem>>, vector<512x256xf32>
    %cst_140 = arith.constant dense<0.000000e+00> : vector<8x256xf32>
    %198 = tpu.matmul %196, %197, %cst_140 {dimension_numbers = #tpu.dot_dimension_numbers<[1], [0], [0], [1], [0, 0, 1, 1], [], []>} : vector<8x512xf32>, vector<512x256xf32>, vector<8x256xf32> -> vector<8x256xf32>
    %c0_141 = arith.constant 0 : index
    %c0_142 = arith.constant 0 : index
    %199 = vector.load %arg8[%c0_141, %c0_142] : memref<1x256xf32, #tpu.memory_space<vmem>>, vector<1x256xf32>
    %c0_143 = arith.constant 0 : index
    %c0_144 = arith.constant 0 : index
    %200 = vector.load %arg12[%c0_143, %c0_144] : memref<1x256xf32, #tpu.memory_space<vmem>>, vector<1x256xf32>
    %cst_145 = arith.constant dense<0.000000e+00> : vector<256xf32>
    %201 = vector.multi_reduction <add>, %198, %cst_145 [0] : vector<8x256xf32> to vector<256xf32>
    %202 = vector.shape_cast %201 : vector<256xf32> to vector<1x256xf32>
    %cst_146 = arith.constant 8.000000e+00 : f32
    %203 = vector.broadcast %cst_146 : f32 to vector<1x256xf32>
    %204 = arith.divf %202, %203 : vector<1x256xf32>
    %205 = vector.broadcast %204 : vector<1x256xf32> to vector<8x256xf32>
    %206 = arith.subf %198, %205 : vector<8x256xf32>
    %207 = arith.mulf %206, %206 : vector<8x256xf32>
    %cst_147 = arith.constant dense<0.000000e+00> : vector<256xf32>
    %208 = vector.multi_reduction <add>, %207, %cst_147 [0] : vector<8x256xf32> to vector<256xf32>
    %209 = vector.shape_cast %208 : vector<256xf32> to vector<1x256xf32>
    %cst_148 = arith.constant 8.000000e+00 : f32
    %210 = vector.broadcast %cst_148 : f32 to vector<1x256xf32>
    %211 = arith.divf %209, %210 : vector<1x256xf32>
    %cst_149 = arith.constant 9.99999974E-6 : f32
    %212 = vector.broadcast %cst_149 : f32 to vector<1x256xf32>
    %213 = arith.addf %211, %212 : vector<1x256xf32>
    %214 = math.rsqrt %213 : vector<1x256xf32>
    %215 = arith.mulf %199, %214 : vector<1x256xf32>
    %216 = arith.mulf %204, %215 : vector<1x256xf32>
    %217 = arith.subf %200, %216 : vector<1x256xf32>
    %218 = vector.broadcast %215 : vector<1x256xf32> to vector<8x256xf32>
    %219 = arith.mulf %198, %218 : vector<8x256xf32>
    %220 = vector.broadcast %217 : vector<1x256xf32> to vector<8x256xf32>
    %221 = arith.addf %219, %220 : vector<8x256xf32>
    %cst_150 = arith.constant 1.000000e-01 : f32
    %222 = vector.broadcast %cst_150 : f32 to vector<8x256xf32>
    %223 = arith.mulf %222, %221 : vector<8x256xf32>
    %224 = arith.maximumf %221, %223 : vector<8x256xf32>
    %225 = vector.extract_strided_slice %224 {offsets = [0, 0], sizes = [1, 256], strides = [1, 1]} : vector<8x256xf32> to vector<1x256xf32>
    %226 = vector.extract_strided_slice %224 {offsets = [1, 0], sizes = [1, 256], strides = [1, 1]} : vector<8x256xf32> to vector<1x256xf32>
    %227 = vector.extract_strided_slice %224 {offsets = [2, 0], sizes = [1, 256], strides = [1, 1]} : vector<8x256xf32> to vector<1x256xf32>
    %228 = vector.extract_strided_slice %224 {offsets = [3, 0], sizes = [1, 256], strides = [1, 1]} : vector<8x256xf32> to vector<1x256xf32>
    %229 = tpu.concatenate %225, %226, %227, %228 in 1 : vector<1x256xf32>, vector<1x256xf32>, vector<1x256xf32>, vector<1x256xf32> -> vector<1x1024xf32>
    %230 = vector.extract_strided_slice %224 {offsets = [4, 0], sizes = [1, 256], strides = [1, 1]} : vector<8x256xf32> to vector<1x256xf32>
    %231 = vector.extract_strided_slice %224 {offsets = [5, 0], sizes = [1, 256], strides = [1, 1]} : vector<8x256xf32> to vector<1x256xf32>
    %232 = vector.extract_strided_slice %224 {offsets = [6, 0], sizes = [1, 256], strides = [1, 1]} : vector<8x256xf32> to vector<1x256xf32>
    %233 = vector.extract_strided_slice %224 {offsets = [7, 0], sizes = [1, 256], strides = [1, 1]} : vector<8x256xf32> to vector<1x256xf32>
    %234 = tpu.concatenate %230, %231, %232, %233 in 1 : vector<1x256xf32>, vector<1x256xf32>, vector<1x256xf32>, vector<1x256xf32> -> vector<1x1024xf32>
    %235 = tpu.concatenate %229, %234 in 0 : vector<1x1024xf32>, vector<1x1024xf32> -> vector<2x1024xf32>
    %236 = arith.truncf %235 : vector<2x1024xf32> to vector<2x1024xbf16>
    %c0_i32_151 = arith.constant 0 : i32
    %c0_i32_152 = arith.constant 0 : i32
    %c0_i32_153 = arith.constant 0 : i32
    %237 = tpu.memref_slice %arg13[%c0_i32_152, %c0_i32_153] : memref<1024x2048xbf16, #tpu.memory_space<any>> -> memref<512x2048xbf16, #tpu.memory_space<any>>
    %c0_i32_154 = arith.constant 0 : i32
    %c0_i32_155 = arith.constant 0 : i32
    %238 = tpu.memref_slice %arg21[%c0_i32_154, %c0_i32_155] : memref<1024x2048xbf16, #tpu.memory_space<vmem>> -> memref<512x2048xbf16, #tpu.memory_space<vmem>>
    %239 = tpu.memref_slice %arg22[%c0_i32_151] : memref<2x!tpu.dma_semaphore, #tpu.memory_space<semaphore_mem>> -> memref<1x!tpu.dma_semaphore, #tpu.memory_space<semaphore_mem>>
    %240 = tpu.memref_squeeze %239 : memref<1x!tpu.dma_semaphore, #tpu.memory_space<semaphore_mem>> -> memref<!tpu.dma_semaphore, #tpu.memory_space<semaphore_mem>>
    tpu.wait_dma2 semaphore(%240 : memref<!tpu.dma_semaphore, #tpu.memory_space<semaphore_mem>>) src(%237 : memref<512x2048xbf16, #tpu.memory_space<any>>) dst(%238 : memref<512x2048xbf16, #tpu.memory_space<vmem>>)
    %c1_i32_156 = arith.constant 1 : i32
    %c512_i32_157 = arith.constant 512 : i32
    %c0_i32_158 = arith.constant 0 : i32
    %241 = tpu.memref_slice %arg13[%c512_i32_157, %c0_i32_158] : memref<1024x2048xbf16, #tpu.memory_space<any>> -> memref<512x2048xbf16, #tpu.memory_space<any>>
    %c512_i32_159 = arith.constant 512 : i32
    %c0_i32_160 = arith.constant 0 : i32
    %242 = tpu.memref_slice %arg21[%c512_i32_159, %c0_i32_160] : memref<1024x2048xbf16, #tpu.memory_space<vmem>> -> memref<512x2048xbf16, #tpu.memory_space<vmem>>
    %243 = tpu.memref_slice %arg22[%c1_i32_156] : memref<2x!tpu.dma_semaphore, #tpu.memory_space<semaphore_mem>> -> memref<1x!tpu.dma_semaphore, #tpu.memory_space<semaphore_mem>>
    %244 = tpu.memref_squeeze %243 : memref<1x!tpu.dma_semaphore, #tpu.memory_space<semaphore_mem>> -> memref<!tpu.dma_semaphore, #tpu.memory_space<semaphore_mem>>
    tpu.wait_dma2 semaphore(%244 : memref<!tpu.dma_semaphore, #tpu.memory_space<semaphore_mem>>) src(%241 : memref<512x2048xbf16, #tpu.memory_space<any>>) dst(%242 : memref<512x2048xbf16, #tpu.memory_space<vmem>>)
    %c0_161 = arith.constant 0 : index
    %c0_162 = arith.constant 0 : index
    %245 = vector.load %arg21[%c0_161, %c0_162] : memref<1024x2048xbf16, #tpu.memory_space<vmem>>, vector<1024x2048xbf16>
    %cst_163 = arith.constant dense<0.000000e+00> : vector<2x2048xf32>
    %246 = tpu.matmul %236, %245, %cst_163 {dimension_numbers = #tpu.dot_dimension_numbers<[1], [0], [0], [1], [0, 0, 1, 1], [], []>} : vector<2x1024xbf16>, vector<1024x2048xbf16>, vector<2x2048xf32> -> vector<2x2048xf32>
    %c0_164 = arith.constant 0 : index
    %c0_165 = arith.constant 0 : index
    %247 = vector.load %arg14[%c0_164, %c0_165] : memref<1x2048xf32, #tpu.memory_space<vmem>>, vector<1x2048xf32>
    %248 = vector.broadcast %247 : vector<1x2048xf32> to vector<2x2048xf32>
    %249 = arith.addf %246, %248 : vector<2x2048xf32>
    %cst_166 = arith.constant 0.000000e+00 : f32
    %250 = vector.broadcast %cst_166 : f32 to vector<2x2048xf32>
    %251 = arith.maximumf %249, %250 : vector<2x2048xf32>
    %c0_167 = arith.constant 0 : index
    %c0_168 = arith.constant 0 : index
    %252 = vector.load %arg15[%c0_167, %c0_168] : memref<1x2048xf32, #tpu.memory_space<vmem>>, vector<1x2048xf32>
    %253 = vector.broadcast %252 : vector<1x2048xf32> to vector<2x2048xf32>
    %254 = arith.mulf %251, %253 : vector<2x2048xf32>
    %cst_169 = arith.constant dense<0.000000e+00> : vector<2xf32>
    %255 = vector.multi_reduction <add>, %254, %cst_169 [1] : vector<2x2048xf32> to vector<2xf32>
    %256 = vector.shape_cast %255 : vector<2xf32> to vector<2x1xf32>
    %c0_170 = arith.constant 0 : index
    %c0_171 = arith.constant 0 : index
    %257 = vector.load %arg16[%c0_170, %c0_171] : memref<1x1xf32, #tpu.memory_space<vmem>>, vector<1x1xf32>
    %258 = vector.broadcast %257 : vector<1x1xf32> to vector<2x1xf32>
    %259 = arith.addf %256, %258 : vector<2x1xf32>
    %cst_172 = arith.constant 0.000000e+00 : f32
    %260 = vector.broadcast %cst_172 : f32 to vector<2x1xf32>
    %261 = arith.subf %260, %259 : vector<2x1xf32>
    %262 = math.exp %261 : vector<2x1xf32>
    %cst_173 = arith.constant 1.000000e+00 : f32
    %263 = vector.broadcast %cst_173 : f32 to vector<2x1xf32>
    %264 = arith.addf %263, %262 : vector<2x1xf32>
    %cst_174 = arith.constant 1.000000e+00 : f32
    %265 = vector.broadcast %cst_174 : f32 to vector<2x1xf32>
    %266 = arith.divf %265, %264 : vector<2x1xf32>
    %c0_175 = arith.constant 0 : index
    %c0_176 = arith.constant 0 : index
    %267 = vector.load %arg17[%c0_175, %c0_176] : memref<2x1xf32, #tpu.memory_space<vmem>>, vector<2x1xf32>
    tpu.vector_store %arg17[%c0_175, %c0_176], %266 {strides = array<i32>} : memref<2x1xf32, #tpu.memory_space<vmem>>, vector<2x1xf32>,
    return
  }
}

</mosaic_0001>

<llo_original>
// kernel: discriminator_forward.1
$region0: #{discriminator_forward.1}
  #allocation0 [shape = 'u32[]', space=smem, size = 0x4, offset = 0x4, fixed_abs, tag = 'smem constant byte address 0x4 - core index']
  #allocation1 [shape = 'u32[72,128]{1,0:T(1,128)}', space=vmem, size = 0x9000, scoped, tag = 'internal scratch']
  #allocation2 [shape = 'f32[68,32]{1,0:T(8,128)}', space=vmem, size = 0x9000, scoped, tag = 'scratch operand']
  #allocation3 [shape = 'f32[36,64]{1,0:T(8,128)}', space=vmem, size = 0x5000, scoped, tag = 'scratch operand']
  #allocation4 [shape = 'f32[20,128]{1,0:T(8,128)}', space=vmem, size = 0x3000, scoped, tag = 'scratch operand']
  #allocation5 [shape = 'bf16[1024,2048]{1,0:T(8,128)(2,1)}', space=vmem, size = 0x400000, scoped, tag = 'scratch operand']
  #allocation6 [shape = 's32[2]{0}', space=sflag, size = 0x8, scoped, tag = 'scratch operand']
  #allocation7 [shape = 'f32[1,1]{1,0:T(1,128)S(1)}', space=vmem, size = 0x200, scoped, tag = 'scoped memory for discriminator_forward.1']
  #allocation28 [shape = 's32[]', space=sflag, size = 0x4, offset = 0, fixed_abs, tag = 'sflag constant byte address 0x0 - dummy sync flag']
  #allocation29 [shape = 's32[]', space=sflag, size = 0x4, offset = 0, fixed_abs, tag = 'sflag constant byte address 0x0 - dummy sync flag']
  #allocation30 [shape = 'u32[]', space=smem, size = 0x4, offset = 0x44, fixed_abs, tag = 'smem constant byte address 0x44 - assertion arg 0']
  #allocation31 [shape = 'u32[]', space=smem, size = 0x4, offset = 0x48, fixed_abs, tag = 'smem constant byte address 0x48 - assertion arg 1']
  #allocation32 [shape = 's32[]', space=sflag, size = 0x4, offset = 0, fixed_abs, tag = 'sflag constant byte address 0x0 - dummy sync flag']
  #allocation33 [shape = 's32[]', space=sflag, size = 0x4, offset = 0, fixed_abs, tag = 'sflag constant byte address 0x0 - dummy sync flag']
  %s0 = inlined_call_operand.vmem [shape: f32[132,1], index: 0, kind: input, shape index: {}]
  %s1 = inlined_call_operand.hbm [shape: f32[4,32], index: 1, kind: input, shape index: {}]
  %s2 = inlined_call_operand.vmem [shape: f32[128,64], index: 2, kind: input, shape index: {}]
  %s3 = inlined_call_operand.hbm [shape: f32[256,128], index: 3, kind: input, shape index: {}]
  %s4 = inlined_call_operand.hbm [shape: f32[512,256], index: 4, kind: input, shape index: {}]
  %s5 = inlined_call_operand.hbm [shape: f32[1,32], index: 5, kind: input, shape index: {}]
  %s6 = inlined_call_operand.hbm [shape: f32[1,64], index: 6, kind: input, shape index: {}]
  %s7 = inlined_call_operand.hbm [shape: f32[1,128], index: 7, kind: input, shape index: {}]
  %s8 = inlined_call_operand.hbm [shape: f32[1,256], index: 8, kind: input, shape index: {}]
  %s9 = inlined_call_operand.hbm [shape: f32[1,32], index: 9, kind: input, shape index: {}]
  %s10 = inlined_call_operand.hbm [shape: f32[1,64], index: 10, kind: input, shape index: {}]
  %s11 = inlined_call_operand.hbm [shape: f32[1,128], index: 11, kind: input, shape index: {}]
  %s12 = inlined_call_operand.hbm [shape: f32[1,256], index: 12, kind: input, shape index: {}]
  %s13 = inlined_call_operand.hbm [shape: bf16[1024,2048], index: 13, kind: input, shape index: {}]
  %s14 = inlined_call_operand.hbm [shape: f32[1,2048], index: 14, kind: input, shape index: {}]
  %s15 = inlined_call_operand.hbm [shape: f32[1,2048], index: 15, kind: input, shape index: {}]
  %s16 = inlined_call_operand.<no memory space> [shape: f32[1,1], index: 16, kind: input, shape index: {}]
  %s17 = inlined_call_operand.vmem [shape: f32[2,1], index: 17, kind: output, shape index: {}]
  %s18 = sld [smem:[#allocation0]]
  $region134: #{discriminator_forward.1} parent=0
    _
  %s20 = ssub.s32 1, %s18
  %s21 = scalar_select 0, %s20, %s18
  %v22 = vstv %s16
  %23 = vst [vmem:[#allocation7] sm:$0x1] %v22
  $region1: #{discriminator_forward.1} parent=0
    #allocation8 [shape = 'u8[2048]{0}', space=vmem, size = 0x800, scoped, tag = 'input window, operand 1, single buffered']
    #allocation9 [shape = 's32[1]{0}', space=sflag, size = 0x4, scoped, tag = 'scoped memory for discriminator_forward.1']
    #allocation10 [shape = 'u8[131072]{0}', space=vmem, size = 0x20000, scoped, tag = 'input window, operand 3, single buffered']
    #allocation11 [shape = 's32[1]{0}', space=sflag, size = 0x4, scoped, tag = 'scoped memory for discriminator_forward.1']
    #allocation12 [shape = 'u8[524288]{0}', space=vmem, size = 0x80000, scoped, tag = 'input window, operand 4, single buffered']
    #allocation13 [shape = 'u8[512]{0}', space=vmem, size = 0x400, scoped, tag = 'input window, operand 5, single buffered']
    #allocation14 [shape = 's32[1]{0}', space=sflag, size = 0x4, scoped, tag = 'scoped memory for discriminator_forward.1']
    #allocation15 [shape = 'u8[512]{0}', space=vmem, size = 0x400, scoped, tag = 'input window, operand 6, single buffered']
    #allocation16 [shape = 'u8[512]{0}', space=vmem, size = 0x400, scoped, tag = 'input window, operand 7, single buffered']
    #allocation17 [shape = 's32[1]{0}', space=sflag, size = 0x4, scoped, tag = 'scoped memory for discriminator_forward.1']
    #allocation18 [shape = 'u8[1024]{0}', space=vmem, size = 0x400, scoped, tag = 'input window, operand 8, single buffered']
    #allocation19 [shape = 'u8[512]{0}', space=vmem, size = 0x400, scoped, tag = 'input window, operand 9, single buffered']
    #allocation20 [shape = 's32[1]{0}', space=sflag, size = 0x4, scoped, tag = 'scoped memory for discriminator_forward.1']
    #allocation21 [shape = 'u8[512]{0}', space=vmem, size = 0x400, scoped, tag = 'input window, operand 10, single buffered']
    #allocation22 [shape = 'u8[512]{0}', space=vmem, size = 0x400, scoped, tag = 'input window, operand 11, single buffered']
    #allocation23 [shape = 's32[1]{0}', space=sflag, size = 0x4, scoped, tag = 'scoped memory for discriminator_forward.1']
    #allocation24 [shape = 'u8[1024]{0}', space=vmem, size = 0x400, scoped, tag = 'input window, operand 12, single buffered']
    #allocation25 [shape = 'u8[8192]{0}', space=vmem, size = 0x2000, scoped, tag = 'input window, operand 14, single buffered']
    #allocation26 [shape = 's32[1]{0}', space=sflag, size = 0x4, scoped, tag = 'scoped memory for discriminator_forward.1']
    #allocation27 [shape = 'u8[8192]{0}', space=vmem, size = 0x2000, scoped, tag = 'input window, operand 15, single buffered']
    %24 = vsyncpa [#allocation9], 0
    %25 = vsyncpa [#allocation11], 0
    %26 = vsyncpa [#allocation14], 0
    %27 = vsyncpa [#allocation17], 0
    %28 = vsyncpa [#allocation20], 0
    %29 = vsyncpa [#allocation23], 0
    %30 = vsyncpa [#allocation26], 0
    // Predicated region
    $region2: #{discriminator_forward.1} parent=1 // pred_check
      _
    $region3: #{discriminator_forward.1} parent=1 // pred_check_branch
      %32 = sbr.rel (0) target = $region5
    $region4: #{discriminator_forward.1} parent=1 // pred_region
      _
    $region5: #{discriminator_forward.1} parent=1 // pred_fallthru
      _
    // Predicated region
    $region6: #{discriminator_forward.1} parent=1 // pred_check
      _
    $region7: #{discriminator_forward.1} parent=1 // pred_check_branch
      %34 = sbr.rel (0) target = $region9
    $region8: #{discriminator_forward.1} parent=1 // pred_region
      %36 = vsyncadd [#allocation9], 0
      %s38 = sshll.u32 %s1, 4
      %s39 = int_to_ptr.hbm [resolvable:$true] %s38
      %s40 = sshll.u32 [#allocation8], 4
      %s41 = int_to_ptr.vmem [resolvable:$true] %s40
      %43 = dma.hbm_to_vmem [thread:$0]  %s39, 64, %s41, [#allocation9]
    $region9: #{discriminator_forward.1} parent=1 // pred_fallthru
      _
    // Predicated region
    $region10: #{discriminator_forward.1} parent=1 // pred_check
      _
    $region11: #{discriminator_forward.1} parent=1 // pred_check_branch
      %45 = sbr.rel (0) target = $region13
    $region12: #{discriminator_forward.1} parent=1 // pred_region
      _
    $region13: #{discriminator_forward.1} parent=1 // pred_fallthru
      _
    // Predicated region
    $region14: #{discriminator_forward.1} parent=1 // pred_check
      _
    $region15: #{discriminator_forward.1} parent=1 // pred_check_branch
      %47 = sbr.rel (0) target = $region17
    $region16: #{discriminator_forward.1} parent=1 // pred_region
      %49 = vsyncadd [#allocation11], 0
      %s50 = sshll.u32 %s3, 4
      %s51 = int_to_ptr.hbm [resolvable:$true] %s50
      %s52 = sshll.u32 [#allocation10], 4
      %s53 = int_to_ptr.vmem [resolvable:$true] %s52
      %58 = dma.hbm_to_vmem [thread:$0]  %s51, 4096, %s53, [#allocation11], 128, 128, 8
    $region17: #{discriminator_forward.1} parent=1 // pred_fallthru
      _
    // Predicated region
    $region18: #{discriminator_forward.1} parent=1 // pred_check
      _
    $region19: #{discriminator_forward.1} parent=1 // pred_check_branch
      %60 = sbr.rel (0) target = $region21
    $region20: #{discriminator_forward.1} parent=1 // pred_region
      %62 = vsyncadd [#allocation11], 0
      %s63 = sshll.u32 %s4, 4
      %s64 = int_to_ptr.hbm [resolvable:$true] %s63
      %s65 = sshll.u32 [#allocation12], 4
      %s66 = int_to_ptr.vmem [resolvable:$true] %s65
      %71 = dma.hbm_to_vmem [thread:$0]  %s64, 16384, %s66, [#allocation11], 256, 256, 16
    $region21: #{discriminator_forward.1} parent=1 // pred_fallthru
      _
    // Predicated region
    $region22: #{discriminator_forward.1} parent=1 // pred_check
      _
    $region23: #{discriminator_forward.1} parent=1 // pred_check_branch
      %73 = sbr.rel (0) target = $region25
    $region24: #{discriminator_forward.1} parent=1 // pred_region
      %75 = vsyncadd [#allocation14], 0
      %s77 = sshll.u32 %s5, 4
      %s78 = int_to_ptr.hbm [resolvable:$true] %s77
      %s79 = sshll.u32 [#allocation13], 4
      %s80 = int_to_ptr.vmem [resolvable:$true] %s79
      %82 = dma.hbm_to_vmem [thread:$0]  %s78, 16, %s80, [#allocation14]
    $region25: #{discriminator_forward.1} parent=1 // pred_fallthru
      _
    // Predicated region
    $region26: #{discriminator_forward.1} parent=1 // pred_check
      _
    $region27: #{discriminator_forward.1} parent=1 // pred_check_branch
      %84 = sbr.rel (0) target = $region29
    $region28: #{discriminator_forward.1} parent=1 // pred_region
      %86 = vsyncadd [#allocation14], 0
      %s88 = sshll.u32 %s6, 4
      %s89 = int_to_ptr.hbm [resolvable:$true] %s88
      %s90 = sshll.u32 [#allocation15], 4
      %s91 = int_to_ptr.vmem [resolvable:$true] %s90
      %93 = dma.hbm_to_vmem [thread:$0]  %s89, 16, %s91, [#allocation14]
    $region29: #{discriminator_forward.1} parent=1 // pred_fallthru
      _
    // Predicated region
    $region30: #{discriminator_forward.1} parent=1 // pred_check
      _
    $region31: #{discriminator_forward.1} parent=1 // pred_check_branch
      %95 = sbr.rel (0) target = $region33
    $region32: #{discriminator_forward.1} parent=1 // pred_region
      %97 = vsyncadd [#allocation17], 0
      %s99 = sshll.u32 %s7, 4
      %s100 = int_to_ptr.hbm [resolvable:$true] %s99
      %s101 = sshll.u32 [#allocation16], 4
      %s102 = int_to_ptr.vmem [resolvable:$true] %s101
      %104 = dma.hbm_to_vmem [thread:$0]  %s100, 16, %s102, [#allocation17]
    $region33: #{discriminator_forward.1} parent=1 // pred_fallthru
      _
    // Predicated region
    $region34: #{discriminator_forward.1} parent=1 // pred_check
      _
    $region35: #{discriminator_forward.1} parent=1 // pred_check_branch
      %106 = sbr.rel (0) target = $region37
    $region36: #{discriminator_forward.1} parent=1 // pred_region
      %108 = vsyncadd [#allocation17], 0
      %s110 = sshll.u32 %s8, 4
      %s111 = int_to_ptr.hbm [resolvable:$true] %s110
      %s112 = sshll.u32 [#allocation18], 4
      %s113 = int_to_ptr.vmem [resolvable:$true] %s112
      %115 = dma.hbm_to_vmem [thread:$0]  %s111, 32, %s113, [#allocation17]
    $region37: #{discriminator_forward.1} parent=1 // pred_fallthru
      _
    // Predicated region
    $region38: #{discriminator_forward.1} parent=1 // pred_check
      _
    $region39: #{discriminator_forward.1} parent=1 // pred_check_branch
      %117 = sbr.rel (0) target = $region41
    $region40: #{discriminator_forward.1} parent=1 // pred_region
      %119 = vsyncadd [#allocation20], 0
      %s121 = sshll.u32 %s9, 4
      %s122 = int_to_ptr.hbm [resolvable:$true] %s121
      %s123 = sshll.u32 [#allocation19], 4
      %s124 = int_to_ptr.vmem [resolvable:$true] %s123
      %126 = dma.hbm_to_vmem [thread:$0]  %s122, 16, %s124, [#allocation20]
    $region41: #{discriminator_forward.1} parent=1 // pred_fallthru
      _
    // Predicated region
    $region42: #{discriminator_forward.1} parent=1 // pred_check
      _
    $region43: #{discriminator_forward.1} parent=1 // pred_check_branch
      %128 = sbr.rel (0) target = $region45
    $region44: #{discriminator_forward.1} parent=1 // pred_region
      %130 = vsyncadd [#allocation20], 0
      %s132 = sshll.u32 %s10, 4
      %s133 = int_to_ptr.hbm [resolvable:$true] %s132
      %s134 = sshll.u32 [#allocation21], 4
      %s135 = int_to_ptr.vmem [resolvable:$true] %s134
      %137 = dma.hbm_to_vmem [thread:$0]  %s133, 16, %s135, [#allocation20]
    $region45: #{discriminator_forward.1} parent=1 // pred_fallthru
      _
    // Predicated region
    $region46: #{discriminator_forward.1} parent=1 // pred_check
      _
    $region47: #{discriminator_forward.1} parent=1 // pred_check_branch
      %139 = sbr.rel (0) target = $region49
    $region48: #{discriminator_forward.1} parent=1 // pred_region
      %141 = vsyncadd [#allocation23], 0
      %s143 = sshll.u32 %s11, 4
      %s144 = int_to_ptr.hbm [resolvable:$true] %s143
      %s145 = sshll.u32 [#allocation22], 4
      %s146 = int_to_ptr.vmem [resolvable:$true] %s145
      %148 = dma.hbm_to_vmem [thread:$0]  %s144, 16, %s146, [#allocation23]
    $region49: #{discriminator_forward.1} parent=1 // pred_fallthru
      _
    // Predicated region
    $region50: #{discriminator_forward.1} parent=1 // pred_check
      _
    $region51: #{discriminator_forward.1} parent=1 // pred_check_branch
      %150 = sbr.rel (0) target = $region53
    $region52: #{discriminator_forward.1} parent=1 // pred_region
      %152 = vsyncadd [#allocation23], 0
      %s154 = sshll.u32 %s12, 4
      %s155 = int_to_ptr.hbm [resolvable:$true] %s154
      %s156 = sshll.u32 [#allocation24], 4
      %s157 = int_to_ptr.vmem [resolvable:$true] %s156
      %159 = dma.hbm_to_vmem [thread:$0]  %s155, 32, %s157, [#allocation23]
    $region53: #{discriminator_forward.1} parent=1 // pred_fallthru
      _
    // Predicated region
    $region54: #{discriminator_forward.1} parent=1 // pred_check
      _
    $region55: #{discriminator_forward.1} parent=1 // pred_check_branch
      %161 = sbr.rel (0) target = $region57
    $region56: #{discriminator_forward.1} parent=1 // pred_region
      %163 = vsyncadd [#allocation26], 0
      %s165 = sshll.u32 %s14, 4
      %s166 = int_to_ptr.hbm [resolvable:$true] %s165
      %s167 = sshll.u32 [#allocation25], 4
      %s168 = int_to_ptr.vmem [resolvable:$true] %s167
      %170 = dma.hbm_to_vmem [thread:$0]  %s166, 256, %s168, [#allocation26]
    $region57: #{discriminator_forward.1} parent=1 // pred_fallthru
      _
    // Predicated region
    $region58: #{discriminator_forward.1} parent=1 // pred_check
      _
    $region59: #{discriminator_forward.1} parent=1 // pred_check_branch
      %172 = sbr.rel (0) target = $region61
    $region60: #{discriminator_forward.1} parent=1 // pred_region
      %174 = vsyncadd [#allocation26], 0
      %s176 = sshll.u32 %s15, 4
      %s177 = int_to_ptr.hbm [resolvable:$true] %s176
      %s178 = sshll.u32 [#allocation27], 4
      %s179 = int_to_ptr.vmem [resolvable:$true] %s178
      %181 = dma.hbm_to_vmem [thread:$0]  %s177, 256, %s179, [#allocation26]
    $region61: #{discriminator_forward.1} parent=1 // pred_fallthru
      _
    // Predicated region
    $region62: #{discriminator_forward.1} parent=1 // pred_check
      _
    $region63: #{discriminator_forward.1} parent=1 // pred_check_branch
      %183 = sbr.rel (0) target = $region65
    $region64: #{discriminator_forward.1} parent=1 // pred_region
      _
    $region65: #{discriminator_forward.1} parent=1 // pred_fallthru
      _
    // Predicated region
    $region66: #{discriminator_forward.1} parent=1 // pred_check
      _
    $region67: #{discriminator_forward.1} parent=1 // pred_check_branch
      %185 = sbr.rel (0) target = $region69
    $region68: #{discriminator_forward.1} parent=1 // pred_region
      %187 = dma.done [#allocation9], 64
    $region69: #{discriminator_forward.1} parent=1 // pred_fallthru
      _
    // Predicated region
    $region70: #{discriminator_forward.1} parent=1 // pred_check
      _
    $region71: #{discriminator_forward.1} parent=1 // pred_check_branch
      %189 = sbr.rel (0) target = $region73
    $region72: #{discriminator_forward.1} parent=1 // pred_region
      %191 = dma.done [#allocation11], 4096
    $region73: #{discriminator_forward.1} parent=1 // pred_fallthru
      _
    // Predicated region
    $region74: #{discriminator_forward.1} parent=1 // pred_check
      _
    $region75: #{discriminator_forward.1} parent=1 // pred_check_branch
      %193 = sbr.rel (0) target = $region77
    $region76: #{discriminator_forward.1} parent=1 // pred_region
      %195 = dma.done [#allocation11], 16384
    $region77: #{discriminator_forward.1} parent=1 // pred_fallthru
      _
    // Predicated region
    $region78: #{discriminator_forward.1} parent=1 // pred_check
      _
    $region79: #{discriminator_forward.1} parent=1 // pred_check_branch
      %197 = sbr.rel (0) target = $region81
    $region80: #{discriminator_forward.1} parent=1 // pred_region
      %199 = dma.done [#allocation14], 16
    $region81: #{discriminator_forward.1} parent=1 // pred_fallthru
      _
    // Predicated region
    $region82: #{discriminator_forward.1} parent=1 // pred_check
      _
    $region83: #{discriminator_forward.1} parent=1 // pred_check_branch
      %201 = sbr.rel (0) target = $region85
    $region84: #{discriminator_forward.1} parent=1 // pred_region
      %203 = dma.done [#allocation14], 16
    $region85: #{discriminator_forward.1} parent=1 // pred_fallthru
      _
    // Predicated region
    $region86: #{discriminator_forward.1} parent=1 // pred_check
      _
    $region87: #{discriminator_forward.1} parent=1 // pred_check_branch
      %205 = sbr.rel (0) target = $region89
    $region88: #{discriminator_forward.1} parent=1 // pred_region
      %207 = dma.done [#allocation17], 16
    $region89: #{discriminator_forward.1} parent=1 // pred_fallthru
      _
    // Predicated region
    $region90: #{discriminator_forward.1} parent=1 // pred_check
      _
    $region91: #{discriminator_forward.1} parent=1 // pred_check_branch
      %209 = sbr.rel (0) target = $region93
    $region92: #{discriminator_forward.1} parent=1 // pred_region
      %211 = dma.done [#allocation17], 32
    $region93: #{discriminator_forward.1} parent=1 // pred_fallthru
      _
    // Predicated region
    $region94: #{discriminator_forward.1} parent=1 // pred_check
      _
    $region95: #{discriminator_forward.1} parent=1 // pred_check_branch
      %213 = sbr.rel (0) target = $region97
    $region96: #{discriminator_forward.1} parent=1 // pred_region
      %215 = dma.done [#allocation20], 16
    $region97: #{discriminator_forward.1} parent=1 // pred_fallthru
      _
    // Predicated region
    $region98: #{discriminator_forward.1} parent=1 // pred_check
      _
    $region99: #{discriminator_forward.1} parent=1 // pred_check_branch
      %217 = sbr.rel (0) target = $region101
    $region100: #{discriminator_forward.1} parent=1 // pred_region
      %219 = dma.done [#allocation20], 16
    $region101: #{discriminator_forward.1} parent=1 // pred_fallthru
      _
    // Predicated region
    $region102: #{discriminator_forward.1} parent=1 // pred_check
      _
    $region103: #{discriminator_forward.1} parent=1 // pred_check_branch
      %221 = sbr.rel (0) target = $region105
    $region104: #{discriminator_forward.1} parent=1 // pred_region
      %223 = dma.done [#allocation23], 16
    $region105: #{discriminator_forward.1} parent=1 // pred_fallthru
      _
    // Predicated region
    $region106: #{discriminator_forward.1} parent=1 // pred_check
      _
    $region107: #{discriminator_forward.1} parent=1 // pred_check_branch
      %225 = sbr.rel (0) target = $region109
    $region108: #{discriminator_forward.1} parent=1 // pred_region
      %227 = dma.done [#allocation23], 32
    $region109: #{discriminator_forward.1} parent=1 // pred_fallthru
      _
    // Predicated region
    $region110: #{discriminator_forward.1} parent=1 // pred_check
      _
    $region111: #{discriminator_forward.1} parent=1 // pred_check_branch
      %229 = sbr.rel (0) target = $region113
    $region112: #{discriminator_forward.1} parent=1 // pred_region
      %231 = dma.done [#allocation26], 256
    $region113: #{discriminator_forward.1} parent=1 // pred_fallthru
      _
    // Predicated region
    $region114: #{discriminator_forward.1} parent=1 // pred_check
      _
    $region115: #{discriminator_forward.1} parent=1 // pred_check_branch
      %233 = sbr.rel (0) target = $region117
    $region116: #{discriminator_forward.1} parent=1 // pred_region
      %235 = dma.done [#allocation26], 256
    $region117: #{discriminator_forward.1} parent=1 // pred_fallthru
      _
    // Predicated region
    $region118: #{discriminator_forward.1} parent=1 // pred_check
      _
    $region119: #{discriminator_forward.1} parent=1 // pred_check_branch
      %237 = sbr.rel target = $region121
    $region120: #{discriminator_forward.1} parent=1 // pred_region
      %238 = sst [smem:[#allocation30]] [#allocation29]
      %239 = sst [smem:[#allocation31]] [#allocation28]
    $region121: #{discriminator_forward.1} parent=1 // pred_fallthru
      _
    %241 = shalt.err (0)
    %s243 = sshll.u32 %s13, 4
    %s244 = int_to_ptr.hbm [resolvable:$true] %s243
    %s245 = sshll.u32 [#allocation5], 4
    %s246 = int_to_ptr.vmem [resolvable:$true] %s245
    %248 = dma.hbm_to_vmem [thread:$0]  %s244, 65536, %s246, [#allocation6]
    %s249 = scalar_lea.hbm %s13, 4096
    %s250 = scalar_lea.vmem [#allocation5], 4096
    %s251 = scalar_lea.sflag [#allocation6], 1
    // Predicated region
    $region122: #{discriminator_forward.1} parent=1 // pred_check
      _
    $region123: #{discriminator_forward.1} parent=1 // pred_check_branch
      %253 = sbr.rel target = $region125
    $region124: #{discriminator_forward.1} parent=1 // pred_region
      %254 = sst [smem:[#allocation30]] [#allocation33]
      %255 = sst [smem:[#allocation31]] [#allocation32]
    $region125: #{discriminator_forward.1} parent=1 // pred_fallthru
      _
    %257 = shalt.err (0)
    %s259 = sshll.u32 %s249, 4
    %s260 = int_to_ptr.hbm [resolvable:$true] %s259
    %s261 = sshll.u32 %s250, 4
    %s262 = int_to_ptr.vmem [resolvable:$true] %s261
    %264 = dma.hbm_to_vmem [thread:$0]  %s260, 65536, %s262, %s251
    %vm265 = vcmask 253952
    %266 = vst.msk [vmem:[#allocation2] sm:$0x1] %vm265, 0.0
    %267 = vst.msk [vmem:[#allocation2 + $0x21] sm:$0x1] %vm265, 0.0
    %268 = vst.msk [vmem:[#allocation2 + $0x22] sm:$0x1] %vm265, 0.0
    %269 = vst.msk [vmem:[#allocation2 + $0x43] sm:$0x1] %vm265, 0.0
    %vm270 = vcmask 516096
    %271 = vst.msk [vmem:[#allocation3] sm:$0x1] %vm270, 0.0
    %272 = vst.msk [vmem:[#allocation3 + $0x11] sm:$0x1] %vm270, 0.0
    %273 = vst.msk [vmem:[#allocation3 + $0x12] sm:$0x1] %vm270, 0.0
    %274 = vst.msk [vmem:[#allocation3 + $0x23] sm:$0x1] %vm270, 0.0
    %275 = vst [vmem:[#allocation4] sm:$0x1] 0.0
    %276 = vst [vmem:[#allocation4 + $0x9] sm:$0x1] 0.0
    %277 = vst [vmem:[#allocation4 + $0xa] sm:$0x1] 0.0
    %278 = vst [vmem:[#allocation4 + $0x13] sm:$0x1] 0.0
    %v279 = vld [vmem:[%s0] ss:$2 sm:$0xff]
    %s280 = scalar_lea.vmem %s0, 16
    %v281 = vld [vmem:[%s280] ss:$2 sm:$0xff]
    %s282 = scalar_lea.vmem %s0, 32
    %v283 = vld [vmem:[%s282] ss:$2 sm:$0xff]
    %s284 = scalar_lea.vmem %s0, 48
    %v285 = vld [vmem:[%s284] ss:$2 sm:$0xff]
    %s286 = scalar_lea.vmem %s0, 1
    %v287 = vld [vmem:[%s286] ss:$2 sm:$0xff]
    %s288 = scalar_lea.vmem %s0, 17
    %v289 = vld [vmem:[%s288] ss:$2 sm:$0xff]
    %s290 = scalar_lea.vmem %s0, 33
    %v291 = vld [vmem:[%s290] ss:$2 sm:$0xff]
    %s292 = scalar_lea.vmem %s0, 49
    %v293 = vld [vmem:[%s292] ss:$2 sm:$0xff]
    %s294 = scalar_lea.vmem %s0, 2
    %v295 = vld [vmem:[%s294] ss:$2 sm:$0xff]
    %s296 = scalar_lea.vmem %s0, 18
    %v297 = vld [vmem:[%s296] ss:$2 sm:$0xff]
    %s298 = scalar_lea.vmem %s0, 34
    %v299 = vld [vmem:[%s298] ss:$2 sm:$0xff]
    %s300 = scalar_lea.vmem %s0, 50
    %v301 = vld [vmem:[%s300] ss:$2 sm:$0xff]
    %s302 = scalar_lea.vmem %s0, 3
    %v303 = vld [vmem:[%s302] ss:$2 sm:$0xff]
    %s304 = scalar_lea.vmem %s0, 19
    %v305 = vld [vmem:[%s304] ss:$2 sm:$0xff]
    %s306 = scalar_lea.vmem %s0, 35
    %v307 = vld [vmem:[%s306] ss:$2 sm:$0xff]
    %s308 = scalar_lea.vmem %s0, 51
    %v309 = vld [vmem:[%s308] ss:$2 sm:$0xff]
    %v310 = vld [vmem:[#allocation8] sm:$0x1]
    %312 = vset.pattern.permute.xlu0 0
    %313 = vperm.xlu0 %312, %v279
    %v314 = vpop.permute.xlu0 %313
    %317 = vset.pattern.permute.xlu0 0
    %318 = vperm.xlu0 %317, %v281
    %v319 = vpop.permute.xlu0 %318
    %322 = vset.pattern.permute.xlu0 0
    %323 = vperm.xlu0 %322, %v283
    %v324 = vpop.permute.xlu0 %323
    %327 = vset.pattern.permute.xlu0 0
    %328 = vperm.xlu0 %327, %v285
    %v329 = vpop.permute.xlu0 %328
    %v331 = vperm.slane %v310, 0
    %v332 = vmul.f32 %v314, %v331
    %v333 = vmul.f32 %v319, %v331
    %v334 = vmul.f32 %v324, %v331
    %v335 = vmul.f32 %v329, %v331
    %v336 = vld [vmem:[#allocation8 + $0x1] sm:$0x1]
    %338 = vset.pattern.permute.xlu0 0
    %339 = vperm.xlu0 %338, %v287
    %v340 = vpop.permute.xlu0 %339
    %343 = vset.pattern.permute.xlu0 0
    %344 = vperm.xlu0 %343, %v289
    %v345 = vpop.permute.xlu0 %344
    %348 = vset.pattern.permute.xlu0 0
    %349 = vperm.xlu0 %348, %v291
    %v350 = vpop.permute.xlu0 %349
    %353 = vset.pattern.permute.xlu0 0
    %354 = vperm.xlu0 %353, %v293
    %v355 = vpop.permute.xlu0 %354
    %v357 = vperm.slane %v336, 0
    %v358 = vmul.f32 %v340, %v357
    %v359 = vmul.f32 %v345, %v357
    %v360 = vmul.f32 %v350, %v357
    %v361 = vmul.f32 %v355, %v357
    %v362 = vadd.f32 %v332, %v358
    %v363 = vadd.f32 %v333, %v359
    %v364 = vadd.f32 %v334, %v360
    %v365 = vadd.f32 %v335, %v361
    %v366 = vld [vmem:[#allocation8 + $0x2] sm:$0x1]
    %368 = vset.pattern.permute.xlu0 0
    %369 = vperm.xlu0 %368, %v295
    %v370 = vpop.permute.xlu0 %369
    %373 = vset.pattern.permute.xlu0 0
    %374 = vperm.xlu0 %373, %v297
    %v375 = vpop.permute.xlu0 %374
    %378 = vset.pattern.permute.xlu0 0
    %379 = vperm.xlu0 %378, %v299
    %v380 = vpop.permute.xlu0 %379
    %383 = vset.pattern.permute.xlu0 0
    %384 = vperm.xlu0 %383, %v301
    %v385 = vpop.permute.xlu0 %384
    %v387 = vperm.slane %v366, 0
    %v388 = vmul.f32 %v370, %v387
    %v389 = vmul.f32 %v375, %v387
    %v390 = vmul.f32 %v380, %v387
    %v391 = vmul.f32 %v385, %v387
    %v392 = vadd.f32 %v362, %v388
    %v393 = vadd.f32 %v363, %v389
    %v394 = vadd.f32 %v364, %v390
    %v395 = vadd.f32 %v365, %v391
    %v396 = vld [vmem:[#allocation8 + $0x3] sm:$0x1]
    %398 = vset.pattern.permute.xlu0 0
    %399 = vperm.xlu0 %398, %v303
    %v400 = vpop.permute.xlu0 %399
    %403 = vset.pattern.permute.xlu0 0
    %404 = vperm.xlu0 %403, %v305
    %v405 = vpop.permute.xlu0 %404
    %408 = vset.pattern.permute.xlu0 0
    %409 = vperm.xlu0 %408, %v307
    %v410 = vpop.permute.xlu0 %409
    %413 = vset.pattern.permute.xlu0 0
    %414 = vperm.xlu0 %413, %v309
    %v415 = vpop.permute.xlu0 %414
    %v417 = vperm.slane %v396, 0
    %v418 = vmul.f32 %v400, %v417
    %v419 = vmul.f32 %v405, %v417
    %v420 = vmul.f32 %v410, %v417
    %v421 = vmul.f32 %v415, %v417
    %v422 = vadd.f32 %v392, %v418
    %v423 = vadd.f32 %v393, %v419
    %v424 = vadd.f32 %v394, %v420
    %v425 = vadd.f32 %v395, %v421
    %s426 = scalar_lea.vmem %s0, 66
    %v427 = vld [vmem:[%s426] ss:$2 sm:$0xff]
    %s428 = scalar_lea.vmem %s0, 82
    %v429 = vld [vmem:[%s428] ss:$2 sm:$0xff]
    %s430 = scalar_lea.vmem %s0, 98
    %v431 = vld [vmem:[%s430] ss:$2 sm:$0xff]
    %s432 = scalar_lea.vmem %s0, 114
    %v433 = vld [vmem:[%s432] ss:$2 sm:$0xff]
    %s434 = scalar_lea.vmem %s0, 67
    %v435 = vld [vmem:[%s434] ss:$2 sm:$0xff]
    %s436 = scalar_lea.vmem %s0, 83
    %v437 = vld [vmem:[%s436] ss:$2 sm:$0xff]
    %s438 = scalar_lea.vmem %s0, 99
    %v439 = vld [vmem:[%s438] ss:$2 sm:$0xff]
    %s440 = scalar_lea.vmem %s0, 115
    %v441 = vld [vmem:[%s440] ss:$2 sm:$0xff]
    %s442 = scalar_lea.vmem %s0, 68
    %v443 = vld [vmem:[%s442] ss:$2 sm:$0xff]
    %s444 = scalar_lea.vmem %s0, 84
    %v445 = vld [vmem:[%s444] ss:$2 sm:$0xff]
    %s446 = scalar_lea.vmem %s0, 100
    %v447 = vld [vmem:[%s446] ss:$2 sm:$0xff]
    %s448 = scalar_lea.vmem %s0, 116
    %v449 = vld [vmem:[%s448] ss:$2 sm:$0xff]
    %s450 = scalar_lea.vmem %s0, 69
    %v451 = vld [vmem:[%s450] ss:$2 sm:$0xff]
    %s452 = scalar_lea.vmem %s0, 85
    %v453 = vld [vmem:[%s452] ss:$2 sm:$0xff]
    %s454 = scalar_lea.vmem %s0, 101
    %v455 = vld [vmem:[%s454] ss:$2 sm:$0xff]
    %s456 = scalar_lea.vmem %s0, 117
    %v457 = vld [vmem:[%s456] ss:$2 sm:$0xff]
    %459 = vset.pattern.permute.xlu0 0
    %460 = vperm.xlu0 %459, %v427
    %v461 = vpop.permute.xlu0 %460
    %464 = vset.pattern.permute.xlu0 0
    %465 = vperm.xlu0 %464, %v429
    %v466 = vpop.permute.xlu0 %465
    %469 = vset.pattern.permute.xlu0 0
    %470 = vperm.xlu0 %469, %v431
    %v471 = vpop.permute.xlu0 %470
    %474 = vset.pattern.permute.xlu0 0
    %475 = vperm.xlu0 %474, %v433
    %v476 = vpop.permute.xlu0 %475
    %v478 = vmul.f32 %v461, %v331
    %v479 = vmul.f32 %v466, %v331
    %v480 = vmul.f32 %v471, %v331
    %v481 = vmul.f32 %v476, %v331
    %483 = vset.pattern.permute.xlu0 0
    %484 = vperm.xlu0 %483, %v435
    %v485 = vpop.permute.xlu0 %484
    %488 = vset.pattern.permute.xlu0 0
    %489 = vperm.xlu0 %488, %v437
    %v490 = vpop.permute.xlu0 %489
    %493 = vset.pattern.permute.xlu0 0
    %494 = vperm.xlu0 %493, %v439
    %v495 = vpop.permute.xlu0 %494
    %498 = vset.pattern.permute.xlu0 0
    %499 = vperm.xlu0 %498, %v441
    %v500 = vpop.permute.xlu0 %499
    %v502 = vmul.f32 %v485, %v357
    %v503 = vmul.f32 %v490, %v357
    %v504 = vmul.f32 %v495, %v357
    %v505 = vmul.f32 %v500, %v357
    %v506 = vadd.f32 %v478, %v502
    %v507 = vadd.f32 %v479, %v503
    %v508 = vadd.f32 %v480, %v504
    %v509 = vadd.f32 %v481, %v505
    %511 = vset.pattern.permute.xlu0 0
    %512 = vperm.xlu0 %511, %v443
    %v513 = vpop.permute.xlu0 %512
    %516 = vset.pattern.permute.xlu0 0
    %517 = vperm.xlu0 %516, %v445
    %v518 = vpop.permute.xlu0 %517
    %521 = vset.pattern.permute.xlu0 0
    %522 = vperm.xlu0 %521, %v447
    %v523 = vpop.permute.xlu0 %522
    %526 = vset.pattern.permute.xlu0 0
    %527 = vperm.xlu0 %526, %v449
    %v528 = vpop.permute.xlu0 %527
    %v530 = vmul.f32 %v513, %v387
    %v531 = vmul.f32 %v518, %v387
    %v532 = vmul.f32 %v523, %v387
    %v533 = vmul.f32 %v528, %v387
    %v534 = vadd.f32 %v506, %v530
    %v535 = vadd.f32 %v507, %v531
    %v536 = vadd.f32 %v508, %v532
    %v537 = vadd.f32 %v509, %v533
    %539 = vset.pattern.permute.xlu0 0
    %540 = vperm.xlu0 %539, %v451
    %v541 = vpop.permute.xlu0 %540
    %544 = vset.pattern.permute.xlu0 0
    %545 = vperm.xlu0 %544, %v453
    %v546 = vpop.permute.xlu0 %545
    %549 = vset.pattern.permute.xlu0 0
    %550 = vperm.xlu0 %549, %v455
    %v551 = vpop.permute.xlu0 %550
    %554 = vset.pattern.permute.xlu0 0
    %555 = vperm.xlu0 %554, %v457
    %v556 = vpop.permute.xlu0 %555
    %v558 = vmul.f32 %v541, %v417
    %v559 = vmul.f32 %v546, %v417
    %v560 = vmul.f32 %v551, %v417
    %v561 = vmul.f32 %v556, %v417
    %v562 = vadd.f32 %v534, %v558
    %v563 = vadd.f32 %v535, %v559
    %v564 = vadd.f32 %v536, %v560
    %v565 = vadd.f32 %v537, %v561
    %v566 = vld [vmem:[#allocation13] sm:$0x1]
    %v567 = vld [vmem:[#allocation19] sm:$0x1]
    %vm568 = vcmask 261120
    %v569 = vsel %vm568, %v422, 0.0
    %v570 = vsel %vm568, %v423, 0.0
    %v571 = vadd.f32 %v569, %v570
    %v572 = vsel %vm568, %v424, 0.0
    %v573 = vadd.f32 %v571, %v572
    %v574 = vsel %vm568, %v425, 0.0
    %v575 = vadd.f32 %v573, %v574
    %v576 = vsel %vm568, %v562, 0.0
    %v577 = vadd.f32 %v575, %v576
    %v578 = vsel %vm568, %v563, 0.0
    %v579 = vadd.f32 %v577, %v578
    %v580 = vsel %vm568, %v564, 0.0
    %v581 = vadd.f32 %v579, %v580
    %v582 = vsel %vm568, %v565, 0.0
    %v583 = vadd.f32 %v581, %v582
    %v584 = vrot.slane %v583, 4
    %v585 = vadd.f32 %v583, %v584
    %v586 = vrot.slane %v585, 2
    %v587 = vadd.f32 %v585, %v586
    %v588 = vrot.slane %v587, 1
    %v589 = vadd.f32 %v587, %v588
    %v590 = vrcp.pop 64.0
    %v591 = vmul.f32 64.0, %v590
    %v592 = vsub.f32 1.0, %v591
    %v593 = vmul.f32 %v590, %v592
    %v594 = vadd.f32 %v590, %v593
    %vm595 = vweird.f32 %v590
    %v596 = vsel %vm595, %v590, %v594
    %v597 = vmul.f32 %v589, %v596
    %v598 = vsub.f32 %v422, %v597
    %v599 = vsub.f32 %v423, %v597
    %v600 = vsub.f32 %v424, %v597
    %v601 = vsub.f32 %v425, %v597
    %v602 = vsub.f32 %v562, %v597
    %v603 = vsub.f32 %v563, %v597
    %v604 = vsub.f32 %v564, %v597
    %v605 = vsub.f32 %v565, %v597
    %v606 = vmul.f32 %v598, %v598
    %v607 = vmul.f32 %v599, %v599
    %v608 = vmul.f32 %v600, %v600
    %v609 = vmul.f32 %v601, %v601
    %v610 = vmul.f32 %v602, %v602
    %v611 = vmul.f32 %v603, %v603
    %v612 = vmul.f32 %v604, %v604
    %v613 = vmul.f32 %v605, %v605
    %v614 = vsel %vm568, %v606, 0.0
    %v615 = vsel %vm568, %v607, 0.0
    %v616 = vadd.f32 %v614, %v615
    %v617 = vsel %vm568, %v608, 0.0
    %v618 = vadd.f32 %v616, %v617
    %v619 = vsel %vm568, %v609, 0.0
    %v620 = vadd.f32 %v618, %v619
    %v621 = vsel %vm568, %v610, 0.0
    %v622 = vadd.f32 %v620, %v621
    %v623 = vsel %vm568, %v611, 0.0
    %v624 = vadd.f32 %v622, %v623
    %v625 = vsel %vm568, %v612, 0.0
    %v626 = vadd.f32 %v624, %v625
    %v627 = vsel %vm568, %v613, 0.0
    %v628 = vadd.f32 %v626, %v627
    %v629 = vrot.slane %v628, 4
    %v630 = vadd.f32 %v628, %v629
    %v631 = vrot.slane %v630, 2
    %v632 = vadd.f32 %v630, %v631
    %v633 = vrot.slane %v632, 1
    %v634 = vadd.f32 %v632, %v633
    %v635 = vmul.f32 %v634, %v596
    %v636 = vadd.f32 %v635, 1e-05
    %v637 = vrsqrt.pop %v636
    %v638 = vmul.f32 %v637, %v636
    %v639 = vmul.f32 %v638, %v637
    %v640 = vmul.f32 0.5, %v639
    %v641 = vsub.f32 1.5, %v640
    %v642 = vmul.f32 %v637, %v641
    %vm643 = vweird.f32 %v636
    %vm644 = vweird.f32 %v637
    %vm645 = vmor %vm643, %vm644
    %v646 = vsel %vm645, %v637, %v642
    %v647 = vmul.f32 %v566, %v646
    %v648 = vmul.f32 %v597, %v647
    %v649 = vsub.f32 %v567, %v648
    %v651 = vperm.slane %v647, 0
    %v653 = vmul.f32 %v422, %v651
    %v654 = vmul.f32 %v423, %v651
    %v655 = vmul.f32 %v424, %v651
    %v656 = vmul.f32 %v425, %v651
    %v657 = vmul.f32 %v562, %v651
    %v658 = vmul.f32 %v563, %v651
    %v659 = vmul.f32 %v564, %v651
    %v660 = vmul.f32 %v565, %v651
    %v662 = vperm.slane %v649, 0
    %v664 = vadd.f32 %v653, %v662
    %v665 = vadd.f32 %v654, %v662
    %v666 = vadd.f32 %v655, %v662
    %v667 = vadd.f32 %v656, %v662
    %v668 = vadd.f32 %v657, %v662
    %v669 = vadd.f32 %v658, %v662
    %v670 = vadd.f32 %v659, %v662
    %v671 = vadd.f32 %v660, %v662
    %v672 = vmul.f32 %v664, 0.1
    %v673 = vmul.f32 %v665, 0.1
    %v674 = vmul.f32 %v666, 0.1
    %v675 = vmul.f32 %v667, 0.1
    %v676 = vmul.f32 %v668, 0.1
    %v677 = vmul.f32 %v669, 0.1
    %v678 = vmul.f32 %v670, 0.1
    %v679 = vmul.f32 %v671, 0.1
    %v680 = vmax.f32 %v664, %v672
    %v681 = vmax.f32 %v665, %v673
    %v682 = vmax.f32 %v666, %v674
    %v683 = vmax.f32 %v667, %v675
    %v684 = vmax.f32 %v668, %v676
    %v685 = vmax.f32 %v669, %v677
    %v686 = vmax.f32 %v670, %v678
    %v687 = vmax.f32 %v671, %v679
    %688 = vst.msk [vmem:[#allocation2 + $0x1] sm:$0xff] %vm568, %v680
    %689 = vst.msk [vmem:[#allocation2 + $0x9] sm:$0xff] %vm568, %v681
    %690 = vst.msk [vmem:[#allocation2 + $0x11] sm:$0xff] %vm568, %v682
    %691 = vst.msk [vmem:[#allocation2 + $0x19] sm:$0xff] %vm568, %v683
    %692 = vst.msk [vmem:[#allocation2 + $0x23] sm:$0xff] %vm568, %v684
    %693 = vst.msk [vmem:[#allocation2 + $0x2b] sm:$0xff] %vm568, %v685
    %694 = vst.msk [vmem:[#allocation2 + $0x33] sm:$0xff] %vm568, %v686
    %695 = vst.msk [vmem:[#allocation2 + $0x3b] sm:$0xff] %vm568, %v687
    %v696 = vld [vmem:[#allocation2] ss:$2 sm:$0xff]
    %s697 = scalar_lea.vmem [#allocation2], 16
    %v698 = vld [vmem:[%s697] ss:$2 sm:$0xff]
    %s699 = scalar_lea.vmem [#allocation2], 1
    %v700 = vld [vmem:[%s699] ss:$2 sm:$0xff]
    %s701 = scalar_lea.vmem [#allocation2], 17
    %v702 = vld [vmem:[%s701] ss:$2 sm:$0xff]
    %s703 = scalar_lea.vmem [#allocation2], 2
    %v704 = vld [vmem:[%s703] ss:$2 sm:$0xff]
    %s705 = scalar_lea.vmem [#allocation2], 18
    %v706 = vld [vmem:[%s705] ss:$2 sm:$0xff]
    %s707 = scalar_lea.vmem [#allocation2], 3
    %v708 = vld [vmem:[%s707] ss:$2 sm:$0xff]
    %s709 = scalar_lea.vmem [#allocation2], 19
    %v710 = vld [vmem:[%s709] ss:$2 sm:$0xff]
    %713 = vrot.lane.b32.xlu0 %v700, 32
    %v714 = vpop.permute.xlu0 %713
    %715 = vrot.lane.b32.xlu0 %v702, 32
    %v716 = vpop.permute.xlu0 %715
    %721 = vrot.lane.b32.xlu0 %v704, 64
    %v722 = vpop.permute.xlu0 %721
    %723 = vrot.lane.b32.xlu0 %v706, 64
    %v724 = vpop.permute.xlu0 %723
    %729 = vrot.lane.b32.xlu0 %v708, 96
    %v730 = vpop.permute.xlu0 %729
    %731 = vrot.lane.b32.xlu0 %v710, 96
    %v732 = vpop.permute.xlu0 %731
    %v735 = vsel %vm568, %v696, %v714
    %v736 = vsel %vm568, %v698, %v716
    %vm737 = vcmask 523264
    %v738 = vsel %vm737, %v735, %v722
    %v739 = vsel %vm737, %v736, %v724
    %vm740 = vcmask 785408
    %v741 = vsel %vm740, %v738, %v730
    %v742 = vsel %vm740, %v739, %v732
    %s743 = scalar_lea.vmem [#allocation2], 34
    %v744 = vld [vmem:[%s743] ss:$2 sm:$0xff]
    %s745 = scalar_lea.vmem [#allocation2], 50
    %v746 = vld [vmem:[%s745] ss:$2 sm:$0xff]
    %s747 = scalar_lea.vmem [#allocation2], 35
    %v748 = vld [vmem:[%s747] ss:$2 sm:$0xff]
    %s749 = scalar_lea.vmem [#allocation2], 51
    %v750 = vld [vmem:[%s749] ss:$2 sm:$0xff]
    %s751 = scalar_lea.vmem [#allocation2], 36
    %v752 = vld [vmem:[%s751] ss:$2 sm:$0xff]
    %s753 = scalar_lea.vmem [#allocation2], 52
    %v754 = vld [vmem:[%s753] ss:$2 sm:$0xff]
    %s755 = scalar_lea.vmem [#allocation2], 37
    %v756 = vld [vmem:[%s755] ss:$2 sm:$0xff]
    %s757 = scalar_lea.vmem [#allocation2], 53
    %v758 = vld [vmem:[%s757] ss:$2 sm:$0xff]
    %761 = vrot.lane.b32.xlu0 %v748, 32
    %v762 = vpop.permute.xlu0 %761
    %763 = vrot.lane.b32.xlu0 %v750, 32
    %v764 = vpop.permute.xlu0 %763
    %769 = vrot.lane.b32.xlu0 %v752, 64
    %v770 = vpop.permute.xlu0 %769
    %771 = vrot.lane.b32.xlu0 %v754, 64
    %v772 = vpop.permute.xlu0 %771
    %777 = vrot.lane.b32.xlu0 %v756, 96
    %v778 = vpop.permute.xlu0 %777
    %779 = vrot.lane.b32.xlu0 %v758, 96
    %v780 = vpop.permute.xlu0 %779
    %v783 = vsel %vm568, %v744, %v762
    %v784 = vsel %vm568, %v746, %v764
    %v785 = vsel %vm737, %v783, %v770
    %v786 = vsel %vm737, %v784, %v772
    %v787 = vsel %vm740, %v785, %v778
    %v788 = vsel %vm740, %v786, %v780
    %v789 = vld [vmem:[%s2] sm:$0xff]
    %v790 = vld [vmem:[%s2 + $0x8] sm:$0xff]
    %v791 = vld [vmem:[%s2 + $0x10] sm:$0xff]
    %v792 = vld [vmem:[%s2 + $0x18] sm:$0xff]
    %v793 = vld [vmem:[%s2 + $0x20] sm:$0xff]
    %v794 = vld [vmem:[%s2 + $0x28] sm:$0xff]
    %v795 = vld [vmem:[%s2 + $0x30] sm:$0xff]
    %v796 = vld [vmem:[%s2 + $0x38] sm:$0xff]
    %v797 = vld [vmem:[%s2 + $0x40] sm:$0xff]
    %v798 = vld [vmem:[%s2 + $0x48] sm:$0xff]
    %v799 = vld [vmem:[%s2 + $0x50] sm:$0xff]
    %v800 = vld [vmem:[%s2 + $0x58] sm:$0xff]
    %v801 = vld [vmem:[%s2 + $0x60] sm:$0xff]
    %v802 = vld [vmem:[%s2 + $0x68] sm:$0xff]
    %v803 = vld [vmem:[%s2 + $0x70] sm:$0xff]
    %v804 = vld [vmem:[%s2 + $0x78] sm:$0xff]
    %805 = vmatpush.msra.mxu0 %v804
    %806 = vmatpush.msra.mxu0 %v803
    %807 = vmatpush.msra.mxu0 %v802
    %808 = vmatpush.msra.mxu0 %v801
    %809 = vmatpush.msra.mxu0 %v800
    %810 = vmatpush.msra.mxu0 %v799
    %811 = vmatpush.msra.mxu0 %v798
    %812 = vmatpush.msra.mxu0 %v797
    %813 = vmatpush.msra.mxu0 %v796
    %814 = vmatpush.msra.mxu0 %v795
    %815 = vmatpush.msra.mxu0 %v794
    %816 = vmatpush.msra.mxu0 %v793
    %817 = vmatpush.msra.mxu0 %v792
    %818 = vmatpush.msra.mxu0 %v791
    %819 = vmatpush.msra.mxu0 %v790
    %820 = vmatpush.msra.mxu0 %v789
    %821 = vmatmul.f32.gmra.mxu0 %v741
    %v822 = vpop.f32.mrf.mxu0
    %v823 = vadd.f32 0.0, %v822
    %824 = vmatmul.f32.gmra.mxu0 %v742
    %v825 = vpop.f32.mrf.mxu0
    %v826 = vadd.f32 0.0, %v825
    %827 = vmatmul.f32.gmra.mxu0 %v787
    %v828 = vpop.f32.mrf.mxu0
    %v829 = vadd.f32 0.0, %v828
    %830 = vmatmul.f32.gmra.mxu0 %v788
    %v831 = vpop.f32.mrf.mxu0
    %v832 = vadd.f32 0.0, %v831
    %833 = vdwg.mxu0
    %v834 = vld [vmem:[#allocation15] sm:$0x1]
    %v835 = vld [vmem:[#allocation21] sm:$0x1]
    %v836 = vsel %vm737, %v823, 0.0
    %v837 = vsel %vm737, %v826, 0.0
    %v838 = vadd.f32 %v836, %v837
    %v839 = vsel %vm737, %v829, 0.0
    %v840 = vadd.f32 %v838, %v839
    %v841 = vsel %vm737, %v832, 0.0
    %v842 = vadd.f32 %v840, %v841
    %v843 = vrot.slane %v842, 4
    %v844 = vadd.f32 %v842, %v843
    %v845 = vrot.slane %v844, 2
    %v846 = vadd.f32 %v844, %v845
    %v847 = vrot.slane %v846, 1
    %v848 = vadd.f32 %v846, %v847
    %v849 = vrcp.pop 32.0
    %v850 = vmul.f32 32.0, %v849
    %v851 = vsub.f32 1.0, %v850
    %v852 = vmul.f32 %v849, %v851
    %v853 = vadd.f32 %v849, %v852
    %vm854 = vweird.f32 %v849
    %v855 = vsel %vm854, %v849, %v853
    %v856 = vmul.f32 %v848, %v855
    %v857 = vsub.f32 %v823, %v856
    %v858 = vsub.f32 %v826, %v856
    %v859 = vsub.f32 %v829, %v856
    %v860 = vsub.f32 %v832, %v856
    %v861 = vmul.f32 %v857, %v857
    %v862 = vmul.f32 %v858, %v858
    %v863 = vmul.f32 %v859, %v859
    %v864 = vmul.f32 %v860, %v860
    %v865 = vsel %vm737, %v861, 0.0
    %v866 = vsel %vm737, %v862, 0.0
    %v867 = vadd.f32 %v865, %v866
    %v868 = vsel %vm737, %v863, 0.0
    %v869 = vadd.f32 %v867, %v868
    %v870 = vsel %vm737, %v864, 0.0
    %v871 = vadd.f32 %v869, %v870
    %v872 = vrot.slane %v871, 4
    %v873 = vadd.f32 %v871, %v872
    %v874 = vrot.slane %v873, 2
    %v875 = vadd.f32 %v873, %v874
    %v876 = vrot.slane %v875, 1
    %v877 = vadd.f32 %v875, %v876
    %v878 = vmul.f32 %v877, %v855
    %v879 = vadd.f32 %v878, 1e-05
    %v880 = vrsqrt.pop %v879
    %v881 = vmul.f32 %v880, %v879
    %v882 = vmul.f32 %v881, %v880
    %v883 = vmul.f32 0.5, %v882
    %v884 = vsub.f32 1.5, %v883
    %v885 = vmul.f32 %v880, %v884
    %vm886 = vweird.f32 %v879
    %vm887 = vweird.f32 %v880
    %vm888 = vmor %vm886, %vm887
    %v889 = vsel %vm888, %v880, %v885
    %v890 = vmul.f32 %v834, %v889
    %v891 = vmul.f32 %v856, %v890
    %v892 = vsub.f32 %v835, %v891
    %v894 = vperm.slane %v890, 0
    %v896 = vmul.f32 %v823, %v894
    %v897 = vmul.f32 %v826, %v894
    %v898 = vmul.f32 %v829, %v894
    %v899 = vmul.f32 %v832, %v894
    %v901 = vperm.slane %v892, 0
    %v903 = vadd.f32 %v896, %v901
    %v904 = vadd.f32 %v897, %v901
    %v905 = vadd.f32 %v898, %v901
    %v906 = vadd.f32 %v899, %v901
    %v907 = vmul.f32 %v903, 0.1
    %v908 = vmul.f32 %v904, 0.1
    %v909 = vmul.f32 %v905, 0.1
    %v910 = vmul.f32 %v906, 0.1
    %v911 = vmax.f32 %v903, %v907
    %v912 = vmax.f32 %v904, %v908
    %v913 = vmax.f32 %v905, %v909
    %v914 = vmax.f32 %v906, %v910
    %915 = vst.msk [vmem:[#allocation3 + $0x1] sm:$0xff] %vm737, %v911
    %916 = vst.msk [vmem:[#allocation3 + $0x9] sm:$0xff] %vm737, %v912
    %917 = vst.msk [vmem:[#allocation3 + $0x13] sm:$0xff] %vm737, %v913
    %918 = vst.msk [vmem:[#allocation3 + $0x1b] sm:$0xff] %vm737, %v914
    %v919 = vld [vmem:[#allocation3] ss:$2 sm:$0xff]
    %s920 = scalar_lea.vmem [#allocation3], 1
    %v921 = vld [vmem:[%s920] ss:$2 sm:$0xff]
    %s922 = scalar_lea.vmem [#allocation3], 2
    %v923 = vld [vmem:[%s922] ss:$2 sm:$0xff]
    %s924 = scalar_lea.vmem [#allocation3], 3
    %v925 = vld [vmem:[%s924] ss:$2 sm:$0xff]
    %927 = vrot.lane.b32.xlu0 %v921, 64
    %v928 = vpop.permute.xlu0 %927
    %931 = vrot.lane.b32.xlu0 %v925, 64
    %v932 = vpop.permute.xlu0 %931
    %v934 = vsel %vm737, %v919, %v928
    %v935 = vsel %vm737, %v923, %v932
    %s936 = scalar_lea.vmem [#allocation3], 18
    %v937 = vld [vmem:[%s936] ss:$2 sm:$0xff]
    %s938 = scalar_lea.vmem [#allocation3], 19
    %v939 = vld [vmem:[%s938] ss:$2 sm:$0xff]
    %s940 = scalar_lea.vmem [#allocation3], 20
    %v941 = vld [vmem:[%s940] ss:$2 sm:$0xff]
    %s942 = scalar_lea.vmem [#allocation3], 21
    %v943 = vld [vmem:[%s942] ss:$2 sm:$0xff]
    %945 = vrot.lane.b32.xlu0 %v939, 64
    %v946 = vpop.permute.xlu0 %945
    %949 = vrot.lane.b32.xlu0 %v943, 64
    %v950 = vpop.permute.xlu0 %949
    %v952 = vsel %vm737, %v937, %v946
    %v953 = vsel %vm737, %v941, %v950
    %v954 = vld [vmem:[#allocation10] sm:$0xff]
    %v955 = vld [vmem:[#allocation10 + $0x8] sm:$0xff]
    %v956 = vld [vmem:[#allocation10 + $0x10] sm:$0xff]
    %v957 = vld [vmem:[#allocation10 + $0x18] sm:$0xff]
    %v958 = vld [vmem:[#allocation10 + $0x20] sm:$0xff]
    %v959 = vld [vmem:[#allocation10 + $0x28] sm:$0xff]
    %v960 = vld [vmem:[#allocation10 + $0x30] sm:$0xff]
    %v961 = vld [vmem:[#allocation10 + $0x38] sm:$0xff]
    %v962 = vld [vmem:[#allocation10 + $0x40] sm:$0xff]
    %v963 = vld [vmem:[#allocation10 + $0x48] sm:$0xff]
    %v964 = vld [vmem:[#allocation10 + $0x50] sm:$0xff]
    %v965 = vld [vmem:[#allocation10 + $0x58] sm:$0xff]
    %v966 = vld [vmem:[#allocation10 + $0x60] sm:$0xff]
    %v967 = vld [vmem:[#allocation10 + $0x68] sm:$0xff]
    %v968 = vld [vmem:[#allocation10 + $0x70] sm:$0xff]
    %v969 = vld [vmem:[#allocation10 + $0x78] sm:$0xff]
    %v970 = vld [vmem:[#allocation10 + $0x80] sm:$0xff]
    %v971 = vld [vmem:[#allocation10 + $0x88] sm:$0xff]
    %v972 = vld [vmem:[#allocation10 + $0x90] sm:$0xff]
    %v973 = vld [vmem:[#allocation10 + $0x98] sm:$0xff]
    %v974 = vld [vmem:[#allocation10 + $0xa0] sm:$0xff]
    %v975 = vld [vmem:[#allocation10 + $0xa8] sm:$0xff]
    %v976 = vld [vmem:[#allocation10 + $0xb0] sm:$0xff]
    %v977 = vld [vmem:[#allocation10 + $0xb8] sm:$0xff]
    %v978 = vld [vmem:[#allocation10 + $0xc0] sm:$0xff]
    %v979 = vld [vmem:[#allocation10 + $0xc8] sm:$0xff]
    %v980 = vld [vmem:[#allocation10 + $0xd0] sm:$0xff]
    %v981 = vld [vmem:[#allocation10 + $0xd8] sm:$0xff]
    %v982 = vld [vmem:[#allocation10 + $0xe0] sm:$0xff]
    %v983 = vld [vmem:[#allocation10 + $0xe8] sm:$0xff]
    %v984 = vld [vmem:[#allocation10 + $0xf0] sm:$0xff]
    %v985 = vld [vmem:[#allocation10 + $0xf8] sm:$0xff]
    %986 = vmatpush.msra.mxu0 %v969
    %987 = vmatpush.msra.mxu0 %v968
    %988 = vmatpush.msra.mxu0 %v967
    %989 = vmatpush.msra.mxu0 %v966
    %990 = vmatpush.msra.mxu0 %v965
    %991 = vmatpush.msra.mxu0 %v964
    %992 = vmatpush.msra.mxu0 %v963
    %993 = vmatpush.msra.mxu0 %v962
    %994 = vmatpush.msra.mxu0 %v961
    %995 = vmatpush.msra.mxu0 %v960
    %996 = vmatpush.msra.mxu0 %v959
    %997 = vmatpush.msra.mxu0 %v958
    %998 = vmatpush.msra.mxu0 %v957
    %999 = vmatpush.msra.mxu0 %v956
    %1000 = vmatpush.msra.mxu0 %v955
    %1001 = vmatpush.msra.mxu0 %v954
    %1002 = vmatmul.f32.gmra.mxu0 %v934
    %v1003 = vpop.f32.mrf.mxu0
    %v1004 = vadd.f32 0.0, %v1003
    %1005 = vmatmul.f32.gmra.mxu0 %v952
    %v1006 = vpop.f32.mrf.mxu0
    %v1007 = vadd.f32 0.0, %v1006
    %1008 = vdwg.mxu0
    %1009 = vmatpush.msra.mxu0 %v985
    %1010 = vmatpush.msra.mxu0 %v984
    %1011 = vmatpush.msra.mxu0 %v983
    %1012 = vmatpush.msra.mxu0 %v982
    %1013 = vmatpush.msra.mxu0 %v981
    %1014 = vmatpush.msra.mxu0 %v980
    %1015 = vmatpush.msra.mxu0 %v979
    %1016 = vmatpush.msra.mxu0 %v978
    %1017 = vmatpush.msra.mxu0 %v977
    %1018 = vmatpush.msra.mxu0 %v976
    %1019 = vmatpush.msra.mxu0 %v975
    %1020 = vmatpush.msra.mxu0 %v974
    %1021 = vmatpush.msra.mxu0 %v973
    %1022 = vmatpush.msra.mxu0 %v972
    %1023 = vmatpush.msra.mxu0 %v971
    %1024 = vmatpush.msra.mxu0 %v970
    %1025 = vmatmul.f32.gmra.mxu0 %v935
    %v1026 = vpop.f32.mrf.mxu0
    %v1027 = vadd.f32 %v1004, %v1026
    %1028 = vmatmul.f32.gmra.mxu0 %v953
    %v1029 = vpop.f32.mrf.mxu0
    %v1030 = vadd.f32 %v1007, %v1029
    %1031 = vdwg.mxu0
    %v1032 = vld [vmem:[#allocation16] sm:$0x1]
    %v1033 = vld [vmem:[#allocation22] sm:$0x1]
    %v1034 = vadd.f32 %v1027, %v1030
    %v1035 = vrot.slane %v1034, 4
    %v1036 = vadd.f32 %v1034, %v1035
    %v1037 = vrot.slane %v1036, 2
    %v1038 = vadd.f32 %v1036, %v1037
    %v1039 = vrot.slane %v1038, 1
    %v1040 = vadd.f32 %v1038, %v1039
    %v1041 = vrcp.pop 16.0
    %v1042 = vmul.f32 16.0, %v1041
    %v1043 = vsub.f32 1.0, %v1042
    %v1044 = vmul.f32 %v1041, %v1043
    %v1045 = vadd.f32 %v1041, %v1044
    %vm1046 = vweird.f32 %v1041
    %v1047 = vsel %vm1046, %v1041, %v1045
    %v1048 = vmul.f32 %v1040, %v1047
    %v1049 = vsub.f32 %v1027, %v1048
    %v1050 = vsub.f32 %v1030, %v1048
    %v1051 = vmul.f32 %v1049, %v1049
    %v1052 = vmul.f32 %v1050, %v1050
    %v1053 = vadd.f32 %v1051, %v1052
    %v1054 = vrot.slane %v1053, 4
    %v1055 = vadd.f32 %v1053, %v1054
    %v1056 = vrot.slane %v1055, 2
    %v1057 = vadd.f32 %v1055, %v1056
    %v1058 = vrot.slane %v1057, 1
    %v1059 = vadd.f32 %v1057, %v1058
    %v1060 = vmul.f32 %v1059, %v1047
    %v1061 = vadd.f32 %v1060, 1e-05
    %v1062 = vrsqrt.pop %v1061
    %v1063 = vmul.f32 %v1062, %v1061
    %v1064 = vmul.f32 %v1063, %v1062
    %v1065 = vmul.f32 0.5, %v1064
    %v1066 = vsub.f32 1.5, %v1065
    %v1067 = vmul.f32 %v1062, %v1066
    %vm1068 = vweird.f32 %v1061
    %vm1069 = vweird.f32 %v1062
    %vm1070 = vmor %vm1068, %vm1069
    %v1071 = vsel %vm1070, %v1062, %v1067
    %v1072 = vmul.f32 %v1032, %v1071
    %v1073 = vmul.f32 %v1048, %v1072
    %v1074 = vsub.f32 %v1033, %v1073
    %v1076 = vperm.slane %v1072, 0
    %v1078 = vmul.f32 %v1027, %v1076
    %v1079 = vmul.f32 %v1030, %v1076
    %v1081 = vperm.slane %v1074, 0
    %v1083 = vadd.f32 %v1078, %v1081
    %v1084 = vadd.f32 %v1079, %v1081
    %v1085 = vmul.f32 %v1083, 0.1
    %v1086 = vmul.f32 %v1084, 0.1
    %v1087 = vmax.f32 %v1083, %v1085
    %v1088 = vmax.f32 %v1084, %v1086
    %1089 = vst [vmem:[#allocation4 + $0x1] sm:$0xff] %v1087
    %1090 = vst [vmem:[#allocation4 + $0xb] sm:$0xff] %v1088
    %v1091 = vld [vmem:[#allocation4] ss:$2 sm:$0xf]
    %s1092 = scalar_lea.vmem [#allocation4], 1
    %v1093 = vld [vmem:[%s1092] ss:$2 sm:$0xf]
    %s1094 = scalar_lea.vmem [#allocation4], 2
    %v1095 = vld [vmem:[%s1094] ss:$2 sm:$0xf]
    %s1096 = scalar_lea.vmem [#allocation4], 3
    %v1097 = vld [vmem:[%s1096] ss:$2 sm:$0xf]
    %s1098 = scalar_lea.vmem [#allocation4], 10
    %v1099 = vld [vmem:[%s1098] ss:$2 sm:$0xf]
    %s1100 = scalar_lea.vmem [#allocation4], 11
    %v1101 = vld [vmem:[%s1100] ss:$2 sm:$0xf]
    %s1102 = scalar_lea.vmem [#allocation4], 12
    %v1103 = vld [vmem:[%s1102] ss:$2 sm:$0xf]
    %s1104 = scalar_lea.vmem [#allocation4], 13
    %v1105 = vld [vmem:[%s1104] ss:$2 sm:$0xf]
    %v1110 = vrot.slane %v1099, 4
    %v1111 = vrot.slane %v1101, 4
    %v1112 = vrot.slane %v1103, 4
    %v1113 = vrot.slane %v1105, 4
    %vm1118 = vcmask 1043456
    %v1119 = vsel %vm1118, %v1091, %v1110
    %v1120 = vsel %vm1118, %v1093, %v1111
    %v1121 = vsel %vm1118, %v1095, %v1112
    %v1122 = vsel %vm1118, %v1097, %v1113
    %v1123 = vld [vmem:[#allocation12] sm:$0xff]
    %v1124 = vld [vmem:[#allocation12 + $0x8] sm:$0xff]
    %v1125 = vld [vmem:[#allocation12 + $0x10] sm:$0xff]
    %v1126 = vld [vmem:[#allocation12 + $0x18] sm:$0xff]
    %v1127 = vld [vmem:[#allocation12 + $0x20] sm:$0xff]
    %v1128 = vld [vmem:[#allocation12 + $0x28] sm:$0xff]
    %v1129 = vld [vmem:[#allocation12 + $0x30] sm:$0xff]
    %v1130 = vld [vmem:[#allocation12 + $0x38] sm:$0xff]
    %v1131 = vld [vmem:[#allocation12 + $0x40] sm:$0xff]
    %v1132 = vld [vmem:[#allocation12 + $0x48] sm:$0xff]
    %v1133 = vld [vmem:[#allocation12 + $0x50] sm:$0xff]
    %v1134 = vld [vmem:[#allocation12 + $0x58] sm:$0xff]
    %v1135 = vld [vmem:[#allocation12 + $0x60] sm:$0xff]
    %v1136 = vld [vmem:[#allocation12 + $0x68] sm:$0xff]
    %v1137 = vld [vmem:[#allocation12 + $0x70] sm:$0xff]
    %v1138 = vld [vmem:[#allocation12 + $0x78] sm:$0xff]
    %v1139 = vld [vmem:[#allocation12 + $0x80] sm:$0xff]
    %v1140 = vld [vmem:[#allocation12 + $0x88] sm:$0xff]
    %v1141 = vld [vmem:[#allocation12 + $0x90] sm:$0xff]
    %v1142 = vld [vmem:[#allocation12 + $0x98] sm:$0xff]
    %v1143 = vld [vmem:[#allocation12 + $0xa0] sm:$0xff]
    %v1144 = vld [vmem:[#allocation12 + $0xa8] sm:$0xff]
    %v1145 = vld [vmem:[#allocation12 + $0xb0] sm:$0xff]
    %v1146 = vld [vmem:[#allocation12 + $0xb8] sm:$0xff]
    %v1147 = vld [vmem:[#allocation12 + $0xc0] sm:$0xff]
    %v1148 = vld [vmem:[#allocation12 + $0xc8] sm:$0xff]
    %v1149 = vld [vmem:[#allocation12 + $0xd0] sm:$0xff]
    %v1150 = vld [vmem:[#allocation12 + $0xd8] sm:$0xff]
    %v1151 = vld [vmem:[#allocation12 + $0xe0] sm:$0xff]
    %v1152 = vld [vmem:[#allocation12 + $0xe8] sm:$0xff]
    %v1153 = vld [vmem:[#allocation12 + $0xf0] sm:$0xff]
    %v1154 = vld [vmem:[#allocation12 + $0xf8] sm:$0xff]
    %v1155 = vld [vmem:[#allocation12 + $0x100] sm:$0xff]
    %v1156 = vld [vmem:[#allocation12 + $0x108] sm:$0xff]
    %v1157 = vld [vmem:[#allocation12 + $0x110] sm:$0xff]
    %v1158 = vld [vmem:[#allocation12 + $0x118] sm:$0xff]
    %v1159 = vld [vmem:[#allocation12 + $0x120] sm:$0xff]
    %v1160 = vld [vmem:[#allocation12 + $0x128] sm:$0xff]
    %v1161 = vld [vmem:[#allocation12 + $0x130] sm:$0xff]
    %v1162 = vld [vmem:[#allocation12 + $0x138] sm:$0xff]
    %v1163 = vld [vmem:[#allocation12 + $0x140] sm:$0xff]
    %v1164 = vld [vmem:[#allocation12 + $0x148] sm:$0xff]
    %v1165 = vld [vmem:[#allocation12 + $0x150] sm:$0xff]
    %v1166 = vld [vmem:[#allocation12 + $0x158] sm:$0xff]
    %v1167 = vld [vmem:[#allocation12 + $0x160] sm:$0xff]
    %v1168 = vld [vmem:[#allocation12 + $0x168] sm:$0xff]
    %v1169 = vld [vmem:[#allocation12 + $0x170] sm:$0xff]
    %v1170 = vld [vmem:[#allocation12 + $0x178] sm:$0xff]
    %v1171 = vld [vmem:[#allocation12 + $0x180] sm:$0xff]
    %v1172 = vld [vmem:[#allocation12 + $0x188] sm:$0xff]
    %v1173 = vld [vmem:[#allocation12 + $0x190] sm:$0xff]
    %v1174 = vld [vmem:[#allocation12 + $0x198] sm:$0xff]
    %v1175 = vld [vmem:[#allocation12 + $0x1a0] sm:$0xff]
    %v1176 = vld [vmem:[#allocation12 + $0x1a8] sm:$0xff]
    %v1177 = vld [vmem:[#allocation12 + $0x1b0] sm:$0xff]
    %v1178 = vld [vmem:[#allocation12 + $0x1b8] sm:$0xff]
    %v1179 = vld [vmem:[#allocation12 + $0x1c0] sm:$0xff]
    %v1180 = vld [vmem:[#allocation12 + $0x1c8] sm:$0xff]
    %v1181 = vld [vmem:[#allocation12 + $0x1d0] sm:$0xff]
    %v1182 = vld [vmem:[#allocation12 + $0x1d8] sm:$0xff]
    %v1183 = vld [vmem:[#allocation12 + $0x1e0] sm:$0xff]
    %v1184 = vld [vmem:[#allocation12 + $0x1e8] sm:$0xff]
    %v1185 = vld [vmem:[#allocation12 + $0x1f0] sm:$0xff]
    %v1186 = vld [vmem:[#allocation12 + $0x1f8] sm:$0xff]
    %v1187 = vld [vmem:[#allocation12 + $0x200] sm:$0xff]
    %v1188 = vld [vmem:[#allocation12 + $0x208] sm:$0xff]
    %v1189 = vld [vmem:[#allocation12 + $0x210] sm:$0xff]
    %v1190 = vld [vmem:[#allocation12 + $0x218] sm:$0xff]
    %v1191 = vld [vmem:[#allocation12 + $0x220] sm:$0xff]
    %v1192 = vld [vmem:[#allocation12 + $0x228] sm:$0xff]
    %v1193 = vld [vmem:[#allocation12 + $0x230] sm:$0xff]
    %v1194 = vld [vmem:[#allocation12 + $0x238] sm:$0xff]
    %v1195 = vld [vmem:[#allocation12 + $0x240] sm:$0xff]
    %v1196 = vld [vmem:[#allocation12 + $0x248] sm:$0xff]
    %v1197 = vld [vmem:[#allocation12 + $0x250] sm:$0xff]
    %v1198 = vld [vmem:[#allocation12 + $0x258] sm:$0xff]
    %v1199 = vld [vmem:[#allocation12 + $0x260] sm:$0xff]
    %v1200 = vld [vmem:[#allocation12 + $0x268] sm:$0xff]
    %v1201 = vld [vmem:[#allocation12 + $0x270] sm:$0xff]
    %v1202 = vld [vmem:[#allocation12 + $0x278] sm:$0xff]
    %v1203 = vld [vmem:[#allocation12 + $0x280] sm:$0xff]
    %v1204 = vld [vmem:[#allocation12 + $0x288] sm:$0xff]
    %v1205 = vld [vmem:[#allocation12 + $0x290] sm:$0xff]
    %v1206 = vld [vmem:[#allocation12 + $0x298] sm:$0xff]
    %v1207 = vld [vmem:[#allocation12 + $0x2a0] sm:$0xff]
    %v1208 = vld [vmem:[#allocation12 + $0x2a8] sm:$0xff]
    %v1209 = vld [vmem:[#allocation12 + $0x2b0] sm:$0xff]
    %v1210 = vld [vmem:[#allocation12 + $0x2b8] sm:$0xff]
    %v1211 = vld [vmem:[#allocation12 + $0x2c0] sm:$0xff]
    %v1212 = vld [vmem:[#allocation12 + $0x2c8] sm:$0xff]
    %v1213 = vld [vmem:[#allocation12 + $0x2d0] sm:$0xff]
    %v1214 = vld [vmem:[#allocation12 + $0x2d8] sm:$0xff]
    %v1215 = vld [vmem:[#allocation12 + $0x2e0] sm:$0xff]
    %v1216 = vld [vmem:[#allocation12 + $0x2e8] sm:$0xff]
    %v1217 = vld [vmem:[#allocation12 + $0x2f0] sm:$0xff]
    %v1218 = vld [vmem:[#allocation12 + $0x2f8] sm:$0xff]
    %v1219 = vld [vmem:[#allocation12 + $0x300] sm:$0xff]
    %v1220 = vld [vmem:[#allocation12 + $0x308] sm:$0xff]
    %v1221 = vld [vmem:[#allocation12 + $0x310] sm:$0xff]
    %v1222 = vld [vmem:[#allocation12 + $0x318] sm:$0xff]
    %v1223 = vld [vmem:[#allocation12 + $0x320] sm:$0xff]
    %v1224 = vld [vmem:[#allocation12 + $0x328] sm:$0xff]
    %v1225 = vld [vmem:[#allocation12 + $0x330] sm:$0xff]
    %v1226 = vld [vmem:[#allocation12 + $0x338] sm:$0xff]
    %v1227 = vld [vmem:[#allocation12 + $0x340] sm:$0xff]
    %v1228 = vld [vmem:[#allocation12 + $0x348] sm:$0xff]
    %v1229 = vld [vmem:[#allocation12 + $0x350] sm:$0xff]
    %v1230 = vld [vmem:[#allocation12 + $0x358] sm:$0xff]
    %v1231 = vld [vmem:[#allocation12 + $0x360] sm:$0xff]
    %v1232 = vld [vmem:[#allocation12 + $0x368] sm:$0xff]
    %v1233 = vld [vmem:[#allocation12 + $0x370] sm:$0xff]
    %v1234 = vld [vmem:[#allocation12 + $0x378] sm:$0xff]
    %v1235 = vld [vmem:[#allocation12 + $0x380] sm:$0xff]
    %v1236 = vld [vmem:[#allocation12 + $0x388] sm:$0xff]
    %v1237 = vld [vmem:[#allocation12 + $0x390] sm:$0xff]
    %v1238 = vld [vmem:[#allocation12 + $0x398] sm:$0xff]
    %v1239 = vld [vmem:[#allocation12 + $0x3a0] sm:$0xff]
    %v1240 = vld [vmem:[#allocation12 + $0x3a8] sm:$0xff]
    %v1241 = vld [vmem:[#allocation12 + $0x3b0] sm:$0xff]
    %v1242 = vld [vmem:[#allocation12 + $0x3b8] sm:$0xff]
    %v1243 = vld [vmem:[#allocation12 + $0x3c0] sm:$0xff]
    %v1244 = vld [vmem:[#allocation12 + $0x3c8] sm:$0xff]
    %v1245 = vld [vmem:[#allocation12 + $0x3d0] sm:$0xff]
    %v1246 = vld [vmem:[#allocation12 + $0x3d8] sm:$0xff]
    %v1247 = vld [vmem:[#allocation12 + $0x3e0] sm:$0xff]
    %v1248 = vld [vmem:[#allocation12 + $0x3e8] sm:$0xff]
    %v1249 = vld [vmem:[#allocation12 + $0x3f0] sm:$0xff]
    %v1250 = vld [vmem:[#allocation12 + $0x3f8] sm:$0xff]
    %1251 = vmatpush.msra.mxu0 %v1153
    %1252 = vmatpush.msra.mxu0 %v1151
    %1253 = vmatpush.msra.mxu0 %v1149
    %1254 = vmatpush.msra.mxu0 %v1147
    %1255 = vmatpush.msra.mxu0 %v1145
    %1256 = vmatpush.msra.mxu0 %v1143
    %1257 = vmatpush.msra.mxu0 %v1141
    %1258 = vmatpush.msra.mxu0 %v1139
    %1259 = vmatpush.msra.mxu0 %v1137
    %1260 = vmatpush.msra.mxu0 %v1135
    %1261 = vmatpush.msra.mxu0 %v1133
    %1262 = vmatpush.msra.mxu0 %v1131
    %1263 = vmatpush.msra.mxu0 %v1129
    %1264 = vmatpush.msra.mxu0 %v1127
    %1265 = vmatpush.msra.mxu0 %v1125
    %1266 = vmatpush.msra.mxu0 %v1123
    %1267 = vmatmul.f32.gmra.mxu0 %v1119
    %v1268 = vpop.f32.mrf.mxu0
    %v1269 = vadd.f32 0.0, %v1268
    %1270 = vdwg.mxu0
    %1271 = vmatpush.msra.mxu0 %v1185
    %1272 = vmatpush.msra.mxu0 %v1183
    %1273 = vmatpush.msra.mxu0 %v1181
    %1274 = vmatpush.msra.mxu0 %v1179
    %1275 = vmatpush.msra.mxu0 %v1177
    %1276 = vmatpush.msra.mxu0 %v1175
    %1277 = vmatpush.msra.mxu0 %v1173
    %1278 = vmatpush.msra.mxu0 %v1171
    %1279 = vmatpush.msra.mxu0 %v1169
    %1280 = vmatpush.msra.mxu0 %v1167
    %1281 = vmatpush.msra.mxu0 %v1165
    %1282 = vmatpush.msra.mxu0 %v1163
    %1283 = vmatpush.msra.mxu0 %v1161
    %1284 = vmatpush.msra.mxu0 %v1159
    %1285 = vmatpush.msra.mxu0 %v1157
    %1286 = vmatpush.msra.mxu0 %v1155
    %1287 = vmatmul.f32.gmra.mxu0 %v1120
    %v1288 = vpop.f32.mrf.mxu0
    %v1289 = vadd.f32 %v1269, %v1288
    %1290 = vdwg.mxu0
    %1291 = vmatpush.msra.mxu0 %v1217
    %1292 = vmatpush.msra.mxu0 %v1215
    %1293 = vmatpush.msra.mxu0 %v1213
    %1294 = vmatpush.msra.mxu0 %v1211
    %1295 = vmatpush.msra.mxu0 %v1209
    %1296 = vmatpush.msra.mxu0 %v1207
    %1297 = vmatpush.msra.mxu0 %v1205
    %1298 = vmatpush.msra.mxu0 %v1203
    %1299 = vmatpush.msra.mxu0 %v1201
    %1300 = vmatpush.msra.mxu0 %v1199
    %1301 = vmatpush.msra.mxu0 %v1197
    %1302 = vmatpush.msra.mxu0 %v1195
    %1303 = vmatpush.msra.mxu0 %v1193
    %1304 = vmatpush.msra.mxu0 %v1191
    %1305 = vmatpush.msra.mxu0 %v1189
    %1306 = vmatpush.msra.mxu0 %v1187
    %1307 = vmatmul.f32.gmra.mxu0 %v1121
    %v1308 = vpop.f32.mrf.mxu0
    %v1309 = vadd.f32 %v1289, %v1308
    %1310 = vdwg.mxu0
    %1311 = vmatpush.msra.mxu0 %v1249
    %1312 = vmatpush.msra.mxu0 %v1247
    %1313 = vmatpush.msra.mxu0 %v1245
    %1314 = vmatpush.msra.mxu0 %v1243
    %1315 = vmatpush.msra.mxu0 %v1241
    %1316 = vmatpush.msra.mxu0 %v1239
    %1317 = vmatpush.msra.mxu0 %v1237
    %1318 = vmatpush.msra.mxu0 %v1235
    %1319 = vmatpush.msra.mxu0 %v1233
    %1320 = vmatpush.msra.mxu0 %v1231
    %1321 = vmatpush.msra.mxu0 %v1229
    %1322 = vmatpush.msra.mxu0 %v1227
    %1323 = vmatpush.msra.mxu0 %v1225
    %1324 = vmatpush.msra.mxu0 %v1223
    %1325 = vmatpush.msra.mxu0 %v1221
    %1326 = vmatpush.msra.mxu0 %v1219
    %1327 = vmatmul.f32.gmra.mxu0 %v1122
    %v1328 = vpop.f32.mrf.mxu0
    %v1329 = vadd.f32 %v1309, %v1328
    %1330 = vdwg.mxu0
    %1331 = vmatpush.msra.mxu0 %v1154
    %1332 = vmatpush.msra.mxu0 %v1152
    %1333 = vmatpush.msra.mxu0 %v1150
    %1334 = vmatpush.msra.mxu0 %v1148
    %1335 = vmatpush.msra.mxu0 %v1146
    %1336 = vmatpush.msra.mxu0 %v1144
    %1337 = vmatpush.msra.mxu0 %v1142
    %1338 = vmatpush.msra.mxu0 %v1140
    %1339 = vmatpush.msra.mxu0 %v1138
    %1340 = vmatpush.msra.mxu0 %v1136
    %1341 = vmatpush.msra.mxu0 %v1134
    %1342 = vmatpush.msra.mxu0 %v1132
    %1343 = vmatpush.msra.mxu0 %v1130
    %1344 = vmatpush.msra.mxu0 %v1128
    %1345 = vmatpush.msra.mxu0 %v1126
    %1346 = vmatpush.msra.mxu0 %v1124
    %1347 = vmatmul.f32.gmra.mxu0 %v1119
    %v1348 = vpop.f32.mrf.mxu0
    %v1349 = vadd.f32 0.0, %v1348
    %1350 = vdwg.mxu0
    %1351 = vmatpush.msra.mxu0 %v1186
    %1352 = vmatpush.msra.mxu0 %v1184
    %1353 = vmatpush.msra.mxu0 %v1182
    %1354 = vmatpush.msra.mxu0 %v1180
    %1355 = vmatpush.msra.mxu0 %v1178
    %1356 = vmatpush.msra.mxu0 %v1176
    %1357 = vmatpush.msra.mxu0 %v1174
    %1358 = vmatpush.msra.mxu0 %v1172
    %1359 = vmatpush.msra.mxu0 %v1170
    %1360 = vmatpush.msra.mxu0 %v1168
    %1361 = vmatpush.msra.mxu0 %v1166
    %1362 = vmatpush.msra.mxu0 %v1164
    %1363 = vmatpush.msra.mxu0 %v1162
    %1364 = vmatpush.msra.mxu0 %v1160
    %1365 = vmatpush.msra.mxu0 %v1158
    %1366 = vmatpush.msra.mxu0 %v1156
    %1367 = vmatmul.f32.gmra.mxu0 %v1120
    %v1368 = vpop.f32.mrf.mxu0
    %v1369 = vadd.f32 %v1349, %v1368
    %1370 = vdwg.mxu0
    %1371 = vmatpush.msra.mxu0 %v1218
    %1372 = vmatpush.msra.mxu0 %v1216
    %1373 = vmatpush.msra.mxu0 %v1214
    %1374 = vmatpush.msra.mxu0 %v1212
    %1375 = vmatpush.msra.mxu0 %v1210
    %1376 = vmatpush.msra.mxu0 %v1208
    %1377 = vmatpush.msra.mxu0 %v1206
    %1378 = vmatpush.msra.mxu0 %v1204
    %1379 = vmatpush.msra.mxu0 %v1202
    %1380 = vmatpush.msra.mxu0 %v1200
    %1381 = vmatpush.msra.mxu0 %v1198
    %1382 = vmatpush.msra.mxu0 %v1196
    %1383 = vmatpush.msra.mxu0 %v1194
    %1384 = vmatpush.msra.mxu0 %v1192
    %1385 = vmatpush.msra.mxu0 %v1190
    %1386 = vmatpush.msra.mxu0 %v1188
    %1387 = vmatmul.f32.gmra.mxu0 %v1121
    %v1388 = vpop.f32.mrf.mxu0
    %v1389 = vadd.f32 %v1369, %v1388
    %1390 = vdwg.mxu0
    %1391 = vmatpush.msra.mxu0 %v1250
    %1392 = vmatpush.msra.mxu0 %v1248
    %1393 = vmatpush.msra.mxu0 %v1246
    %1394 = vmatpush.msra.mxu0 %v1244
    %1395 = vmatpush.msra.mxu0 %v1242
    %1396 = vmatpush.msra.mxu0 %v1240
    %1397 = vmatpush.msra.mxu0 %v1238
    %1398 = vmatpush.msra.mxu0 %v1236
    %1399 = vmatpush.msra.mxu0 %v1234
    %1400 = vmatpush.msra.mxu0 %v1232
    %1401 = vmatpush.msra.mxu0 %v1230
    %1402 = vmatpush.msra.mxu0 %v1228
    %1403 = vmatpush.msra.mxu0 %v1226
    %1404 = vmatpush.msra.mxu0 %v1224
    %1405 = vmatpush.msra.mxu0 %v1222
    %1406 = vmatpush.msra.mxu0 %v1220
    %1407 = vmatmul.f32.gmra.mxu0 %v1122
    %v1408 = vpop.f32.mrf.mxu0
    %v1409 = vadd.f32 %v1389, %v1408
    %1410 = vdwg.mxu0
    %v1411 = vld [vmem:[#allocation18] sm:$0x3]
    %v1412 = vld [vmem:[#allocation24] sm:$0x3]
    %v1413 = vrot.slane %v1329, 4
    %v1414 = vadd.f32 %v1329, %v1413
    %v1415 = vrot.slane %v1414, 2
    %v1416 = vadd.f32 %v1414, %v1415
    %v1417 = vrot.slane %v1416, 1
    %v1418 = vadd.f32 %v1416, %v1417
    %v1419 = vrot.slane %v1409, 4
    %v1420 = vadd.f32 %v1409, %v1419
    %v1421 = vrot.slane %v1420, 2
    %v1422 = vadd.f32 %v1420, %v1421
    %v1423 = vrot.slane %v1422, 1
    %v1424 = vadd.f32 %v1422, %v1423
    %v1425 = vrcp.pop 8.0
    %v1426 = vmul.f32 8.0, %v1425
    %v1427 = vsub.f32 1.0, %v1426
    %v1428 = vmul.f32 %v1425, %v1427
    %v1429 = vadd.f32 %v1425, %v1428
    %vm1430 = vweird.f32 %v1425
    %v1431 = vsel %vm1430, %v1425, %v1429
    %v1432 = vmul.f32 %v1418, %v1431
    %v1433 = vmul.f32 %v1424, %v1431
    %v1434 = vsub.f32 %v1329, %v1432
    %v1435 = vsub.f32 %v1409, %v1433
    %v1436 = vmul.f32 %v1434, %v1434
    %v1437 = vmul.f32 %v1435, %v1435
    %v1438 = vrot.slane %v1436, 4
    %v1439 = vadd.f32 %v1436, %v1438
    %v1440 = vrot.slane %v1439, 2
    %v1441 = vadd.f32 %v1439, %v1440
    %v1442 = vrot.slane %v1441, 1
    %v1443 = vadd.f32 %v1441, %v1442
    %v1444 = vrot.slane %v1437, 4
    %v1445 = vadd.f32 %v1437, %v1444
    %v1446 = vrot.slane %v1445, 2
    %v1447 = vadd.f32 %v1445, %v1446
    %v1448 = vrot.slane %v1447, 1
    %v1449 = vadd.f32 %v1447, %v1448
    %v1450 = vmul.f32 %v1443, %v1431
    %v1451 = vmul.f32 %v1449, %v1431
    %v1452 = vadd.f32 %v1450, 1e-05
    %v1453 = vadd.f32 %v1451, 1e-05
    %v1454 = vrsqrt.pop %v1452
    %v1455 = vmul.f32 %v1454, %v1452
    %v1456 = vmul.f32 %v1455, %v1454
    %v1457 = vmul.f32 0.5, %v1456
    %v1458 = vsub.f32 1.5, %v1457
    %v1459 = vmul.f32 %v1454, %v1458
    %vm1460 = vweird.f32 %v1452
    %vm1461 = vweird.f32 %v1454
    %vm1462 = vmor %vm1460, %vm1461
    %v1463 = vsel %vm1462, %v1454, %v1459
    %v1464 = vrsqrt.pop %v1453
    %v1465 = vmul.f32 %v1464, %v1453
    %v1466 = vmul.f32 %v1465, %v1464
    %v1467 = vmul.f32 0.5, %v1466
    %v1468 = vsub.f32 1.5, %v1467
    %v1469 = vmul.f32 %v1464, %v1468
    %vm1470 = vweird.f32 %v1453
    %vm1471 = vweird.f32 %v1464
    %vm1472 = vmor %vm1470, %vm1471
    %v1473 = vsel %vm1472, %v1464, %v1469
    %v1476 = vrot.slane %v1473, 7
    %vm1477 = vcmask 1040384
    %v1478 = vsel %vm1477, %v1463, %v1476
    %v1480 = vmul.f32 %v1411, %v1478
    %v1482 = vperm.slane %v1480, 0
    %v1483 = vperm.slane %v1480, 1
    %v1486 = vmul.f32 %v1432, %v1482
    %v1487 = vmul.f32 %v1433, %v1483
    %v1490 = vrot.slane %v1487, 7
    %v1491 = vsel %vm1477, %v1486, %v1490
    %v1493 = vsub.f32 %v1412, %v1491
    %v1494 = vmul.f32 %v1329, %v1482
    %v1495 = vmul.f32 %v1409, %v1483
    %v1497 = vperm.slane %v1493, 0
    %v1498 = vperm.slane %v1493, 1
    %v1501 = vadd.f32 %v1494, %v1497
    %v1502 = vadd.f32 %v1495, %v1498
    %v1503 = vmul.f32 %v1501, 0.1
    %v1504 = vmul.f32 %v1502, 0.1
    %v1505 = vmax.f32 %v1501, %v1503
    %v1506 = vmax.f32 %v1502, %v1504
    %v1509 = vrot.slane %v1505, 1
    %v1510 = vrot.slane %v1506, 1
    %v1513 = vrot.slane %v1505, 2
    %v1514 = vrot.slane %v1506, 2
    %v1517 = vrot.slane %v1505, 3
    %v1518 = vrot.slane %v1506, 3
    %v1521 = vrot.slane %v1509, 3
    %v1522 = vrot.slane %v1510, 3
    %v1523 = vrot.slane %v1513, 3
    %v1524 = vrot.slane %v1514, 3
    %v1525 = vrot.slane %v1517, 3
    %v1526 = vrot.slane %v1518, 3
    %v1533 = vsel %vm1477, %v1505, %v1517
    %v1534 = vsel %vm1477, %v1506, %v1518
    %v1535 = vsel %vm1477, %v1509, %v1521
    %v1536 = vsel %vm1477, %v1510, %v1522
    %v1537 = vsel %vm1477, %v1513, %v1523
    %v1538 = vsel %vm1477, %v1514, %v1524
    %v1539 = vsel %vm1477, %v1517, %v1525
    %v1540 = vsel %vm1477, %v1518, %v1526
    %v1541 = vpack.c.bf16 %v1533, %v1533
    %v1542 = vpack.c.bf16 %v1534, %v1534
    %v1543 = vpack.c.bf16 %v1535, %v1535
    %v1544 = vpack.c.bf16 %v1536, %v1536
    %v1545 = vpack.c.bf16 %v1537, %v1537
    %v1546 = vpack.c.bf16 %v1538, %v1538
    %v1547 = vpack.c.bf16 %v1539, %v1539
    %v1548 = vpack.c.bf16 %v1540, %v1540
    %s1549 = smul.u32 4, 64
    %s1550 = smul.u32 %s1549, 16
    %s1551 = sshll.u32 %s1550, 4
    %1552 = dma.done [#allocation6], %s1551
    %s1553 = sshll.u32 %s1550, 4
    %1554 = dma.done %s251, %s1553
    %v1555 = vld [vmem:[#allocation5] sm:$0xff]
    %v1556 = vld [vmem:[#allocation5 + $0x8] sm:$0xff]
    %v1557 = vld [vmem:[#allocation5 + $0x10] sm:$0xff]
    %v1558 = vld [vmem:[#allocation5 + $0x18] sm:$0xff]
    %v1559 = vld [vmem:[#allocation5 + $0x20] sm:$0xff]
    %v1560 = vld [vmem:[#allocation5 + $0x28] sm:$0xff]
    %v1561 = vld [vmem:[#allocation5 + $0x30] sm:$0xff]
    %v1562 = vld [vmem:[#allocation5 + $0x38] sm:$0xff]
    %v1563 = vld [vmem:[#allocation5 + $0x40] sm:$0xff]
    %v1564 = vld [vmem:[#allocation5 + $0x48] sm:$0xff]
    %v1565 = vld [vmem:[#allocation5 + $0x50] sm:$0xff]
    %v1566 = vld [vmem:[#allocation5 + $0x58] sm:$0xff]
    %v1567 = vld [vmem:[#allocation5 + $0x60] sm:$0xff]
    %v1568 = vld [vmem:[#allocation5 + $0x68] sm:$0xff]
    %v1569 = vld [vmem:[#allocation5 + $0x70] sm:$0xff]
    %v1570 = vld [vmem:[#allocation5 + $0x78] sm:$0xff]
    %v1571 = vld [vmem:[#allocation5 + $0x80] sm:$0xff]
    %v1572 = vld [vmem:[#allocation5 + $0x88] sm:$0xff]
    %v1573 = vld [vmem:[#allocation5 + $0x90] sm:$0xff]
    %v1574 = vld [vmem:[#allocation5 + $0x98] sm:$0xff]
    %v1575 = vld [vmem:[#allocation5 + $0xa0] sm:$0xff]
    %v1576 = vld [vmem:[#allocation5 + $0xa8] sm:$0xff]
    %v1577 = vld [vmem:[#allocation5 + $0xb0] sm:$0xff]
    %v1578 = vld [vmem:[#allocation5 + $0xb8] sm:$0xff]
    %v1579 = vld [vmem:[#allocation5 + $0xc0] sm:$0xff]
    %v1580 = vld [vmem:[#allocation5 + $0xc8] sm:$0xff]
    %v1581 = vld [vmem:[#allocation5 + $0xd0] sm:$0xff]
    %v1582 = vld [vmem:[#allocation5 + $0xd8] sm:$0xff]
    %v1583 = vld [vmem:[#allocation5 + $0xe0] sm:$0xff]
    %v1584 = vld [vmem:[#allocation5 + $0xe8] sm:$0xff]
    %v1585 = vld [vmem:[#allocation5 + $0xf0] sm:$0xff]
    %v1586 = vld [vmem:[#allocation5 + $0xf8] sm:$0xff]
    %v1587 = vld [vmem:[#allocation5 + $0x100] sm:$0xff]
    %v1588 = vld [vmem:[#allocation5 + $0x108] sm:$0xff]
    %v1589 = vld [vmem:[#allocation5 + $0x110] sm:$0xff]
    %v1590 = vld [vmem:[#allocation5 + $0x118] sm:$0xff]
    %v1591 = vld [vmem:[#allocation5 + $0x120] sm:$0xff]
    %v1592 = vld [vmem:[#allocation5 + $0x128] sm:$0xff]
    %v1593 = vld [vmem:[#allocation5 + $0x130] sm:$0xff]
    %v1594 = vld [vmem:[#allocation5 + $0x138] sm:$0xff]
    %v1595 = vld [vmem:[#allocation5 + $0x140] sm:$0xff]
    %v1596 = vld [vmem:[#allocation5 + $0x148] sm:$0xff]
    %v1597 = vld [vmem:[#allocation5 + $0x150] sm:$0xff]
    %v1598 = vld [vmem:[#allocation5 + $0x158] sm:$0xff]
    %v1599 = vld [vmem:[#allocation5 + $0x160] sm:$0xff]
    %v1600 = vld [vmem:[#allocation5 + $0x168] sm:$0xff]
    %v1601 = vld [vmem:[#allocation5 + $0x170] sm:$0xff]
    %v1602 = vld [vmem:[#allocation5 + $0x178] sm:$0xff]
    %v1603 = vld [vmem:[#allocation5 + $0x180] sm:$0xff]
    %v1604 = vld [vmem:[#allocation5 + $0x188] sm:$0xff]
    %v1605 = vld [vmem:[#allocation5 + $0x190] sm:$0xff]
    %v1606 = vld [vmem:[#allocation5 + $0x198] sm:$0xff]
    %v1607 = vld [vmem:[#allocation5 + $0x1a0] sm:$0xff]
    %v1608 = vld [vmem:[#allocation5 + $0x1a8] sm:$0xff]
    %v1609 = vld [vmem:[#allocation5 + $0x1b0] sm:$0xff]
    %v1610 = vld [vmem:[#allocation5 + $0x1b8] sm:$0xff]
    %v1611 = vld [vmem:[#allocation5 + $0x1c0] sm:$0xff]
    %v1612 = vld [vmem:[#allocation5 + $0x1c8] sm:$0xff]
    %v1613 = vld [vmem:[#allocation5 + $0x1d0] sm:$0xff]
    %v1614 = vld [vmem:[#allocation5 + $0x1d8] sm:$0xff]
    %v1615 = vld [vmem:[#allocation5 + $0x1e0] sm:$0xff]
    %v1616 = vld [vmem:[#allocation5 + $0x1e8] sm:$0xff]
    %v1617 = vld [vmem:[#allocation5 + $0x1f0] sm:$0xff]
    %v1618 = vld [vmem:[#allocation5 + $0x1f8] sm:$0xff]
    %v1619 = vld [vmem:[#allocation5 + $0x200] sm:$0xff]
    %v1620 = vld [vmem:[#allocation5 + $0x208] sm:$0xff]
    %v1621 = vld [vmem:[#allocation5 + $0x210] sm:$0xff]
    %v1622 = vld [vmem:[#allocation5 + $0x218] sm:$0xff]
    %v1623 = vld [vmem:[#allocation5 + $0x220] sm:$0xff]
    %v1624 = vld [vmem:[#allocation5 + $0x228] sm:$0xff]
    %v1625 = vld [vmem:[#allocation5 + $0x230] sm:$0xff]
    %v1626 = vld [vmem:[#allocation5 + $0x238] sm:$0xff]
    %v1627 = vld [vmem:[#allocation5 + $0x240] sm:$0xff]
    %v1628 = vld [vmem:[#allocation5 + $0x248] sm:$0xff]
    %v1629 = vld [vmem:[#allocation5 + $0x250] sm:$0xff]
    %v1630 = vld [vmem:[#allocation5 + $0x258] sm:$0xff]
    %v1631 = vld [vmem:[#allocation5 + $0x260] sm:$0xff]
    %v1632 = vld [vmem:[#allocation5 + $0x268] sm:$0xff]
    %v1633 = vld [vmem:[#allocation5 + $0x270] sm:$0xff]
    %v1634 = vld [vmem:[#allocation5 + $0x278] sm:$0xff]
    %v1635 = vld [vmem:[#allocation5 + $0x280] sm:$0xff]
    %v1636 = vld [vmem:[#allocation5 + $0x288] sm:$0xff]
    %v1637 = vld [vmem:[#allocation5 + $0x290] sm:$0xff]
    %v1638 = vld [vmem:[#allocation5 + $0x298] sm:$0xff]
    %v1639 = vld [vmem:[#allocation5 + $0x2a0] sm:$0xff]
    %v1640 = vld [vmem:[#allocation5 + $0x2a8] sm:$0xff]
    %v1641 = vld [vmem:[#allocation5 + $0x2b0] sm:$0xff]
    %v1642 = vld [vmem:[#allocation5 + $0x2b8] sm:$0xff]
    %v1643 = vld [vmem:[#allocation5 + $0x2c0] sm:$0xff]
    %v1644 = vld [vmem:[#allocation5 + $0x2c8] sm:$0xff]
    %v1645 = vld [vmem:[#allocation5 + $0x2d0] sm:$0xff]
    %v1646 = vld [vmem:[#allocation5 + $0x2d8] sm:$0xff]
    %v1647 = vld [vmem:[#allocation5 + $0x2e0] sm:$0xff]
    %v1648 = vld [vmem:[#allocation5 + $0x2e8] sm:$0xff]
    %v1649 = vld [vmem:[#allocation5 + $0x2f0] sm:$0xff]
    %v1650 = vld [vmem:[#allocation5 + $0x2f8] sm:$0xff]
    %v1651 = vld [vmem:[#allocation5 + $0x300] sm:$0xff]
    %v1652 = vld [vmem:[#allocation5 + $0x308] sm:$0xff]
    %v1653 = vld [vmem:[#allocation5 + $0x310] sm:$0xff]
    %v1654 = vld [vmem:[#allocation5 + $0x318] sm:$0xff]
    %v1655 = vld [vmem:[#allocation5 + $0x320] sm:$0xff]
    %v1656 = vld [vmem:[#allocation5 + $0x328] sm:$0xff]
    %v1657 = vld [vmem:[#allocation5 + $0x330] sm:$0xff]
    %v1658 = vld [vmem:[#allocation5 + $0x338] sm:$0xff]
    %v1659 = vld [vmem:[#allocation5 + $0x340] sm:$0xff]
    %v1660 = vld [vmem:[#allocation5 + $0x348] sm:$0xff]
    %v1661 = vld [vmem:[#allocation5 + $0x350] sm:$0xff]
    %v1662 = vld [vmem:[#allocation5 + $0x358] sm:$0xff]
    %v1663 = vld [vmem:[#allocation5 + $0x360] sm:$0xff]
    %v1664 = vld [vmem:[#allocation5 + $0x368] sm:$0xff]
    %v1665 = vld [vmem:[#allocation5 + $0x370] sm:$0xff]
    %v1666 = vld [vmem:[#allocation5 + $0x378] sm:$0xff]
    %v1667 = vld [vmem:[#allocation5 + $0x380] sm:$0xff]
    %v1668 = vld [vmem:[#allocation5 + $0x388] sm:$0xff]
    %v1669 = vld [vmem:[#allocation5 + $0x390] sm:$0xff]
    %v1670 = vld [vmem:[#allocation5 + $0x398] sm:$0xff]
    %v1671 = vld [vmem:[#allocation5 + $0x3a0] sm:$0xff]
    %v1672 = vld [vmem:[#allocation5 + $0x3a8] sm:$0xff]
    %v1673 = vld [vmem:[#allocation5 + $0x3b0] sm:$0xff]
    %v1674 = vld [vmem:[#allocation5 + $0x3b8] sm:$0xff]
    %v1675 = vld [vmem:[#allocation5 + $0x3c0] sm:$0xff]
    %v1676 = vld [vmem:[#allocation5 + $0x3c8] sm:$0xff]
    %v1677 = vld [vmem:[#allocation5 + $0x3d0] sm:$0xff]
    %v1678 = vld [vmem:[#allocation5 + $0x3d8] sm:$0xff]
    %v1679 = vld [vmem:[#allocation5 + $0x3e0] sm:$0xff]
    %v1680 = vld [vmem:[#allocation5 + $0x3e8] sm:$0xff]
    %v1681 = vld [vmem:[#allocation5 + $0x3f0] sm:$0xff]
    %v1682 = vld [vmem:[#allocation5 + $0x3f8] sm:$0xff]
    %v1683 = vld [vmem:[#allocation5 + $0x400] sm:$0xff]
    %v1684 = vld [vmem:[#allocation5 + $0x408] sm:$0xff]
    %v1685 = vld [vmem:[#allocation5 + $0x410] sm:$0xff]
    %v1686 = vld [vmem:[#allocation5 + $0x418] sm:$0xff]
    %v1687 = vld [vmem:[#allocation5 + $0x420] sm:$0xff]
    %v1688 = vld [vmem:[#allocation5 + $0x428] sm:$0xff]
    %v1689 = vld [vmem:[#allocation5 + $0x430] sm:$0xff]
    %v1690 = vld [vmem:[#allocation5 + $0x438] sm:$0xff]
    %v1691 = vld [vmem:[#allocation5 + $0x440] sm:$0xff]
    %v1692 = vld [vmem:[#allocation5 + $0x448] sm:$0xff]
    %v1693 = vld [vmem:[#allocation5 + $0x450] sm:$0xff]
    %v1694 = vld [vmem:[#allocation5 + $0x458] sm:$0xff]
    %v1695 = vld [vmem:[#allocation5 + $0x460] sm:$0xff]
    %v1696 = vld [vmem:[#allocation5 + $0x468] sm:$0xff]
    %v1697 = vld [vmem:[#allocation5 + $0x470] sm:$0xff]
    %v1698 = vld [vmem:[#allocation5 + $0x478] sm:$0xff]
    %v1699 = vld [vmem:[#allocation5 + $0x480] sm:$0xff]
    %v1700 = vld [vmem:[#allocation5 + $0x488] sm:$0xff]
    %v1701 = vld [vmem:[#allocation5 + $0x490] sm:$0xff]
    %v1702 = vld [vmem:[#allocation5 + $0x498] sm:$0xff]
    %v1703 = vld [vmem:[#allocation5 + $0x4a0] sm:$0xff]
    %v1704 = vld [vmem:[#allocation5 + $0x4a8] sm:$0xff]
    %v1705 = vld [vmem:[#allocation5 + $0x4b0] sm:$0xff]
    %v1706 = vld [vmem:[#allocation5 + $0x4b8] sm:$0xff]
    %v1707 = vld [vmem:[#allocation5 + $0x4c0] sm:$0xff]
    %v1708 = vld [vmem:[#allocation5 + $0x4c8] sm:$0xff]
    %v1709 = vld [vmem:[#allocation5 + $0x4d0] sm:$0xff]
    %v1710 = vld [vmem:[#allocation5 + $0x4d8] sm:$0xff]
    %v1711 = vld [vmem:[#allocation5 + $0x4e0] sm:$0xff]
    %v1712 = vld [vmem:[#allocation5 + $0x4e8] sm:$0xff]
    %v1713 = vld [vmem:[#allocation5 + $0x4f0] sm:$0xff]
    %v1714 = vld [vmem:[#allocation5 + $0x4f8] sm:$0xff]
    %v1715 = vld [vmem:[#allocation5 + $0x500] sm:$0xff]
    %v1716 = vld [vmem:[#allocation5 + $0x508] sm:$0xff]
    %v1717 = vld [vmem:[#allocation5 + $0x510] sm:$0xff]
    %v1718 = vld [vmem:[#allocation5 + $0x518] sm:$0xff]
    %v1719 = vld [vmem:[#allocation5 + $0x520] sm:$0xff]
    %v1720 = vld [vmem:[#allocation5 + $0x528] sm:$0xff]
    %v1721 = vld [vmem:[#allocation5 + $0x530] sm:$0xff]
    %v1722 = vld [vmem:[#allocation5 + $0x538] sm:$0xff]
    %v1723 = vld [vmem:[#allocation5 + $0x540] sm:$0xff]
    %v1724 = vld [vmem:[#allocation5 + $0x548] sm:$0xff]
    %v1725 = vld [vmem:[#allocation5 + $0x550] sm:$0xff]
    %v1726 = vld [vmem:[#allocation5 + $0x558] sm:$0xff]
    %v1727 = vld [vmem:[#allocation5 + $0x560] sm:$0xff]
    %v1728 = vld [vmem:[#allocation5 + $0x568] sm:$0xff]
    %v1729 = vld [vmem:[#allocation5 + $0x570] sm:$0xff]
    %v1730 = vld [vmem:[#allocation5 + $0x578] sm:$0xff]
    %v1731 = vld [vmem:[#allocation5 + $0x580] sm:$0xff]
    %v1732 = vld [vmem:[#allocation5 + $0x588] sm:$0xff]
    %v1733 = vld [vmem:[#allocation5 + $0x590] sm:$0xff]
    %v1734 = vld [vmem:[#allocation5 + $0x598] sm:$0xff]
    %v1735 = vld [vmem:[#allocation5 + $0x5a0] sm:$0xff]
    %v1736 = vld [vmem:[#allocation5 + $0x5a8] sm:$0xff]
    %v1737 = vld [vmem:[#allocation5 + $0x5b0] sm:$0xff]
    %v1738 = vld [vmem:[#allocation5 + $0x5b8] sm:$0xff]
    %v1739 = vld [vmem:[#allocation5 + $0x5c0] sm:$0xff]
    %v1740 = vld [vmem:[#allocation5 + $0x5c8] sm:$0xff]
    %v1741 = vld [vmem:[#allocation5 + $0x5d0] sm:$0xff]
    %v1742 = vld [vmem:[#allocation5 + $0x5d8] sm:$0xff]
    %v1743 = vld [vmem:[#allocation5 + $0x5e0] sm:$0xff]
    %v1744 = vld [vmem:[#allocation5 + $0x5e8] sm:$0xff]
    %v1745 = vld [vmem:[#allocation5 + $0x5f0] sm:$0xff]
    %v1746 = vld [vmem:[#allocation5 + $0x5f8] sm:$0xff]
    %v1747 = vld [vmem:[#allocation5 + $0x600] sm:$0xff]
    %v1748 = vld [vmem:[#allocation5 + $0x608] sm:$0xff]
    %v1749 = vld [vmem:[#allocation5 + $0x610] sm:$0xff]
    %v1750 = vld [vmem:[#allocation5 + $0x618] sm:$0xff]
    %v1751 = vld [vmem:[#allocation5 + $0x620] sm:$0xff]
    %v1752 = vld [vmem:[#allocation5 + $0x628] sm:$0xff]
    %v1753 = vld [vmem:[#allocation5 + $0x630] sm:$0xff]
    %v1754 = vld [vmem:[#allocation5 + $0x638] sm:$0xff]
    %v1755 = vld [vmem:[#allocation5 + $0x640] sm:$0xff]
    %v1756 = vld [vmem:[#allocation5 + $0x648] sm:$0xff]
    %v1757 = vld [vmem:[#allocation5 + $0x650] sm:$0xff]
    %v1758 = vld [vmem:[#allocation5 + $0x658] sm:$0xff]
    %v1759 = vld [vmem:[#allocation5 + $0x660] sm:$0xff]
    %v1760 = vld [vmem:[#allocation5 + $0x668] sm:$0xff]
    %v1761 = vld [vmem:[#allocation5 + $0x670] sm:$0xff]
    %v1762 = vld [vmem:[#allocation5 + $0x678] sm:$0xff]
    %v1763 = vld [vmem:[#allocation5 + $0x680] sm:$0xff]
    %v1764 = vld [vmem:[#allocation5 + $0x688] sm:$0xff]
    %v1765 = vld [vmem:[#allocation5 + $0x690] sm:$0xff]
    %v1766 = vld [vmem:[#allocation5 + $0x698] sm:$0xff]
    %v1767 = vld [vmem:[#allocation5 + $0x6a0] sm:$0xff]
    %v1768 = vld [vmem:[#allocation5 + $0x6a8] sm:$0xff]
    %v1769 = vld [vmem:[#allocation5 + $0x6b0] sm:$0xff]
    %v1770 = vld [vmem:[#allocation5 + $0x6b8] sm:$0xff]
    %v1771 = vld [vmem:[#allocation5 + $0x6c0] sm:$0xff]
    %v1772 = vld [vmem:[#allocation5 + $0x6c8] sm:$0xff]
    %v1773 = vld [vmem:[#allocation5 + $0x6d0] sm:$0xff]
    %v1774 = vld [vmem:[#allocation5 + $0x6d8] sm:$0xff]
    %v1775 = vld [vmem:[#allocation5 + $0x6e0] sm:$0xff]
    %v1776 = vld [vmem:[#allocation5 + $0x6e8] sm:$0xff]
    %v1777 = vld [vmem:[#allocation5 + $0x6f0] sm:$0xff]
    %v1778 = vld [vmem:[#allocation5 + $0x6f8] sm:$0xff]
    %v1779 = vld [vmem:[#allocation5 + $0x700] sm:$0xff]
    %v1780 = vld [vmem:[#allocation5 + $0x708] sm:$0xff]
    %v1781 = vld [vmem:[#allocation5 + $0x710] sm:$0xff]
    %v1782 = vld [vmem:[#allocation5 + $0x718] sm:$0xff]
    %v1783 = vld [vmem:[#allocation5 + $0x720] sm:$0xff]
    %v1784 = vld [vmem:[#allocation5 + $0x728] sm:$0xff]
    %v1785 = vld [vmem:[#allocation5 + $0x730] sm:$0xff]
    %v1786 = vld [vmem:[#allocation5 + $0x738] sm:$0xff]
    %v1787 = vld [vmem:[#allocation5 + $0x740] sm:$0xff]
    %v1788 = vld [vmem:[#allocation5 + $0x748] sm:$0xff]
    %v1789 = vld [vmem:[#allocation5 + $0x750] sm:$0xff]
    %v1790 = vld [vmem:[#allocation5 + $0x758] sm:$0xff]
    %v1791 = vld [vmem:[#allocation5 + $0x760] sm:$0xff]
    %v1792 = vld [vmem:[#allocation5 + $0x768] sm:$0xff]
    %v1793 = vld [vmem:[#allocation5 + $0x770] sm:$0xff]
    %v1794 = vld [vmem:[#allocation5 + $0x778] sm:$0xff]
    %v1795 = vld [vmem:[#allocation5 + $0x780] sm:$0xff]
    %v1796 = vld [vmem:[#allocation5 + $0x788] sm:$0xff]
    %v1797 = vld [vmem:[#allocation5 + $0x790] sm:$0xff]
    %v1798 = vld [vmem:[#allocation5 + $0x798] sm:$0xff]
    %v1799 = vld [vmem:[#allocation5 + $0x7a0] sm:$0xff]
    %v1800 = vld [vmem:[#allocation5 + $0x7a8] sm:$0xff]
    %v1801 = vld [vmem:[#allocation5 + $0x7b0] sm:$0xff]
    %v1802 = vld [vmem:[#allocation5 + $0x7b8] sm:$0xff]
    %v1803 = vld [vmem:[#allocation5 + $0x7c0] sm:$0xff]
    %v1804 = vld [vmem:[#allocation5 + $0x7c8] sm:$0xff]
    %v1805 = vld [vmem:[#allocation5 + $0x7d0] sm:$0xff]
    %v1806 = vld [vmem:[#allocation5 + $0x7d8] sm:$0xff]
    %v1807 = vld [vmem:[#allocation5 + $0x7e0] sm:$0xff]
    %v1808 = vld [vmem:[#allocation5 + $0x7e8] sm:$0xff]
    %v1809 = vld [vmem:[#allocation5 + $0x7f0] sm:$0xff]
    %v1810 = vld [vmem:[#allocation5 + $0x7f8] sm:$0xff]
    %v1811 = vld [vmem:[#allocation5 + $0x800] sm:$0xff]
    %v1812 = vld [vmem:[#allocation5 + $0x808] sm:$0xff]
    %v1813 = vld [vmem:[#allocation5 + $0x810] sm:$0xff]
    %v1814 = vld [vmem:[#allocation5 + $0x818] sm:$0xff]
    %v1815 = vld [vmem:[#allocation5 + $0x820] sm:$0xff]
    %v1816 = vld [vmem:[#allocation5 + $0x828] sm:$0xff]
    %v1817 = vld [vmem:[#allocation5 + $0x830] sm:$0xff]
    %v1818 = vld [vmem:[#allocation5 + $0x838] sm:$0xff]
    %v1819 = vld [vmem:[#allocation5 + $0x840] sm:$0xff]
    %v1820 = vld [vmem:[#allocation5 + $0x848] sm:$0xff]
    %v1821 = vld [vmem:[#allocation5 + $0x850] sm:$0xff]
    %v1822 = vld [vmem:[#allocation5 + $0x858] sm:$0xff]
    %v1823 = vld [vmem:[#allocation5 + $0x860] sm:$0xff]
    %v1824 = vld [vmem:[#allocation5 + $0x868] sm:$0xff]
    %v1825 = vld [vmem:[#allocation5 + $0x870] sm:$0xff]
    %v1826 = vld [vmem:[#allocation5 + $0x878] sm:$0xff]
    %v1827 = vld [vmem:[#allocation5 + $0x880] sm:$0xff]
    %v1828 = vld [vmem:[#allocation5 + $0x888] sm:$0xff]
    %v1829 = vld [vmem:[#allocation5 + $0x890] sm:$0xff]
    %v1830 = vld [vmem:[#allocation5 + $0x898] sm:$0xff]
    %v1831 = vld [vmem:[#allocation5 + $0x8a0] sm:$0xff]
    %v1832 = vld [vmem:[#allocation5 + $0x8a8] sm:$0xff]
    %v1833 = vld [vmem:[#allocation5 + $0x8b0] sm:$0xff]
    %v1834 = vld [vmem:[#allocation5 + $0x8b8] sm:$0xff]
    %v1835 = vld [vmem:[#allocation5 + $0x8c0] sm:$0xff]
    %v1836 = vld [vmem:[#allocation5 + $0x8c8] sm:$0xff]
    %v1837 = vld [vmem:[#allocation5 + $0x8d0] sm:$0xff]
    %v1838 = vld [vmem:[#allocation5 + $0x8d8] sm:$0xff]
    %v1839 = vld [vmem:[#allocation5 + $0x8e0] sm:$0xff]
    %v1840 = vld [vmem:[#allocation5 + $0x8e8] sm:$0xff]
    %v1841 = vld [vmem:[#allocation5 + $0x8f0] sm:$0xff]
    %v1842 = vld [vmem:[#allocation5 + $0x8f8] sm:$0xff]
    %v1843 = vld [vmem:[#allocation5 + $0x900] sm:$0xff]
    %v1844 = vld [vmem:[#allocation5 + $0x908] sm:$0xff]
    %v1845 = vld [vmem:[#allocation5 + $0x910] sm:$0xff]
    %v1846 = vld [vmem:[#allocation5 + $0x918] sm:$0xff]
    %v1847 = vld [vmem:[#allocation5 + $0x920] sm:$0xff]
    %v1848 = vld [vmem:[#allocation5 + $0x928] sm:$0xff]
    %v1849 = vld [vmem:[#allocation5 + $0x930] sm:$0xff]
    %v1850 = vld [vmem:[#allocation5 + $0x938] sm:$0xff]
    %v1851 = vld [vmem:[#allocation5 + $0x940] sm:$0xff]
    %v1852 = vld [vmem:[#allocation5 + $0x948] sm:$0xff]
    %v1853 = vld [vmem:[#allocation5 + $0x950] sm:$0xff]
    %v1854 = vld [vmem:[#allocation5 + $0x958] sm:$0xff]
    %v1855 = vld [vmem:[#allocation5 + $0x960] sm:$0xff]
    %v1856 = vld [vmem:[#allocation5 + $0x968] sm:$0xff]
    %v1857 = vld [vmem:[#allocation5 + $0x970] sm:$0xff]
    %v1858 = vld [vmem:[#allocation5 + $0x978] sm:$0xff]
    %v1859 = vld [vmem:[#allocation5 + $0x980] sm:$0xff]
    %v1860 = vld [vmem:[#allocation5 + $0x988] sm:$0xff]
    %v1861 = vld [vmem:[#allocation5 + $0x990] sm:$0xff]
    %v1862 = vld [vmem:[#allocation5 + $0x998] sm:$0xff]
    %v1863 = vld [vmem:[#allocation5 + $0x9a0] sm:$0xff]
    %v1864 = vld [vmem:[#allocation5 + $0x9a8] sm:$0xff]
    %v1865 = vld [vmem:[#allocation5 + $0x9b0] sm:$0xff]
    %v1866 = vld [vmem:[#allocation5 + $0x9b8] sm:$0xff]
    %v1867 = vld [vmem:[#allocation5 + $0x9c0] sm:$0xff]
    %v1868 = vld [vmem:[#allocation5 + $0x9c8] sm:$0xff]
    %v1869 = vld [vmem:[#allocation5 + $0x9d0] sm:$0xff]
    %v1870 = vld [vmem:[#allocation5 + $0x9d8] sm:$0xff]
    %v1871 = vld [vmem:[#allocation5 + $0x9e0] sm:$0xff]
    %v1872 = vld [vmem:[#allocation5 + $0x9e8] sm:$0xff]
    %v1873 = vld [vmem:[#allocation5 + $0x9f0] sm:$0xff]
    %v1874 = vld [vmem:[#allocation5 + $0x9f8] sm:$0xff]
    %v1875 = vld [vmem:[#allocation5 + $0xa00] sm:$0xff]
    %v1876 = vld [vmem:[#allocation5 + $0xa08] sm:$0xff]
    %v1877 = vld [vmem:[#allocation5 + $0xa10] sm:$0xff]
    %v1878 = vld [vmem:[#allocation5 + $0xa18] sm:$0xff]
    %v1879 = vld [vmem:[#allocation5 + $0xa20] sm:$0xff]
    %v1880 = vld [vmem:[#allocation5 + $0xa28] sm:$0xff]
    %v1881 = vld [vmem:[#allocation5 + $0xa30] sm:$0xff]
    %v1882 = vld [vmem:[#allocation5 + $0xa38] sm:$0xff]
    %v1883 = vld [vmem:[#allocation5 + $0xa40] sm:$0xff]
    %v1884 = vld [vmem:[#allocation5 + $0xa48] sm:$0xff]
    %v1885 = vld [vmem:[#allocation5 + $0xa50] sm:$0xff]
    %v1886 = vld [vmem:[#allocation5 + $0xa58] sm:$0xff]
    %v1887 = vld [vmem:[#allocation5 + $0xa60] sm:$0xff]
    %v1888 = vld [vmem:[#allocation5 + $0xa68] sm:$0xff]
    %v1889 = vld [vmem:[#allocation5 + $0xa70] sm:$0xff]
    %v1890 = vld [vmem:[#allocation5 + $0xa78] sm:$0xff]
    %v1891 = vld [vmem:[#allocation5 + $0xa80] sm:$0xff]
    %v1892 = vld [vmem:[#allocation5 + $0xa88] sm:$0xff]
    %v1893 = vld [vmem:[#allocation5 + $0xa90] sm:$0xff]
    %v1894 = vld [vmem:[#allocation5 + $0xa98] sm:$0xff]
    %v1895 = vld [vmem:[#allocation5 + $0xaa0] sm:$0xff]
    %v1896 = vld [vmem:[#allocation5 + $0xaa8] sm:$0xff]
    %v1897 = vld [vmem:[#allocation5 + $0xab0] sm:$0xff]
    %v1898 = vld [vmem:[#allocation5 + $0xab8] sm:$0xff]
    %v1899 = vld [vmem:[#allocation5 + $0xac0] sm:$0xff]
    %v1900 = vld [vmem:[#allocation5 + $0xac8] sm:$0xff]
    %v1901 = vld [vmem:[#allocation5 + $0xad0] sm:$0xff]
    %v1902 = vld [vmem:[#allocation5 + $0xad8] sm:$0xff]
    %v1903 = vld [vmem:[#allocation5 + $0xae0] sm:$0xff]
    %v1904 = vld [vmem:[#allocation5 + $0xae8] sm:$0xff]
    %v1905 = vld [vmem:[#allocation5 + $0xaf0] sm:$0xff]
    %v1906 = vld [vmem:[#allocation5 + $0xaf8] sm:$0xff]
    %v1907 = vld [vmem:[#allocation5 + $0xb00] sm:$0xff]
    %v1908 = vld [vmem:[#allocation5 + $0xb08] sm:$0xff]
    %v1909 = vld [vmem:[#allocation5 + $0xb10] sm:$0xff]
    %v1910 = vld [vmem:[#allocation5 + $0xb18] sm:$0xff]
    %v1911 = vld [vmem:[#allocation5 + $0xb20] sm:$0xff]
    %v1912 = vld [vmem:[#allocation5 + $0xb28] sm:$0xff]
    %v1913 = vld [vmem:[#allocation5 + $0xb30] sm:$0xff]
    %v1914 = vld [vmem:[#allocation5 + $0xb38] sm:$0xff]
    %v1915 = vld [vmem:[#allocation5 + $0xb40] sm:$0xff]
    %v1916 = vld [vmem:[#allocation5 + $0xb48] sm:$0xff]
    %v1917 = vld [vmem:[#allocation5 + $0xb50] sm:$0xff]
    %v1918 = vld [vmem:[#allocation5 + $0xb58] sm:$0xff]
    %v1919 = vld [vmem:[#allocation5 + $0xb60] sm:$0xff]
    %v1920 = vld [vmem:[#allocation5 + $0xb68] sm:$0xff]
    %v1921 = vld [vmem:[#allocation5 + $0xb70] sm:$0xff]
    %v1922 = vld [vmem:[#allocation5 + $0xb78] sm:$0xff]
    %v1923 = vld [vmem:[#allocation5 + $0xb80] sm:$0xff]
    %v1924 = vld [vmem:[#allocation5 + $0xb88] sm:$0xff]
    %v1925 = vld [vmem:[#allocation5 + $0xb90] sm:$0xff]
    %v1926 = vld [vmem:[#allocation5 + $0xb98] sm:$0xff]
    %v1927 = vld [vmem:[#allocation5 + $0xba0] sm:$0xff]
    %v1928 = vld [vmem:[#allocation5 + $0xba8] sm:$0xff]
    %v1929 = vld [vmem:[#allocation5 + $0xbb0] sm:$0xff]
    %v1930 = vld [vmem:[#allocation5 + $0xbb8] sm:$0xff]
    %v1931 = vld [vmem:[#allocation5 + $0xbc0] sm:$0xff]
    %v1932 = vld [vmem:[#allocation5 + $0xbc8] sm:$0xff]
    %v1933 = vld [vmem:[#allocation5 + $0xbd0] sm:$0xff]
    %v1934 = vld [vmem:[#allocation5 + $0xbd8] sm:$0xff]
    %v1935 = vld [vmem:[#allocation5 + $0xbe0] sm:$0xff]
    %v1936 = vld [vmem:[#allocation5 + $0xbe8] sm:$0xff]
    %v1937 = vld [vmem:[#allocation5 + $0xbf0] sm:$0xff]
    %v1938 = vld [vmem:[#allocation5 + $0xbf8] sm:$0xff]
    %v1939 = vld [vmem:[#allocation5 + $0xc00] sm:$0xff]
    %v1940 = vld [vmem:[#allocation5 + $0xc08] sm:$0xff]
    %v1941 = vld [vmem:[#allocation5 + $0xc10] sm:$0xff]
    %v1942 = vld [vmem:[#allocation5 + $0xc18] sm:$0xff]
    %v1943 = vld [vmem:[#allocation5 + $0xc20] sm:$0xff]
    %v1944 = vld [vmem:[#allocation5 + $0xc28] sm:$0xff]
    %v1945 = vld [vmem:[#allocation5 + $0xc30] sm:$0xff]
    %v1946 = vld [vmem:[#allocation5 + $0xc38] sm:$0xff]
    %v1947 = vld [vmem:[#allocation5 + $0xc40] sm:$0xff]
    %v1948 = vld [vmem:[#allocation5 + $0xc48] sm:$0xff]
    %v1949 = vld [vmem:[#allocation5 + $0xc50] sm:$0xff]
    %v1950 = vld [vmem:[#allocation5 + $0xc58] sm:$0xff]
    %v1951 = vld [vmem:[#allocation5 + $0xc60] sm:$0xff]
    %v1952 = vld [vmem:[#allocation5 + $0xc68] sm:$0xff]
    %v1953 = vld [vmem:[#allocation5 + $0xc70] sm:$0xff]
    %v1954 = vld [vmem:[#allocation5 + $0xc78] sm:$0xff]
    %v1955 = vld [vmem:[#allocation5 + $0xc80] sm:$0xff]
    %v1956 = vld [vmem:[#allocation5 + $0xc88] sm:$0xff]
    %v1957 = vld [vmem:[#allocation5 + $0xc90] sm:$0xff]
    %v1958 = vld [vmem:[#allocation5 + $0xc98] sm:$0xff]
    %v1959 = vld [vmem:[#allocation5 + $0xca0] sm:$0xff]
    %v1960 = vld [vmem:[#allocation5 + $0xca8] sm:$0xff]
    %v1961 = vld [vmem:[#allocation5 + $0xcb0] sm:$0xff]
    %v1962 = vld [vmem:[#allocation5 + $0xcb8] sm:$0xff]
    %v1963 = vld [vmem:[#allocation5 + $0xcc0] sm:$0xff]
    %v1964 = vld [vmem:[#allocation5 + $0xcc8] sm:$0xff]
    %v1965 = vld [vmem:[#allocation5 + $0xcd0] sm:$0xff]
    %v1966 = vld [vmem:[#allocation5 + $0xcd8] sm:$0xff]
    %v1967 = vld [vmem:[#allocation5 + $0xce0] sm:$0xff]
    %v1968 = vld [vmem:[#allocation5 + $0xce8] sm:$0xff]
    %v1969 = vld [vmem:[#allocation5 + $0xcf0] sm:$0xff]
    %v1970 = vld [vmem:[#allocation5 + $0xcf8] sm:$0xff]
    %v1971 = vld [vmem:[#allocation5 + $0xd00] sm:$0xff]
    %v1972 = vld [vmem:[#allocation5 + $0xd08] sm:$0xff]
    %v1973 = vld [vmem:[#allocation5 + $0xd10] sm:$0xff]
    %v1974 = vld [vmem:[#allocation5 + $0xd18] sm:$0xff]
    %v1975 = vld [vmem:[#allocation5 + $0xd20] sm:$0xff]
    %v1976 = vld [vmem:[#allocation5 + $0xd28] sm:$0xff]
    %v1977 = vld [vmem:[#allocation5 + $0xd30] sm:$0xff]
    %v1978 = vld [vmem:[#allocation5 + $0xd38] sm:$0xff]
    %v1979 = vld [vmem:[#allocation5 + $0xd40] sm:$0xff]
    %v1980 = vld [vmem:[#allocation5 + $0xd48] sm:$0xff]
    %v1981 = vld [vmem:[#allocation5 + $0xd50] sm:$0xff]
    %v1982 = vld [vmem:[#allocation5 + $0xd58] sm:$0xff]
    %v1983 = vld [vmem:[#allocation5 + $0xd60] sm:$0xff]
    %v1984 = vld [vmem:[#allocation5 + $0xd68] sm:$0xff]
    %v1985 = vld [vmem:[#allocation5 + $0xd70] sm:$0xff]
    %v1986 = vld [vmem:[#allocation5 + $0xd78] sm:$0xff]
    %v1987 = vld [vmem:[#allocation5 + $0xd80] sm:$0xff]
    %v1988 = vld [vmem:[#allocation5 + $0xd88] sm:$0xff]
    %v1989 = vld [vmem:[#allocation5 + $0xd90] sm:$0xff]
    %v1990 = vld [vmem:[#allocation5 + $0xd98] sm:$0xff]
    %v1991 = vld [vmem:[#allocation5 + $0xda0] sm:$0xff]
    %v1992 = vld [vmem:[#allocation5 + $0xda8] sm:$0xff]
    %v1993 = vld [vmem:[#allocation5 + $0xdb0] sm:$0xff]
    %v1994 = vld [vmem:[#allocation5 + $0xdb8] sm:$0xff]
    %v1995 = vld [vmem:[#allocation5 + $0xdc0] sm:$0xff]
    %v1996 = vld [vmem:[#allocation5 + $0xdc8] sm:$0xff]
    %v1997 = vld [vmem:[#allocation5 + $0xdd0] sm:$0xff]
    %v1998 = vld [vmem:[#allocation5 + $0xdd8] sm:$0xff]
    %v1999 = vld [vmem:[#allocation5 + $0xde0] sm:$0xff]
    %v2000 = vld [vmem:[#allocation5 + $0xde8] sm:$0xff]
    %v2001 = vld [vmem:[#allocation5 + $0xdf0] sm:$0xff]
    %v2002 = vld [vmem:[#allocation5 + $0xdf8] sm:$0xff]
    %v2003 = vld [vmem:[#allocation5 + $0xe00] sm:$0xff]
    %v2004 = vld [vmem:[#allocation5 + $0xe08] sm:$0xff]
    %v2005 = vld [vmem:[#allocation5 + $0xe10] sm:$0xff]
    %v2006 = vld [vmem:[#allocation5 + $0xe18] sm:$0xff]
    %v2007 = vld [vmem:[#allocation5 + $0xe20] sm:$0xff]
    %v2008 = vld [vmem:[#allocation5 + $0xe28] sm:$0xff]
    %v2009 = vld [vmem:[#allocation5 + $0xe30] sm:$0xff]
    %v2010 = vld [vmem:[#allocation5 + $0xe38] sm:$0xff]
    %v2011 = vld [vmem:[#allocation5 + $0xe40] sm:$0xff]
    %v2012 = vld [vmem:[#allocation5 + $0xe48] sm:$0xff]
    %v2013 = vld [vmem:[#allocation5 + $0xe50] sm:$0xff]
    %v2014 = vld [vmem:[#allocation5 + $0xe58] sm:$0xff]
    %v2015 = vld [vmem:[#allocation5 + $0xe60] sm:$0xff]
    %v2016 = vld [vmem:[#allocation5 + $0xe68] sm:$0xff]
    %v2017 = vld [vmem:[#allocation5 + $0xe70] sm:$0xff]
    %v2018 = vld [vmem:[#allocation5 + $0xe78] sm:$0xff]
    %v2019 = vld [vmem:[#allocation5 + $0xe80] sm:$0xff]
    %v2020 = vld [vmem:[#allocation5 + $0xe88] sm:$0xff]
    %v2021 = vld [vmem:[#allocation5 + $0xe90] sm:$0xff]
    %v2022 = vld [vmem:[#allocation5 + $0xe98] sm:$0xff]
    %v2023 = vld [vmem:[#allocation5 + $0xea0] sm:$0xff]
    %v2024 = vld [vmem:[#allocation5 + $0xea8] sm:$0xff]
    %v2025 = vld [vmem:[#allocation5 + $0xeb0] sm:$0xff]
    %v2026 = vld [vmem:[#allocation5 + $0xeb8] sm:$0xff]
    %v2027 = vld [vmem:[#allocation5 + $0xec0] sm:$0xff]
    %v2028 = vld [vmem:[#allocation5 + $0xec8] sm:$0xff]
    %v2029 = vld [vmem:[#allocation5 + $0xed0] sm:$0xff]
    %v2030 = vld [vmem:[#allocation5 + $0xed8] sm:$0xff]
    %v2031 = vld [vmem:[#allocation5 + $0xee0] sm:$0xff]
    %v2032 = vld [vmem:[#allocation5 + $0xee8] sm:$0xff]
    %v2033 = vld [vmem:[#allocation5 + $0xef0] sm:$0xff]
    %v2034 = vld [vmem:[#allocation5 + $0xef8] sm:$0xff]
    %v2035 = vld [vmem:[#allocation5 + $0xf00] sm:$0xff]
    %v2036 = vld [vmem:[#allocation5 + $0xf08] sm:$0xff]
    %v2037 = vld [vmem:[#allocation5 + $0xf10] sm:$0xff]
    %v2038 = vld [vmem:[#allocation5 + $0xf18] sm:$0xff]
    %v2039 = vld [vmem:[#allocation5 + $0xf20] sm:$0xff]
    %v2040 = vld [vmem:[#allocation5 + $0xf28] sm:$0xff]
    %v2041 = vld [vmem:[#allocation5 + $0xf30] sm:$0xff]
    %v2042 = vld [vmem:[#allocation5 + $0xf38] sm:$0xff]
    %v2043 = vld [vmem:[#allocation5 + $0xf40] sm:$0xff]
    %v2044 = vld [vmem:[#allocation5 + $0xf48] sm:$0xff]
    %v2045 = vld [vmem:[#allocation5 + $0xf50] sm:$0xff]
    %v2046 = vld [vmem:[#allocation5 + $0xf58] sm:$0xff]
    %v2047 = vld [vmem:[#allocation5 + $0xf60] sm:$0xff]
    %v2048 = vld [vmem:[#allocation5 + $0xf68] sm:$0xff]
    %v2049 = vld [vmem:[#allocation5 + $0xf70] sm:$0xff]
    %v2050 = vld [vmem:[#allocation5 + $0xf78] sm:$0xff]
    %v2051 = vld [vmem:[#allocation5 + $0xf80] sm:$0xff]
    %v2052 = vld [vmem:[#allocation5 + $0xf88] sm:$0xff]
    %v2053 = vld [vmem:[#allocation5 + $0xf90] sm:$0xff]
    %v2054 = vld [vmem:[#allocation5 + $0xf98] sm:$0xff]
    %v2055 = vld [vmem:[#allocation5 + $0xfa0] sm:$0xff]
    %v2056 = vld [vmem:[#allocation5 + $0xfa8] sm:$0xff]
    %v2057 = vld [vmem:[#allocation5 + $0xfb0] sm:$0xff]
    %v2058 = vld [vmem:[#allocation5 + $0xfb8] sm:$0xff]
    %v2059 = vld [vmem:[#allocation5 + $0xfc0] sm:$0xff]
    %v2060 = vld [vmem:[#allocation5 + $0xfc8] sm:$0xff]
    %v2061 = vld [vmem:[#allocation5 + $0xfd0] sm:$0xff]
    %v2062 = vld [vmem:[#allocation5 + $0xfd8] sm:$0xff]
    %v2063 = vld [vmem:[#allocation5 + $0xfe0] sm:$0xff]
    %v2064 = vld [vmem:[#allocation5 + $0xfe8] sm:$0xff]
    %v2065 = vld [vmem:[#allocation5 + $0xff0] sm:$0xff]
    %v2066 = vld [vmem:[#allocation5 + $0xff8] sm:$0xff]
    %v2067 = vld [vmem:[#allocation5 + $0x1000] sm:$0xff]
    %v2068 = vld [vmem:[#allocation5 + $0x1008] sm:$0xff]
    %v2069 = vld [vmem:[#allocation5 + $0x1010] sm:$0xff]
    %v2070 = vld [vmem:[#allocation5 + $0x1018] sm:$0xff]
    %v2071 = vld [vmem:[#allocation5 + $0x1020] sm:$0xff]
    %v2072 = vld [vmem:[#allocation5 + $0x1028] sm:$0xff]
    %v2073 = vld [vmem:[#allocation5 + $0x1030] sm:$0xff]
    %v2074 = vld [vmem:[#allocation5 + $0x1038] sm:$0xff]
    %v2075 = vld [vmem:[#allocation5 + $0x1040] sm:$0xff]
    %v2076 = vld [vmem:[#allocation5 + $0x1048] sm:$0xff]
    %v2077 = vld [vmem:[#allocation5 + $0x1050] sm:$0xff]
    %v2078 = vld [vmem:[#allocation5 + $0x1058] sm:$0xff]
    %v2079 = vld [vmem:[#allocation5 + $0x1060] sm:$0xff]
    %v2080 = vld [vmem:[#allocation5 + $0x1068] sm:$0xff]
    %v2081 = vld [vmem:[#allocation5 + $0x1070] sm:$0xff]
    %v2082 = vld [vmem:[#allocation5 + $0x1078] sm:$0xff]
    %v2083 = vld [vmem:[#allocation5 + $0x1080] sm:$0xff]
    %v2084 = vld [vmem:[#allocation5 + $0x1088] sm:$0xff]
    %v2085 = vld [vmem:[#allocation5 + $0x1090] sm:$0xff]
    %v2086 = vld [vmem:[#allocation5 + $0x1098] sm:$0xff]
    %v2087 = vld [vmem:[#allocation5 + $0x10a0] sm:$0xff]
    %v2088 = vld [vmem:[#allocation5 + $0x10a8] sm:$0xff]
    %v2089 = vld [vmem:[#allocation5 + $0x10b0] sm:$0xff]
    %v2090 = vld [vmem:[#allocation5 + $0x10b8] sm:$0xff]
    %v2091 = vld [vmem:[#allocation5 + $0x10c0] sm:$0xff]
    %v2092 = vld [vmem:[#allocation5 + $0x10c8] sm:$0xff]
    %v2093 = vld [vmem:[#allocation5 + $0x10d0] sm:$0xff]
    %v2094 = vld [vmem:[#allocation5 + $0x10d8] sm:$0xff]
    %v2095 = vld [vmem:[#allocation5 + $0x10e0] sm:$0xff]
    %v2096 = vld [vmem:[#allocation5 + $0x10e8] sm:$0xff]
    %v2097 = vld [vmem:[#allocation5 + $0x10f0] sm:$0xff]
    %v2098 = vld [vmem:[#allocation5 + $0x10f8] sm:$0xff]
    %v2099 = vld [vmem:[#allocation5 + $0x1100] sm:$0xff]
    %v2100 = vld [vmem:[#allocation5 + $0x1108] sm:$0xff]
    %v2101 = vld [vmem:[#allocation5 + $0x1110] sm:$0xff]
    %v2102 = vld [vmem:[#allocation5 + $0x1118] sm:$0xff]
    %v2103 = vld [vmem:[#allocation5 + $0x1120] sm:$0xff]
    %v2104 = vld [vmem:[#allocation5 + $0x1128] sm:$0xff]
    %v2105 = vld [vmem:[#allocation5 + $0x1130] sm:$0xff]
    %v2106 = vld [vmem:[#allocation5 + $0x1138] sm:$0xff]
    %v2107 = vld [vmem:[#allocation5 + $0x1140] sm:$0xff]
    %v2108 = vld [vmem:[#allocation5 + $0x1148] sm:$0xff]
    %v2109 = vld [vmem:[#allocation5 + $0x1150] sm:$0xff]
    %v2110 = vld [vmem:[#allocation5 + $0x1158] sm:$0xff]
    %v2111 = vld [vmem:[#allocation5 + $0x1160] sm:$0xff]
    %v2112 = vld [vmem:[#allocation5 + $0x1168] sm:$0xff]
    %v2113 = vld [vmem:[#allocation5 + $0x1170] sm:$0xff]
    %v2114 = vld [vmem:[#allocation5 + $0x1178] sm:$0xff]
    %v2115 = vld [vmem:[#allocation5 + $0x1180] sm:$0xff]
    %v2116 = vld [vmem:[#allocation5 + $0x1188] sm:$0xff]
    %v2117 = vld [vmem:[#allocation5 + $0x1190] sm:$0xff]
    %v2118 = vld [vmem:[#allocation5 + $0x1198] sm:$0xff]
    %v2119 = vld [vmem:[#allocation5 + $0x11a0] sm:$0xff]
    %v2120 = vld [vmem:[#allocation5 + $0x11a8] sm:$0xff]
    %v2121 = vld [vmem:[#allocation5 + $0x11b0] sm:$0xff]
    %v2122 = vld [vmem:[#allocation5 + $0x11b8] sm:$0xff]
    %v2123 = vld [vmem:[#allocation5 + $0x11c0] sm:$0xff]
    %v2124 = vld [vmem:[#allocation5 + $0x11c8] sm:$0xff]
    %v2125 = vld [vmem:[#allocation5 + $0x11d0] sm:$0xff]
    %v2126 = vld [vmem:[#allocation5 + $0x11d8] sm:$0xff]
    %v2127 = vld [vmem:[#allocation5 + $0x11e0] sm:$0xff]
    %v2128 = vld [vmem:[#allocation5 + $0x11e8] sm:$0xff]
    %v2129 = vld [vmem:[#allocation5 + $0x11f0] sm:$0xff]
    %v2130 = vld [vmem:[#allocation5 + $0x11f8] sm:$0xff]
    %v2131 = vld [vmem:[#allocation5 + $0x1200] sm:$0xff]
    %v2132 = vld [vmem:[#allocation5 + $0x1208] sm:$0xff]
    %v2133 = vld [vmem:[#allocation5 + $0x1210] sm:$0xff]
    %v2134 = vld [vmem:[#allocation5 + $0x1218] sm:$0xff]
    %v2135 = vld [vmem:[#allocation5 + $0x1220] sm:$0xff]
    %v2136 = vld [vmem:[#allocation5 + $0x1228] sm:$0xff]
    %v2137 = vld [vmem:[#allocation5 + $0x1230] sm:$0xff]
    %v2138 = vld [vmem:[#allocation5 + $0x1238] sm:$0xff]
    %v2139 = vld [vmem:[#allocation5 + $0x1240] sm:$0xff]
    %v2140 = vld [vmem:[#allocation5 + $0x1248] sm:$0xff]
    %v2141 = vld [vmem:[#allocation5 + $0x1250] sm:$0xff]
    %v2142 = vld [vmem:[#allocation5 + $0x1258] sm:$0xff]
    %v2143 = vld [vmem:[#allocation5 + $0x1260] sm:$0xff]
    %v2144 = vld [vmem:[#allocation5 + $0x1268] sm:$0xff]
    %v2145 = vld [vmem:[#allocation5 + $0x1270] sm:$0xff]
    %v2146 = vld [vmem:[#allocation5 + $0x1278] sm:$0xff]
    %v2147 = vld [vmem:[#allocation5 + $0x1280] sm:$0xff]
    %v2148 = vld [vmem:[#allocation5 + $0x1288] sm:$0xff]
    %v2149 = vld [vmem:[#allocation5 + $0x1290] sm:$0xff]
    %v2150 = vld [vmem:[#allocation5 + $0x1298] sm:$0xff]
    %v2151 = vld [vmem:[#allocation5 + $0x12a0] sm:$0xff]
    %v2152 = vld [vmem:[#allocation5 + $0x12a8] sm:$0xff]
    %v2153 = vld [vmem:[#allocation5 + $0x12b0] sm:$0xff]
    %v2154 = vld [vmem:[#allocation5 + $0x12b8] sm:$0xff]
    %v2155 = vld [vmem:[#allocation5 + $0x12c0] sm:$0xff]
    %v2156 = vld [vmem:[#allocation5 + $0x12c8] sm:$0xff]
    %v2157 = vld [vmem:[#allocation5 + $0x12d0] sm:$0xff]
    %v2158 = vld [vmem:[#allocation5 + $0x12d8] sm:$0xff]
    %v2159 = vld [vmem:[#allocation5 + $0x12e0] sm:$0xff]
    %v2160 = vld [vmem:[#allocation5 + $0x12e8] sm:$0xff]
    %v2161 = vld [vmem:[#allocation5 + $0x12f0] sm:$0xff]
    %v2162 = vld [vmem:[#allocation5 + $0x12f8] sm:$0xff]
    %v2163 = vld [vmem:[#allocation5 + $0x1300] sm:$0xff]
    %v2164 = vld [vmem:[#allocation5 + $0x1308] sm:$0xff]
    %v2165 = vld [vmem:[#allocation5 + $0x1310] sm:$0xff]
    %v2166 = vld [vmem:[#allocation5 + $0x1318] sm:$0xff]
    %v2167 = vld [vmem:[#allocation5 + $0x1320] sm:$0xff]
    %v2168 = vld [vmem:[#allocation5 + $0x1328] sm:$0xff]
    %v2169 = vld [vmem:[#allocation5 + $0x1330] sm:$0xff]
    %v2170 = vld [vmem:[#allocation5 + $0x1338] sm:$0xff]
    %v2171 = vld [vmem:[#allocation5 + $0x1340] sm:$0xff]
    %v2172 = vld [vmem:[#allocation5 + $0x1348] sm:$0xff]
    %v2173 = vld [vmem:[#allocation5 + $0x1350] sm:$0xff]
    %v2174 = vld [vmem:[#allocation5 + $0x1358] sm:$0xff]
    %v2175 = vld [vmem:[#allocation5 + $0x1360] sm:$0xff]
    %v2176 = vld [vmem:[#allocation5 + $0x1368] sm:$0xff]
    %v2177 = vld [vmem:[#allocation5 + $0x1370] sm:$0xff]
    %v2178 = vld [vmem:[#allocation5 + $0x1378] sm:$0xff]
    %v2179 = vld [vmem:[#allocation5 + $0x1380] sm:$0xff]
    %v2180 = vld [vmem:[#allocation5 + $0x1388] sm:$0xff]
    %v2181 = vld [vmem:[#allocation5 + $0x1390] sm:$0xff]
    %v2182 = vld [vmem:[#allocation5 + $0x1398] sm:$0xff]
    %v2183 = vld [vmem:[#allocation5 + $0x13a0] sm:$0xff]
    %v2184 = vld [vmem:[#allocation5 + $0x13a8] sm:$0xff]
    %v2185 = vld [vmem:[#allocation5 + $0x13b0] sm:$0xff]
    %v2186 = vld [vmem:[#allocation5 + $0x13b8] sm:$0xff]
    %v2187 = vld [vmem:[#allocation5 + $0x13c0] sm:$0xff]
    %v2188 = vld [vmem:[#allocation5 + $0x13c8] sm:$0xff]
    %v2189 = vld [vmem:[#allocation5 + $0x13d0] sm:$0xff]
    %v2190 = vld [vmem:[#allocation5 + $0x13d8] sm:$0xff]
    %v2191 = vld [vmem:[#allocation5 + $0x13e0] sm:$0xff]
    %v2192 = vld [vmem:[#allocation5 + $0x13e8] sm:$0xff]
    %v2193 = vld [vmem:[#allocation5 + $0x13f0] sm:$0xff]
    %v2194 = vld [vmem:[#allocation5 + $0x13f8] sm:$0xff]
    %v2195 = vld [vmem:[#allocation5 + $0x1400] sm:$0xff]
    %v2196 = vld [vmem:[#allocation5 + $0x1408] sm:$0xff]
    %v2197 = vld [vmem:[#allocation5 + $0x1410] sm:$0xff]
    %v2198 = vld [vmem:[#allocation5 + $0x1418] sm:$0xff]
    %v2199 = vld [vmem:[#allocation5 + $0x1420] sm:$0xff]
    %v2200 = vld [vmem:[#allocation5 + $0x1428] sm:$0xff]
    %v2201 = vld [vmem:[#allocation5 + $0x1430] sm:$0xff]
    %v2202 = vld [vmem:[#allocation5 + $0x1438] sm:$0xff]
    %v2203 = vld [vmem:[#allocation5 + $0x1440] sm:$0xff]
    %v2204 = vld [vmem:[#allocation5 + $0x1448] sm:$0xff]
    %v2205 = vld [vmem:[#allocation5 + $0x1450] sm:$0xff]
    %v2206 = vld [vmem:[#allocation5 + $0x1458] sm:$0xff]
    %v2207 = vld [vmem:[#allocation5 + $0x1460] sm:$0xff]
    %v2208 = vld [vmem:[#allocation5 + $0x1468] sm:$0xff]
    %v2209 = vld [vmem:[#allocation5 + $0x1470] sm:$0xff]
    %v2210 = vld [vmem:[#allocation5 + $0x1478] sm:$0xff]
    %v2211 = vld [vmem:[#allocation5 + $0x1480] sm:$0xff]
    %v2212 = vld [vmem:[#allocation5 + $0x1488] sm:$0xff]
    %v2213 = vld [vmem:[#allocation5 + $0x1490] sm:$0xff]
    %v2214 = vld [vmem:[#allocation5 + $0x1498] sm:$0xff]
    %v2215 = vld [vmem:[#allocation5 + $0x14a0] sm:$0xff]
    %v2216 = vld [vmem:[#allocation5 + $0x14a8] sm:$0xff]
    %v2217 = vld [vmem:[#allocation5 + $0x14b0] sm:$0xff]
    %v2218 = vld [vmem:[#allocation5 + $0x14b8] sm:$0xff]
    %v2219 = vld [vmem:[#allocation5 + $0x14c0] sm:$0xff]
    %v2220 = vld [vmem:[#allocation5 + $0x14c8] sm:$0xff]
    %v2221 = vld [vmem:[#allocation5 + $0x14d0] sm:$0xff]
    %v2222 = vld [vmem:[#allocation5 + $0x14d8] sm:$0xff]
    %v2223 = vld [vmem:[#allocation5 + $0x14e0] sm:$0xff]
    %v2224 = vld [vmem:[#allocation5 + $0x14e8] sm:$0xff]
    %v2225 = vld [vmem:[#allocation5 + $0x14f0] sm:$0xff]
    %v2226 = vld [vmem:[#allocation5 + $0x14f8] sm:$0xff]
    %v2227 = vld [vmem:[#allocation5 + $0x1500] sm:$0xff]
    %v2228 = vld [vmem:[#allocation5 + $0x1508] sm:$0xff]
    %v2229 = vld [vmem:[#allocation5 + $0x1510] sm:$0xff]
    %v2230 = vld [vmem:[#allocation5 + $0x1518] sm:$0xff]
    %v2231 = vld [vmem:[#allocation5 + $0x1520] sm:$0xff]
    %v2232 = vld [vmem:[#allocation5 + $0x1528] sm:$0xff]
    %v2233 = vld [vmem:[#allocation5 + $0x1530] sm:$0xff]
    %v2234 = vld [vmem:[#allocation5 + $0x1538] sm:$0xff]
    %v2235 = vld [vmem:[#allocation5 + $0x1540] sm:$0xff]
    %v2236 = vld [vmem:[#allocation5 + $0x1548] sm:$0xff]
    %v2237 = vld [vmem:[#allocation5 + $0x1550] sm:$0xff]
    %v2238 = vld [vmem:[#allocation5 + $0x1558] sm:$0xff]
    %v2239 = vld [vmem:[#allocation5 + $0x1560] sm:$0xff]
    %v2240 = vld [vmem:[#allocation5 + $0x1568] sm:$0xff]
    %v2241 = vld [vmem:[#allocation5 + $0x1570] sm:$0xff]
    %v2242 = vld [vmem:[#allocation5 + $0x1578] sm:$0xff]
    %v2243 = vld [vmem:[#allocation5 + $0x1580] sm:$0xff]
    %v2244 = vld [vmem:[#allocation5 + $0x1588] sm:$0xff]
    %v2245 = vld [vmem:[#allocation5 + $0x1590] sm:$0xff]
    %v2246 = vld [vmem:[#allocation5 + $0x1598] sm:$0xff]
    %v2247 = vld [vmem:[#allocation5 + $0x15a0] sm:$0xff]
    %v2248 = vld [vmem:[#allocation5 + $0x15a8] sm:$0xff]
    %v2249 = vld [vmem:[#allocation5 + $0x15b0] sm:$0xff]
    %v2250 = vld [vmem:[#allocation5 + $0x15b8] sm:$0xff]
    %v2251 = vld [vmem:[#allocation5 + $0x15c0] sm:$0xff]
    %v2252 = vld [vmem:[#allocation5 + $0x15c8] sm:$0xff]
    %v2253 = vld [vmem:[#allocation5 + $0x15d0] sm:$0xff]
    %v2254 = vld [vmem:[#allocation5 + $0x15d8] sm:$0xff]
    %v2255 = vld [vmem:[#allocation5 + $0x15e0] sm:$0xff]
    %v2256 = vld [vmem:[#allocation5 + $0x15e8] sm:$0xff]
    %v2257 = vld [vmem:[#allocation5 + $0x15f0] sm:$0xff]
    %v2258 = vld [vmem:[#allocation5 + $0x15f8] sm:$0xff]
    %v2259 = vld [vmem:[#allocation5 + $0x1600] sm:$0xff]
    %v2260 = vld [vmem:[#allocation5 + $0x1608] sm:$0xff]
    %v2261 = vld [vmem:[#allocation5 + $0x1610] sm:$0xff]
    %v2262 = vld [vmem:[#allocation5 + $0x1618] sm:$0xff]
    %v2263 = vld [vmem:[#allocation5 + $0x1620] sm:$0xff]
    %v2264 = vld [vmem:[#allocation5 + $0x1628] sm:$0xff]
    %v2265 = vld [vmem:[#allocation5 + $0x1630] sm:$0xff]
    %v2266 = vld [vmem:[#allocation5 + $0x1638] sm:$0xff]
    %v2267 = vld [vmem:[#allocation5 + $0x1640] sm:$0xff]
    %v2268 = vld [vmem:[#allocation5 + $0x1648] sm:$0xff]
    %v2269 = vld [vmem:[#allocation5 + $0x1650] sm:$0xff]
    %v2270 = vld [vmem:[#allocation5 + $0x1658] sm:$0xff]
    %v2271 = vld [vmem:[#allocation5 + $0x1660] sm:$0xff]
    %v2272 = vld [vmem:[#allocation5 + $0x1668] sm:$0xff]
    %v2273 = vld [vmem:[#allocation5 + $0x1670] sm:$0xff]
    %v2274 = vld [vmem:[#allocation5 + $0x1678] sm:$0xff]
    %v2275 = vld [vmem:[#allocation5 + $0x1680] sm:$0xff]
    %v2276 = vld [vmem:[#allocation5 + $0x1688] sm:$0xff]
    %v2277 = vld [vmem:[#allocation5 + $0x1690] sm:$0xff]
    %v2278 = vld [vmem:[#allocation5 + $0x1698] sm:$0xff]
    %v2279 = vld [vmem:[#allocation5 + $0x16a0] sm:$0xff]
    %v2280 = vld [vmem:[#allocation5 + $0x16a8] sm:$0xff]
    %v2281 = vld [vmem:[#allocation5 + $0x16b0] sm:$0xff]
    %v2282 = vld [vmem:[#allocation5 + $0x16b8] sm:$0xff]
    %v2283 = vld [vmem:[#allocation5 + $0x16c0] sm:$0xff]
    %v2284 = vld [vmem:[#allocation5 + $0x16c8] sm:$0xff]
    %v2285 = vld [vmem:[#allocation5 + $0x16d0] sm:$0xff]
    %v2286 = vld [vmem:[#allocation5 + $0x16d8] sm:$0xff]
    %v2287 = vld [vmem:[#allocation5 + $0x16e0] sm:$0xff]
    %v2288 = vld [vmem:[#allocation5 + $0x16e8] sm:$0xff]
    %v2289 = vld [vmem:[#allocation5 + $0x16f0] sm:$0xff]
    %v2290 = vld [vmem:[#allocation5 + $0x16f8] sm:$0xff]
    %v2291 = vld [vmem:[#allocation5 + $0x1700] sm:$0xff]
    %v2292 = vld [vmem:[#allocation5 + $0x1708] sm:$0xff]
    %v2293 = vld [vmem:[#allocation5 + $0x1710] sm:$0xff]
    %v2294 = vld [vmem:[#allocation5 + $0x1718] sm:$0xff]
    %v2295 = vld [vmem:[#allocation5 + $0x1720] sm:$0xff]
    %v2296 = vld [vmem:[#allocation5 + $0x1728] sm:$0xff]
    %v2297 = vld [vmem:[#allocation5 + $0x1730] sm:$0xff]
    %v2298 = vld [vmem:[#allocation5 + $0x1738] sm:$0xff]
    %v2299 = vld [vmem:[#allocation5 + $0x1740] sm:$0xff]
    %v2300 = vld [vmem:[#allocation5 + $0x1748] sm:$0xff]
    %v2301 = vld [vmem:[#allocation5 + $0x1750] sm:$0xff]
    %v2302 = vld [vmem:[#allocation5 + $0x1758] sm:$0xff]
    %v2303 = vld [vmem:[#allocation5 + $0x1760] sm:$0xff]
    %v2304 = vld [vmem:[#allocation5 + $0x1768] sm:$0xff]
    %v2305 = vld [vmem:[#allocation5 + $0x1770] sm:$0xff]
    %v2306 = vld [vmem:[#allocation5 + $0x1778] sm:$0xff]
    %v2307 = vld [vmem:[#allocation5 + $0x1780] sm:$0xff]
    %v2308 = vld [vmem:[#allocation5 + $0x1788] sm:$0xff]
    %v2309 = vld [vmem:[#allocation5 + $0x1790] sm:$0xff]
    %v2310 = vld [vmem:[#allocation5 + $0x1798] sm:$0xff]
    %v2311 = vld [vmem:[#allocation5 + $0x17a0] sm:$0xff]
    %v2312 = vld [vmem:[#allocation5 + $0x17a8] sm:$0xff]
    %v2313 = vld [vmem:[#allocation5 + $0x17b0] sm:$0xff]
    %v2314 = vld [vmem:[#allocation5 + $0x17b8] sm:$0xff]
    %v2315 = vld [vmem:[#allocation5 + $0x17c0] sm:$0xff]
    %v2316 = vld [vmem:[#allocation5 + $0x17c8] sm:$0xff]
    %v2317 = vld [vmem:[#allocation5 + $0x17d0] sm:$0xff]
    %v2318 = vld [vmem:[#allocation5 + $0x17d8] sm:$0xff]
    %v2319 = vld [vmem:[#allocation5 + $0x17e0] sm:$0xff]
    %v2320 = vld [vmem:[#allocation5 + $0x17e8] sm:$0xff]
    %v2321 = vld [vmem:[#allocation5 + $0x17f0] sm:$0xff]
    %v2322 = vld [vmem:[#allocation5 + $0x17f8] sm:$0xff]
    %v2323 = vld [vmem:[#allocation5 + $0x1800] sm:$0xff]
    %v2324 = vld [vmem:[#allocation5 + $0x1808] sm:$0xff]
    %v2325 = vld [vmem:[#allocation5 + $0x1810] sm:$0xff]
    %v2326 = vld [vmem:[#allocation5 + $0x1818] sm:$0xff]
    %v2327 = vld [vmem:[#allocation5 + $0x1820] sm:$0xff]
    %v2328 = vld [vmem:[#allocation5 + $0x1828] sm:$0xff]
    %v2329 = vld [vmem:[#allocation5 + $0x1830] sm:$0xff]
    %v2330 = vld [vmem:[#allocation5 + $0x1838] sm:$0xff]
    %v2331 = vld [vmem:[#allocation5 + $0x1840] sm:$0xff]
    %v2332 = vld [vmem:[#allocation5 + $0x1848] sm:$0xff]
    %v2333 = vld [vmem:[#allocation5 + $0x1850] sm:$0xff]
    %v2334 = vld [vmem:[#allocation5 + $0x1858] sm:$0xff]
    %v2335 = vld [vmem:[#allocation5 + $0x1860] sm:$0xff]
    %v2336 = vld [vmem:[#allocation5 + $0x1868] sm:$0xff]
    %v2337 = vld [vmem:[#allocation5 + $0x1870] sm:$0xff]
    %v2338 = vld [vmem:[#allocation5 + $0x1878] sm:$0xff]
    %v2339 = vld [vmem:[#allocation5 + $0x1880] sm:$0xff]
    %v2340 = vld [vmem:[#allocation5 + $0x1888] sm:$0xff]
    %v2341 = vld [vmem:[#allocation5 + $0x1890] sm:$0xff]
    %v2342 = vld [vmem:[#allocation5 + $0x1898] sm:$0xff]
    %v2343 = vld [vmem:[#allocation5 + $0x18a0] sm:$0xff]
    %v2344 = vld [vmem:[#allocation5 + $0x18a8] sm:$0xff]
    %v2345 = vld [vmem:[#allocation5 + $0x18b0] sm:$0xff]
    %v2346 = vld [vmem:[#allocation5 + $0x18b8] sm:$0xff]
    %v2347 = vld [vmem:[#allocation5 + $0x18c0] sm:$0xff]
    %v2348 = vld [vmem:[#allocation5 + $0x18c8] sm:$0xff]
    %v2349 = vld [vmem:[#allocation5 + $0x18d0] sm:$0xff]
    %v2350 = vld [vmem:[#allocation5 + $0x18d8] sm:$0xff]
    %v2351 = vld [vmem:[#allocation5 + $0x18e0] sm:$0xff]
    %v2352 = vld [vmem:[#allocation5 + $0x18e8] sm:$0xff]
    %v2353 = vld [vmem:[#allocation5 + $0x18f0] sm:$0xff]
    %v2354 = vld [vmem:[#allocation5 + $0x18f8] sm:$0xff]
    %v2355 = vld [vmem:[#allocation5 + $0x1900] sm:$0xff]
    %v2356 = vld [vmem:[#allocation5 + $0x1908] sm:$0xff]
    %v2357 = vld [vmem:[#allocation5 + $0x1910] sm:$0xff]
    %v2358 = vld [vmem:[#allocation5 + $0x1918] sm:$0xff]
    %v2359 = vld [vmem:[#allocation5 + $0x1920] sm:$0xff]
    %v2360 = vld [vmem:[#allocation5 + $0x1928] sm:$0xff]
    %v2361 = vld [vmem:[#allocation5 + $0x1930] sm:$0xff]
    %v2362 = vld [vmem:[#allocation5 + $0x1938] sm:$0xff]
    %v2363 = vld [vmem:[#allocation5 + $0x1940] sm:$0xff]
    %v2364 = vld [vmem:[#allocation5 + $0x1948] sm:$0xff]
    %v2365 = vld [vmem:[#allocation5 + $0x1950] sm:$0xff]
    %v2366 = vld [vmem:[#allocation5 + $0x1958] sm:$0xff]
    %v2367 = vld [vmem:[#allocation5 + $0x1960] sm:$0xff]
    %v2368 = vld [vmem:[#allocation5 + $0x1968] sm:$0xff]
    %v2369 = vld [vmem:[#allocation5 + $0x1970] sm:$0xff]
    %v2370 = vld [vmem:[#allocation5 + $0x1978] sm:$0xff]
    %v2371 = vld [vmem:[#allocation5 + $0x1980] sm:$0xff]
    %v2372 = vld [vmem:[#allocation5 + $0x1988] sm:$0xff]
    %v2373 = vld [vmem:[#allocation5 + $0x1990] sm:$0xff]
    %v2374 = vld [vmem:[#allocation5 + $0x1998] sm:$0xff]
    %v2375 = vld [vmem:[#allocation5 + $0x19a0] sm:$0xff]
    %v2376 = vld [vmem:[#allocation5 + $0x19a8] sm:$0xff]
    %v2377 = vld [vmem:[#allocation5 + $0x19b0] sm:$0xff]
    %v2378 = vld [vmem:[#allocation5 + $0x19b8] sm:$0xff]
    %v2379 = vld [vmem:[#allocation5 + $0x19c0] sm:$0xff]
    %v2380 = vld [vmem:[#allocation5 + $0x19c8] sm:$0xff]
    %v2381 = vld [vmem:[#allocation5 + $0x19d0] sm:$0xff]
    %v2382 = vld [vmem:[#allocation5 + $0x19d8] sm:$0xff]
    %v2383 = vld [vmem:[#allocation5 + $0x19e0] sm:$0xff]
    %v2384 = vld [vmem:[#allocation5 + $0x19e8] sm:$0xff]
    %v2385 = vld [vmem:[#allocation5 + $0x19f0] sm:$0xff]
    %v2386 = vld [vmem:[#allocation5 + $0x19f8] sm:$0xff]
    %v2387 = vld [vmem:[#allocation5 + $0x1a00] sm:$0xff]
    %v2388 = vld [vmem:[#allocation5 + $0x1a08] sm:$0xff]
    %v2389 = vld [vmem:[#allocation5 + $0x1a10] sm:$0xff]
    %v2390 = vld [vmem:[#allocation5 + $0x1a18] sm:$0xff]
    %v2391 = vld [vmem:[#allocation5 + $0x1a20] sm:$0xff]
    %v2392 = vld [vmem:[#allocation5 + $0x1a28] sm:$0xff]
    %v2393 = vld [vmem:[#allocation5 + $0x1a30] sm:$0xff]
    %v2394 = vld [vmem:[#allocation5 + $0x1a38] sm:$0xff]
    %v2395 = vld [vmem:[#allocation5 + $0x1a40] sm:$0xff]
    %v2396 = vld [vmem:[#allocation5 + $0x1a48] sm:$0xff]
    %v2397 = vld [vmem:[#allocation5 + $0x1a50] sm:$0xff]
    %v2398 = vld [vmem:[#allocation5 + $0x1a58] sm:$0xff]
    %v2399 = vld [vmem:[#allocation5 + $0x1a60] sm:$0xff]
    %v2400 = vld [vmem:[#allocation5 + $0x1a68] sm:$0xff]
    %v2401 = vld [vmem:[#allocation5 + $0x1a70] sm:$0xff]
    %v2402 = vld [vmem:[#allocation5 + $0x1a78] sm:$0xff]
    %v2403 = vld [vmem:[#allocation5 + $0x1a80] sm:$0xff]
    %v2404 = vld [vmem:[#allocation5 + $0x1a88] sm:$0xff]
    %v2405 = vld [vmem:[#allocation5 + $0x1a90] sm:$0xff]
    %v2406 = vld [vmem:[#allocation5 + $0x1a98] sm:$0xff]
    %v2407 = vld [vmem:[#allocation5 + $0x1aa0] sm:$0xff]
    %v2408 = vld [vmem:[#allocation5 + $0x1aa8] sm:$0xff]
    %v2409 = vld [vmem:[#allocation5 + $0x1ab0] sm:$0xff]
    %v2410 = vld [vmem:[#allocation5 + $0x1ab8] sm:$0xff]
    %v2411 = vld [vmem:[#allocation5 + $0x1ac0] sm:$0xff]
    %v2412 = vld [vmem:[#allocation5 + $0x1ac8] sm:$0xff]
    %v2413 = vld [vmem:[#allocation5 + $0x1ad0] sm:$0xff]
    %v2414 = vld [vmem:[#allocation5 + $0x1ad8] sm:$0xff]
    %v2415 = vld [vmem:[#allocation5 + $0x1ae0] sm:$0xff]
    %v2416 = vld [vmem:[#allocation5 + $0x1ae8] sm:$0xff]
    %v2417 = vld [vmem:[#allocation5 + $0x1af0] sm:$0xff]
    %v2418 = vld [vmem:[#allocation5 + $0x1af8] sm:$0xff]
    %v2419 = vld [vmem:[#allocation5 + $0x1b00] sm:$0xff]
    %v2420 = vld [vmem:[#allocation5 + $0x1b08] sm:$0xff]
    %v2421 = vld [vmem:[#allocation5 + $0x1b10] sm:$0xff]
    %v2422 = vld [vmem:[#allocation5 + $0x1b18] sm:$0xff]
    %v2423 = vld [vmem:[#allocation5 + $0x1b20] sm:$0xff]
    %v2424 = vld [vmem:[#allocation5 + $0x1b28] sm:$0xff]
    %v2425 = vld [vmem:[#allocation5 + $0x1b30] sm:$0xff]
    %v2426 = vld [vmem:[#allocation5 + $0x1b38] sm:$0xff]
    %v2427 = vld [vmem:[#allocation5 + $0x1b40] sm:$0xff]
    %v2428 = vld [vmem:[#allocation5 + $0x1b48] sm:$0xff]
    %v2429 = vld [vmem:[#allocation5 + $0x1b50] sm:$0xff]
    %v2430 = vld [vmem:[#allocation5 + $0x1b58] sm:$0xff]
    %v2431 = vld [vmem:[#allocation5 + $0x1b60] sm:$0xff]
    %v2432 = vld [vmem:[#allocation5 + $0x1b68] sm:$0xff]
    %v2433 = vld [vmem:[#allocation5 + $0x1b70] sm:$0xff]
    %v2434 = vld [vmem:[#allocation5 + $0x1b78] sm:$0xff]
    %v2435 = vld [vmem:[#allocation5 + $0x1b80] sm:$0xff]
    %v2436 = vld [vmem:[#allocation5 + $0x1b88] sm:$0xff]
    %v2437 = vld [vmem:[#allocation5 + $0x1b90] sm:$0xff]
    %v2438 = vld [vmem:[#allocation5 + $0x1b98] sm:$0xff]
    %v2439 = vld [vmem:[#allocation5 + $0x1ba0] sm:$0xff]
    %v2440 = vld [vmem:[#allocation5 + $0x1ba8] sm:$0xff]
    %v2441 = vld [vmem:[#allocation5 + $0x1bb0] sm:$0xff]
    %v2442 = vld [vmem:[#allocation5 + $0x1bb8] sm:$0xff]
    %v2443 = vld [vmem:[#allocation5 + $0x1bc0] sm:$0xff]
    %v2444 = vld [vmem:[#allocation5 + $0x1bc8] sm:$0xff]
    %v2445 = vld [vmem:[#allocation5 + $0x1bd0] sm:$0xff]
    %v2446 = vld [vmem:[#allocation5 + $0x1bd8] sm:$0xff]
    %v2447 = vld [vmem:[#allocation5 + $0x1be0] sm:$0xff]
    %v2448 = vld [vmem:[#allocation5 + $0x1be8] sm:$0xff]
    %v2449 = vld [vmem:[#allocation5 + $0x1bf0] sm:$0xff]
    %v2450 = vld [vmem:[#allocation5 + $0x1bf8] sm:$0xff]
    %v2451 = vld [vmem:[#allocation5 + $0x1c00] sm:$0xff]
    %v2452 = vld [vmem:[#allocation5 + $0x1c08] sm:$0xff]
    %v2453 = vld [vmem:[#allocation5 + $0x1c10] sm:$0xff]
    %v2454 = vld [vmem:[#allocation5 + $0x1c18] sm:$0xff]
    %v2455 = vld [vmem:[#allocation5 + $0x1c20] sm:$0xff]
    %v2456 = vld [vmem:[#allocation5 + $0x1c28] sm:$0xff]
    %v2457 = vld [vmem:[#allocation5 + $0x1c30] sm:$0xff]
    %v2458 = vld [vmem:[#allocation5 + $0x1c38] sm:$0xff]
    %v2459 = vld [vmem:[#allocation5 + $0x1c40] sm:$0xff]
    %v2460 = vld [vmem:[#allocation5 + $0x1c48] sm:$0xff]
    %v2461 = vld [vmem:[#allocation5 + $0x1c50] sm:$0xff]
    %v2462 = vld [vmem:[#allocation5 + $0x1c58] sm:$0xff]
    %v2463 = vld [vmem:[#allocation5 + $0x1c60] sm:$0xff]
    %v2464 = vld [vmem:[#allocation5 + $0x1c68] sm:$0xff]
    %v2465 = vld [vmem:[#allocation5 + $0x1c70] sm:$0xff]
    %v2466 = vld [vmem:[#allocation5 + $0x1c78] sm:$0xff]
    %v2467 = vld [vmem:[#allocation5 + $0x1c80] sm:$0xff]
    %v2468 = vld [vmem:[#allocation5 + $0x1c88] sm:$0xff]
    %v2469 = vld [vmem:[#allocation5 + $0x1c90] sm:$0xff]
    %v2470 = vld [vmem:[#allocation5 + $0x1c98] sm:$0xff]
    %v2471 = vld [vmem:[#allocation5 + $0x1ca0] sm:$0xff]
    %v2472 = vld [vmem:[#allocation5 + $0x1ca8] sm:$0xff]
    %v2473 = vld [vmem:[#allocation5 + $0x1cb0] sm:$0xff]
    %v2474 = vld [vmem:[#allocation5 + $0x1cb8] sm:$0xff]
    %v2475 = vld [vmem:[#allocation5 + $0x1cc0] sm:$0xff]
    %v2476 = vld [vmem:[#allocation5 + $0x1cc8] sm:$0xff]
    %v2477 = vld [vmem:[#allocation5 + $0x1cd0] sm:$0xff]
    %v2478 = vld [vmem:[#allocation5 + $0x1cd8] sm:$0xff]
    %v2479 = vld [vmem:[#allocation5 + $0x1ce0] sm:$0xff]
    %v2480 = vld [vmem:[#allocation5 + $0x1ce8] sm:$0xff]
    %v2481 = vld [vmem:[#allocation5 + $0x1cf0] sm:$0xff]
    %v2482 = vld [vmem:[#allocation5 + $0x1cf8] sm:$0xff]
    %v2483 = vld [vmem:[#allocation5 + $0x1d00] sm:$0xff]
    %v2484 = vld [vmem:[#allocation5 + $0x1d08] sm:$0xff]
    %v2485 = vld [vmem:[#allocation5 + $0x1d10] sm:$0xff]
    %v2486 = vld [vmem:[#allocation5 + $0x1d18] sm:$0xff]
    %v2487 = vld [vmem:[#allocation5 + $0x1d20] sm:$0xff]
    %v2488 = vld [vmem:[#allocation5 + $0x1d28] sm:$0xff]
    %v2489 = vld [vmem:[#allocation5 + $0x1d30] sm:$0xff]
    %v2490 = vld [vmem:[#allocation5 + $0x1d38] sm:$0xff]
    %v2491 = vld [vmem:[#allocation5 + $0x1d40] sm:$0xff]
    %v2492 = vld [vmem:[#allocation5 + $0x1d48] sm:$0xff]
    %v2493 = vld [vmem:[#allocation5 + $0x1d50] sm:$0xff]
    %v2494 = vld [vmem:[#allocation5 + $0x1d58] sm:$0xff]
    %v2495 = vld [vmem:[#allocation5 + $0x1d60] sm:$0xff]
    %v2496 = vld [vmem:[#allocation5 + $0x1d68] sm:$0xff]
    %v2497 = vld [vmem:[#allocation5 + $0x1d70] sm:$0xff]
    %v2498 = vld [vmem:[#allocation5 + $0x1d78] sm:$0xff]
    %v2499 = vld [vmem:[#allocation5 + $0x1d80] sm:$0xff]
    %v2500 = vld [vmem:[#allocation5 + $0x1d88] sm:$0xff]
    %v2501 = vld [vmem:[#allocation5 + $0x1d90] sm:$0xff]
    %v2502 = vld [vmem:[#allocation5 + $0x1d98] sm:$0xff]
    %v2503 = vld [vmem:[#allocation5 + $0x1da0] sm:$0xff]
    %v2504 = vld [vmem:[#allocation5 + $0x1da8] sm:$0xff]
    %v2505 = vld [vmem:[#allocation5 + $0x1db0] sm:$0xff]
    %v2506 = vld [vmem:[#allocation5 + $0x1db8] sm:$0xff]
    %v2507 = vld [vmem:[#allocation5 + $0x1dc0] sm:$0xff]
    %v2508 = vld [vmem:[#allocation5 + $0x1dc8] sm:$0xff]
    %v2509 = vld [vmem:[#allocation5 + $0x1dd0] sm:$0xff]
    %v2510 = vld [vmem:[#allocation5 + $0x1dd8] sm:$0xff]
    %v2511 = vld [vmem:[#allocation5 + $0x1de0] sm:$0xff]
    %v2512 = vld [vmem:[#allocation5 + $0x1de8] sm:$0xff]
    %v2513 = vld [vmem:[#allocation5 + $0x1df0] sm:$0xff]
    %v2514 = vld [vmem:[#allocation5 + $0x1df8] sm:$0xff]
    %v2515 = vld [vmem:[#allocation5 + $0x1e00] sm:$0xff]
    %v2516 = vld [vmem:[#allocation5 + $0x1e08] sm:$0xff]
    %v2517 = vld [vmem:[#allocation5 + $0x1e10] sm:$0xff]
    %v2518 = vld [vmem:[#allocation5 + $0x1e18] sm:$0xff]
    %v2519 = vld [vmem:[#allocation5 + $0x1e20] sm:$0xff]
    %v2520 = vld [vmem:[#allocation5 + $0x1e28] sm:$0xff]
    %v2521 = vld [vmem:[#allocation5 + $0x1e30] sm:$0xff]
    %v2522 = vld [vmem:[#allocation5 + $0x1e38] sm:$0xff]
    %v2523 = vld [vmem:[#allocation5 + $0x1e40] sm:$0xff]
    %v2524 = vld [vmem:[#allocation5 + $0x1e48] sm:$0xff]
    %v2525 = vld [vmem:[#allocation5 + $0x1e50] sm:$0xff]
    %v2526 = vld [vmem:[#allocation5 + $0x1e58] sm:$0xff]
    %v2527 = vld [vmem:[#allocation5 + $0x1e60] sm:$0xff]
    %v2528 = vld [vmem:[#allocation5 + $0x1e68] sm:$0xff]
    %v2529 = vld [vmem:[#allocation5 + $0x1e70] sm:$0xff]
    %v2530 = vld [vmem:[#allocation5 + $0x1e78] sm:$0xff]
    %v2531 = vld [vmem:[#allocation5 + $0x1e80] sm:$0xff]
    %v2532 = vld [vmem:[#allocation5 + $0x1e88] sm:$0xff]
    %v2533 = vld [vmem:[#allocation5 + $0x1e90] sm:$0xff]
    %v2534 = vld [vmem:[#allocation5 + $0x1e98] sm:$0xff]
    %v2535 = vld [vmem:[#allocation5 + $0x1ea0] sm:$0xff]
    %v2536 = vld [vmem:[#allocation5 + $0x1ea8] sm:$0xff]
    %v2537 = vld [vmem:[#allocation5 + $0x1eb0] sm:$0xff]
    %v2538 = vld [vmem:[#allocation5 + $0x1eb8] sm:$0xff]
    %v2539 = vld [vmem:[#allocation5 + $0x1ec0] sm:$0xff]
    %v2540 = vld [vmem:[#allocation5 + $0x1ec8] sm:$0xff]
    %v2541 = vld [vmem:[#allocation5 + $0x1ed0] sm:$0xff]
    %v2542 = vld [vmem:[#allocation5 + $0x1ed8] sm:$0xff]
    %v2543 = vld [vmem:[#allocation5 + $0x1ee0] sm:$0xff]
    %v2544 = vld [vmem:[#allocation5 + $0x1ee8] sm:$0xff]
    %v2545 = vld [vmem:[#allocation5 + $0x1ef0] sm:$0xff]
    %v2546 = vld [vmem:[#allocation5 + $0x1ef8] sm:$0xff]
    %v2547 = vld [vmem:[#allocation5 + $0x1f00] sm:$0xff]
    %v2548 = vld [vmem:[#allocation5 + $0x1f08] sm:$0xff]
    %v2549 = vld [vmem:[#allocation5 + $0x1f10] sm:$0xff]
    %v2550 = vld [vmem:[#allocation5 + $0x1f18] sm:$0xff]
    %v2551 = vld [vmem:[#allocation5 + $0x1f20] sm:$0xff]
    %v2552 = vld [vmem:[#allocation5 + $0x1f28] sm:$0xff]
    %v2553 = vld [vmem:[#allocation5 + $0x1f30] sm:$0xff]
    %v2554 = vld [vmem:[#allocation5 + $0x1f38] sm:$0xff]
    %v2555 = vld [vmem:[#allocation5 + $0x1f40] sm:$0xff]
    %v2556 = vld [vmem:[#allocation5 + $0x1f48] sm:$0xff]
    %v2557 = vld [vmem:[#allocation5 + $0x1f50] sm:$0xff]
    %v2558 = vld [vmem:[#allocation5 + $0x1f58] sm:$0xff]
    %v2559 = vld [vmem:[#allocation5 + $0x1f60] sm:$0xff]
    %v2560 = vld [vmem:[#allocation5 + $0x1f68] sm:$0xff]
    %v2561 = vld [vmem:[#allocation5 + $0x1f70] sm:$0xff]
    %v2562 = vld [vmem:[#allocation5 + $0x1f78] sm:$0xff]
    %v2563 = vld [vmem:[#allocation5 + $0x1f80] sm:$0xff]
    %v2564 = vld [vmem:[#allocation5 + $0x1f88] sm:$0xff]
    %v2565 = vld [vmem:[#allocation5 + $0x1f90] sm:$0xff]
    %v2566 = vld [vmem:[#allocation5 + $0x1f98] sm:$0xff]
    %v2567 = vld [vmem:[#allocation5 + $0x1fa0] sm:$0xff]
    %v2568 = vld [vmem:[#allocation5 + $0x1fa8] sm:$0xff]
    %v2569 = vld [vmem:[#allocation5 + $0x1fb0] sm:$0xff]
    %v2570 = vld [vmem:[#allocation5 + $0x1fb8] sm:$0xff]
    %v2571 = vld [vmem:[#allocation5 + $0x1fc0] sm:$0xff]
    %v2572 = vld [vmem:[#allocation5 + $0x1fc8] sm:$0xff]
    %v2573 = vld [vmem:[#allocation5 + $0x1fd0] sm:$0xff]
    %v2574 = vld [vmem:[#allocation5 + $0x1fd8] sm:$0xff]
    %v2575 = vld [vmem:[#allocation5 + $0x1fe0] sm:$0xff]
    %v2576 = vld [vmem:[#allocation5 + $0x1fe8] sm:$0xff]
    %v2577 = vld [vmem:[#allocation5 + $0x1ff0] sm:$0xff]
    %v2578 = vld [vmem:[#allocation5 + $0x1ff8] sm:$0xff]
    %v2579 = vld [vmem:[#allocation25] sm:$0xff]
    %v2580 = vld [vmem:[#allocation25 + $0x8] sm:$0xff]
    %v2583 = vperm.slane %v2579, 0
    %v2584 = vperm.slane %v2579, 1
    %v2585 = vperm.slane %v2579, 2
    %v2586 = vperm.slane %v2579, 3
    %v2587 = vperm.slane %v2579, 4
    %v2588 = vperm.slane %v2579, 5
    %v2589 = vperm.slane %v2579, 6
    %v2590 = vperm.slane %v2579, 7
    %v2591 = vperm.slane %v2580, 0
    %v2592 = vperm.slane %v2580, 1
    %v2593 = vperm.slane %v2580, 2
    %v2594 = vperm.slane %v2580, 3
    %v2595 = vperm.slane %v2580, 4
    %v2596 = vperm.slane %v2580, 5
    %v2597 = vperm.slane %v2580, 6
    %v2598 = vperm.slane %v2580, 7
    %v3639 = vunpack.c.l.b16 %v1555
    %v3640 = vunpack.c.h.b16 %v1555
    %v3641 = vunpack.c.l.b16 %v1556
    %v3642 = vunpack.c.h.b16 %v1556
    %v3643 = vunpack.c.l.b16 %v1557
    %v3644 = vunpack.c.h.b16 %v1557
    %v3645 = vunpack.c.l.b16 %v1558
    %v3646 = vunpack.c.h.b16 %v1558
    %v3647 = vunpack.c.l.b16 %v1559
    %v3648 = vunpack.c.h.b16 %v1559
    %v3649 = vunpack.c.l.b16 %v1560
    %v3650 = vunpack.c.h.b16 %v1560
    %v3651 = vunpack.c.l.b16 %v1561
    %v3652 = vunpack.c.h.b16 %v1561
    %v3653 = vunpack.c.l.b16 %v1562
    %v3654 = vunpack.c.h.b16 %v1562
    %v3655 = vunpack.c.l.b16 %v1563
    %v3656 = vunpack.c.h.b16 %v1563
    %v3657 = vunpack.c.l.b16 %v1564
    %v3658 = vunpack.c.h.b16 %v1564
    %v3659 = vunpack.c.l.b16 %v1565
    %v3660 = vunpack.c.h.b16 %v1565
    %v3661 = vunpack.c.l.b16 %v1566
    %v3662 = vunpack.c.h.b16 %v1566
    %v3663 = vunpack.c.l.b16 %v1567
    %v3664 = vunpack.c.h.b16 %v1567
    %v3665 = vunpack.c.l.b16 %v1568
    %v3666 = vunpack.c.h.b16 %v1568
    %v3667 = vunpack.c.l.b16 %v1569
    %v3668 = vunpack.c.h.b16 %v1569
    %v3669 = vunpack.c.l.b16 %v1570
    %v3670 = vunpack.c.h.b16 %v1570
    %v3671 = vunpack.c.l.b16 %v1571
    %v3672 = vunpack.c.h.b16 %v1571
    %v3673 = vunpack.c.l.b16 %v1572
    %v3674 = vunpack.c.h.b16 %v1572
    %v3675 = vunpack.c.l.b16 %v1573
    %v3676 = vunpack.c.h.b16 %v1573
    %v3677 = vunpack.c.l.b16 %v1574
    %v3678 = vunpack.c.h.b16 %v1574
    %v3679 = vunpack.c.l.b16 %v1575
    %v3680 = vunpack.c.h.b16 %v1575
    %v3681 = vunpack.c.l.b16 %v1576
    %v3682 = vunpack.c.h.b16 %v1576
    %v3683 = vunpack.c.l.b16 %v1577
    %v3684 = vunpack.c.h.b16 %v1577
    %v3685 = vunpack.c.l.b16 %v1578
    %v3686 = vunpack.c.h.b16 %v1578
    %v3687 = vunpack.c.l.b16 %v1579
    %v3688 = vunpack.c.h.b16 %v1579
    %v3689 = vunpack.c.l.b16 %v1580
    %v3690 = vunpack.c.h.b16 %v1580
    %v3691 = vunpack.c.l.b16 %v1581
    %v3692 = vunpack.c.h.b16 %v1581
    %v3693 = vunpack.c.l.b16 %v1582
    %v3694 = vunpack.c.h.b16 %v1582
    %v3695 = vunpack.c.l.b16 %v1583
    %v3696 = vunpack.c.h.b16 %v1583
    %v3697 = vunpack.c.l.b16 %v1584
    %v3698 = vunpack.c.h.b16 %v1584
    %v3699 = vunpack.c.l.b16 %v1585
    %v3700 = vunpack.c.h.b16 %v1585
    %v3701 = vunpack.c.l.b16 %v1586
    %v3702 = vunpack.c.h.b16 %v1586
    %v3703 = vunpack.c.l.b16 %v1587
    %v3704 = vunpack.c.h.b16 %v1587
    %v3705 = vunpack.c.l.b16 %v1588
    %v3706 = vunpack.c.h.b16 %v1588
    %v3707 = vunpack.c.l.b16 %v1589
    %v3708 = vunpack.c.h.b16 %v1589
    %v3709 = vunpack.c.l.b16 %v1590
    %v3710 = vunpack.c.h.b16 %v1590
    %v3711 = vunpack.c.l.b16 %v1591
    %v3712 = vunpack.c.h.b16 %v1591
    %v3713 = vunpack.c.l.b16 %v1592
    %v3714 = vunpack.c.h.b16 %v1592
    %v3715 = vunpack.c.l.b16 %v1593
    %v3716 = vunpack.c.h.b16 %v1593
    %v3717 = vunpack.c.l.b16 %v1594
    %v3718 = vunpack.c.h.b16 %v1594
    %v3719 = vunpack.c.l.b16 %v1595
    %v3720 = vunpack.c.h.b16 %v1595
    %v3721 = vunpack.c.l.b16 %v1596
    %v3722 = vunpack.c.h.b16 %v1596
    %v3723 = vunpack.c.l.b16 %v1597
    %v3724 = vunpack.c.h.b16 %v1597
    %v3725 = vunpack.c.l.b16 %v1598
    %v3726 = vunpack.c.h.b16 %v1598
    %v3727 = vunpack.c.l.b16 %v1599
    %v3728 = vunpack.c.h.b16 %v1599
    %v3729 = vunpack.c.l.b16 %v1600
    %v3730 = vunpack.c.h.b16 %v1600
    %v3731 = vunpack.c.l.b16 %v1601
    %v3732 = vunpack.c.h.b16 %v1601
    %v3733 = vunpack.c.l.b16 %v1602
    %v3734 = vunpack.c.h.b16 %v1602
    %v3735 = vunpack.c.l.b16 %v1603
    %v3736 = vunpack.c.h.b16 %v1603
    %v3737 = vunpack.c.l.b16 %v1604
    %v3738 = vunpack.c.h.b16 %v1604
    %v3739 = vunpack.c.l.b16 %v1605
    %v3740 = vunpack.c.h.b16 %v1605
    %v3741 = vunpack.c.l.b16 %v1606
    %v3742 = vunpack.c.h.b16 %v1606
    %v3743 = vunpack.c.l.b16 %v1607
    %v3744 = vunpack.c.h.b16 %v1607
    %v3745 = vunpack.c.l.b16 %v1608
    %v3746 = vunpack.c.h.b16 %v1608
    %v3747 = vunpack.c.l.b16 %v1609
    %v3748 = vunpack.c.h.b16 %v1609
    %v3749 = vunpack.c.l.b16 %v1610
    %v3750 = vunpack.c.h.b16 %v1610
    %v3751 = vunpack.c.l.b16 %v1611
    %v3752 = vunpack.c.h.b16 %v1611
    %v3753 = vunpack.c.l.b16 %v1612
    %v3754 = vunpack.c.h.b16 %v1612
    %v3755 = vunpack.c.l.b16 %v1613
    %v3756 = vunpack.c.h.b16 %v1613
    %v3757 = vunpack.c.l.b16 %v1614
    %v3758 = vunpack.c.h.b16 %v1614
    %v3759 = vunpack.c.l.b16 %v1615
    %v3760 = vunpack.c.h.b16 %v1615
    %v3761 = vunpack.c.l.b16 %v1616
    %v3762 = vunpack.c.h.b16 %v1616
    %v3763 = vunpack.c.l.b16 %v1617
    %v3764 = vunpack.c.h.b16 %v1617
    %v3765 = vunpack.c.l.b16 %v1618
    %v3766 = vunpack.c.h.b16 %v1618
    %v3767 = vunpack.c.l.b16 %v1619
    %v3768 = vunpack.c.h.b16 %v1619
    %v3769 = vunpack.c.l.b16 %v1620
    %v3770 = vunpack.c.h.b16 %v1620
    %v3771 = vunpack.c.l.b16 %v1621
    %v3772 = vunpack.c.h.b16 %v1621
    %v3773 = vunpack.c.l.b16 %v1622
    %v3774 = vunpack.c.h.b16 %v1622
    %v3775 = vunpack.c.l.b16 %v1623
    %v3776 = vunpack.c.h.b16 %v1623
    %v3777 = vunpack.c.l.b16 %v1624
    %v3778 = vunpack.c.h.b16 %v1624
    %v3779 = vunpack.c.l.b16 %v1625
    %v3780 = vunpack.c.h.b16 %v1625
    %v3781 = vunpack.c.l.b16 %v1626
    %v3782 = vunpack.c.h.b16 %v1626
    %v3783 = vunpack.c.l.b16 %v1627
    %v3784 = vunpack.c.h.b16 %v1627
    %v3785 = vunpack.c.l.b16 %v1628
    %v3786 = vunpack.c.h.b16 %v1628
    %v3787 = vunpack.c.l.b16 %v1629
    %v3788 = vunpack.c.h.b16 %v1629
    %v3789 = vunpack.c.l.b16 %v1630
    %v3790 = vunpack.c.h.b16 %v1630
    %v3791 = vunpack.c.l.b16 %v1631
    %v3792 = vunpack.c.h.b16 %v1631
    %v3793 = vunpack.c.l.b16 %v1632
    %v3794 = vunpack.c.h.b16 %v1632
    %v3795 = vunpack.c.l.b16 %v1633
    %v3796 = vunpack.c.h.b16 %v1633
    %v3797 = vunpack.c.l.b16 %v1634
    %v3798 = vunpack.c.h.b16 %v1634
    %v3799 = vunpack.c.l.b16 %v1635
    %v3800 = vunpack.c.h.b16 %v1635
    %v3801 = vunpack.c.l.b16 %v1636
    %v3802 = vunpack.c.h.b16 %v1636
    %v3803 = vunpack.c.l.b16 %v1637
    %v3804 = vunpack.c.h.b16 %v1637
    %v3805 = vunpack.c.l.b16 %v1638
    %v3806 = vunpack.c.h.b16 %v1638
    %v3807 = vunpack.c.l.b16 %v1639
    %v3808 = vunpack.c.h.b16 %v1639
    %v3809 = vunpack.c.l.b16 %v1640
    %v3810 = vunpack.c.h.b16 %v1640
    %v3811 = vunpack.c.l.b16 %v1641
    %v3812 = vunpack.c.h.b16 %v1641
    %v3813 = vunpack.c.l.b16 %v1642
    %v3814 = vunpack.c.h.b16 %v1642
    %v3815 = vunpack.c.l.b16 %v1643
    %v3816 = vunpack.c.h.b16 %v1643
    %v3817 = vunpack.c.l.b16 %v1644
    %v3818 = vunpack.c.h.b16 %v1644
    %v3819 = vunpack.c.l.b16 %v1645
    %v3820 = vunpack.c.h.b16 %v1645
    %v3821 = vunpack.c.l.b16 %v1646
    %v3822 = vunpack.c.h.b16 %v1646
    %v3823 = vunpack.c.l.b16 %v1647
    %v3824 = vunpack.c.h.b16 %v1647
    %v3825 = vunpack.c.l.b16 %v1648
    %v3826 = vunpack.c.h.b16 %v1648
    %v3827 = vunpack.c.l.b16 %v1649
    %v3828 = vunpack.c.h.b16 %v1649
    %v3829 = vunpack.c.l.b16 %v1650
    %v3830 = vunpack.c.h.b16 %v1650
    %v3831 = vunpack.c.l.b16 %v1651
    %v3832 = vunpack.c.h.b16 %v1651
    %v3833 = vunpack.c.l.b16 %v1652
    %v3834 = vunpack.c.h.b16 %v1652
    %v3835 = vunpack.c.l.b16 %v1653
    %v3836 = vunpack.c.h.b16 %v1653
    %v3837 = vunpack.c.l.b16 %v1654
    %v3838 = vunpack.c.h.b16 %v1654
    %v3839 = vunpack.c.l.b16 %v1655
    %v3840 = vunpack.c.h.b16 %v1655
    %v3841 = vunpack.c.l.b16 %v1656
    %v3842 = vunpack.c.h.b16 %v1656
    %v3843 = vunpack.c.l.b16 %v1657
    %v3844 = vunpack.c.h.b16 %v1657
    %v3845 = vunpack.c.l.b16 %v1658
    %v3846 = vunpack.c.h.b16 %v1658
    %v3847 = vunpack.c.l.b16 %v1659
    %v3848 = vunpack.c.h.b16 %v1659
    %v3849 = vunpack.c.l.b16 %v1660
    %v3850 = vunpack.c.h.b16 %v1660
    %v3851 = vunpack.c.l.b16 %v1661
    %v3852 = vunpack.c.h.b16 %v1661
    %v3853 = vunpack.c.l.b16 %v1662
    %v3854 = vunpack.c.h.b16 %v1662
    %v3855 = vunpack.c.l.b16 %v1663
    %v3856 = vunpack.c.h.b16 %v1663
    %v3857 = vunpack.c.l.b16 %v1664
    %v3858 = vunpack.c.h.b16 %v1664
    %v3859 = vunpack.c.l.b16 %v1665
    %v3860 = vunpack.c.h.b16 %v1665
    %v3861 = vunpack.c.l.b16 %v1666
    %v3862 = vunpack.c.h.b16 %v1666
    %v3863 = vunpack.c.l.b16 %v1667
    %v3864 = vunpack.c.h.b16 %v1667
    %v3865 = vunpack.c.l.b16 %v1668
    %v3866 = vunpack.c.h.b16 %v1668
    %v3867 = vunpack.c.l.b16 %v1669
    %v3868 = vunpack.c.h.b16 %v1669
    %v3869 = vunpack.c.l.b16 %v1670
    %v3870 = vunpack.c.h.b16 %v1670
    %v3871 = vunpack.c.l.b16 %v1671
    %v3872 = vunpack.c.h.b16 %v1671
    %v3873 = vunpack.c.l.b16 %v1672
    %v3874 = vunpack.c.h.b16 %v1672
    %v3875 = vunpack.c.l.b16 %v1673
    %v3876 = vunpack.c.h.b16 %v1673
    %v3877 = vunpack.c.l.b16 %v1674
    %v3878 = vunpack.c.h.b16 %v1674
    %v3879 = vunpack.c.l.b16 %v1675
    %v3880 = vunpack.c.h.b16 %v1675
    %v3881 = vunpack.c.l.b16 %v1676
    %v3882 = vunpack.c.h.b16 %v1676
    %v3883 = vunpack.c.l.b16 %v1677
    %v3884 = vunpack.c.h.b16 %v1677
    %v3885 = vunpack.c.l.b16 %v1678
    %v3886 = vunpack.c.h.b16 %v1678
    %v3887 = vunpack.c.l.b16 %v1679
    %v3888 = vunpack.c.h.b16 %v1679
    %v3889 = vunpack.c.l.b16 %v1680
    %v3890 = vunpack.c.h.b16 %v1680
    %v3891 = vunpack.c.l.b16 %v1681
    %v3892 = vunpack.c.h.b16 %v1681
    %v3893 = vunpack.c.l.b16 %v1682
    %v3894 = vunpack.c.h.b16 %v1682
    %v3895 = vunpack.c.l.b16 %v1683
    %v3896 = vunpack.c.h.b16 %v1683
    %v3897 = vunpack.c.l.b16 %v1684
    %v3898 = vunpack.c.h.b16 %v1684
    %v3899 = vunpack.c.l.b16 %v1685
    %v3900 = vunpack.c.h.b16 %v1685
    %v3901 = vunpack.c.l.b16 %v1686
    %v3902 = vunpack.c.h.b16 %v1686
    %v3903 = vunpack.c.l.b16 %v1687
    %v3904 = vunpack.c.h.b16 %v1687
    %v3905 = vunpack.c.l.b16 %v1688
    %v3906 = vunpack.c.h.b16 %v1688
    %v3907 = vunpack.c.l.b16 %v1689
    %v3908 = vunpack.c.h.b16 %v1689
    %v3909 = vunpack.c.l.b16 %v1690
    %v3910 = vunpack.c.h.b16 %v1690
    %v3911 = vunpack.c.l.b16 %v1691
    %v3912 = vunpack.c.h.b16 %v1691
    %v3913 = vunpack.c.l.b16 %v1692
    %v3914 = vunpack.c.h.b16 %v1692
    %v3915 = vunpack.c.l.b16 %v1693
    %v3916 = vunpack.c.h.b16 %v1693
    %v3917 = vunpack.c.l.b16 %v1694
    %v3918 = vunpack.c.h.b16 %v1694
    %v3919 = vunpack.c.l.b16 %v1695
    %v3920 = vunpack.c.h.b16 %v1695
    %v3921 = vunpack.c.l.b16 %v1696
    %v3922 = vunpack.c.h.b16 %v1696
    %v3923 = vunpack.c.l.b16 %v1697
    %v3924 = vunpack.c.h.b16 %v1697
    %v3925 = vunpack.c.l.b16 %v1698
    %v3926 = vunpack.c.h.b16 %v1698
    %v3927 = vunpack.c.l.b16 %v1699
    %v3928 = vunpack.c.h.b16 %v1699
    %v3929 = vunpack.c.l.b16 %v1700
    %v3930 = vunpack.c.h.b16 %v1700
    %v3931 = vunpack.c.l.b16 %v1701
    %v3932 = vunpack.c.h.b16 %v1701
    %v3933 = vunpack.c.l.b16 %v1702
    %v3934 = vunpack.c.h.b16 %v1702
    %v3935 = vunpack.c.l.b16 %v1703
    %v3936 = vunpack.c.h.b16 %v1703
    %v3937 = vunpack.c.l.b16 %v1704
    %v3938 = vunpack.c.h.b16 %v1704
    %v3939 = vunpack.c.l.b16 %v1705
    %v3940 = vunpack.c.h.b16 %v1705
    %v3941 = vunpack.c.l.b16 %v1706
    %v3942 = vunpack.c.h.b16 %v1706
    %v3943 = vunpack.c.l.b16 %v1707
    %v3944 = vunpack.c.h.b16 %v1707
    %v3945 = vunpack.c.l.b16 %v1708
    %v3946 = vunpack.c.h.b16 %v1708
    %v3947 = vunpack.c.l.b16 %v1709
    %v3948 = vunpack.c.h.b16 %v1709
    %v3949 = vunpack.c.l.b16 %v1710
    %v3950 = vunpack.c.h.b16 %v1710
    %v3951 = vunpack.c.l.b16 %v1711
    %v3952 = vunpack.c.h.b16 %v1711
    %v3953 = vunpack.c.l.b16 %v1712
    %v3954 = vunpack.c.h.b16 %v1712
    %v3955 = vunpack.c.l.b16 %v1713
    %v3956 = vunpack.c.h.b16 %v1713
    %v3957 = vunpack.c.l.b16 %v1714
    %v3958 = vunpack.c.h.b16 %v1714
    %v3959 = vunpack.c.l.b16 %v1715
    %v3960 = vunpack.c.h.b16 %v1715
    %v3961 = vunpack.c.l.b16 %v1716
    %v3962 = vunpack.c.h.b16 %v1716
    %v3963 = vunpack.c.l.b16 %v1717
    %v3964 = vunpack.c.h.b16 %v1717
    %v3965 = vunpack.c.l.b16 %v1718
    %v3966 = vunpack.c.h.b16 %v1718
    %v3967 = vunpack.c.l.b16 %v1719
    %v3968 = vunpack.c.h.b16 %v1719
    %v3969 = vunpack.c.l.b16 %v1720
    %v3970 = vunpack.c.h.b16 %v1720
    %v3971 = vunpack.c.l.b16 %v1721
    %v3972 = vunpack.c.h.b16 %v1721
    %v3973 = vunpack.c.l.b16 %v1722
    %v3974 = vunpack.c.h.b16 %v1722
    %v3975 = vunpack.c.l.b16 %v1723
    %v3976 = vunpack.c.h.b16 %v1723
    %v3977 = vunpack.c.l.b16 %v1724
    %v3978 = vunpack.c.h.b16 %v1724
    %v3979 = vunpack.c.l.b16 %v1725
    %v3980 = vunpack.c.h.b16 %v1725
    %v3981 = vunpack.c.l.b16 %v1726
    %v3982 = vunpack.c.h.b16 %v1726
    %v3983 = vunpack.c.l.b16 %v1727
    %v3984 = vunpack.c.h.b16 %v1727
    %v3985 = vunpack.c.l.b16 %v1728
    %v3986 = vunpack.c.h.b16 %v1728
    %v3987 = vunpack.c.l.b16 %v1729
    %v3988 = vunpack.c.h.b16 %v1729
    %v3989 = vunpack.c.l.b16 %v1730
    %v3990 = vunpack.c.h.b16 %v1730
    %v3991 = vunpack.c.l.b16 %v1731
    %v3992 = vunpack.c.h.b16 %v1731
    %v3993 = vunpack.c.l.b16 %v1732
    %v3994 = vunpack.c.h.b16 %v1732
    %v3995 = vunpack.c.l.b16 %v1733
    %v3996 = vunpack.c.h.b16 %v1733
    %v3997 = vunpack.c.l.b16 %v1734
    %v3998 = vunpack.c.h.b16 %v1734
    %v3999 = vunpack.c.l.b16 %v1735
    %v4000 = vunpack.c.h.b16 %v1735
    %v4001 = vunpack.c.l.b16 %v1736
    %v4002 = vunpack.c.h.b16 %v1736
    %v4003 = vunpack.c.l.b16 %v1737
    %v4004 = vunpack.c.h.b16 %v1737
    %v4005 = vunpack.c.l.b16 %v1738
    %v4006 = vunpack.c.h.b16 %v1738
    %v4007 = vunpack.c.l.b16 %v1739
    %v4008 = vunpack.c.h.b16 %v1739
    %v4009 = vunpack.c.l.b16 %v1740
    %v4010 = vunpack.c.h.b16 %v1740
    %v4011 = vunpack.c.l.b16 %v1741
    %v4012 = vunpack.c.h.b16 %v1741
    %v4013 = vunpack.c.l.b16 %v1742
    %v4014 = vunpack.c.h.b16 %v1742
    %v4015 = vunpack.c.l.b16 %v1743
    %v4016 = vunpack.c.h.b16 %v1743
    %v4017 = vunpack.c.l.b16 %v1744
    %v4018 = vunpack.c.h.b16 %v1744
    %v4019 = vunpack.c.l.b16 %v1745
    %v4020 = vunpack.c.h.b16 %v1745
    %v4021 = vunpack.c.l.b16 %v1746
    %v4022 = vunpack.c.h.b16 %v1746
    %v4023 = vunpack.c.l.b16 %v1747
    %v4024 = vunpack.c.h.b16 %v1747
    %v4025 = vunpack.c.l.b16 %v1748
    %v4026 = vunpack.c.h.b16 %v1748
    %v4027 = vunpack.c.l.b16 %v1749
    %v4028 = vunpack.c.h.b16 %v1749
    %v4029 = vunpack.c.l.b16 %v1750
    %v4030 = vunpack.c.h.b16 %v1750
    %v4031 = vunpack.c.l.b16 %v1751
    %v4032 = vunpack.c.h.b16 %v1751
    %v4033 = vunpack.c.l.b16 %v1752
    %v4034 = vunpack.c.h.b16 %v1752
    %v4035 = vunpack.c.l.b16 %v1753
    %v4036 = vunpack.c.h.b16 %v1753
    %v4037 = vunpack.c.l.b16 %v1754
    %v4038 = vunpack.c.h.b16 %v1754
    %v4039 = vunpack.c.l.b16 %v1755
    %v4040 = vunpack.c.h.b16 %v1755
    %v4041 = vunpack.c.l.b16 %v1756
    %v4042 = vunpack.c.h.b16 %v1756
    %v4043 = vunpack.c.l.b16 %v1757
    %v4044 = vunpack.c.h.b16 %v1757
    %v4045 = vunpack.c.l.b16 %v1758
    %v4046 = vunpack.c.h.b16 %v1758
    %v4047 = vunpack.c.l.b16 %v1759
    %v4048 = vunpack.c.h.b16 %v1759
    %v4049 = vunpack.c.l.b16 %v1760
    %v4050 = vunpack.c.h.b16 %v1760
    %v4051 = vunpack.c.l.b16 %v1761
    %v4052 = vunpack.c.h.b16 %v1761
    %v4053 = vunpack.c.l.b16 %v1762
    %v4054 = vunpack.c.h.b16 %v1762
    %v4055 = vunpack.c.l.b16 %v1763
    %v4056 = vunpack.c.h.b16 %v1763
    %v4057 = vunpack.c.l.b16 %v1764
    %v4058 = vunpack.c.h.b16 %v1764
    %v4059 = vunpack.c.l.b16 %v1765
    %v4060 = vunpack.c.h.b16 %v1765
    %v4061 = vunpack.c.l.b16 %v1766
    %v4062 = vunpack.c.h.b16 %v1766
    %v4063 = vunpack.c.l.b16 %v1767
    %v4064 = vunpack.c.h.b16 %v1767
    %v4065 = vunpack.c.l.b16 %v1768
    %v4066 = vunpack.c.h.b16 %v1768
    %v4067 = vunpack.c.l.b16 %v1769
    %v4068 = vunpack.c.h.b16 %v1769
    %v4069 = vunpack.c.l.b16 %v1770
    %v4070 = vunpack.c.h.b16 %v1770
    %v4071 = vunpack.c.l.b16 %v1771
    %v4072 = vunpack.c.h.b16 %v1771
    %v4073 = vunpack.c.l.b16 %v1772
    %v4074 = vunpack.c.h.b16 %v1772
    %v4075 = vunpack.c.l.b16 %v1773
    %v4076 = vunpack.c.h.b16 %v1773
    %v4077 = vunpack.c.l.b16 %v1774
    %v4078 = vunpack.c.h.b16 %v1774
    %v4079 = vunpack.c.l.b16 %v1775
    %v4080 = vunpack.c.h.b16 %v1775
    %v4081 = vunpack.c.l.b16 %v1776
    %v4082 = vunpack.c.h.b16 %v1776
    %v4083 = vunpack.c.l.b16 %v1777
    %v4084 = vunpack.c.h.b16 %v1777
    %v4085 = vunpack.c.l.b16 %v1778
    %v4086 = vunpack.c.h.b16 %v1778
    %v4087 = vunpack.c.l.b16 %v1779
    %v4088 = vunpack.c.h.b16 %v1779
    %v4089 = vunpack.c.l.b16 %v1780
    %v4090 = vunpack.c.h.b16 %v1780
    %v4091 = vunpack.c.l.b16 %v1781
    %v4092 = vunpack.c.h.b16 %v1781
    %v4093 = vunpack.c.l.b16 %v1782
    %v4094 = vunpack.c.h.b16 %v1782
    %v4095 = vunpack.c.l.b16 %v1783
    %v4096 = vunpack.c.h.b16 %v1783
    %v4097 = vunpack.c.l.b16 %v1784
    %v4098 = vunpack.c.h.b16 %v1784
    %v4099 = vunpack.c.l.b16 %v1785
    %v4100 = vunpack.c.h.b16 %v1785
    %v4101 = vunpack.c.l.b16 %v1786
    %v4102 = vunpack.c.h.b16 %v1786
    %v4103 = vunpack.c.l.b16 %v1787
    %v4104 = vunpack.c.h.b16 %v1787
    %v4105 = vunpack.c.l.b16 %v1788
    %v4106 = vunpack.c.h.b16 %v1788
    %v4107 = vunpack.c.l.b16 %v1789
    %v4108 = vunpack.c.h.b16 %v1789
    %v4109 = vunpack.c.l.b16 %v1790
    %v4110 = vunpack.c.h.b16 %v1790
    %v4111 = vunpack.c.l.b16 %v1791
    %v4112 = vunpack.c.h.b16 %v1791
    %v4113 = vunpack.c.l.b16 %v1792
    %v4114 = vunpack.c.h.b16 %v1792
    %v4115 = vunpack.c.l.b16 %v1793
    %v4116 = vunpack.c.h.b16 %v1793
    %v4117 = vunpack.c.l.b16 %v1794
    %v4118 = vunpack.c.h.b16 %v1794
    %v4119 = vunpack.c.l.b16 %v1795
    %v4120 = vunpack.c.h.b16 %v1795
    %v4121 = vunpack.c.l.b16 %v1796
    %v4122 = vunpack.c.h.b16 %v1796
    %v4123 = vunpack.c.l.b16 %v1797
    %v4124 = vunpack.c.h.b16 %v1797
    %v4125 = vunpack.c.l.b16 %v1798
    %v4126 = vunpack.c.h.b16 %v1798
    %v4127 = vunpack.c.l.b16 %v1799
    %v4128 = vunpack.c.h.b16 %v1799
    %v4129 = vunpack.c.l.b16 %v1800
    %v4130 = vunpack.c.h.b16 %v1800
    %v4131 = vunpack.c.l.b16 %v1801
    %v4132 = vunpack.c.h.b16 %v1801
    %v4133 = vunpack.c.l.b16 %v1802
    %v4134 = vunpack.c.h.b16 %v1802
    %v4135 = vunpack.c.l.b16 %v1803
    %v4136 = vunpack.c.h.b16 %v1803
    %v4137 = vunpack.c.l.b16 %v1804
    %v4138 = vunpack.c.h.b16 %v1804
    %v4139 = vunpack.c.l.b16 %v1805
    %v4140 = vunpack.c.h.b16 %v1805
    %v4141 = vunpack.c.l.b16 %v1806
    %v4142 = vunpack.c.h.b16 %v1806
    %v4143 = vunpack.c.l.b16 %v1807
    %v4144 = vunpack.c.h.b16 %v1807
    %v4145 = vunpack.c.l.b16 %v1808
    %v4146 = vunpack.c.h.b16 %v1808
    %v4147 = vunpack.c.l.b16 %v1809
    %v4148 = vunpack.c.h.b16 %v1809
    %v4149 = vunpack.c.l.b16 %v1810
    %v4150 = vunpack.c.h.b16 %v1810
    %v4151 = vunpack.c.l.b16 %v1811
    %v4152 = vunpack.c.h.b16 %v1811
    %v4153 = vunpack.c.l.b16 %v1812
    %v4154 = vunpack.c.h.b16 %v1812
    %v4155 = vunpack.c.l.b16 %v1813
    %v4156 = vunpack.c.h.b16 %v1813
    %v4157 = vunpack.c.l.b16 %v1814
    %v4158 = vunpack.c.h.b16 %v1814
    %v4159 = vunpack.c.l.b16 %v1815
    %v4160 = vunpack.c.h.b16 %v1815
    %v4161 = vunpack.c.l.b16 %v1816
    %v4162 = vunpack.c.h.b16 %v1816
    %v4163 = vunpack.c.l.b16 %v1817
    %v4164 = vunpack.c.h.b16 %v1817
    %v4165 = vunpack.c.l.b16 %v1818
    %v4166 = vunpack.c.h.b16 %v1818
    %v4167 = vunpack.c.l.b16 %v1819
    %v4168 = vunpack.c.h.b16 %v1819
    %v4169 = vunpack.c.l.b16 %v1820
    %v4170 = vunpack.c.h.b16 %v1820
    %v4171 = vunpack.c.l.b16 %v1821
    %v4172 = vunpack.c.h.b16 %v1821
    %v4173 = vunpack.c.l.b16 %v1822
    %v4174 = vunpack.c.h.b16 %v1822
    %v4175 = vunpack.c.l.b16 %v1823
    %v4176 = vunpack.c.h.b16 %v1823
    %v4177 = vunpack.c.l.b16 %v1824
    %v4178 = vunpack.c.h.b16 %v1824
    %v4179 = vunpack.c.l.b16 %v1825
    %v4180 = vunpack.c.h.b16 %v1825
    %v4181 = vunpack.c.l.b16 %v1826
    %v4182 = vunpack.c.h.b16 %v1826
    %v4183 = vunpack.c.l.b16 %v1827
    %v4184 = vunpack.c.h.b16 %v1827
    %v4185 = vunpack.c.l.b16 %v1828
    %v4186 = vunpack.c.h.b16 %v1828
    %v4187 = vunpack.c.l.b16 %v1829
    %v4188 = vunpack.c.h.b16 %v1829
    %v4189 = vunpack.c.l.b16 %v1830
    %v4190 = vunpack.c.h.b16 %v1830
    %v4191 = vunpack.c.l.b16 %v1831
    %v4192 = vunpack.c.h.b16 %v1831
    %v4193 = vunpack.c.l.b16 %v1832
    %v4194 = vunpack.c.h.b16 %v1832
    %v4195 = vunpack.c.l.b16 %v1833
    %v4196 = vunpack.c.h.b16 %v1833
    %v4197 = vunpack.c.l.b16 %v1834
    %v4198 = vunpack.c.h.b16 %v1834
    %v4199 = vunpack.c.l.b16 %v1835
    %v4200 = vunpack.c.h.b16 %v1835
    %v4201 = vunpack.c.l.b16 %v1836
    %v4202 = vunpack.c.h.b16 %v1836
    %v4203 = vunpack.c.l.b16 %v1837
    %v4204 = vunpack.c.h.b16 %v1837
    %v4205 = vunpack.c.l.b16 %v1838
    %v4206 = vunpack.c.h.b16 %v1838
    %v4207 = vunpack.c.l.b16 %v1839
    %v4208 = vunpack.c.h.b16 %v1839
    %v4209 = vunpack.c.l.b16 %v1840
    %v4210 = vunpack.c.h.b16 %v1840
    %v4211 = vunpack.c.l.b16 %v1841
    %v4212 = vunpack.c.h.b16 %v1841
    %v4213 = vunpack.c.l.b16 %v1842
    %v4214 = vunpack.c.h.b16 %v1842
    %v4215 = vunpack.c.l.b16 %v1843
    %v4216 = vunpack.c.h.b16 %v1843
    %v4217 = vunpack.c.l.b16 %v1844
    %v4218 = vunpack.c.h.b16 %v1844
    %v4219 = vunpack.c.l.b16 %v1845
    %v4220 = vunpack.c.h.b16 %v1845
    %v4221 = vunpack.c.l.b16 %v1846
    %v4222 = vunpack.c.h.b16 %v1846
    %v4223 = vunpack.c.l.b16 %v1847
    %v4224 = vunpack.c.h.b16 %v1847
    %v4225 = vunpack.c.l.b16 %v1848
    %v4226 = vunpack.c.h.b16 %v1848
    %v4227 = vunpack.c.l.b16 %v1849
    %v4228 = vunpack.c.h.b16 %v1849
    %v4229 = vunpack.c.l.b16 %v1850
    %v4230 = vunpack.c.h.b16 %v1850
    %v4231 = vunpack.c.l.b16 %v1851
    %v4232 = vunpack.c.h.b16 %v1851
    %v4233 = vunpack.c.l.b16 %v1852
    %v4234 = vunpack.c.h.b16 %v1852
    %v4235 = vunpack.c.l.b16 %v1853
    %v4236 = vunpack.c.h.b16 %v1853
    %v4237 = vunpack.c.l.b16 %v1854
    %v4238 = vunpack.c.h.b16 %v1854
    %v4239 = vunpack.c.l.b16 %v1855
    %v4240 = vunpack.c.h.b16 %v1855
    %v4241 = vunpack.c.l.b16 %v1856
    %v4242 = vunpack.c.h.b16 %v1856
    %v4243 = vunpack.c.l.b16 %v1857
    %v4244 = vunpack.c.h.b16 %v1857
    %v4245 = vunpack.c.l.b16 %v1858
    %v4246 = vunpack.c.h.b16 %v1858
    %v4247 = vunpack.c.l.b16 %v1859
    %v4248 = vunpack.c.h.b16 %v1859
    %v4249 = vunpack.c.l.b16 %v1860
    %v4250 = vunpack.c.h.b16 %v1860
    %v4251 = vunpack.c.l.b16 %v1861
    %v4252 = vunpack.c.h.b16 %v1861
    %v4253 = vunpack.c.l.b16 %v1862
    %v4254 = vunpack.c.h.b16 %v1862
    %v4255 = vunpack.c.l.b16 %v1863
    %v4256 = vunpack.c.h.b16 %v1863
    %v4257 = vunpack.c.l.b16 %v1864
    %v4258 = vunpack.c.h.b16 %v1864
    %v4259 = vunpack.c.l.b16 %v1865
    %v4260 = vunpack.c.h.b16 %v1865
    %v4261 = vunpack.c.l.b16 %v1866
    %v4262 = vunpack.c.h.b16 %v1866
    %v4263 = vunpack.c.l.b16 %v1867
    %v4264 = vunpack.c.h.b16 %v1867
    %v4265 = vunpack.c.l.b16 %v1868
    %v4266 = vunpack.c.h.b16 %v1868
    %v4267 = vunpack.c.l.b16 %v1869
    %v4268 = vunpack.c.h.b16 %v1869
    %v4269 = vunpack.c.l.b16 %v1870
    %v4270 = vunpack.c.h.b16 %v1870
    %v4271 = vunpack.c.l.b16 %v1871
    %v4272 = vunpack.c.h.b16 %v1871
    %v4273 = vunpack.c.l.b16 %v1872
    %v4274 = vunpack.c.h.b16 %v1872
    %v4275 = vunpack.c.l.b16 %v1873
    %v4276 = vunpack.c.h.b16 %v1873
    %v4277 = vunpack.c.l.b16 %v1874
    %v4278 = vunpack.c.h.b16 %v1874
    %v4279 = vunpack.c.l.b16 %v1875
    %v4280 = vunpack.c.h.b16 %v1875
    %v4281 = vunpack.c.l.b16 %v1876
    %v4282 = vunpack.c.h.b16 %v1876
    %v4283 = vunpack.c.l.b16 %v1877
    %v4284 = vunpack.c.h.b16 %v1877
    %v4285 = vunpack.c.l.b16 %v1878
    %v4286 = vunpack.c.h.b16 %v1878
    %v4287 = vunpack.c.l.b16 %v1879
    %v4288 = vunpack.c.h.b16 %v1879
    %v4289 = vunpack.c.l.b16 %v1880
    %v4290 = vunpack.c.h.b16 %v1880
    %v4291 = vunpack.c.l.b16 %v1881
    %v4292 = vunpack.c.h.b16 %v1881
    %v4293 = vunpack.c.l.b16 %v1882
    %v4294 = vunpack.c.h.b16 %v1882
    %v4295 = vunpack.c.l.b16 %v1883
    %v4296 = vunpack.c.h.b16 %v1883
    %v4297 = vunpack.c.l.b16 %v1884
    %v4298 = vunpack.c.h.b16 %v1884
    %v4299 = vunpack.c.l.b16 %v1885
    %v4300 = vunpack.c.h.b16 %v1885
    %v4301 = vunpack.c.l.b16 %v1886
    %v4302 = vunpack.c.h.b16 %v1886
    %v4303 = vunpack.c.l.b16 %v1887
    %v4304 = vunpack.c.h.b16 %v1887
    %v4305 = vunpack.c.l.b16 %v1888
    %v4306 = vunpack.c.h.b16 %v1888
    %v4307 = vunpack.c.l.b16 %v1889
    %v4308 = vunpack.c.h.b16 %v1889
    %v4309 = vunpack.c.l.b16 %v1890
    %v4310 = vunpack.c.h.b16 %v1890
    %v4311 = vunpack.c.l.b16 %v1891
    %v4312 = vunpack.c.h.b16 %v1891
    %v4313 = vunpack.c.l.b16 %v1892
    %v4314 = vunpack.c.h.b16 %v1892
    %v4315 = vunpack.c.l.b16 %v1893
    %v4316 = vunpack.c.h.b16 %v1893
    %v4317 = vunpack.c.l.b16 %v1894
    %v4318 = vunpack.c.h.b16 %v1894
    %v4319 = vunpack.c.l.b16 %v1895
    %v4320 = vunpack.c.h.b16 %v1895
    %v4321 = vunpack.c.l.b16 %v1896
    %v4322 = vunpack.c.h.b16 %v1896
    %v4323 = vunpack.c.l.b16 %v1897
    %v4324 = vunpack.c.h.b16 %v1897
    %v4325 = vunpack.c.l.b16 %v1898
    %v4326 = vunpack.c.h.b16 %v1898
    %v4327 = vunpack.c.l.b16 %v1899
    %v4328 = vunpack.c.h.b16 %v1899
    %v4329 = vunpack.c.l.b16 %v1900
    %v4330 = vunpack.c.h.b16 %v1900
    %v4331 = vunpack.c.l.b16 %v1901
    %v4332 = vunpack.c.h.b16 %v1901
    %v4333 = vunpack.c.l.b16 %v1902
    %v4334 = vunpack.c.h.b16 %v1902
    %v4335 = vunpack.c.l.b16 %v1903
    %v4336 = vunpack.c.h.b16 %v1903
    %v4337 = vunpack.c.l.b16 %v1904
    %v4338 = vunpack.c.h.b16 %v1904
    %v4339 = vunpack.c.l.b16 %v1905
    %v4340 = vunpack.c.h.b16 %v1905
    %v4341 = vunpack.c.l.b16 %v1906
    %v4342 = vunpack.c.h.b16 %v1906
    %v4343 = vunpack.c.l.b16 %v1907
    %v4344 = vunpack.c.h.b16 %v1907
    %v4345 = vunpack.c.l.b16 %v1908
    %v4346 = vunpack.c.h.b16 %v1908
    %v4347 = vunpack.c.l.b16 %v1909
    %v4348 = vunpack.c.h.b16 %v1909
    %v4349 = vunpack.c.l.b16 %v1910
    %v4350 = vunpack.c.h.b16 %v1910
    %v4351 = vunpack.c.l.b16 %v1911
    %v4352 = vunpack.c.h.b16 %v1911
    %v4353 = vunpack.c.l.b16 %v1912
    %v4354 = vunpack.c.h.b16 %v1912
    %v4355 = vunpack.c.l.b16 %v1913
    %v4356 = vunpack.c.h.b16 %v1913
    %v4357 = vunpack.c.l.b16 %v1914
    %v4358 = vunpack.c.h.b16 %v1914
    %v4359 = vunpack.c.l.b16 %v1915
    %v4360 = vunpack.c.h.b16 %v1915
    %v4361 = vunpack.c.l.b16 %v1916
    %v4362 = vunpack.c.h.b16 %v1916
    %v4363 = vunpack.c.l.b16 %v1917
    %v4364 = vunpack.c.h.b16 %v1917
    %v4365 = vunpack.c.l.b16 %v1918
    %v4366 = vunpack.c.h.b16 %v1918
    %v4367 = vunpack.c.l.b16 %v1919
    %v4368 = vunpack.c.h.b16 %v1919
    %v4369 = vunpack.c.l.b16 %v1920
    %v4370 = vunpack.c.h.b16 %v1920
    %v4371 = vunpack.c.l.b16 %v1921
    %v4372 = vunpack.c.h.b16 %v1921
    %v4373 = vunpack.c.l.b16 %v1922
    %v4374 = vunpack.c.h.b16 %v1922
    %v4375 = vunpack.c.l.b16 %v1923
    %v4376 = vunpack.c.h.b16 %v1923
    %v4377 = vunpack.c.l.b16 %v1924
    %v4378 = vunpack.c.h.b16 %v1924
    %v4379 = vunpack.c.l.b16 %v1925
    %v4380 = vunpack.c.h.b16 %v1925
    %v4381 = vunpack.c.l.b16 %v1926
    %v4382 = vunpack.c.h.b16 %v1926
    %v4383 = vunpack.c.l.b16 %v1927
    %v4384 = vunpack.c.h.b16 %v1927
    %v4385 = vunpack.c.l.b16 %v1928
    %v4386 = vunpack.c.h.b16 %v1928
    %v4387 = vunpack.c.l.b16 %v1929
    %v4388 = vunpack.c.h.b16 %v1929
    %v4389 = vunpack.c.l.b16 %v1930
    %v4390 = vunpack.c.h.b16 %v1930
    %v4391 = vunpack.c.l.b16 %v1931
    %v4392 = vunpack.c.h.b16 %v1931
    %v4393 = vunpack.c.l.b16 %v1932
    %v4394 = vunpack.c.h.b16 %v1932
    %v4395 = vunpack.c.l.b16 %v1933
    %v4396 = vunpack.c.h.b16 %v1933
    %v4397 = vunpack.c.l.b16 %v1934
    %v4398 = vunpack.c.h.b16 %v1934
    %v4399 = vunpack.c.l.b16 %v1935
    %v4400 = vunpack.c.h.b16 %v1935
    %v4401 = vunpack.c.l.b16 %v1936
    %v4402 = vunpack.c.h.b16 %v1936
    %v4403 = vunpack.c.l.b16 %v1937
    %v4404 = vunpack.c.h.b16 %v1937
    %v4405 = vunpack.c.l.b16 %v1938
    %v4406 = vunpack.c.h.b16 %v1938
    %v4407 = vunpack.c.l.b16 %v1939
    %v4408 = vunpack.c.h.b16 %v1939
    %v4409 = vunpack.c.l.b16 %v1940
    %v4410 = vunpack.c.h.b16 %v1940
    %v4411 = vunpack.c.l.b16 %v1941
    %v4412 = vunpack.c.h.b16 %v1941
    %v4413 = vunpack.c.l.b16 %v1942
    %v4414 = vunpack.c.h.b16 %v1942
    %v4415 = vunpack.c.l.b16 %v1943
    %v4416 = vunpack.c.h.b16 %v1943
    %v4417 = vunpack.c.l.b16 %v1944
    %v4418 = vunpack.c.h.b16 %v1944
    %v4419 = vunpack.c.l.b16 %v1945
    %v4420 = vunpack.c.h.b16 %v1945
    %v4421 = vunpack.c.l.b16 %v1946
    %v4422 = vunpack.c.h.b16 %v1946
    %v4423 = vunpack.c.l.b16 %v1947
    %v4424 = vunpack.c.h.b16 %v1947
    %v4425 = vunpack.c.l.b16 %v1948
    %v4426 = vunpack.c.h.b16 %v1948
    %v4427 = vunpack.c.l.b16 %v1949
    %v4428 = vunpack.c.h.b16 %v1949
    %v4429 = vunpack.c.l.b16 %v1950
    %v4430 = vunpack.c.h.b16 %v1950
    %v4431 = vunpack.c.l.b16 %v1951
    %v4432 = vunpack.c.h.b16 %v1951
    %v4433 = vunpack.c.l.b16 %v1952
    %v4434 = vunpack.c.h.b16 %v1952
    %v4435 = vunpack.c.l.b16 %v1953
    %v4436 = vunpack.c.h.b16 %v1953
    %v4437 = vunpack.c.l.b16 %v1954
    %v4438 = vunpack.c.h.b16 %v1954
    %v4439 = vunpack.c.l.b16 %v1955
    %v4440 = vunpack.c.h.b16 %v1955
    %v4441 = vunpack.c.l.b16 %v1956
    %v4442 = vunpack.c.h.b16 %v1956
    %v4443 = vunpack.c.l.b16 %v1957
    %v4444 = vunpack.c.h.b16 %v1957
    %v4445 = vunpack.c.l.b16 %v1958
    %v4446 = vunpack.c.h.b16 %v1958
    %v4447 = vunpack.c.l.b16 %v1959
    %v4448 = vunpack.c.h.b16 %v1959
    %v4449 = vunpack.c.l.b16 %v1960
    %v4450 = vunpack.c.h.b16 %v1960
    %v4451 = vunpack.c.l.b16 %v1961
    %v4452 = vunpack.c.h.b16 %v1961
    %v4453 = vunpack.c.l.b16 %v1962
    %v4454 = vunpack.c.h.b16 %v1962
    %v4455 = vunpack.c.l.b16 %v1963
    %v4456 = vunpack.c.h.b16 %v1963
    %v4457 = vunpack.c.l.b16 %v1964
    %v4458 = vunpack.c.h.b16 %v1964
    %v4459 = vunpack.c.l.b16 %v1965
    %v4460 = vunpack.c.h.b16 %v1965
    %v4461 = vunpack.c.l.b16 %v1966
    %v4462 = vunpack.c.h.b16 %v1966
    %v4463 = vunpack.c.l.b16 %v1967
    %v4464 = vunpack.c.h.b16 %v1967
    %v4465 = vunpack.c.l.b16 %v1968
    %v4466 = vunpack.c.h.b16 %v1968
    %v4467 = vunpack.c.l.b16 %v1969
    %v4468 = vunpack.c.h.b16 %v1969
    %v4469 = vunpack.c.l.b16 %v1970
    %v4470 = vunpack.c.h.b16 %v1970
    %v4471 = vunpack.c.l.b16 %v1971
    %v4472 = vunpack.c.h.b16 %v1971
    %v4473 = vunpack.c.l.b16 %v1972
    %v4474 = vunpack.c.h.b16 %v1972
    %v4475 = vunpack.c.l.b16 %v1973
    %v4476 = vunpack.c.h.b16 %v1973
    %v4477 = vunpack.c.l.b16 %v1974
    %v4478 = vunpack.c.h.b16 %v1974
    %v4479 = vunpack.c.l.b16 %v1975
    %v4480 = vunpack.c.h.b16 %v1975
    %v4481 = vunpack.c.l.b16 %v1976
    %v4482 = vunpack.c.h.b16 %v1976
    %v4483 = vunpack.c.l.b16 %v1977
    %v4484 = vunpack.c.h.b16 %v1977
    %v4485 = vunpack.c.l.b16 %v1978
    %v4486 = vunpack.c.h.b16 %v1978
    %v4487 = vunpack.c.l.b16 %v1979
    %v4488 = vunpack.c.h.b16 %v1979
    %v4489 = vunpack.c.l.b16 %v1980
    %v4490 = vunpack.c.h.b16 %v1980
    %v4491 = vunpack.c.l.b16 %v1981
    %v4492 = vunpack.c.h.b16 %v1981
    %v4493 = vunpack.c.l.b16 %v1982
    %v4494 = vunpack.c.h.b16 %v1982
    %v4495 = vunpack.c.l.b16 %v1983
    %v4496 = vunpack.c.h.b16 %v1983
    %v4497 = vunpack.c.l.b16 %v1984
    %v4498 = vunpack.c.h.b16 %v1984
    %v4499 = vunpack.c.l.b16 %v1985
    %v4500 = vunpack.c.h.b16 %v1985
    %v4501 = vunpack.c.l.b16 %v1986
    %v4502 = vunpack.c.h.b16 %v1986
    %v4503 = vunpack.c.l.b16 %v1987
    %v4504 = vunpack.c.h.b16 %v1987
    %v4505 = vunpack.c.l.b16 %v1988
    %v4506 = vunpack.c.h.b16 %v1988
    %v4507 = vunpack.c.l.b16 %v1989
    %v4508 = vunpack.c.h.b16 %v1989
    %v4509 = vunpack.c.l.b16 %v1990
    %v4510 = vunpack.c.h.b16 %v1990
    %v4511 = vunpack.c.l.b16 %v1991
    %v4512 = vunpack.c.h.b16 %v1991
    %v4513 = vunpack.c.l.b16 %v1992
    %v4514 = vunpack.c.h.b16 %v1992
    %v4515 = vunpack.c.l.b16 %v1993
    %v4516 = vunpack.c.h.b16 %v1993
    %v4517 = vunpack.c.l.b16 %v1994
    %v4518 = vunpack.c.h.b16 %v1994
    %v4519 = vunpack.c.l.b16 %v1995
    %v4520 = vunpack.c.h.b16 %v1995
    %v4521 = vunpack.c.l.b16 %v1996
    %v4522 = vunpack.c.h.b16 %v1996
    %v4523 = vunpack.c.l.b16 %v1997
    %v4524 = vunpack.c.h.b16 %v1997
    %v4525 = vunpack.c.l.b16 %v1998
    %v4526 = vunpack.c.h.b16 %v1998
    %v4527 = vunpack.c.l.b16 %v1999
    %v4528 = vunpack.c.h.b16 %v1999
    %v4529 = vunpack.c.l.b16 %v2000
    %v4530 = vunpack.c.h.b16 %v2000
    %v4531 = vunpack.c.l.b16 %v2001
    %v4532 = vunpack.c.h.b16 %v2001
    %v4533 = vunpack.c.l.b16 %v2002
    %v4534 = vunpack.c.h.b16 %v2002
    %v4535 = vunpack.c.l.b16 %v2003
    %v4536 = vunpack.c.h.b16 %v2003
    %v4537 = vunpack.c.l.b16 %v2004
    %v4538 = vunpack.c.h.b16 %v2004
    %v4539 = vunpack.c.l.b16 %v2005
    %v4540 = vunpack.c.h.b16 %v2005
    %v4541 = vunpack.c.l.b16 %v2006
    %v4542 = vunpack.c.h.b16 %v2006
    %v4543 = vunpack.c.l.b16 %v2007
    %v4544 = vunpack.c.h.b16 %v2007
    %v4545 = vunpack.c.l.b16 %v2008
    %v4546 = vunpack.c.h.b16 %v2008
    %v4547 = vunpack.c.l.b16 %v2009
    %v4548 = vunpack.c.h.b16 %v2009
    %v4549 = vunpack.c.l.b16 %v2010
    %v4550 = vunpack.c.h.b16 %v2010
    %v4551 = vunpack.c.l.b16 %v2011
    %v4552 = vunpack.c.h.b16 %v2011
    %v4553 = vunpack.c.l.b16 %v2012
    %v4554 = vunpack.c.h.b16 %v2012
    %v4555 = vunpack.c.l.b16 %v2013
    %v4556 = vunpack.c.h.b16 %v2013
    %v4557 = vunpack.c.l.b16 %v2014
    %v4558 = vunpack.c.h.b16 %v2014
    %v4559 = vunpack.c.l.b16 %v2015
    %v4560 = vunpack.c.h.b16 %v2015
    %v4561 = vunpack.c.l.b16 %v2016
    %v4562 = vunpack.c.h.b16 %v2016
    %v4563 = vunpack.c.l.b16 %v2017
    %v4564 = vunpack.c.h.b16 %v2017
    %v4565 = vunpack.c.l.b16 %v2018
    %v4566 = vunpack.c.h.b16 %v2018
    %v4567 = vunpack.c.l.b16 %v2019
    %v4568 = vunpack.c.h.b16 %v2019
    %v4569 = vunpack.c.l.b16 %v2020
    %v4570 = vunpack.c.h.b16 %v2020
    %v4571 = vunpack.c.l.b16 %v2021
    %v4572 = vunpack.c.h.b16 %v2021
    %v4573 = vunpack.c.l.b16 %v2022
    %v4574 = vunpack.c.h.b16 %v2022
    %v4575 = vunpack.c.l.b16 %v2023
    %v4576 = vunpack.c.h.b16 %v2023
    %v4577 = vunpack.c.l.b16 %v2024
    %v4578 = vunpack.c.h.b16 %v2024
    %v4579 = vunpack.c.l.b16 %v2025
    %v4580 = vunpack.c.h.b16 %v2025
    %v4581 = vunpack.c.l.b16 %v2026
    %v4582 = vunpack.c.h.b16 %v2026
    %v4583 = vunpack.c.l.b16 %v2027
    %v4584 = vunpack.c.h.b16 %v2027
    %v4585 = vunpack.c.l.b16 %v2028
    %v4586 = vunpack.c.h.b16 %v2028
    %v4587 = vunpack.c.l.b16 %v2029
    %v4588 = vunpack.c.h.b16 %v2029
    %v4589 = vunpack.c.l.b16 %v2030
    %v4590 = vunpack.c.h.b16 %v2030
    %v4591 = vunpack.c.l.b16 %v2031
    %v4592 = vunpack.c.h.b16 %v2031
    %v4593 = vunpack.c.l.b16 %v2032
    %v4594 = vunpack.c.h.b16 %v2032
    %v4595 = vunpack.c.l.b16 %v2033
    %v4596 = vunpack.c.h.b16 %v2033
    %v4597 = vunpack.c.l.b16 %v2034
    %v4598 = vunpack.c.h.b16 %v2034
    %v4599 = vunpack.c.l.b16 %v2035
    %v4600 = vunpack.c.h.b16 %v2035
    %v4601 = vunpack.c.l.b16 %v2036
    %v4602 = vunpack.c.h.b16 %v2036
    %v4603 = vunpack.c.l.b16 %v2037
    %v4604 = vunpack.c.h.b16 %v2037
    %v4605 = vunpack.c.l.b16 %v2038
    %v4606 = vunpack.c.h.b16 %v2038
    %v4607 = vunpack.c.l.b16 %v2039
    %v4608 = vunpack.c.h.b16 %v2039
    %v4609 = vunpack.c.l.b16 %v2040
    %v4610 = vunpack.c.h.b16 %v2040
    %v4611 = vunpack.c.l.b16 %v2041
    %v4612 = vunpack.c.h.b16 %v2041
    %v4613 = vunpack.c.l.b16 %v2042
    %v4614 = vunpack.c.h.b16 %v2042
    %v4615 = vunpack.c.l.b16 %v2043
    %v4616 = vunpack.c.h.b16 %v2043
    %v4617 = vunpack.c.l.b16 %v2044
    %v4618 = vunpack.c.h.b16 %v2044
    %v4619 = vunpack.c.l.b16 %v2045
    %v4620 = vunpack.c.h.b16 %v2045
    %v4621 = vunpack.c.l.b16 %v2046
    %v4622 = vunpack.c.h.b16 %v2046
    %v4623 = vunpack.c.l.b16 %v2047
    %v4624 = vunpack.c.h.b16 %v2047
    %v4625 = vunpack.c.l.b16 %v2048
    %v4626 = vunpack.c.h.b16 %v2048
    %v4627 = vunpack.c.l.b16 %v2049
    %v4628 = vunpack.c.h.b16 %v2049
    %v4629 = vunpack.c.l.b16 %v2050
    %v4630 = vunpack.c.h.b16 %v2050
    %v4631 = vunpack.c.l.b16 %v2051
    %v4632 = vunpack.c.h.b16 %v2051
    %v4633 = vunpack.c.l.b16 %v2052
    %v4634 = vunpack.c.h.b16 %v2052
    %v4635 = vunpack.c.l.b16 %v2053
    %v4636 = vunpack.c.h.b16 %v2053
    %v4637 = vunpack.c.l.b16 %v2054
    %v4638 = vunpack.c.h.b16 %v2054
    %v4639 = vunpack.c.l.b16 %v2055
    %v4640 = vunpack.c.h.b16 %v2055
    %v4641 = vunpack.c.l.b16 %v2056
    %v4642 = vunpack.c.h.b16 %v2056
    %v4643 = vunpack.c.l.b16 %v2057
    %v4644 = vunpack.c.h.b16 %v2057
    %v4645 = vunpack.c.l.b16 %v2058
    %v4646 = vunpack.c.h.b16 %v2058
    %v4647 = vunpack.c.l.b16 %v2059
    %v4648 = vunpack.c.h.b16 %v2059
    %v4649 = vunpack.c.l.b16 %v2060
    %v4650 = vunpack.c.h.b16 %v2060
    %v4651 = vunpack.c.l.b16 %v2061
    %v4652 = vunpack.c.h.b16 %v2061
    %v4653 = vunpack.c.l.b16 %v2062
    %v4654 = vunpack.c.h.b16 %v2062
    %v4655 = vunpack.c.l.b16 %v2063
    %v4656 = vunpack.c.h.b16 %v2063
    %v4657 = vunpack.c.l.b16 %v2064
    %v4658 = vunpack.c.h.b16 %v2064
    %v4659 = vunpack.c.l.b16 %v2065
    %v4660 = vunpack.c.h.b16 %v2065
    %v4661 = vunpack.c.l.b16 %v2066
    %v4662 = vunpack.c.h.b16 %v2066
    %v4663 = vunpack.c.l.b16 %v2067
    %v4664 = vunpack.c.h.b16 %v2067
    %v4665 = vunpack.c.l.b16 %v2068
    %v4666 = vunpack.c.h.b16 %v2068
    %v4667 = vunpack.c.l.b16 %v2069
    %v4668 = vunpack.c.h.b16 %v2069
    %v4669 = vunpack.c.l.b16 %v2070
    %v4670 = vunpack.c.h.b16 %v2070
    %v4671 = vunpack.c.l.b16 %v2071
    %v4672 = vunpack.c.h.b16 %v2071
    %v4673 = vunpack.c.l.b16 %v2072
    %v4674 = vunpack.c.h.b16 %v2072
    %v4675 = vunpack.c.l.b16 %v2073
    %v4676 = vunpack.c.h.b16 %v2073
    %v4677 = vunpack.c.l.b16 %v2074
    %v4678 = vunpack.c.h.b16 %v2074
    %v4679 = vunpack.c.l.b16 %v2075
    %v4680 = vunpack.c.h.b16 %v2075
    %v4681 = vunpack.c.l.b16 %v2076
    %v4682 = vunpack.c.h.b16 %v2076
    %v4683 = vunpack.c.l.b16 %v2077
    %v4684 = vunpack.c.h.b16 %v2077
    %v4685 = vunpack.c.l.b16 %v2078
    %v4686 = vunpack.c.h.b16 %v2078
    %v4687 = vunpack.c.l.b16 %v2079
    %v4688 = vunpack.c.h.b16 %v2079
    %v4689 = vunpack.c.l.b16 %v2080
    %v4690 = vunpack.c.h.b16 %v2080
    %v4691 = vunpack.c.l.b16 %v2081
    %v4692 = vunpack.c.h.b16 %v2081
    %v4693 = vunpack.c.l.b16 %v2082
    %v4694 = vunpack.c.h.b16 %v2082
    %v4695 = vunpack.c.l.b16 %v2083
    %v4696 = vunpack.c.h.b16 %v2083
    %v4697 = vunpack.c.l.b16 %v2084
    %v4698 = vunpack.c.h.b16 %v2084
    %v4699 = vunpack.c.l.b16 %v2085
    %v4700 = vunpack.c.h.b16 %v2085
    %v4701 = vunpack.c.l.b16 %v2086
    %v4702 = vunpack.c.h.b16 %v2086
    %v4703 = vunpack.c.l.b16 %v2087
    %v4704 = vunpack.c.h.b16 %v2087
    %v4705 = vunpack.c.l.b16 %v2088
    %v4706 = vunpack.c.h.b16 %v2088
    %v4707 = vunpack.c.l.b16 %v2089
    %v4708 = vunpack.c.h.b16 %v2089
    %v4709 = vunpack.c.l.b16 %v2090
    %v4710 = vunpack.c.h.b16 %v2090
    %v4711 = vunpack.c.l.b16 %v2091
    %v4712 = vunpack.c.h.b16 %v2091
    %v4713 = vunpack.c.l.b16 %v2092
    %v4714 = vunpack.c.h.b16 %v2092
    %v4715 = vunpack.c.l.b16 %v2093
    %v4716 = vunpack.c.h.b16 %v2093
    %v4717 = vunpack.c.l.b16 %v2094
    %v4718 = vunpack.c.h.b16 %v2094
    %v4719 = vunpack.c.l.b16 %v2095
    %v4720 = vunpack.c.h.b16 %v2095
    %v4721 = vunpack.c.l.b16 %v2096
    %v4722 = vunpack.c.h.b16 %v2096
    %v4723 = vunpack.c.l.b16 %v2097
    %v4724 = vunpack.c.h.b16 %v2097
    %v4725 = vunpack.c.l.b16 %v2098
    %v4726 = vunpack.c.h.b16 %v2098
    %v4727 = vunpack.c.l.b16 %v2099
    %v4728 = vunpack.c.h.b16 %v2099
    %v4729 = vunpack.c.l.b16 %v2100
    %v4730 = vunpack.c.h.b16 %v2100
    %v4731 = vunpack.c.l.b16 %v2101
    %v4732 = vunpack.c.h.b16 %v2101
    %v4733 = vunpack.c.l.b16 %v2102
    %v4734 = vunpack.c.h.b16 %v2102
    %v4735 = vunpack.c.l.b16 %v2103
    %v4736 = vunpack.c.h.b16 %v2103
    %v4737 = vunpack.c.l.b16 %v2104
    %v4738 = vunpack.c.h.b16 %v2104
    %v4739 = vunpack.c.l.b16 %v2105
    %v4740 = vunpack.c.h.b16 %v2105
    %v4741 = vunpack.c.l.b16 %v2106
    %v4742 = vunpack.c.h.b16 %v2106
    %v4743 = vunpack.c.l.b16 %v2107
    %v4744 = vunpack.c.h.b16 %v2107
    %v4745 = vunpack.c.l.b16 %v2108
    %v4746 = vunpack.c.h.b16 %v2108
    %v4747 = vunpack.c.l.b16 %v2109
    %v4748 = vunpack.c.h.b16 %v2109
    %v4749 = vunpack.c.l.b16 %v2110
    %v4750 = vunpack.c.h.b16 %v2110
    %v4751 = vunpack.c.l.b16 %v2111
    %v4752 = vunpack.c.h.b16 %v2111
    %v4753 = vunpack.c.l.b16 %v2112
    %v4754 = vunpack.c.h.b16 %v2112
    %v4755 = vunpack.c.l.b16 %v2113
    %v4756 = vunpack.c.h.b16 %v2113
    %v4757 = vunpack.c.l.b16 %v2114
    %v4758 = vunpack.c.h.b16 %v2114
    %v4759 = vunpack.c.l.b16 %v2115
    %v4760 = vunpack.c.h.b16 %v2115
    %v4761 = vunpack.c.l.b16 %v2116
    %v4762 = vunpack.c.h.b16 %v2116
    %v4763 = vunpack.c.l.b16 %v2117
    %v4764 = vunpack.c.h.b16 %v2117
    %v4765 = vunpack.c.l.b16 %v2118
    %v4766 = vunpack.c.h.b16 %v2118
    %v4767 = vunpack.c.l.b16 %v2119
    %v4768 = vunpack.c.h.b16 %v2119
    %v4769 = vunpack.c.l.b16 %v2120
    %v4770 = vunpack.c.h.b16 %v2120
    %v4771 = vunpack.c.l.b16 %v2121
    %v4772 = vunpack.c.h.b16 %v2121
    %v4773 = vunpack.c.l.b16 %v2122
    %v4774 = vunpack.c.h.b16 %v2122
    %v4775 = vunpack.c.l.b16 %v2123
    %v4776 = vunpack.c.h.b16 %v2123
    %v4777 = vunpack.c.l.b16 %v2124
    %v4778 = vunpack.c.h.b16 %v2124
    %v4779 = vunpack.c.l.b16 %v2125
    %v4780 = vunpack.c.h.b16 %v2125
    %v4781 = vunpack.c.l.b16 %v2126
    %v4782 = vunpack.c.h.b16 %v2126
    %v4783 = vunpack.c.l.b16 %v2127
    %v4784 = vunpack.c.h.b16 %v2127
    %v4785 = vunpack.c.l.b16 %v2128
    %v4786 = vunpack.c.h.b16 %v2128
    %v4787 = vunpack.c.l.b16 %v2129
    %v4788 = vunpack.c.h.b16 %v2129
    %v4789 = vunpack.c.l.b16 %v2130
    %v4790 = vunpack.c.h.b16 %v2130
    %v4791 = vunpack.c.l.b16 %v2131
    %v4792 = vunpack.c.h.b16 %v2131
    %v4793 = vunpack.c.l.b16 %v2132
    %v4794 = vunpack.c.h.b16 %v2132
    %v4795 = vunpack.c.l.b16 %v2133
    %v4796 = vunpack.c.h.b16 %v2133
    %v4797 = vunpack.c.l.b16 %v2134
    %v4798 = vunpack.c.h.b16 %v2134
    %v4799 = vunpack.c.l.b16 %v2135
    %v4800 = vunpack.c.h.b16 %v2135
    %v4801 = vunpack.c.l.b16 %v2136
    %v4802 = vunpack.c.h.b16 %v2136
    %v4803 = vunpack.c.l.b16 %v2137
    %v4804 = vunpack.c.h.b16 %v2137
    %v4805 = vunpack.c.l.b16 %v2138
    %v4806 = vunpack.c.h.b16 %v2138
    %v4807 = vunpack.c.l.b16 %v2139
    %v4808 = vunpack.c.h.b16 %v2139
    %v4809 = vunpack.c.l.b16 %v2140
    %v4810 = vunpack.c.h.b16 %v2140
    %v4811 = vunpack.c.l.b16 %v2141
    %v4812 = vunpack.c.h.b16 %v2141
    %v4813 = vunpack.c.l.b16 %v2142
    %v4814 = vunpack.c.h.b16 %v2142
    %v4815 = vunpack.c.l.b16 %v2143
    %v4816 = vunpack.c.h.b16 %v2143
    %v4817 = vunpack.c.l.b16 %v2144
    %v4818 = vunpack.c.h.b16 %v2144
    %v4819 = vunpack.c.l.b16 %v2145
    %v4820 = vunpack.c.h.b16 %v2145
    %v4821 = vunpack.c.l.b16 %v2146
    %v4822 = vunpack.c.h.b16 %v2146
    %v4823 = vunpack.c.l.b16 %v2147
    %v4824 = vunpack.c.h.b16 %v2147
    %v4825 = vunpack.c.l.b16 %v2148
    %v4826 = vunpack.c.h.b16 %v2148
    %v4827 = vunpack.c.l.b16 %v2149
    %v4828 = vunpack.c.h.b16 %v2149
    %v4829 = vunpack.c.l.b16 %v2150
    %v4830 = vunpack.c.h.b16 %v2150
    %v4831 = vunpack.c.l.b16 %v2151
    %v4832 = vunpack.c.h.b16 %v2151
    %v4833 = vunpack.c.l.b16 %v2152
    %v4834 = vunpack.c.h.b16 %v2152
    %v4835 = vunpack.c.l.b16 %v2153
    %v4836 = vunpack.c.h.b16 %v2153
    %v4837 = vunpack.c.l.b16 %v2154
    %v4838 = vunpack.c.h.b16 %v2154
    %v4839 = vunpack.c.l.b16 %v2155
    %v4840 = vunpack.c.h.b16 %v2155
    %v4841 = vunpack.c.l.b16 %v2156
    %v4842 = vunpack.c.h.b16 %v2156
    %v4843 = vunpack.c.l.b16 %v2157
    %v4844 = vunpack.c.h.b16 %v2157
    %v4845 = vunpack.c.l.b16 %v2158
    %v4846 = vunpack.c.h.b16 %v2158
    %v4847 = vunpack.c.l.b16 %v2159
    %v4848 = vunpack.c.h.b16 %v2159
    %v4849 = vunpack.c.l.b16 %v2160
    %v4850 = vunpack.c.h.b16 %v2160
    %v4851 = vunpack.c.l.b16 %v2161
    %v4852 = vunpack.c.h.b16 %v2161
    %v4853 = vunpack.c.l.b16 %v2162
    %v4854 = vunpack.c.h.b16 %v2162
    %v4855 = vunpack.c.l.b16 %v2163
    %v4856 = vunpack.c.h.b16 %v2163
    %v4857 = vunpack.c.l.b16 %v2164
    %v4858 = vunpack.c.h.b16 %v2164
    %v4859 = vunpack.c.l.b16 %v2165
    %v4860 = vunpack.c.h.b16 %v2165
    %v4861 = vunpack.c.l.b16 %v2166
    %v4862 = vunpack.c.h.b16 %v2166
    %v4863 = vunpack.c.l.b16 %v2167
    %v4864 = vunpack.c.h.b16 %v2167
    %v4865 = vunpack.c.l.b16 %v2168
    %v4866 = vunpack.c.h.b16 %v2168
    %v4867 = vunpack.c.l.b16 %v2169
    %v4868 = vunpack.c.h.b16 %v2169
    %v4869 = vunpack.c.l.b16 %v2170
    %v4870 = vunpack.c.h.b16 %v2170
    %v4871 = vunpack.c.l.b16 %v2171
    %v4872 = vunpack.c.h.b16 %v2171
    %v4873 = vunpack.c.l.b16 %v2172
    %v4874 = vunpack.c.h.b16 %v2172
    %v4875 = vunpack.c.l.b16 %v2173
    %v4876 = vunpack.c.h.b16 %v2173
    %v4877 = vunpack.c.l.b16 %v2174
    %v4878 = vunpack.c.h.b16 %v2174
    %v4879 = vunpack.c.l.b16 %v2175
    %v4880 = vunpack.c.h.b16 %v2175
    %v4881 = vunpack.c.l.b16 %v2176
    %v4882 = vunpack.c.h.b16 %v2176
    %v4883 = vunpack.c.l.b16 %v2177
    %v4884 = vunpack.c.h.b16 %v2177
    %v4885 = vunpack.c.l.b16 %v2178
    %v4886 = vunpack.c.h.b16 %v2178
    %v4887 = vunpack.c.l.b16 %v2179
    %v4888 = vunpack.c.h.b16 %v2179
    %v4889 = vunpack.c.l.b16 %v2180
    %v4890 = vunpack.c.h.b16 %v2180
    %v4891 = vunpack.c.l.b16 %v2181
    %v4892 = vunpack.c.h.b16 %v2181
    %v4893 = vunpack.c.l.b16 %v2182
    %v4894 = vunpack.c.h.b16 %v2182
    %v4895 = vunpack.c.l.b16 %v2183
    %v4896 = vunpack.c.h.b16 %v2183
    %v4897 = vunpack.c.l.b16 %v2184
    %v4898 = vunpack.c.h.b16 %v2184
    %v4899 = vunpack.c.l.b16 %v2185
    %v4900 = vunpack.c.h.b16 %v2185
    %v4901 = vunpack.c.l.b16 %v2186
    %v4902 = vunpack.c.h.b16 %v2186
    %v4903 = vunpack.c.l.b16 %v2187
    %v4904 = vunpack.c.h.b16 %v2187
    %v4905 = vunpack.c.l.b16 %v2188
    %v4906 = vunpack.c.h.b16 %v2188
    %v4907 = vunpack.c.l.b16 %v2189
    %v4908 = vunpack.c.h.b16 %v2189
    %v4909 = vunpack.c.l.b16 %v2190
    %v4910 = vunpack.c.h.b16 %v2190
    %v4911 = vunpack.c.l.b16 %v2191
    %v4912 = vunpack.c.h.b16 %v2191
    %v4913 = vunpack.c.l.b16 %v2192
    %v4914 = vunpack.c.h.b16 %v2192
    %v4915 = vunpack.c.l.b16 %v2193
    %v4916 = vunpack.c.h.b16 %v2193
    %v4917 = vunpack.c.l.b16 %v2194
    %v4918 = vunpack.c.h.b16 %v2194
    %v4919 = vunpack.c.l.b16 %v2195
    %v4920 = vunpack.c.h.b16 %v2195
    %v4921 = vunpack.c.l.b16 %v2196
    %v4922 = vunpack.c.h.b16 %v2196
    %v4923 = vunpack.c.l.b16 %v2197
    %v4924 = vunpack.c.h.b16 %v2197
    %v4925 = vunpack.c.l.b16 %v2198
    %v4926 = vunpack.c.h.b16 %v2198
    %v4927 = vunpack.c.l.b16 %v2199
    %v4928 = vunpack.c.h.b16 %v2199
    %v4929 = vunpack.c.l.b16 %v2200
    %v4930 = vunpack.c.h.b16 %v2200
    %v4931 = vunpack.c.l.b16 %v2201
    %v4932 = vunpack.c.h.b16 %v2201
    %v4933 = vunpack.c.l.b16 %v2202
    %v4934 = vunpack.c.h.b16 %v2202
    %v4935 = vunpack.c.l.b16 %v2203
    %v4936 = vunpack.c.h.b16 %v2203
    %v4937 = vunpack.c.l.b16 %v2204
    %v4938 = vunpack.c.h.b16 %v2204
    %v4939 = vunpack.c.l.b16 %v2205
    %v4940 = vunpack.c.h.b16 %v2205
    %v4941 = vunpack.c.l.b16 %v2206
    %v4942 = vunpack.c.h.b16 %v2206
    %v4943 = vunpack.c.l.b16 %v2207
    %v4944 = vunpack.c.h.b16 %v2207
    %v4945 = vunpack.c.l.b16 %v2208
    %v4946 = vunpack.c.h.b16 %v2208
    %v4947 = vunpack.c.l.b16 %v2209
    %v4948 = vunpack.c.h.b16 %v2209
    %v4949 = vunpack.c.l.b16 %v2210
    %v4950 = vunpack.c.h.b16 %v2210
    %v4951 = vunpack.c.l.b16 %v2211
    %v4952 = vunpack.c.h.b16 %v2211
    %v4953 = vunpack.c.l.b16 %v2212
    %v4954 = vunpack.c.h.b16 %v2212
    %v4955 = vunpack.c.l.b16 %v2213
    %v4956 = vunpack.c.h.b16 %v2213
    %v4957 = vunpack.c.l.b16 %v2214
    %v4958 = vunpack.c.h.b16 %v2214
    %v4959 = vunpack.c.l.b16 %v2215
    %v4960 = vunpack.c.h.b16 %v2215
    %v4961 = vunpack.c.l.b16 %v2216
    %v4962 = vunpack.c.h.b16 %v2216
    %v4963 = vunpack.c.l.b16 %v2217
    %v4964 = vunpack.c.h.b16 %v2217
    %v4965 = vunpack.c.l.b16 %v2218
    %v4966 = vunpack.c.h.b16 %v2218
    %v4967 = vunpack.c.l.b16 %v2219
    %v4968 = vunpack.c.h.b16 %v2219
    %v4969 = vunpack.c.l.b16 %v2220
    %v4970 = vunpack.c.h.b16 %v2220
    %v4971 = vunpack.c.l.b16 %v2221
    %v4972 = vunpack.c.h.b16 %v2221
    %v4973 = vunpack.c.l.b16 %v2222
    %v4974 = vunpack.c.h.b16 %v2222
    %v4975 = vunpack.c.l.b16 %v2223
    %v4976 = vunpack.c.h.b16 %v2223
    %v4977 = vunpack.c.l.b16 %v2224
    %v4978 = vunpack.c.h.b16 %v2224
    %v4979 = vunpack.c.l.b16 %v2225
    %v4980 = vunpack.c.h.b16 %v2225
    %v4981 = vunpack.c.l.b16 %v2226
    %v4982 = vunpack.c.h.b16 %v2226
    %v4983 = vunpack.c.l.b16 %v2227
    %v4984 = vunpack.c.h.b16 %v2227
    %v4985 = vunpack.c.l.b16 %v2228
    %v4986 = vunpack.c.h.b16 %v2228
    %v4987 = vunpack.c.l.b16 %v2229
    %v4988 = vunpack.c.h.b16 %v2229
    %v4989 = vunpack.c.l.b16 %v2230
    %v4990 = vunpack.c.h.b16 %v2230
    %v4991 = vunpack.c.l.b16 %v2231
    %v4992 = vunpack.c.h.b16 %v2231
    %v4993 = vunpack.c.l.b16 %v2232
    %v4994 = vunpack.c.h.b16 %v2232
    %v4995 = vunpack.c.l.b16 %v2233
    %v4996 = vunpack.c.h.b16 %v2233
    %v4997 = vunpack.c.l.b16 %v2234
    %v4998 = vunpack.c.h.b16 %v2234
    %v4999 = vunpack.c.l.b16 %v2235
    %v5000 = vunpack.c.h.b16 %v2235
    %v5001 = vunpack.c.l.b16 %v2236
    %v5002 = vunpack.c.h.b16 %v2236
    %v5003 = vunpack.c.l.b16 %v2237
    %v5004 = vunpack.c.h.b16 %v2237
    %v5005 = vunpack.c.l.b16 %v2238
    %v5006 = vunpack.c.h.b16 %v2238
    %v5007 = vunpack.c.l.b16 %v2239
    %v5008 = vunpack.c.h.b16 %v2239
    %v5009 = vunpack.c.l.b16 %v2240
    %v5010 = vunpack.c.h.b16 %v2240
    %v5011 = vunpack.c.l.b16 %v2241
    %v5012 = vunpack.c.h.b16 %v2241
    %v5013 = vunpack.c.l.b16 %v2242
    %v5014 = vunpack.c.h.b16 %v2242
    %v5015 = vunpack.c.l.b16 %v2243
    %v5016 = vunpack.c.h.b16 %v2243
    %v5017 = vunpack.c.l.b16 %v2244
    %v5018 = vunpack.c.h.b16 %v2244
    %v5019 = vunpack.c.l.b16 %v2245
    %v5020 = vunpack.c.h.b16 %v2245
    %v5021 = vunpack.c.l.b16 %v2246
    %v5022 = vunpack.c.h.b16 %v2246
    %v5023 = vunpack.c.l.b16 %v2247
    %v5024 = vunpack.c.h.b16 %v2247
    %v5025 = vunpack.c.l.b16 %v2248
    %v5026 = vunpack.c.h.b16 %v2248
    %v5027 = vunpack.c.l.b16 %v2249
    %v5028 = vunpack.c.h.b16 %v2249
    %v5029 = vunpack.c.l.b16 %v2250
    %v5030 = vunpack.c.h.b16 %v2250
    %v5031 = vunpack.c.l.b16 %v2251
    %v5032 = vunpack.c.h.b16 %v2251
    %v5033 = vunpack.c.l.b16 %v2252
    %v5034 = vunpack.c.h.b16 %v2252
    %v5035 = vunpack.c.l.b16 %v2253
    %v5036 = vunpack.c.h.b16 %v2253
    %v5037 = vunpack.c.l.b16 %v2254
    %v5038 = vunpack.c.h.b16 %v2254
    %v5039 = vunpack.c.l.b16 %v2255
    %v5040 = vunpack.c.h.b16 %v2255
    %v5041 = vunpack.c.l.b16 %v2256
    %v5042 = vunpack.c.h.b16 %v2256
    %v5043 = vunpack.c.l.b16 %v2257
    %v5044 = vunpack.c.h.b16 %v2257
    %v5045 = vunpack.c.l.b16 %v2258
    %v5046 = vunpack.c.h.b16 %v2258
    %v5047 = vunpack.c.l.b16 %v2259
    %v5048 = vunpack.c.h.b16 %v2259
    %v5049 = vunpack.c.l.b16 %v2260
    %v5050 = vunpack.c.h.b16 %v2260
    %v5051 = vunpack.c.l.b16 %v2261
    %v5052 = vunpack.c.h.b16 %v2261
    %v5053 = vunpack.c.l.b16 %v2262
    %v5054 = vunpack.c.h.b16 %v2262
    %v5055 = vunpack.c.l.b16 %v2263
    %v5056 = vunpack.c.h.b16 %v2263
    %v5057 = vunpack.c.l.b16 %v2264
    %v5058 = vunpack.c.h.b16 %v2264
    %v5059 = vunpack.c.l.b16 %v2265
    %v5060 = vunpack.c.h.b16 %v2265
    %v5061 = vunpack.c.l.b16 %v2266
    %v5062 = vunpack.c.h.b16 %v2266
    %v5063 = vunpack.c.l.b16 %v2267
    %v5064 = vunpack.c.h.b16 %v2267
    %v5065 = vunpack.c.l.b16 %v2268
    %v5066 = vunpack.c.h.b16 %v2268
    %v5067 = vunpack.c.l.b16 %v2269
    %v5068 = vunpack.c.h.b16 %v2269
    %v5069 = vunpack.c.l.b16 %v2270
    %v5070 = vunpack.c.h.b16 %v2270
    %v5071 = vunpack.c.l.b16 %v2271
    %v5072 = vunpack.c.h.b16 %v2271
    %v5073 = vunpack.c.l.b16 %v2272
    %v5074 = vunpack.c.h.b16 %v2272
    %v5075 = vunpack.c.l.b16 %v2273
    %v5076 = vunpack.c.h.b16 %v2273
    %v5077 = vunpack.c.l.b16 %v2274
    %v5078 = vunpack.c.h.b16 %v2274
    %v5079 = vunpack.c.l.b16 %v2275
    %v5080 = vunpack.c.h.b16 %v2275
    %v5081 = vunpack.c.l.b16 %v2276
    %v5082 = vunpack.c.h.b16 %v2276
    %v5083 = vunpack.c.l.b16 %v2277
    %v5084 = vunpack.c.h.b16 %v2277
    %v5085 = vunpack.c.l.b16 %v2278
    %v5086 = vunpack.c.h.b16 %v2278
    %v5087 = vunpack.c.l.b16 %v2279
    %v5088 = vunpack.c.h.b16 %v2279
    %v5089 = vunpack.c.l.b16 %v2280
    %v5090 = vunpack.c.h.b16 %v2280
    %v5091 = vunpack.c.l.b16 %v2281
    %v5092 = vunpack.c.h.b16 %v2281
    %v5093 = vunpack.c.l.b16 %v2282
    %v5094 = vunpack.c.h.b16 %v2282
    %v5095 = vunpack.c.l.b16 %v2283
    %v5096 = vunpack.c.h.b16 %v2283
    %v5097 = vunpack.c.l.b16 %v2284
    %v5098 = vunpack.c.h.b16 %v2284
    %v5099 = vunpack.c.l.b16 %v2285
    %v5100 = vunpack.c.h.b16 %v2285
    %v5101 = vunpack.c.l.b16 %v2286
    %v5102 = vunpack.c.h.b16 %v2286
    %v5103 = vunpack.c.l.b16 %v2287
    %v5104 = vunpack.c.h.b16 %v2287
    %v5105 = vunpack.c.l.b16 %v2288
    %v5106 = vunpack.c.h.b16 %v2288
    %v5107 = vunpack.c.l.b16 %v2289
    %v5108 = vunpack.c.h.b16 %v2289
    %v5109 = vunpack.c.l.b16 %v2290
    %v5110 = vunpack.c.h.b16 %v2290
    %v5111 = vunpack.c.l.b16 %v2291
    %v5112 = vunpack.c.h.b16 %v2291
    %v5113 = vunpack.c.l.b16 %v2292
    %v5114 = vunpack.c.h.b16 %v2292
    %v5115 = vunpack.c.l.b16 %v2293
    %v5116 = vunpack.c.h.b16 %v2293
    %v5117 = vunpack.c.l.b16 %v2294
    %v5118 = vunpack.c.h.b16 %v2294
    %v5119 = vunpack.c.l.b16 %v2295
    %v5120 = vunpack.c.h.b16 %v2295
    %v5121 = vunpack.c.l.b16 %v2296
    %v5122 = vunpack.c.h.b16 %v2296
    %v5123 = vunpack.c.l.b16 %v2297
    %v5124 = vunpack.c.h.b16 %v2297
    %v5125 = vunpack.c.l.b16 %v2298
    %v5126 = vunpack.c.h.b16 %v2298
    %v5127 = vunpack.c.l.b16 %v2299
    %v5128 = vunpack.c.h.b16 %v2299
    %v5129 = vunpack.c.l.b16 %v2300
    %v5130 = vunpack.c.h.b16 %v2300
    %v5131 = vunpack.c.l.b16 %v2301
    %v5132 = vunpack.c.h.b16 %v2301
    %v5133 = vunpack.c.l.b16 %v2302
    %v5134 = vunpack.c.h.b16 %v2302
    %v5135 = vunpack.c.l.b16 %v2303
    %v5136 = vunpack.c.h.b16 %v2303
    %v5137 = vunpack.c.l.b16 %v2304
    %v5138 = vunpack.c.h.b16 %v2304
    %v5139 = vunpack.c.l.b16 %v2305
    %v5140 = vunpack.c.h.b16 %v2305
    %v5141 = vunpack.c.l.b16 %v2306
    %v5142 = vunpack.c.h.b16 %v2306
    %v5143 = vunpack.c.l.b16 %v2307
    %v5144 = vunpack.c.h.b16 %v2307
    %v5145 = vunpack.c.l.b16 %v2308
    %v5146 = vunpack.c.h.b16 %v2308
    %v5147 = vunpack.c.l.b16 %v2309
    %v5148 = vunpack.c.h.b16 %v2309
    %v5149 = vunpack.c.l.b16 %v2310
    %v5150 = vunpack.c.h.b16 %v2310
    %v5151 = vunpack.c.l.b16 %v2311
    %v5152 = vunpack.c.h.b16 %v2311
    %v5153 = vunpack.c.l.b16 %v2312
    %v5154 = vunpack.c.h.b16 %v2312
    %v5155 = vunpack.c.l.b16 %v2313
    %v5156 = vunpack.c.h.b16 %v2313
    %v5157 = vunpack.c.l.b16 %v2314
    %v5158 = vunpack.c.h.b16 %v2314
    %v5159 = vunpack.c.l.b16 %v2315
    %v5160 = vunpack.c.h.b16 %v2315
    %v5161 = vunpack.c.l.b16 %v2316
    %v5162 = vunpack.c.h.b16 %v2316
    %v5163 = vunpack.c.l.b16 %v2317
    %v5164 = vunpack.c.h.b16 %v2317
    %v5165 = vunpack.c.l.b16 %v2318
    %v5166 = vunpack.c.h.b16 %v2318
    %v5167 = vunpack.c.l.b16 %v2319
    %v5168 = vunpack.c.h.b16 %v2319
    %v5169 = vunpack.c.l.b16 %v2320
    %v5170 = vunpack.c.h.b16 %v2320
    %v5171 = vunpack.c.l.b16 %v2321
    %v5172 = vunpack.c.h.b16 %v2321
    %v5173 = vunpack.c.l.b16 %v2322
    %v5174 = vunpack.c.h.b16 %v2322
    %v5175 = vunpack.c.l.b16 %v2323
    %v5176 = vunpack.c.h.b16 %v2323
    %v5177 = vunpack.c.l.b16 %v2324
    %v5178 = vunpack.c.h.b16 %v2324
    %v5179 = vunpack.c.l.b16 %v2325
    %v5180 = vunpack.c.h.b16 %v2325
    %v5181 = vunpack.c.l.b16 %v2326
    %v5182 = vunpack.c.h.b16 %v2326
    %v5183 = vunpack.c.l.b16 %v2327
    %v5184 = vunpack.c.h.b16 %v2327
    %v5185 = vunpack.c.l.b16 %v2328
    %v5186 = vunpack.c.h.b16 %v2328
    %v5187 = vunpack.c.l.b16 %v2329
    %v5188 = vunpack.c.h.b16 %v2329
    %v5189 = vunpack.c.l.b16 %v2330
    %v5190 = vunpack.c.h.b16 %v2330
    %v5191 = vunpack.c.l.b16 %v2331
    %v5192 = vunpack.c.h.b16 %v2331
    %v5193 = vunpack.c.l.b16 %v2332
    %v5194 = vunpack.c.h.b16 %v2332
    %v5195 = vunpack.c.l.b16 %v2333
    %v5196 = vunpack.c.h.b16 %v2333
    %v5197 = vunpack.c.l.b16 %v2334
    %v5198 = vunpack.c.h.b16 %v2334
    %v5199 = vunpack.c.l.b16 %v2335
    %v5200 = vunpack.c.h.b16 %v2335
    %v5201 = vunpack.c.l.b16 %v2336
    %v5202 = vunpack.c.h.b16 %v2336
    %v5203 = vunpack.c.l.b16 %v2337
    %v5204 = vunpack.c.h.b16 %v2337
    %v5205 = vunpack.c.l.b16 %v2338
    %v5206 = vunpack.c.h.b16 %v2338
    %v5207 = vunpack.c.l.b16 %v2339
    %v5208 = vunpack.c.h.b16 %v2339
    %v5209 = vunpack.c.l.b16 %v2340
    %v5210 = vunpack.c.h.b16 %v2340
    %v5211 = vunpack.c.l.b16 %v2341
    %v5212 = vunpack.c.h.b16 %v2341
    %v5213 = vunpack.c.l.b16 %v2342
    %v5214 = vunpack.c.h.b16 %v2342
    %v5215 = vunpack.c.l.b16 %v2343
    %v5216 = vunpack.c.h.b16 %v2343
    %v5217 = vunpack.c.l.b16 %v2344
    %v5218 = vunpack.c.h.b16 %v2344
    %v5219 = vunpack.c.l.b16 %v2345
    %v5220 = vunpack.c.h.b16 %v2345
    %v5221 = vunpack.c.l.b16 %v2346
    %v5222 = vunpack.c.h.b16 %v2346
    %v5223 = vunpack.c.l.b16 %v2347
    %v5224 = vunpack.c.h.b16 %v2347
    %v5225 = vunpack.c.l.b16 %v2348
    %v5226 = vunpack.c.h.b16 %v2348
    %v5227 = vunpack.c.l.b16 %v2349
    %v5228 = vunpack.c.h.b16 %v2349
    %v5229 = vunpack.c.l.b16 %v2350
    %v5230 = vunpack.c.h.b16 %v2350
    %v5231 = vunpack.c.l.b16 %v2351
    %v5232 = vunpack.c.h.b16 %v2351
    %v5233 = vunpack.c.l.b16 %v2352
    %v5234 = vunpack.c.h.b16 %v2352
    %v5235 = vunpack.c.l.b16 %v2353
    %v5236 = vunpack.c.h.b16 %v2353
    %v5237 = vunpack.c.l.b16 %v2354
    %v5238 = vunpack.c.h.b16 %v2354
    %v5239 = vunpack.c.l.b16 %v2355
    %v5240 = vunpack.c.h.b16 %v2355
    %v5241 = vunpack.c.l.b16 %v2356
    %v5242 = vunpack.c.h.b16 %v2356
    %v5243 = vunpack.c.l.b16 %v2357
    %v5244 = vunpack.c.h.b16 %v2357
    %v5245 = vunpack.c.l.b16 %v2358
    %v5246 = vunpack.c.h.b16 %v2358
    %v5247 = vunpack.c.l.b16 %v2359
    %v5248 = vunpack.c.h.b16 %v2359
    %v5249 = vunpack.c.l.b16 %v2360
    %v5250 = vunpack.c.h.b16 %v2360
    %v5251 = vunpack.c.l.b16 %v2361
    %v5252 = vunpack.c.h.b16 %v2361
    %v5253 = vunpack.c.l.b16 %v2362
    %v5254 = vunpack.c.h.b16 %v2362
    %v5255 = vunpack.c.l.b16 %v2363
    %v5256 = vunpack.c.h.b16 %v2363
    %v5257 = vunpack.c.l.b16 %v2364
    %v5258 = vunpack.c.h.b16 %v2364
    %v5259 = vunpack.c.l.b16 %v2365
    %v5260 = vunpack.c.h.b16 %v2365
    %v5261 = vunpack.c.l.b16 %v2366
    %v5262 = vunpack.c.h.b16 %v2366
    %v5263 = vunpack.c.l.b16 %v2367
    %v5264 = vunpack.c.h.b16 %v2367
    %v5265 = vunpack.c.l.b16 %v2368
    %v5266 = vunpack.c.h.b16 %v2368
    %v5267 = vunpack.c.l.b16 %v2369
    %v5268 = vunpack.c.h.b16 %v2369
    %v5269 = vunpack.c.l.b16 %v2370
    %v5270 = vunpack.c.h.b16 %v2370
    %v5271 = vunpack.c.l.b16 %v2371
    %v5272 = vunpack.c.h.b16 %v2371
    %v5273 = vunpack.c.l.b16 %v2372
    %v5274 = vunpack.c.h.b16 %v2372
    %v5275 = vunpack.c.l.b16 %v2373
    %v5276 = vunpack.c.h.b16 %v2373
    %v5277 = vunpack.c.l.b16 %v2374
    %v5278 = vunpack.c.h.b16 %v2374
    %v5279 = vunpack.c.l.b16 %v2375
    %v5280 = vunpack.c.h.b16 %v2375
    %v5281 = vunpack.c.l.b16 %v2376
    %v5282 = vunpack.c.h.b16 %v2376
    %v5283 = vunpack.c.l.b16 %v2377
    %v5284 = vunpack.c.h.b16 %v2377
    %v5285 = vunpack.c.l.b16 %v2378
    %v5286 = vunpack.c.h.b16 %v2378
    %v5287 = vunpack.c.l.b16 %v2379
    %v5288 = vunpack.c.h.b16 %v2379
    %v5289 = vunpack.c.l.b16 %v2380
    %v5290 = vunpack.c.h.b16 %v2380
    %v5291 = vunpack.c.l.b16 %v2381
    %v5292 = vunpack.c.h.b16 %v2381
    %v5293 = vunpack.c.l.b16 %v2382
    %v5294 = vunpack.c.h.b16 %v2382
    %v5295 = vunpack.c.l.b16 %v2383
    %v5296 = vunpack.c.h.b16 %v2383
    %v5297 = vunpack.c.l.b16 %v2384
    %v5298 = vunpack.c.h.b16 %v2384
    %v5299 = vunpack.c.l.b16 %v2385
    %v5300 = vunpack.c.h.b16 %v2385
    %v5301 = vunpack.c.l.b16 %v2386
    %v5302 = vunpack.c.h.b16 %v2386
    %v5303 = vunpack.c.l.b16 %v2387
    %v5304 = vunpack.c.h.b16 %v2387
    %v5305 = vunpack.c.l.b16 %v2388
    %v5306 = vunpack.c.h.b16 %v2388
    %v5307 = vunpack.c.l.b16 %v2389
    %v5308 = vunpack.c.h.b16 %v2389
    %v5309 = vunpack.c.l.b16 %v2390
    %v5310 = vunpack.c.h.b16 %v2390
    %v5311 = vunpack.c.l.b16 %v2391
    %v5312 = vunpack.c.h.b16 %v2391
    %v5313 = vunpack.c.l.b16 %v2392
    %v5314 = vunpack.c.h.b16 %v2392
    %v5315 = vunpack.c.l.b16 %v2393
    %v5316 = vunpack.c.h.b16 %v2393
    %v5317 = vunpack.c.l.b16 %v2394
    %v5318 = vunpack.c.h.b16 %v2394
    %v5319 = vunpack.c.l.b16 %v2395
    %v5320 = vunpack.c.h.b16 %v2395
    %v5321 = vunpack.c.l.b16 %v2396
    %v5322 = vunpack.c.h.b16 %v2396
    %v5323 = vunpack.c.l.b16 %v2397
    %v5324 = vunpack.c.h.b16 %v2397
    %v5325 = vunpack.c.l.b16 %v2398
    %v5326 = vunpack.c.h.b16 %v2398
    %v5327 = vunpack.c.l.b16 %v2399
    %v5328 = vunpack.c.h.b16 %v2399
    %v5329 = vunpack.c.l.b16 %v2400
    %v5330 = vunpack.c.h.b16 %v2400
    %v5331 = vunpack.c.l.b16 %v2401
    %v5332 = vunpack.c.h.b16 %v2401
    %v5333 = vunpack.c.l.b16 %v2402
    %v5334 = vunpack.c.h.b16 %v2402
    %v5335 = vunpack.c.l.b16 %v2403
    %v5336 = vunpack.c.h.b16 %v2403
    %v5337 = vunpack.c.l.b16 %v2404
    %v5338 = vunpack.c.h.b16 %v2404
    %v5339 = vunpack.c.l.b16 %v2405
    %v5340 = vunpack.c.h.b16 %v2405
    %v5341 = vunpack.c.l.b16 %v2406
    %v5342 = vunpack.c.h.b16 %v2406
    %v5343 = vunpack.c.l.b16 %v2407
    %v5344 = vunpack.c.h.b16 %v2407
    %v5345 = vunpack.c.l.b16 %v2408
    %v5346 = vunpack.c.h.b16 %v2408
    %v5347 = vunpack.c.l.b16 %v2409
    %v5348 = vunpack.c.h.b16 %v2409
    %v5349 = vunpack.c.l.b16 %v2410
    %v5350 = vunpack.c.h.b16 %v2410
    %v5351 = vunpack.c.l.b16 %v2411
    %v5352 = vunpack.c.h.b16 %v2411
    %v5353 = vunpack.c.l.b16 %v2412
    %v5354 = vunpack.c.h.b16 %v2412
    %v5355 = vunpack.c.l.b16 %v2413
    %v5356 = vunpack.c.h.b16 %v2413
    %v5357 = vunpack.c.l.b16 %v2414
    %v5358 = vunpack.c.h.b16 %v2414
    %v5359 = vunpack.c.l.b16 %v2415
    %v5360 = vunpack.c.h.b16 %v2415
    %v5361 = vunpack.c.l.b16 %v2416
    %v5362 = vunpack.c.h.b16 %v2416
    %v5363 = vunpack.c.l.b16 %v2417
    %v5364 = vunpack.c.h.b16 %v2417
    %v5365 = vunpack.c.l.b16 %v2418
    %v5366 = vunpack.c.h.b16 %v2418
    %v5367 = vunpack.c.l.b16 %v2419
    %v5368 = vunpack.c.h.b16 %v2419
    %v5369 = vunpack.c.l.b16 %v2420
    %v5370 = vunpack.c.h.b16 %v2420
    %v5371 = vunpack.c.l.b16 %v2421
    %v5372 = vunpack.c.h.b16 %v2421
    %v5373 = vunpack.c.l.b16 %v2422
    %v5374 = vunpack.c.h.b16 %v2422
    %v5375 = vunpack.c.l.b16 %v2423
    %v5376 = vunpack.c.h.b16 %v2423
    %v5377 = vunpack.c.l.b16 %v2424
    %v5378 = vunpack.c.h.b16 %v2424
    %v5379 = vunpack.c.l.b16 %v2425
    %v5380 = vunpack.c.h.b16 %v2425
    %v5381 = vunpack.c.l.b16 %v2426
    %v5382 = vunpack.c.h.b16 %v2426
    %v5383 = vunpack.c.l.b16 %v2427
    %v5384 = vunpack.c.h.b16 %v2427
    %v5385 = vunpack.c.l.b16 %v2428
    %v5386 = vunpack.c.h.b16 %v2428
    %v5387 = vunpack.c.l.b16 %v2429
    %v5388 = vunpack.c.h.b16 %v2429
    %v5389 = vunpack.c.l.b16 %v2430
    %v5390 = vunpack.c.h.b16 %v2430
    %v5391 = vunpack.c.l.b16 %v2431
    %v5392 = vunpack.c.h.b16 %v2431
    %v5393 = vunpack.c.l.b16 %v2432
    %v5394 = vunpack.c.h.b16 %v2432
    %v5395 = vunpack.c.l.b16 %v2433
    %v5396 = vunpack.c.h.b16 %v2433
    %v5397 = vunpack.c.l.b16 %v2434
    %v5398 = vunpack.c.h.b16 %v2434
    %v5399 = vunpack.c.l.b16 %v2435
    %v5400 = vunpack.c.h.b16 %v2435
    %v5401 = vunpack.c.l.b16 %v2436
    %v5402 = vunpack.c.h.b16 %v2436
    %v5403 = vunpack.c.l.b16 %v2437
    %v5404 = vunpack.c.h.b16 %v2437
    %v5405 = vunpack.c.l.b16 %v2438
    %v5406 = vunpack.c.h.b16 %v2438
    %v5407 = vunpack.c.l.b16 %v2439
    %v5408 = vunpack.c.h.b16 %v2439
    %v5409 = vunpack.c.l.b16 %v2440
    %v5410 = vunpack.c.h.b16 %v2440
    %v5411 = vunpack.c.l.b16 %v2441
    %v5412 = vunpack.c.h.b16 %v2441
    %v5413 = vunpack.c.l.b16 %v2442
    %v5414 = vunpack.c.h.b16 %v2442
    %v5415 = vunpack.c.l.b16 %v2443
    %v5416 = vunpack.c.h.b16 %v2443
    %v5417 = vunpack.c.l.b16 %v2444
    %v5418 = vunpack.c.h.b16 %v2444
    %v5419 = vunpack.c.l.b16 %v2445
    %v5420 = vunpack.c.h.b16 %v2445
    %v5421 = vunpack.c.l.b16 %v2446
    %v5422 = vunpack.c.h.b16 %v2446
    %v5423 = vunpack.c.l.b16 %v2447
    %v5424 = vunpack.c.h.b16 %v2447
    %v5425 = vunpack.c.l.b16 %v2448
    %v5426 = vunpack.c.h.b16 %v2448
    %v5427 = vunpack.c.l.b16 %v2449
    %v5428 = vunpack.c.h.b16 %v2449
    %v5429 = vunpack.c.l.b16 %v2450
    %v5430 = vunpack.c.h.b16 %v2450
    %v5431 = vunpack.c.l.b16 %v2451
    %v5432 = vunpack.c.h.b16 %v2451
    %v5433 = vunpack.c.l.b16 %v2452
    %v5434 = vunpack.c.h.b16 %v2452
    %v5435 = vunpack.c.l.b16 %v2453
    %v5436 = vunpack.c.h.b16 %v2453
    %v5437 = vunpack.c.l.b16 %v2454
    %v5438 = vunpack.c.h.b16 %v2454
    %v5439 = vunpack.c.l.b16 %v2455
    %v5440 = vunpack.c.h.b16 %v2455
    %v5441 = vunpack.c.l.b16 %v2456
    %v5442 = vunpack.c.h.b16 %v2456
    %v5443 = vunpack.c.l.b16 %v2457
    %v5444 = vunpack.c.h.b16 %v2457
    %v5445 = vunpack.c.l.b16 %v2458
    %v5446 = vunpack.c.h.b16 %v2458
    %v5447 = vunpack.c.l.b16 %v2459
    %v5448 = vunpack.c.h.b16 %v2459
    %v5449 = vunpack.c.l.b16 %v2460
    %v5450 = vunpack.c.h.b16 %v2460
    %v5451 = vunpack.c.l.b16 %v2461
    %v5452 = vunpack.c.h.b16 %v2461
    %v5453 = vunpack.c.l.b16 %v2462
    %v5454 = vunpack.c.h.b16 %v2462
    %v5455 = vunpack.c.l.b16 %v2463
    %v5456 = vunpack.c.h.b16 %v2463
    %v5457 = vunpack.c.l.b16 %v2464
    %v5458 = vunpack.c.h.b16 %v2464
    %v5459 = vunpack.c.l.b16 %v2465
    %v5460 = vunpack.c.h.b16 %v2465
    %v5461 = vunpack.c.l.b16 %v2466
    %v5462 = vunpack.c.h.b16 %v2466
    %v5463 = vunpack.c.l.b16 %v2467
    %v5464 = vunpack.c.h.b16 %v2467
    %v5465 = vunpack.c.l.b16 %v2468
    %v5466 = vunpack.c.h.b16 %v2468
    %v5467 = vunpack.c.l.b16 %v2469
    %v5468 = vunpack.c.h.b16 %v2469
    %v5469 = vunpack.c.l.b16 %v2470
    %v5470 = vunpack.c.h.b16 %v2470
    %v5471 = vunpack.c.l.b16 %v2471
    %v5472 = vunpack.c.h.b16 %v2471
    %v5473 = vunpack.c.l.b16 %v2472
    %v5474 = vunpack.c.h.b16 %v2472
    %v5475 = vunpack.c.l.b16 %v2473
    %v5476 = vunpack.c.h.b16 %v2473
    %v5477 = vunpack.c.l.b16 %v2474
    %v5478 = vunpack.c.h.b16 %v2474
    %v5479 = vunpack.c.l.b16 %v2475
    %v5480 = vunpack.c.h.b16 %v2475
    %v5481 = vunpack.c.l.b16 %v2476
    %v5482 = vunpack.c.h.b16 %v2476
    %v5483 = vunpack.c.l.b16 %v2477
    %v5484 = vunpack.c.h.b16 %v2477
    %v5485 = vunpack.c.l.b16 %v2478
    %v5486 = vunpack.c.h.b16 %v2478
    %v5487 = vunpack.c.l.b16 %v2479
    %v5488 = vunpack.c.h.b16 %v2479
    %v5489 = vunpack.c.l.b16 %v2480
    %v5490 = vunpack.c.h.b16 %v2480
    %v5491 = vunpack.c.l.b16 %v2481
    %v5492 = vunpack.c.h.b16 %v2481
    %v5493 = vunpack.c.l.b16 %v2482
    %v5494 = vunpack.c.h.b16 %v2482
    %v5495 = vunpack.c.l.b16 %v2483
    %v5496 = vunpack.c.h.b16 %v2483
    %v5497 = vunpack.c.l.b16 %v2484
    %v5498 = vunpack.c.h.b16 %v2484
    %v5499 = vunpack.c.l.b16 %v2485
    %v5500 = vunpack.c.h.b16 %v2485
    %v5501 = vunpack.c.l.b16 %v2486
    %v5502 = vunpack.c.h.b16 %v2486
    %v5503 = vunpack.c.l.b16 %v2487
    %v5504 = vunpack.c.h.b16 %v2487
    %v5505 = vunpack.c.l.b16 %v2488
    %v5506 = vunpack.c.h.b16 %v2488
    %v5507 = vunpack.c.l.b16 %v2489
    %v5508 = vunpack.c.h.b16 %v2489
    %v5509 = vunpack.c.l.b16 %v2490
    %v5510 = vunpack.c.h.b16 %v2490
    %v5511 = vunpack.c.l.b16 %v2491
    %v5512 = vunpack.c.h.b16 %v2491
    %v5513 = vunpack.c.l.b16 %v2492
    %v5514 = vunpack.c.h.b16 %v2492
    %v5515 = vunpack.c.l.b16 %v2493
    %v5516 = vunpack.c.h.b16 %v2493
    %v5517 = vunpack.c.l.b16 %v2494
    %v5518 = vunpack.c.h.b16 %v2494
    %v5519 = vunpack.c.l.b16 %v2495
    %v5520 = vunpack.c.h.b16 %v2495
    %v5521 = vunpack.c.l.b16 %v2496
    %v5522 = vunpack.c.h.b16 %v2496
    %v5523 = vunpack.c.l.b16 %v2497
    %v5524 = vunpack.c.h.b16 %v2497
    %v5525 = vunpack.c.l.b16 %v2498
    %v5526 = vunpack.c.h.b16 %v2498
    %v5527 = vunpack.c.l.b16 %v2499
    %v5528 = vunpack.c.h.b16 %v2499
    %v5529 = vunpack.c.l.b16 %v2500
    %v5530 = vunpack.c.h.b16 %v2500
    %v5531 = vunpack.c.l.b16 %v2501
    %v5532 = vunpack.c.h.b16 %v2501
    %v5533 = vunpack.c.l.b16 %v2502
    %v5534 = vunpack.c.h.b16 %v2502
    %v5535 = vunpack.c.l.b16 %v2503
    %v5536 = vunpack.c.h.b16 %v2503
    %v5537 = vunpack.c.l.b16 %v2504
    %v5538 = vunpack.c.h.b16 %v2504
    %v5539 = vunpack.c.l.b16 %v2505
    %v5540 = vunpack.c.h.b16 %v2505
    %v5541 = vunpack.c.l.b16 %v2506
    %v5542 = vunpack.c.h.b16 %v2506
    %v5543 = vunpack.c.l.b16 %v2507
    %v5544 = vunpack.c.h.b16 %v2507
    %v5545 = vunpack.c.l.b16 %v2508
    %v5546 = vunpack.c.h.b16 %v2508
    %v5547 = vunpack.c.l.b16 %v2509
    %v5548 = vunpack.c.h.b16 %v2509
    %v5549 = vunpack.c.l.b16 %v2510
    %v5550 = vunpack.c.h.b16 %v2510
    %v5551 = vunpack.c.l.b16 %v2511
    %v5552 = vunpack.c.h.b16 %v2511
    %v5553 = vunpack.c.l.b16 %v2512
    %v5554 = vunpack.c.h.b16 %v2512
    %v5555 = vunpack.c.l.b16 %v2513
    %v5556 = vunpack.c.h.b16 %v2513
    %v5557 = vunpack.c.l.b16 %v2514
    %v5558 = vunpack.c.h.b16 %v2514
    %v5559 = vunpack.c.l.b16 %v2515
    %v5560 = vunpack.c.h.b16 %v2515
    %v5561 = vunpack.c.l.b16 %v2516
    %v5562 = vunpack.c.h.b16 %v2516
    %v5563 = vunpack.c.l.b16 %v2517
    %v5564 = vunpack.c.h.b16 %v2517
    %v5565 = vunpack.c.l.b16 %v2518
    %v5566 = vunpack.c.h.b16 %v2518
    %v5567 = vunpack.c.l.b16 %v2519
    %v5568 = vunpack.c.h.b16 %v2519
    %v5569 = vunpack.c.l.b16 %v2520
    %v5570 = vunpack.c.h.b16 %v2520
    %v5571 = vunpack.c.l.b16 %v2521
    %v5572 = vunpack.c.h.b16 %v2521
    %v5573 = vunpack.c.l.b16 %v2522
    %v5574 = vunpack.c.h.b16 %v2522
    %v5575 = vunpack.c.l.b16 %v2523
    %v5576 = vunpack.c.h.b16 %v2523
    %v5577 = vunpack.c.l.b16 %v2524
    %v5578 = vunpack.c.h.b16 %v2524
    %v5579 = vunpack.c.l.b16 %v2525
    %v5580 = vunpack.c.h.b16 %v2525
    %v5581 = vunpack.c.l.b16 %v2526
    %v5582 = vunpack.c.h.b16 %v2526
    %v5583 = vunpack.c.l.b16 %v2527
    %v5584 = vunpack.c.h.b16 %v2527
    %v5585 = vunpack.c.l.b16 %v2528
    %v5586 = vunpack.c.h.b16 %v2528
    %v5587 = vunpack.c.l.b16 %v2529
    %v5588 = vunpack.c.h.b16 %v2529
    %v5589 = vunpack.c.l.b16 %v2530
    %v5590 = vunpack.c.h.b16 %v2530
    %v5591 = vunpack.c.l.b16 %v2531
    %v5592 = vunpack.c.h.b16 %v2531
    %v5593 = vunpack.c.l.b16 %v2532
    %v5594 = vunpack.c.h.b16 %v2532
    %v5595 = vunpack.c.l.b16 %v2533
    %v5596 = vunpack.c.h.b16 %v2533
    %v5597 = vunpack.c.l.b16 %v2534
    %v5598 = vunpack.c.h.b16 %v2534
    %v5599 = vunpack.c.l.b16 %v2535
    %v5600 = vunpack.c.h.b16 %v2535
    %v5601 = vunpack.c.l.b16 %v2536
    %v5602 = vunpack.c.h.b16 %v2536
    %v5603 = vunpack.c.l.b16 %v2537
    %v5604 = vunpack.c.h.b16 %v2537
    %v5605 = vunpack.c.l.b16 %v2538
    %v5606 = vunpack.c.h.b16 %v2538
    %v5607 = vunpack.c.l.b16 %v2539
    %v5608 = vunpack.c.h.b16 %v2539
    %v5609 = vunpack.c.l.b16 %v2540
    %v5610 = vunpack.c.h.b16 %v2540
    %v5611 = vunpack.c.l.b16 %v2541
    %v5612 = vunpack.c.h.b16 %v2541
    %v5613 = vunpack.c.l.b16 %v2542
    %v5614 = vunpack.c.h.b16 %v2542
    %v5615 = vunpack.c.l.b16 %v2543
    %v5616 = vunpack.c.h.b16 %v2543
    %v5617 = vunpack.c.l.b16 %v2544
    %v5618 = vunpack.c.h.b16 %v2544
    %v5619 = vunpack.c.l.b16 %v2545
    %v5620 = vunpack.c.h.b16 %v2545
    %v5621 = vunpack.c.l.b16 %v2546
    %v5622 = vunpack.c.h.b16 %v2546
    %v5623 = vunpack.c.l.b16 %v2547
    %v5624 = vunpack.c.h.b16 %v2547
    %v5625 = vunpack.c.l.b16 %v2548
    %v5626 = vunpack.c.h.b16 %v2548
    %v5627 = vunpack.c.l.b16 %v2549
    %v5628 = vunpack.c.h.b16 %v2549
    %v5629 = vunpack.c.l.b16 %v2550
    %v5630 = vunpack.c.h.b16 %v2550
    %v5631 = vunpack.c.l.b16 %v2551
    %v5632 = vunpack.c.h.b16 %v2551
    %v5633 = vunpack.c.l.b16 %v2552
    %v5634 = vunpack.c.h.b16 %v2552
    %v5635 = vunpack.c.l.b16 %v2553
    %v5636 = vunpack.c.h.b16 %v2553
    %v5637 = vunpack.c.l.b16 %v2554
    %v5638 = vunpack.c.h.b16 %v2554
    %v5639 = vunpack.c.l.b16 %v2555
    %v5640 = vunpack.c.h.b16 %v2555
    %v5641 = vunpack.c.l.b16 %v2556
    %v5642 = vunpack.c.h.b16 %v2556
    %v5643 = vunpack.c.l.b16 %v2557
    %v5644 = vunpack.c.h.b16 %v2557
    %v5645 = vunpack.c.l.b16 %v2558
    %v5646 = vunpack.c.h.b16 %v2558
    %v5647 = vunpack.c.l.b16 %v2559
    %v5648 = vunpack.c.h.b16 %v2559
    %v5649 = vunpack.c.l.b16 %v2560
    %v5650 = vunpack.c.h.b16 %v2560
    %v5651 = vunpack.c.l.b16 %v2561
    %v5652 = vunpack.c.h.b16 %v2561
    %v5653 = vunpack.c.l.b16 %v2562
    %v5654 = vunpack.c.h.b16 %v2562
    %v5655 = vunpack.c.l.b16 %v2563
    %v5656 = vunpack.c.h.b16 %v2563
    %v5657 = vunpack.c.l.b16 %v2564
    %v5658 = vunpack.c.h.b16 %v2564
    %v5659 = vunpack.c.l.b16 %v2565
    %v5660 = vunpack.c.h.b16 %v2565
    %v5661 = vunpack.c.l.b16 %v2566
    %v5662 = vunpack.c.h.b16 %v2566
    %v5663 = vunpack.c.l.b16 %v2567
    %v5664 = vunpack.c.h.b16 %v2567
    %v5665 = vunpack.c.l.b16 %v2568
    %v5666 = vunpack.c.h.b16 %v2568
    %v5667 = vunpack.c.l.b16 %v2569
    %v5668 = vunpack.c.h.b16 %v2569
    %v5669 = vunpack.c.l.b16 %v2570
    %v5670 = vunpack.c.h.b16 %v2570
    %v5671 = vunpack.c.l.b16 %v2571
    %v5672 = vunpack.c.h.b16 %v2571
    %v5673 = vunpack.c.l.b16 %v2572
    %v5674 = vunpack.c.h.b16 %v2572
    %v5675 = vunpack.c.l.b16 %v2573
    %v5676 = vunpack.c.h.b16 %v2573
    %v5677 = vunpack.c.l.b16 %v2574
    %v5678 = vunpack.c.h.b16 %v2574
    %v5679 = vunpack.c.l.b16 %v2575
    %v5680 = vunpack.c.h.b16 %v2575
    %v5681 = vunpack.c.l.b16 %v2576
    %v5682 = vunpack.c.h.b16 %v2576
    %v5683 = vunpack.c.l.b16 %v2577
    %v5684 = vunpack.c.h.b16 %v2577
    %v5685 = vunpack.c.l.b16 %v2578
    %v5686 = vunpack.c.h.b16 %v2578
    %v5687 = vpack.c.b16 %v3655, %v3639
    %v5688 = vpack.c.b16 %v3656, %v3640
    %v5689 = vpack.c.b16 %v3657, %v3641
    %v5690 = vpack.c.b16 %v3658, %v3642
    %v5691 = vpack.c.b16 %v3659, %v3643
    %v5692 = vpack.c.b16 %v3660, %v3644
    %v5693 = vpack.c.b16 %v3661, %v3645
    %v5694 = vpack.c.b16 %v3662, %v3646
    %v5695 = vpack.c.b16 %v3663, %v3647
    %v5696 = vpack.c.b16 %v3664, %v3648
    %v5697 = vpack.c.b16 %v3665, %v3649
    %v5698 = vpack.c.b16 %v3666, %v3650
    %v5699 = vpack.c.b16 %v3667, %v3651
    %v5700 = vpack.c.b16 %v3668, %v3652
    %v5701 = vpack.c.b16 %v3669, %v3653
    %v5702 = vpack.c.b16 %v3670, %v3654
    %v5703 = vpack.c.b16 %v3687, %v3671
    %v5704 = vpack.c.b16 %v3688, %v3672
    %v5705 = vpack.c.b16 %v3689, %v3673
    %v5706 = vpack.c.b16 %v3690, %v3674
    %v5707 = vpack.c.b16 %v3691, %v3675
    %v5708 = vpack.c.b16 %v3692, %v3676
    %v5709 = vpack.c.b16 %v3693, %v3677
    %v5710 = vpack.c.b16 %v3694, %v3678
    %v5711 = vpack.c.b16 %v3695, %v3679
    %v5712 = vpack.c.b16 %v3696, %v3680
    %v5713 = vpack.c.b16 %v3697, %v3681
    %v5714 = vpack.c.b16 %v3698, %v3682
    %v5715 = vpack.c.b16 %v3699, %v3683
    %v5716 = vpack.c.b16 %v3700, %v3684
    %v5717 = vpack.c.b16 %v3701, %v3685
    %v5718 = vpack.c.b16 %v3702, %v3686
    %v5719 = vpack.c.b16 %v3719, %v3703
    %v5720 = vpack.c.b16 %v3720, %v3704
    %v5721 = vpack.c.b16 %v3721, %v3705
    %v5722 = vpack.c.b16 %v3722, %v3706
    %v5723 = vpack.c.b16 %v3723, %v3707
    %v5724 = vpack.c.b16 %v3724, %v3708
    %v5725 = vpack.c.b16 %v3725, %v3709
    %v5726 = vpack.c.b16 %v3726, %v3710
    %v5727 = vpack.c.b16 %v3727, %v3711
    %v5728 = vpack.c.b16 %v3728, %v3712
    %v5729 = vpack.c.b16 %v3729, %v3713
    %v5730 = vpack.c.b16 %v3730, %v3714
    %v5731 = vpack.c.b16 %v3731, %v3715
    %v5732 = vpack.c.b16 %v3732, %v3716
    %v5733 = vpack.c.b16 %v3733, %v3717
    %v5734 = vpack.c.b16 %v3734, %v3718
    %v5735 = vpack.c.b16 %v3751, %v3735
    %v5736 = vpack.c.b16 %v3752, %v3736
    %v5737 = vpack.c.b16 %v3753, %v3737
    %v5738 = vpack.c.b16 %v3754, %v3738
    %v5739 = vpack.c.b16 %v3755, %v3739
    %v5740 = vpack.c.b16 %v3756, %v3740
    %v5741 = vpack.c.b16 %v3757, %v3741
    %v5742 = vpack.c.b16 %v3758, %v3742
    %v5743 = vpack.c.b16 %v3759, %v3743
    %v5744 = vpack.c.b16 %v3760, %v3744
    %v5745 = vpack.c.b16 %v3761, %v3745
    %v5746 = vpack.c.b16 %v3762, %v3746
    %v5747 = vpack.c.b16 %v3763, %v3747
    %v5748 = vpack.c.b16 %v3764, %v3748
    %v5749 = vpack.c.b16 %v3765, %v3749
    %v5750 = vpack.c.b16 %v3766, %v3750
    %v5751 = vpack.c.b16 %v3783, %v3767
    %v5752 = vpack.c.b16 %v3784, %v3768
    %v5753 = vpack.c.b16 %v3785, %v3769
    %v5754 = vpack.c.b16 %v3786, %v3770
    %v5755 = vpack.c.b16 %v3787, %v3771
    %v5756 = vpack.c.b16 %v3788, %v3772
    %v5757 = vpack.c.b16 %v3789, %v3773
    %v5758 = vpack.c.b16 %v3790, %v3774
    %v5759 = vpack.c.b16 %v3791, %v3775
    %v5760 = vpack.c.b16 %v3792, %v3776
    %v5761 = vpack.c.b16 %v3793, %v3777
    %v5762 = vpack.c.b16 %v3794, %v3778
    %v5763 = vpack.c.b16 %v3795, %v3779
    %v5764 = vpack.c.b16 %v3796, %v3780
    %v5765 = vpack.c.b16 %v3797, %v3781
    %v5766 = vpack.c.b16 %v3798, %v3782
    %v5767 = vpack.c.b16 %v3815, %v3799
    %v5768 = vpack.c.b16 %v3816, %v3800
    %v5769 = vpack.c.b16 %v3817, %v3801
    %v5770 = vpack.c.b16 %v3818, %v3802
    %v5771 = vpack.c.b16 %v3819, %v3803
    %v5772 = vpack.c.b16 %v3820, %v3804
    %v5773 = vpack.c.b16 %v3821, %v3805
    %v5774 = vpack.c.b16 %v3822, %v3806
    %v5775 = vpack.c.b16 %v3823, %v3807
    %v5776 = vpack.c.b16 %v3824, %v3808
    %v5777 = vpack.c.b16 %v3825, %v3809
    %v5778 = vpack.c.b16 %v3826, %v3810
    %v5779 = vpack.c.b16 %v3827, %v3811
    %v5780 = vpack.c.b16 %v3828, %v3812
    %v5781 = vpack.c.b16 %v3829, %v3813
    %v5782 = vpack.c.b16 %v3830, %v3814
    %v5783 = vpack.c.b16 %v3847, %v3831
    %v5784 = vpack.c.b16 %v3848, %v3832
    %v5785 = vpack.c.b16 %v3849, %v3833
    %v5786 = vpack.c.b16 %v3850, %v3834
    %v5787 = vpack.c.b16 %v3851, %v3835
    %v5788 = vpack.c.b16 %v3852, %v3836
    %v5789 = vpack.c.b16 %v3853, %v3837
    %v5790 = vpack.c.b16 %v3854, %v3838
    %v5791 = vpack.c.b16 %v3855, %v3839
    %v5792 = vpack.c.b16 %v3856, %v3840
    %v5793 = vpack.c.b16 %v3857, %v3841
    %v5794 = vpack.c.b16 %v3858, %v3842
    %v5795 = vpack.c.b16 %v3859, %v3843
    %v5796 = vpack.c.b16 %v3860, %v3844
    %v5797 = vpack.c.b16 %v3861, %v3845
    %v5798 = vpack.c.b16 %v3862, %v3846
    %v5799 = vpack.c.b16 %v3879, %v3863
    %v5800 = vpack.c.b16 %v3880, %v3864
    %v5801 = vpack.c.b16 %v3881, %v3865
    %v5802 = vpack.c.b16 %v3882, %v3866
    %v5803 = vpack.c.b16 %v3883, %v3867
    %v5804 = vpack.c.b16 %v3884, %v3868
    %v5805 = vpack.c.b16 %v3885, %v3869
    %v5806 = vpack.c.b16 %v3886, %v3870
    %v5807 = vpack.c.b16 %v3887, %v3871
    %v5808 = vpack.c.b16 %v3888, %v3872
    %v5809 = vpack.c.b16 %v3889, %v3873
    %v5810 = vpack.c.b16 %v3890, %v3874
    %v5811 = vpack.c.b16 %v3891, %v3875
    %v5812 = vpack.c.b16 %v3892, %v3876
    %v5813 = vpack.c.b16 %v3893, %v3877
    %v5814 = vpack.c.b16 %v3894, %v3878
    %v5815 = vpack.c.b16 %v3911, %v3895
    %v5816 = vpack.c.b16 %v3912, %v3896
    %v5817 = vpack.c.b16 %v3913, %v3897
    %v5818 = vpack.c.b16 %v3914, %v3898
    %v5819 = vpack.c.b16 %v3915, %v3899
    %v5820 = vpack.c.b16 %v3916, %v3900
    %v5821 = vpack.c.b16 %v3917, %v3901
    %v5822 = vpack.c.b16 %v3918, %v3902
    %v5823 = vpack.c.b16 %v3919, %v3903
    %v5824 = vpack.c.b16 %v3920, %v3904
    %v5825 = vpack.c.b16 %v3921, %v3905
    %v5826 = vpack.c.b16 %v3922, %v3906
    %v5827 = vpack.c.b16 %v3923, %v3907
    %v5828 = vpack.c.b16 %v3924, %v3908
    %v5829 = vpack.c.b16 %v3925, %v3909
    %v5830 = vpack.c.b16 %v3926, %v3910
    %v5831 = vpack.c.b16 %v3943, %v3927
    %v5832 = vpack.c.b16 %v3944, %v3928
    %v5833 = vpack.c.b16 %v3945, %v3929
    %v5834 = vpack.c.b16 %v3946, %v3930
    %v5835 = vpack.c.b16 %v3947, %v3931
    %v5836 = vpack.c.b16 %v3948, %v3932
    %v5837 = vpack.c.b16 %v3949, %v3933
    %v5838 = vpack.c.b16 %v3950, %v3934
    %v5839 = vpack.c.b16 %v3951, %v3935
    %v5840 = vpack.c.b16 %v3952, %v3936
    %v5841 = vpack.c.b16 %v3953, %v3937
    %v5842 = vpack.c.b16 %v3954, %v3938
    %v5843 = vpack.c.b16 %v3955, %v3939
    %v5844 = vpack.c.b16 %v3956, %v3940
    %v5845 = vpack.c.b16 %v3957, %v3941
    %v5846 = vpack.c.b16 %v3958, %v3942
    %v5847 = vpack.c.b16 %v3975, %v3959
    %v5848 = vpack.c.b16 %v3976, %v3960
    %v5849 = vpack.c.b16 %v3977, %v3961
    %v5850 = vpack.c.b16 %v3978, %v3962
    %v5851 = vpack.c.b16 %v3979, %v3963
    %v5852 = vpack.c.b16 %v3980, %v3964
    %v5853 = vpack.c.b16 %v3981, %v3965
    %v5854 = vpack.c.b16 %v3982, %v3966
    %v5855 = vpack.c.b16 %v3983, %v3967
    %v5856 = vpack.c.b16 %v3984, %v3968
    %v5857 = vpack.c.b16 %v3985, %v3969
    %v5858 = vpack.c.b16 %v3986, %v3970
    %v5859 = vpack.c.b16 %v3987, %v3971
    %v5860 = vpack.c.b16 %v3988, %v3972
    %v5861 = vpack.c.b16 %v3989, %v3973
    %v5862 = vpack.c.b16 %v3990, %v3974
    %v5863 = vpack.c.b16 %v4007, %v3991
    %v5864 = vpack.c.b16 %v4008, %v3992
    %v5865 = vpack.c.b16 %v4009, %v3993
    %v5866 = vpack.c.b16 %v4010, %v3994
    %v5867 = vpack.c.b16 %v4011, %v3995
    %v5868 = vpack.c.b16 %v4012, %v3996
    %v5869 = vpack.c.b16 %v4013, %v3997
    %v5870 = vpack.c.b16 %v4014, %v3998
    %v5871 = vpack.c.b16 %v4015, %v3999
    %v5872 = vpack.c.b16 %v4016, %v4000
    %v5873 = vpack.c.b16 %v4017, %v4001
    %v5874 = vpack.c.b16 %v4018, %v4002
    %v5875 = vpack.c.b16 %v4019, %v4003
    %v5876 = vpack.c.b16 %v4020, %v4004
    %v5877 = vpack.c.b16 %v4021, %v4005
    %v5878 = vpack.c.b16 %v4022, %v4006
    %v5879 = vpack.c.b16 %v4039, %v4023
    %v5880 = vpack.c.b16 %v4040, %v4024
    %v5881 = vpack.c.b16 %v4041, %v4025
    %v5882 = vpack.c.b16 %v4042, %v4026
    %v5883 = vpack.c.b16 %v4043, %v4027
    %v5884 = vpack.c.b16 %v4044, %v4028
    %v5885 = vpack.c.b16 %v4045, %v4029
    %v5886 = vpack.c.b16 %v4046, %v4030
    %v5887 = vpack.c.b16 %v4047, %v4031
    %v5888 = vpack.c.b16 %v4048, %v4032
    %v5889 = vpack.c.b16 %v4049, %v4033
    %v5890 = vpack.c.b16 %v4050, %v4034
    %v5891 = vpack.c.b16 %v4051, %v4035
    %v5892 = vpack.c.b16 %v4052, %v4036
    %v5893 = vpack.c.b16 %v4053, %v4037
    %v5894 = vpack.c.b16 %v4054, %v4038
    %v5895 = vpack.c.b16 %v4071, %v4055
    %v5896 = vpack.c.b16 %v4072, %v4056
    %v5897 = vpack.c.b16 %v4073, %v4057
    %v5898 = vpack.c.b16 %v4074, %v4058
    %v5899 = vpack.c.b16 %v4075, %v4059
    %v5900 = vpack.c.b16 %v4076, %v4060
    %v5901 = vpack.c.b16 %v4077, %v4061
    %v5902 = vpack.c.b16 %v4078, %v4062
    %v5903 = vpack.c.b16 %v4079, %v4063
    %v5904 = vpack.c.b16 %v4080, %v4064
    %v5905 = vpack.c.b16 %v4081, %v4065
    %v5906 = vpack.c.b16 %v4082, %v4066
    %v5907 = vpack.c.b16 %v4083, %v4067
    %v5908 = vpack.c.b16 %v4084, %v4068
    %v5909 = vpack.c.b16 %v4085, %v4069
    %v5910 = vpack.c.b16 %v4086, %v4070
    %v5911 = vpack.c.b16 %v4103, %v4087
    %v5912 = vpack.c.b16 %v4104, %v4088
    %v5913 = vpack.c.b16 %v4105, %v4089
    %v5914 = vpack.c.b16 %v4106, %v4090
    %v5915 = vpack.c.b16 %v4107, %v4091
    %v5916 = vpack.c.b16 %v4108, %v4092
    %v5917 = vpack.c.b16 %v4109, %v4093
    %v5918 = vpack.c.b16 %v4110, %v4094
    %v5919 = vpack.c.b16 %v4111, %v4095
    %v5920 = vpack.c.b16 %v4112, %v4096
    %v5921 = vpack.c.b16 %v4113, %v4097
    %v5922 = vpack.c.b16 %v4114, %v4098
    %v5923 = vpack.c.b16 %v4115, %v4099
    %v5924 = vpack.c.b16 %v4116, %v4100
    %v5925 = vpack.c.b16 %v4117, %v4101
    %v5926 = vpack.c.b16 %v4118, %v4102
    %v5927 = vpack.c.b16 %v4135, %v4119
    %v5928 = vpack.c.b16 %v4136, %v4120
    %v5929 = vpack.c.b16 %v4137, %v4121
    %v5930 = vpack.c.b16 %v4138, %v4122
    %v5931 = vpack.c.b16 %v4139, %v4123
    %v5932 = vpack.c.b16 %v4140, %v4124
    %v5933 = vpack.c.b16 %v4141, %v4125
    %v5934 = vpack.c.b16 %v4142, %v4126
    %v5935 = vpack.c.b16 %v4143, %v4127
    %v5936 = vpack.c.b16 %v4144, %v4128
    %v5937 = vpack.c.b16 %v4145, %v4129
    %v5938 = vpack.c.b16 %v4146, %v4130
    %v5939 = vpack.c.b16 %v4147, %v4131
    %v5940 = vpack.c.b16 %v4148, %v4132
    %v5941 = vpack.c.b16 %v4149, %v4133
    %v5942 = vpack.c.b16 %v4150, %v4134
    %v5943 = vpack.c.b16 %v4167, %v4151
    %v5944 = vpack.c.b16 %v4168, %v4152
    %v5945 = vpack.c.b16 %v4169, %v4153
    %v5946 = vpack.c.b16 %v4170, %v4154
    %v5947 = vpack.c.b16 %v4171, %v4155
    %v5948 = vpack.c.b16 %v4172, %v4156
    %v5949 = vpack.c.b16 %v4173, %v4157
    %v5950 = vpack.c.b16 %v4174, %v4158
    %v5951 = vpack.c.b16 %v4175, %v4159
    %v5952 = vpack.c.b16 %v4176, %v4160
    %v5953 = vpack.c.b16 %v4177, %v4161
    %v5954 = vpack.c.b16 %v4178, %v4162
    %v5955 = vpack.c.b16 %v4179, %v4163
    %v5956 = vpack.c.b16 %v4180, %v4164
    %v5957 = vpack.c.b16 %v4181, %v4165
    %v5958 = vpack.c.b16 %v4182, %v4166
    %v5959 = vpack.c.b16 %v4199, %v4183
    %v5960 = vpack.c.b16 %v4200, %v4184
    %v5961 = vpack.c.b16 %v4201, %v4185
    %v5962 = vpack.c.b16 %v4202, %v4186
    %v5963 = vpack.c.b16 %v4203, %v4187
    %v5964 = vpack.c.b16 %v4204, %v4188
    %v5965 = vpack.c.b16 %v4205, %v4189
    %v5966 = vpack.c.b16 %v4206, %v4190
    %v5967 = vpack.c.b16 %v4207, %v4191
    %v5968 = vpack.c.b16 %v4208, %v4192
    %v5969 = vpack.c.b16 %v4209, %v4193
    %v5970 = vpack.c.b16 %v4210, %v4194
    %v5971 = vpack.c.b16 %v4211, %v4195
    %v5972 = vpack.c.b16 %v4212, %v4196
    %v5973 = vpack.c.b16 %v4213, %v4197
    %v5974 = vpack.c.b16 %v4214, %v4198
    %v5975 = vpack.c.b16 %v4231, %v4215
    %v5976 = vpack.c.b16 %v4232, %v4216
    %v5977 = vpack.c.b16 %v4233, %v4217
    %v5978 = vpack.c.b16 %v4234, %v4218
    %v5979 = vpack.c.b16 %v4235, %v4219
    %v5980 = vpack.c.b16 %v4236, %v4220
    %v5981 = vpack.c.b16 %v4237, %v4221
    %v5982 = vpack.c.b16 %v4238, %v4222
    %v5983 = vpack.c.b16 %v4239, %v4223
    %v5984 = vpack.c.b16 %v4240, %v4224
    %v5985 = vpack.c.b16 %v4241, %v4225
    %v5986 = vpack.c.b16 %v4242, %v4226
    %v5987 = vpack.c.b16 %v4243, %v4227
    %v5988 = vpack.c.b16 %v4244, %v4228
    %v5989 = vpack.c.b16 %v4245, %v4229
    %v5990 = vpack.c.b16 %v4246, %v4230
    %v5991 = vpack.c.b16 %v4263, %v4247
    %v5992 = vpack.c.b16 %v4264, %v4248
    %v5993 = vpack.c.b16 %v4265, %v4249
    %v5994 = vpack.c.b16 %v4266, %v4250
    %v5995 = vpack.c.b16 %v4267, %v4251
    %v5996 = vpack.c.b16 %v4268, %v4252
    %v5997 = vpack.c.b16 %v4269, %v4253
    %v5998 = vpack.c.b16 %v4270, %v4254
    %v5999 = vpack.c.b16 %v4271, %v4255
    %v6000 = vpack.c.b16 %v4272, %v4256
    %v6001 = vpack.c.b16 %v4273, %v4257
    %v6002 = vpack.c.b16 %v4274, %v4258
    %v6003 = vpack.c.b16 %v4275, %v4259
    %v6004 = vpack.c.b16 %v4276, %v4260
    %v6005 = vpack.c.b16 %v4277, %v4261
    %v6006 = vpack.c.b16 %v4278, %v4262
    %v6007 = vpack.c.b16 %v4295, %v4279
    %v6008 = vpack.c.b16 %v4296, %v4280
    %v6009 = vpack.c.b16 %v4297, %v4281
    %v6010 = vpack.c.b16 %v4298, %v4282
    %v6011 = vpack.c.b16 %v4299, %v4283
    %v6012 = vpack.c.b16 %v4300, %v4284
    %v6013 = vpack.c.b16 %v4301, %v4285
    %v6014 = vpack.c.b16 %v4302, %v4286
    %v6015 = vpack.c.b16 %v4303, %v4287
    %v6016 = vpack.c.b16 %v4304, %v4288
    %v6017 = vpack.c.b16 %v4305, %v4289
    %v6018 = vpack.c.b16 %v4306, %v4290
    %v6019 = vpack.c.b16 %v4307, %v4291
    %v6020 = vpack.c.b16 %v4308, %v4292
    %v6021 = vpack.c.b16 %v4309, %v4293
    %v6022 = vpack.c.b16 %v4310, %v4294
    %v6023 = vpack.c.b16 %v4327, %v4311
    %v6024 = vpack.c.b16 %v4328, %v4312
    %v6025 = vpack.c.b16 %v4329, %v4313
    %v6026 = vpack.c.b16 %v4330, %v4314
    %v6027 = vpack.c.b16 %v4331, %v4315
    %v6028 = vpack.c.b16 %v4332, %v4316
    %v6029 = vpack.c.b16 %v4333, %v4317
    %v6030 = vpack.c.b16 %v4334, %v4318
    %v6031 = vpack.c.b16 %v4335, %v4319
    %v6032 = vpack.c.b16 %v4336, %v4320
    %v6033 = vpack.c.b16 %v4337, %v4321
    %v6034 = vpack.c.b16 %v4338, %v4322
    %v6035 = vpack.c.b16 %v4339, %v4323
    %v6036 = vpack.c.b16 %v4340, %v4324
    %v6037 = vpack.c.b16 %v4341, %v4325
    %v6038 = vpack.c.b16 %v4342, %v4326
    %v6039 = vpack.c.b16 %v4359, %v4343
    %v6040 = vpack.c.b16 %v4360, %v4344
    %v6041 = vpack.c.b16 %v4361, %v4345
    %v6042 = vpack.c.b16 %v4362, %v4346
    %v6043 = vpack.c.b16 %v4363, %v4347
    %v6044 = vpack.c.b16 %v4364, %v4348
    %v6045 = vpack.c.b16 %v4365, %v4349
    %v6046 = vpack.c.b16 %v4366, %v4350
    %v6047 = vpack.c.b16 %v4367, %v4351
    %v6048 = vpack.c.b16 %v4368, %v4352
    %v6049 = vpack.c.b16 %v4369, %v4353
    %v6050 = vpack.c.b16 %v4370, %v4354
    %v6051 = vpack.c.b16 %v4371, %v4355
    %v6052 = vpack.c.b16 %v4372, %v4356
    %v6053 = vpack.c.b16 %v4373, %v4357
    %v6054 = vpack.c.b16 %v4374, %v4358
    %v6055 = vpack.c.b16 %v4391, %v4375
    %v6056 = vpack.c.b16 %v4392, %v4376
    %v6057 = vpack.c.b16 %v4393, %v4377
    %v6058 = vpack.c.b16 %v4394, %v4378
    %v6059 = vpack.c.b16 %v4395, %v4379
    %v6060 = vpack.c.b16 %v4396, %v4380
    %v6061 = vpack.c.b16 %v4397, %v4381
    %v6062 = vpack.c.b16 %v4398, %v4382
    %v6063 = vpack.c.b16 %v4399, %v4383
    %v6064 = vpack.c.b16 %v4400, %v4384
    %v6065 = vpack.c.b16 %v4401, %v4385
    %v6066 = vpack.c.b16 %v4402, %v4386
    %v6067 = vpack.c.b16 %v4403, %v4387
    %v6068 = vpack.c.b16 %v4404, %v4388
    %v6069 = vpack.c.b16 %v4405, %v4389
    %v6070 = vpack.c.b16 %v4406, %v4390
    %v6071 = vpack.c.b16 %v4423, %v4407
    %v6072 = vpack.c.b16 %v4424, %v4408
    %v6073 = vpack.c.b16 %v4425, %v4409
    %v6074 = vpack.c.b16 %v4426, %v4410
    %v6075 = vpack.c.b16 %v4427, %v4411
    %v6076 = vpack.c.b16 %v4428, %v4412
    %v6077 = vpack.c.b16 %v4429, %v4413
    %v6078 = vpack.c.b16 %v4430, %v4414
    %v6079 = vpack.c.b16 %v4431, %v4415
    %v6080 = vpack.c.b16 %v4432, %v4416
    %v6081 = vpack.c.b16 %v4433, %v4417
    %v6082 = vpack.c.b16 %v4434, %v4418
    %v6083 = vpack.c.b16 %v4435, %v4419
    %v6084 = vpack.c.b16 %v4436, %v4420
    %v6085 = vpack.c.b16 %v4437, %v4421
    %v6086 = vpack.c.b16 %v4438, %v4422
    %v6087 = vpack.c.b16 %v4455, %v4439
    %v6088 = vpack.c.b16 %v4456, %v4440
    %v6089 = vpack.c.b16 %v4457, %v4441
    %v6090 = vpack.c.b16 %v4458, %v4442
    %v6091 = vpack.c.b16 %v4459, %v4443
    %v6092 = vpack.c.b16 %v4460, %v4444
    %v6093 = vpack.c.b16 %v4461, %v4445
    %v6094 = vpack.c.b16 %v4462, %v4446
    %v6095 = vpack.c.b16 %v4463, %v4447
    %v6096 = vpack.c.b16 %v4464, %v4448
    %v6097 = vpack.c.b16 %v4465, %v4449
    %v6098 = vpack.c.b16 %v4466, %v4450
    %v6099 = vpack.c.b16 %v4467, %v4451
    %v6100 = vpack.c.b16 %v4468, %v4452
    %v6101 = vpack.c.b16 %v4469, %v4453
    %v6102 = vpack.c.b16 %v4470, %v4454
    %v6103 = vpack.c.b16 %v4487, %v4471
    %v6104 = vpack.c.b16 %v4488, %v4472
    %v6105 = vpack.c.b16 %v4489, %v4473
    %v6106 = vpack.c.b16 %v4490, %v4474
    %v6107 = vpack.c.b16 %v4491, %v4475
    %v6108 = vpack.c.b16 %v4492, %v4476
    %v6109 = vpack.c.b16 %v4493, %v4477
    %v6110 = vpack.c.b16 %v4494, %v4478
    %v6111 = vpack.c.b16 %v4495, %v4479
    %v6112 = vpack.c.b16 %v4496, %v4480
    %v6113 = vpack.c.b16 %v4497, %v4481
    %v6114 = vpack.c.b16 %v4498, %v4482
    %v6115 = vpack.c.b16 %v4499, %v4483
    %v6116 = vpack.c.b16 %v4500, %v4484
    %v6117 = vpack.c.b16 %v4501, %v4485
    %v6118 = vpack.c.b16 %v4502, %v4486
    %v6119 = vpack.c.b16 %v4519, %v4503
    %v6120 = vpack.c.b16 %v4520, %v4504
    %v6121 = vpack.c.b16 %v4521, %v4505
    %v6122 = vpack.c.b16 %v4522, %v4506
    %v6123 = vpack.c.b16 %v4523, %v4507
    %v6124 = vpack.c.b16 %v4524, %v4508
    %v6125 = vpack.c.b16 %v4525, %v4509
    %v6126 = vpack.c.b16 %v4526, %v4510
    %v6127 = vpack.c.b16 %v4527, %v4511
    %v6128 = vpack.c.b16 %v4528, %v4512
    %v6129 = vpack.c.b16 %v4529, %v4513
    %v6130 = vpack.c.b16 %v4530, %v4514
    %v6131 = vpack.c.b16 %v4531, %v4515
    %v6132 = vpack.c.b16 %v4532, %v4516
    %v6133 = vpack.c.b16 %v4533, %v4517
    %v6134 = vpack.c.b16 %v4534, %v4518
    %v6135 = vpack.c.b16 %v4551, %v4535
    %v6136 = vpack.c.b16 %v4552, %v4536
    %v6137 = vpack.c.b16 %v4553, %v4537
    %v6138 = vpack.c.b16 %v4554, %v4538
    %v6139 = vpack.c.b16 %v4555, %v4539
    %v6140 = vpack.c.b16 %v4556, %v4540
    %v6141 = vpack.c.b16 %v4557, %v4541
    %v6142 = vpack.c.b16 %v4558, %v4542
    %v6143 = vpack.c.b16 %v4559, %v4543
    %v6144 = vpack.c.b16 %v4560, %v4544
    %v6145 = vpack.c.b16 %v4561, %v4545
    %v6146 = vpack.c.b16 %v4562, %v4546
    %v6147 = vpack.c.b16 %v4563, %v4547
    %v6148 = vpack.c.b16 %v4564, %v4548
    %v6149 = vpack.c.b16 %v4565, %v4549
    %v6150 = vpack.c.b16 %v4566, %v4550
    %v6151 = vpack.c.b16 %v4583, %v4567
    %v6152 = vpack.c.b16 %v4584, %v4568
    %v6153 = vpack.c.b16 %v4585, %v4569
    %v6154 = vpack.c.b16 %v4586, %v4570
    %v6155 = vpack.c.b16 %v4587, %v4571
    %v6156 = vpack.c.b16 %v4588, %v4572
    %v6157 = vpack.c.b16 %v4589, %v4573
    %v6158 = vpack.c.b16 %v4590, %v4574
    %v6159 = vpack.c.b16 %v4591, %v4575
    %v6160 = vpack.c.b16 %v4592, %v4576
    %v6161 = vpack.c.b16 %v4593, %v4577
    %v6162 = vpack.c.b16 %v4594, %v4578
    %v6163 = vpack.c.b16 %v4595, %v4579
    %v6164 = vpack.c.b16 %v4596, %v4580
    %v6165 = vpack.c.b16 %v4597, %v4581
    %v6166 = vpack.c.b16 %v4598, %v4582
    %v6167 = vpack.c.b16 %v4615, %v4599
    %v6168 = vpack.c.b16 %v4616, %v4600
    %v6169 = vpack.c.b16 %v4617, %v4601
    %v6170 = vpack.c.b16 %v4618, %v4602
    %v6171 = vpack.c.b16 %v4619, %v4603
    %v6172 = vpack.c.b16 %v4620, %v4604
    %v6173 = vpack.c.b16 %v4621, %v4605
    %v6174 = vpack.c.b16 %v4622, %v4606
    %v6175 = vpack.c.b16 %v4623, %v4607
    %v6176 = vpack.c.b16 %v4624, %v4608
    %v6177 = vpack.c.b16 %v4625, %v4609
    %v6178 = vpack.c.b16 %v4626, %v4610
    %v6179 = vpack.c.b16 %v4627, %v4611
    %v6180 = vpack.c.b16 %v4628, %v4612
    %v6181 = vpack.c.b16 %v4629, %v4613
    %v6182 = vpack.c.b16 %v4630, %v4614
    %v6183 = vpack.c.b16 %v4647, %v4631
    %v6184 = vpack.c.b16 %v4648, %v4632
    %v6185 = vpack.c.b16 %v4649, %v4633
    %v6186 = vpack.c.b16 %v4650, %v4634
    %v6187 = vpack.c.b16 %v4651, %v4635
    %v6188 = vpack.c.b16 %v4652, %v4636
    %v6189 = vpack.c.b16 %v4653, %v4637
    %v6190 = vpack.c.b16 %v4654, %v4638
    %v6191 = vpack.c.b16 %v4655, %v4639
    %v6192 = vpack.c.b16 %v4656, %v4640
    %v6193 = vpack.c.b16 %v4657, %v4641
    %v6194 = vpack.c.b16 %v4658, %v4642
    %v6195 = vpack.c.b16 %v4659, %v4643
    %v6196 = vpack.c.b16 %v4660, %v4644
    %v6197 = vpack.c.b16 %v4661, %v4645
    %v6198 = vpack.c.b16 %v4662, %v4646
    %v6199 = vpack.c.b16 %v4679, %v4663
    %v6200 = vpack.c.b16 %v4680, %v4664
    %v6201 = vpack.c.b16 %v4681, %v4665
    %v6202 = vpack.c.b16 %v4682, %v4666
    %v6203 = vpack.c.b16 %v4683, %v4667
    %v6204 = vpack.c.b16 %v4684, %v4668
    %v6205 = vpack.c.b16 %v4685, %v4669
    %v6206 = vpack.c.b16 %v4686, %v4670
    %v6207 = vpack.c.b16 %v4687, %v4671
    %v6208 = vpack.c.b16 %v4688, %v4672
    %v6209 = vpack.c.b16 %v4689, %v4673
    %v6210 = vpack.c.b16 %v4690, %v4674
    %v6211 = vpack.c.b16 %v4691, %v4675
    %v6212 = vpack.c.b16 %v4692, %v4676
    %v6213 = vpack.c.b16 %v4693, %v4677
    %v6214 = vpack.c.b16 %v4694, %v4678
    %v6215 = vpack.c.b16 %v4711, %v4695
    %v6216 = vpack.c.b16 %v4712, %v4696
    %v6217 = vpack.c.b16 %v4713, %v4697
    %v6218 = vpack.c.b16 %v4714, %v4698
    %v6219 = vpack.c.b16 %v4715, %v4699
    %v6220 = vpack.c.b16 %v4716, %v4700
    %v6221 = vpack.c.b16 %v4717, %v4701
    %v6222 = vpack.c.b16 %v4718, %v4702
    %v6223 = vpack.c.b16 %v4719, %v4703
    %v6224 = vpack.c.b16 %v4720, %v4704
    %v6225 = vpack.c.b16 %v4721, %v4705
    %v6226 = vpack.c.b16 %v4722, %v4706
    %v6227 = vpack.c.b16 %v4723, %v4707
    %v6228 = vpack.c.b16 %v4724, %v4708
    %v6229 = vpack.c.b16 %v4725, %v4709
    %v6230 = vpack.c.b16 %v4726, %v4710
    %v6231 = vpack.c.b16 %v4743, %v4727
    %v6232 = vpack.c.b16 %v4744, %v4728
    %v6233 = vpack.c.b16 %v4745, %v4729
    %v6234 = vpack.c.b16 %v4746, %v4730
    %v6235 = vpack.c.b16 %v4747, %v4731
    %v6236 = vpack.c.b16 %v4748, %v4732
    %v6237 = vpack.c.b16 %v4749, %v4733
    %v6238 = vpack.c.b16 %v4750, %v4734
    %v6239 = vpack.c.b16 %v4751, %v4735
    %v6240 = vpack.c.b16 %v4752, %v4736
    %v6241 = vpack.c.b16 %v4753, %v4737
    %v6242 = vpack.c.b16 %v4754, %v4738
    %v6243 = vpack.c.b16 %v4755, %v4739
    %v6244 = vpack.c.b16 %v4756, %v4740
    %v6245 = vpack.c.b16 %v4757, %v4741
    %v6246 = vpack.c.b16 %v4758, %v4742
    %v6247 = vpack.c.b16 %v4775, %v4759
    %v6248 = vpack.c.b16 %v4776, %v4760
    %v6249 = vpack.c.b16 %v4777, %v4761
    %v6250 = vpack.c.b16 %v4778, %v4762
    %v6251 = vpack.c.b16 %v4779, %v4763
    %v6252 = vpack.c.b16 %v4780, %v4764
    %v6253 = vpack.c.b16 %v4781, %v4765
    %v6254 = vpack.c.b16 %v4782, %v4766
    %v6255 = vpack.c.b16 %v4783, %v4767
    %v6256 = vpack.c.b16 %v4784, %v4768
    %v6257 = vpack.c.b16 %v4785, %v4769
    %v6258 = vpack.c.b16 %v4786, %v4770
    %v6259 = vpack.c.b16 %v4787, %v4771
    %v6260 = vpack.c.b16 %v4788, %v4772
    %v6261 = vpack.c.b16 %v4789, %v4773
    %v6262 = vpack.c.b16 %v4790, %v4774
    %v6263 = vpack.c.b16 %v4807, %v4791
    %v6264 = vpack.c.b16 %v4808, %v4792
    %v6265 = vpack.c.b16 %v4809, %v4793
    %v6266 = vpack.c.b16 %v4810, %v4794
    %v6267 = vpack.c.b16 %v4811, %v4795
    %v6268 = vpack.c.b16 %v4812, %v4796
    %v6269 = vpack.c.b16 %v4813, %v4797
    %v6270 = vpack.c.b16 %v4814, %v4798
    %v6271 = vpack.c.b16 %v4815, %v4799
    %v6272 = vpack.c.b16 %v4816, %v4800
    %v6273 = vpack.c.b16 %v4817, %v4801
    %v6274 = vpack.c.b16 %v4818, %v4802
    %v6275 = vpack.c.b16 %v4819, %v4803
    %v6276 = vpack.c.b16 %v4820, %v4804
    %v6277 = vpack.c.b16 %v4821, %v4805
    %v6278 = vpack.c.b16 %v4822, %v4806
    %v6279 = vpack.c.b16 %v4839, %v4823
    %v6280 = vpack.c.b16 %v4840, %v4824
    %v6281 = vpack.c.b16 %v4841, %v4825
    %v6282 = vpack.c.b16 %v4842, %v4826
    %v6283 = vpack.c.b16 %v4843, %v4827
    %v6284 = vpack.c.b16 %v4844, %v4828
    %v6285 = vpack.c.b16 %v4845, %v4829
    %v6286 = vpack.c.b16 %v4846, %v4830
    %v6287 = vpack.c.b16 %v4847, %v4831
    %v6288 = vpack.c.b16 %v4848, %v4832
    %v6289 = vpack.c.b16 %v4849, %v4833
    %v6290 = vpack.c.b16 %v4850, %v4834
    %v6291 = vpack.c.b16 %v4851, %v4835
    %v6292 = vpack.c.b16 %v4852, %v4836
    %v6293 = vpack.c.b16 %v4853, %v4837
    %v6294 = vpack.c.b16 %v4854, %v4838
    %v6295 = vpack.c.b16 %v4871, %v4855
    %v6296 = vpack.c.b16 %v4872, %v4856
    %v6297 = vpack.c.b16 %v4873, %v4857
    %v6298 = vpack.c.b16 %v4874, %v4858
    %v6299 = vpack.c.b16 %v4875, %v4859
    %v6300 = vpack.c.b16 %v4876, %v4860
    %v6301 = vpack.c.b16 %v4877, %v4861
    %v6302 = vpack.c.b16 %v4878, %v4862
    %v6303 = vpack.c.b16 %v4879, %v4863
    %v6304 = vpack.c.b16 %v4880, %v4864
    %v6305 = vpack.c.b16 %v4881, %v4865
    %v6306 = vpack.c.b16 %v4882, %v4866
    %v6307 = vpack.c.b16 %v4883, %v4867
    %v6308 = vpack.c.b16 %v4884, %v4868
    %v6309 = vpack.c.b16 %v4885, %v4869
    %v6310 = vpack.c.b16 %v4886, %v4870
    %v6311 = vpack.c.b16 %v4903, %v4887
    %v6312 = vpack.c.b16 %v4904, %v4888
    %v6313 = vpack.c.b16 %v4905, %v4889
    %v6314 = vpack.c.b16 %v4906, %v4890
    %v6315 = vpack.c.b16 %v4907, %v4891
    %v6316 = vpack.c.b16 %v4908, %v4892
    %v6317 = vpack.c.b16 %v4909, %v4893
    %v6318 = vpack.c.b16 %v4910, %v4894
    %v6319 = vpack.c.b16 %v4911, %v4895
    %v6320 = vpack.c.b16 %v4912, %v4896
    %v6321 = vpack.c.b16 %v4913, %v4897
    %v6322 = vpack.c.b16 %v4914, %v4898
    %v6323 = vpack.c.b16 %v4915, %v4899
    %v6324 = vpack.c.b16 %v4916, %v4900
    %v6325 = vpack.c.b16 %v4917, %v4901
    %v6326 = vpack.c.b16 %v4918, %v4902
    %v6327 = vpack.c.b16 %v4935, %v4919
    %v6328 = vpack.c.b16 %v4936, %v4920
    %v6329 = vpack.c.b16 %v4937, %v4921
    %v6330 = vpack.c.b16 %v4938, %v4922
    %v6331 = vpack.c.b16 %v4939, %v4923
    %v6332 = vpack.c.b16 %v4940, %v4924
    %v6333 = vpack.c.b16 %v4941, %v4925
    %v6334 = vpack.c.b16 %v4942, %v4926
    %v6335 = vpack.c.b16 %v4943, %v4927
    %v6336 = vpack.c.b16 %v4944, %v4928
    %v6337 = vpack.c.b16 %v4945, %v4929
    %v6338 = vpack.c.b16 %v4946, %v4930
    %v6339 = vpack.c.b16 %v4947, %v4931
    %v6340 = vpack.c.b16 %v4948, %v4932
    %v6341 = vpack.c.b16 %v4949, %v4933
    %v6342 = vpack.c.b16 %v4950, %v4934
    %v6343 = vpack.c.b16 %v4967, %v4951
    %v6344 = vpack.c.b16 %v4968, %v4952
    %v6345 = vpack.c.b16 %v4969, %v4953
    %v6346 = vpack.c.b16 %v4970, %v4954
    %v6347 = vpack.c.b16 %v4971, %v4955
    %v6348 = vpack.c.b16 %v4972, %v4956
    %v6349 = vpack.c.b16 %v4973, %v4957
    %v6350 = vpack.c.b16 %v4974, %v4958
    %v6351 = vpack.c.b16 %v4975, %v4959
    %v6352 = vpack.c.b16 %v4976, %v4960
    %v6353 = vpack.c.b16 %v4977, %v4961
    %v6354 = vpack.c.b16 %v4978, %v4962
    %v6355 = vpack.c.b16 %v4979, %v4963
    %v6356 = vpack.c.b16 %v4980, %v4964
    %v6357 = vpack.c.b16 %v4981, %v4965
    %v6358 = vpack.c.b16 %v4982, %v4966
    %v6359 = vpack.c.b16 %v4999, %v4983
    %v6360 = vpack.c.b16 %v5000, %v4984
    %v6361 = vpack.c.b16 %v5001, %v4985
    %v6362 = vpack.c.b16 %v5002, %v4986
    %v6363 = vpack.c.b16 %v5003, %v4987
    %v6364 = vpack.c.b16 %v5004, %v4988
    %v6365 = vpack.c.b16 %v5005, %v4989
    %v6366 = vpack.c.b16 %v5006, %v4990
    %v6367 = vpack.c.b16 %v5007, %v4991
    %v6368 = vpack.c.b16 %v5008, %v4992
    %v6369 = vpack.c.b16 %v5009, %v4993
    %v6370 = vpack.c.b16 %v5010, %v4994
    %v6371 = vpack.c.b16 %v5011, %v4995
    %v6372 = vpack.c.b16 %v5012, %v4996
    %v6373 = vpack.c.b16 %v5013, %v4997
    %v6374 = vpack.c.b16 %v5014, %v4998
    %v6375 = vpack.c.b16 %v5031, %v5015
    %v6376 = vpack.c.b16 %v5032, %v5016
    %v6377 = vpack.c.b16 %v5033, %v5017
    %v6378 = vpack.c.b16 %v5034, %v5018
    %v6379 = vpack.c.b16 %v5035, %v5019
    %v6380 = vpack.c.b16 %v5036, %v5020
    %v6381 = vpack.c.b16 %v5037, %v5021
    %v6382 = vpack.c.b16 %v5038, %v5022
    %v6383 = vpack.c.b16 %v5039, %v5023
    %v6384 = vpack.c.b16 %v5040, %v5024
    %v6385 = vpack.c.b16 %v5041, %v5025
    %v6386 = vpack.c.b16 %v5042, %v5026
    %v6387 = vpack.c.b16 %v5043, %v5027
    %v6388 = vpack.c.b16 %v5044, %v5028
    %v6389 = vpack.c.b16 %v5045, %v5029
    %v6390 = vpack.c.b16 %v5046, %v5030
    %v6391 = vpack.c.b16 %v5063, %v5047
    %v6392 = vpack.c.b16 %v5064, %v5048
    %v6393 = vpack.c.b16 %v5065, %v5049
    %v6394 = vpack.c.b16 %v5066, %v5050
    %v6395 = vpack.c.b16 %v5067, %v5051
    %v6396 = vpack.c.b16 %v5068, %v5052
    %v6397 = vpack.c.b16 %v5069, %v5053
    %v6398 = vpack.c.b16 %v5070, %v5054
    %v6399 = vpack.c.b16 %v5071, %v5055
    %v6400 = vpack.c.b16 %v5072, %v5056
    %v6401 = vpack.c.b16 %v5073, %v5057
    %v6402 = vpack.c.b16 %v5074, %v5058
    %v6403 = vpack.c.b16 %v5075, %v5059
    %v6404 = vpack.c.b16 %v5076, %v5060
    %v6405 = vpack.c.b16 %v5077, %v5061
    %v6406 = vpack.c.b16 %v5078, %v5062
    %v6407 = vpack.c.b16 %v5095, %v5079
    %v6408 = vpack.c.b16 %v5096, %v5080
    %v6409 = vpack.c.b16 %v5097, %v5081
    %v6410 = vpack.c.b16 %v5098, %v5082
    %v6411 = vpack.c.b16 %v5099, %v5083
    %v6412 = vpack.c.b16 %v5100, %v5084
    %v6413 = vpack.c.b16 %v5101, %v5085
    %v6414 = vpack.c.b16 %v5102, %v5086
    %v6415 = vpack.c.b16 %v5103, %v5087
    %v6416 = vpack.c.b16 %v5104, %v5088
    %v6417 = vpack.c.b16 %v5105, %v5089
    %v6418 = vpack.c.b16 %v5106, %v5090
    %v6419 = vpack.c.b16 %v5107, %v5091
    %v6420 = vpack.c.b16 %v5108, %v5092
    %v6421 = vpack.c.b16 %v5109, %v5093
    %v6422 = vpack.c.b16 %v5110, %v5094
    %v6423 = vpack.c.b16 %v5127, %v5111
    %v6424 = vpack.c.b16 %v5128, %v5112
    %v6425 = vpack.c.b16 %v5129, %v5113
    %v6426 = vpack.c.b16 %v5130, %v5114
    %v6427 = vpack.c.b16 %v5131, %v5115
    %v6428 = vpack.c.b16 %v5132, %v5116
    %v6429 = vpack.c.b16 %v5133, %v5117
    %v6430 = vpack.c.b16 %v5134, %v5118
    %v6431 = vpack.c.b16 %v5135, %v5119
    %v6432 = vpack.c.b16 %v5136, %v5120
    %v6433 = vpack.c.b16 %v5137, %v5121
    %v6434 = vpack.c.b16 %v5138, %v5122
    %v6435 = vpack.c.b16 %v5139, %v5123
    %v6436 = vpack.c.b16 %v5140, %v5124
    %v6437 = vpack.c.b16 %v5141, %v5125
    %v6438 = vpack.c.b16 %v5142, %v5126
    %v6439 = vpack.c.b16 %v5159, %v5143
    %v6440 = vpack.c.b16 %v5160, %v5144
    %v6441 = vpack.c.b16 %v5161, %v5145
    %v6442 = vpack.c.b16 %v5162, %v5146
    %v6443 = vpack.c.b16 %v5163, %v5147
    %v6444 = vpack.c.b16 %v5164, %v5148
    %v6445 = vpack.c.b16 %v5165, %v5149
    %v6446 = vpack.c.b16 %v5166, %v5150
    %v6447 = vpack.c.b16 %v5167, %v5151
    %v6448 = vpack.c.b16 %v5168, %v5152
    %v6449 = vpack.c.b16 %v5169, %v5153
    %v6450 = vpack.c.b16 %v5170, %v5154
    %v6451 = vpack.c.b16 %v5171, %v5155
    %v6452 = vpack.c.b16 %v5172, %v5156
    %v6453 = vpack.c.b16 %v5173, %v5157
    %v6454 = vpack.c.b16 %v5174, %v5158
    %v6455 = vpack.c.b16 %v5191, %v5175
    %v6456 = vpack.c.b16 %v5192, %v5176
    %v6457 = vpack.c.b16 %v5193, %v5177
    %v6458 = vpack.c.b16 %v5194, %v5178
    %v6459 = vpack.c.b16 %v5195, %v5179
    %v6460 = vpack.c.b16 %v5196, %v5180
    %v6461 = vpack.c.b16 %v5197, %v5181
    %v6462 = vpack.c.b16 %v5198, %v5182
    %v6463 = vpack.c.b16 %v5199, %v5183
    %v6464 = vpack.c.b16 %v5200, %v5184
    %v6465 = vpack.c.b16 %v5201, %v5185
    %v6466 = vpack.c.b16 %v5202, %v5186
    %v6467 = vpack.c.b16 %v5203, %v5187
    %v6468 = vpack.c.b16 %v5204, %v5188
    %v6469 = vpack.c.b16 %v5205, %v5189
    %v6470 = vpack.c.b16 %v5206, %v5190
    %v6471 = vpack.c.b16 %v5223, %v5207
    %v6472 = vpack.c.b16 %v5224, %v5208
    %v6473 = vpack.c.b16 %v5225, %v5209
    %v6474 = vpack.c.b16 %v5226, %v5210
    %v6475 = vpack.c.b16 %v5227, %v5211
    %v6476 = vpack.c.b16 %v5228, %v5212
    %v6477 = vpack.c.b16 %v5229, %v5213
    %v6478 = vpack.c.b16 %v5230, %v5214
    %v6479 = vpack.c.b16 %v5231, %v5215
    %v6480 = vpack.c.b16 %v5232, %v5216
    %v6481 = vpack.c.b16 %v5233, %v5217
    %v6482 = vpack.c.b16 %v5234, %v5218
    %v6483 = vpack.c.b16 %v5235, %v5219
    %v6484 = vpack.c.b16 %v5236, %v5220
    %v6485 = vpack.c.b16 %v5237, %v5221
    %v6486 = vpack.c.b16 %v5238, %v5222
    %v6487 = vpack.c.b16 %v5255, %v5239
    %v6488 = vpack.c.b16 %v5256, %v5240
    %v6489 = vpack.c.b16 %v5257, %v5241
    %v6490 = vpack.c.b16 %v5258, %v5242
    %v6491 = vpack.c.b16 %v5259, %v5243
    %v6492 = vpack.c.b16 %v5260, %v5244
    %v6493 = vpack.c.b16 %v5261, %v5245
    %v6494 = vpack.c.b16 %v5262, %v5246
    %v6495 = vpack.c.b16 %v5263, %v5247
    %v6496 = vpack.c.b16 %v5264, %v5248
    %v6497 = vpack.c.b16 %v5265, %v5249
    %v6498 = vpack.c.b16 %v5266, %v5250
    %v6499 = vpack.c.b16 %v5267, %v5251
    %v6500 = vpack.c.b16 %v5268, %v5252
    %v6501 = vpack.c.b16 %v5269, %v5253
    %v6502 = vpack.c.b16 %v5270, %v5254
    %v6503 = vpack.c.b16 %v5287, %v5271
    %v6504 = vpack.c.b16 %v5288, %v5272
    %v6505 = vpack.c.b16 %v5289, %v5273
    %v6506 = vpack.c.b16 %v5290, %v5274
    %v6507 = vpack.c.b16 %v5291, %v5275
    %v6508 = vpack.c.b16 %v5292, %v5276
    %v6509 = vpack.c.b16 %v5293, %v5277
    %v6510 = vpack.c.b16 %v5294, %v5278
    %v6511 = vpack.c.b16 %v5295, %v5279
    %v6512 = vpack.c.b16 %v5296, %v5280
    %v6513 = vpack.c.b16 %v5297, %v5281
    %v6514 = vpack.c.b16 %v5298, %v5282
    %v6515 = vpack.c.b16 %v5299, %v5283
    %v6516 = vpack.c.b16 %v5300, %v5284
    %v6517 = vpack.c.b16 %v5301, %v5285
    %v6518 = vpack.c.b16 %v5302, %v5286
    %v6519 = vpack.c.b16 %v5319, %v5303
    %v6520 = vpack.c.b16 %v5320, %v5304
    %v6521 = vpack.c.b16 %v5321, %v5305
    %v6522 = vpack.c.b16 %v5322, %v5306
    %v6523 = vpack.c.b16 %v5323, %v5307
    %v6524 = vpack.c.b16 %v5324, %v5308
    %v6525 = vpack.c.b16 %v5325, %v5309
    %v6526 = vpack.c.b16 %v5326, %v5310
    %v6527 = vpack.c.b16 %v5327, %v5311
    %v6528 = vpack.c.b16 %v5328, %v5312
    %v6529 = vpack.c.b16 %v5329, %v5313
    %v6530 = vpack.c.b16 %v5330, %v5314
    %v6531 = vpack.c.b16 %v5331, %v5315
    %v6532 = vpack.c.b16 %v5332, %v5316
    %v6533 = vpack.c.b16 %v5333, %v5317
    %v6534 = vpack.c.b16 %v5334, %v5318
    %v6535 = vpack.c.b16 %v5351, %v5335
    %v6536 = vpack.c.b16 %v5352, %v5336
    %v6537 = vpack.c.b16 %v5353, %v5337
    %v6538 = vpack.c.b16 %v5354, %v5338
    %v6539 = vpack.c.b16 %v5355, %v5339
    %v6540 = vpack.c.b16 %v5356, %v5340
    %v6541 = vpack.c.b16 %v5357, %v5341
    %v6542 = vpack.c.b16 %v5358, %v5342
    %v6543 = vpack.c.b16 %v5359, %v5343
    %v6544 = vpack.c.b16 %v5360, %v5344
    %v6545 = vpack.c.b16 %v5361, %v5345
    %v6546 = vpack.c.b16 %v5362, %v5346
    %v6547 = vpack.c.b16 %v5363, %v5347
    %v6548 = vpack.c.b16 %v5364, %v5348
    %v6549 = vpack.c.b16 %v5365, %v5349
    %v6550 = vpack.c.b16 %v5366, %v5350
    %v6551 = vpack.c.b16 %v5383, %v5367
    %v6552 = vpack.c.b16 %v5384, %v5368
    %v6553 = vpack.c.b16 %v5385, %v5369
    %v6554 = vpack.c.b16 %v5386, %v5370
    %v6555 = vpack.c.b16 %v5387, %v5371
    %v6556 = vpack.c.b16 %v5388, %v5372
    %v6557 = vpack.c.b16 %v5389, %v5373
    %v6558 = vpack.c.b16 %v5390, %v5374
    %v6559 = vpack.c.b16 %v5391, %v5375
    %v6560 = vpack.c.b16 %v5392, %v5376
    %v6561 = vpack.c.b16 %v5393, %v5377
    %v6562 = vpack.c.b16 %v5394, %v5378
    %v6563 = vpack.c.b16 %v5395, %v5379
    %v6564 = vpack.c.b16 %v5396, %v5380
    %v6565 = vpack.c.b16 %v5397, %v5381
    %v6566 = vpack.c.b16 %v5398, %v5382
    %v6567 = vpack.c.b16 %v5415, %v5399
    %v6568 = vpack.c.b16 %v5416, %v5400
    %v6569 = vpack.c.b16 %v5417, %v5401
    %v6570 = vpack.c.b16 %v5418, %v5402
    %v6571 = vpack.c.b16 %v5419, %v5403
    %v6572 = vpack.c.b16 %v5420, %v5404
    %v6573 = vpack.c.b16 %v5421, %v5405
    %v6574 = vpack.c.b16 %v5422, %v5406
    %v6575 = vpack.c.b16 %v5423, %v5407
    %v6576 = vpack.c.b16 %v5424, %v5408
    %v6577 = vpack.c.b16 %v5425, %v5409
    %v6578 = vpack.c.b16 %v5426, %v5410
    %v6579 = vpack.c.b16 %v5427, %v5411
    %v6580 = vpack.c.b16 %v5428, %v5412
    %v6581 = vpack.c.b16 %v5429, %v5413
    %v6582 = vpack.c.b16 %v5430, %v5414
    %v6583 = vpack.c.b16 %v5447, %v5431
    %v6584 = vpack.c.b16 %v5448, %v5432
    %v6585 = vpack.c.b16 %v5449, %v5433
    %v6586 = vpack.c.b16 %v5450, %v5434
    %v6587 = vpack.c.b16 %v5451, %v5435
    %v6588 = vpack.c.b16 %v5452, %v5436
    %v6589 = vpack.c.b16 %v5453, %v5437
    %v6590 = vpack.c.b16 %v5454, %v5438
    %v6591 = vpack.c.b16 %v5455, %v5439
    %v6592 = vpack.c.b16 %v5456, %v5440
    %v6593 = vpack.c.b16 %v5457, %v5441
    %v6594 = vpack.c.b16 %v5458, %v5442
    %v6595 = vpack.c.b16 %v5459, %v5443
    %v6596 = vpack.c.b16 %v5460, %v5444
    %v6597 = vpack.c.b16 %v5461, %v5445
    %v6598 = vpack.c.b16 %v5462, %v5446
    %v6599 = vpack.c.b16 %v5479, %v5463
    %v6600 = vpack.c.b16 %v5480, %v5464
    %v6601 = vpack.c.b16 %v5481, %v5465
    %v6602 = vpack.c.b16 %v5482, %v5466
    %v6603 = vpack.c.b16 %v5483, %v5467
    %v6604 = vpack.c.b16 %v5484, %v5468
    %v6605 = vpack.c.b16 %v5485, %v5469
    %v6606 = vpack.c.b16 %v5486, %v5470
    %v6607 = vpack.c.b16 %v5487, %v5471
    %v6608 = vpack.c.b16 %v5488, %v5472
    %v6609 = vpack.c.b16 %v5489, %v5473
    %v6610 = vpack.c.b16 %v5490, %v5474
    %v6611 = vpack.c.b16 %v5491, %v5475
    %v6612 = vpack.c.b16 %v5492, %v5476
    %v6613 = vpack.c.b16 %v5493, %v5477
    %v6614 = vpack.c.b16 %v5494, %v5478
    %v6615 = vpack.c.b16 %v5511, %v5495
    %v6616 = vpack.c.b16 %v5512, %v5496
    %v6617 = vpack.c.b16 %v5513, %v5497
    %v6618 = vpack.c.b16 %v5514, %v5498
    %v6619 = vpack.c.b16 %v5515, %v5499
    %v6620 = vpack.c.b16 %v5516, %v5500
    %v6621 = vpack.c.b16 %v5517, %v5501
    %v6622 = vpack.c.b16 %v5518, %v5502
    %v6623 = vpack.c.b16 %v5519, %v5503
    %v6624 = vpack.c.b16 %v5520, %v5504
    %v6625 = vpack.c.b16 %v5521, %v5505
    %v6626 = vpack.c.b16 %v5522, %v5506
    %v6627 = vpack.c.b16 %v5523, %v5507
    %v6628 = vpack.c.b16 %v5524, %v5508
    %v6629 = vpack.c.b16 %v5525, %v5509
    %v6630 = vpack.c.b16 %v5526, %v5510
    %v6631 = vpack.c.b16 %v5543, %v5527
    %v6632 = vpack.c.b16 %v5544, %v5528
    %v6633 = vpack.c.b16 %v5545, %v5529
    %v6634 = vpack.c.b16 %v5546, %v5530
    %v6635 = vpack.c.b16 %v5547, %v5531
    %v6636 = vpack.c.b16 %v5548, %v5532
    %v6637 = vpack.c.b16 %v5549, %v5533
    %v6638 = vpack.c.b16 %v5550, %v5534
    %v6639 = vpack.c.b16 %v5551, %v5535
    %v6640 = vpack.c.b16 %v5552, %v5536
    %v6641 = vpack.c.b16 %v5553, %v5537
    %v6642 = vpack.c.b16 %v5554, %v5538
    %v6643 = vpack.c.b16 %v5555, %v5539
    %v6644 = vpack.c.b16 %v5556, %v5540
    %v6645 = vpack.c.b16 %v5557, %v5541
    %v6646 = vpack.c.b16 %v5558, %v5542
    %v6647 = vpack.c.b16 %v5575, %v5559
    %v6648 = vpack.c.b16 %v5576, %v5560
    %v6649 = vpack.c.b16 %v5577, %v5561
    %v6650 = vpack.c.b16 %v5578, %v5562
    %v6651 = vpack.c.b16 %v5579, %v5563
    %v6652 = vpack.c.b16 %v5580, %v5564
    %v6653 = vpack.c.b16 %v5581, %v5565
    %v6654 = vpack.c.b16 %v5582, %v5566
    %v6655 = vpack.c.b16 %v5583, %v5567
    %v6656 = vpack.c.b16 %v5584, %v5568
    %v6657 = vpack.c.b16 %v5585, %v5569
    %v6658 = vpack.c.b16 %v5586, %v5570
    %v6659 = vpack.c.b16 %v5587, %v5571
    %v6660 = vpack.c.b16 %v5588, %v5572
    %v6661 = vpack.c.b16 %v5589, %v5573
    %v6662 = vpack.c.b16 %v5590, %v5574
    %v6663 = vpack.c.b16 %v5607, %v5591
    %v6664 = vpack.c.b16 %v5608, %v5592
    %v6665 = vpack.c.b16 %v5609, %v5593
    %v6666 = vpack.c.b16 %v5610, %v5594
    %v6667 = vpack.c.b16 %v5611, %v5595
    %v6668 = vpack.c.b16 %v5612, %v5596
    %v6669 = vpack.c.b16 %v5613, %v5597
    %v6670 = vpack.c.b16 %v5614, %v5598
    %v6671 = vpack.c.b16 %v5615, %v5599
    %v6672 = vpack.c.b16 %v5616, %v5600
    %v6673 = vpack.c.b16 %v5617, %v5601
    %v6674 = vpack.c.b16 %v5618, %v5602
    %v6675 = vpack.c.b16 %v5619, %v5603
    %v6676 = vpack.c.b16 %v5620, %v5604
    %v6677 = vpack.c.b16 %v5621, %v5605
    %v6678 = vpack.c.b16 %v5622, %v5606
    %v6679 = vpack.c.b16 %v5639, %v5623
    %v6680 = vpack.c.b16 %v5640, %v5624
    %v6681 = vpack.c.b16 %v5641, %v5625
    %v6682 = vpack.c.b16 %v5642, %v5626
    %v6683 = vpack.c.b16 %v5643, %v5627
    %v6684 = vpack.c.b16 %v5644, %v5628
    %v6685 = vpack.c.b16 %v5645, %v5629
    %v6686 = vpack.c.b16 %v5646, %v5630
    %v6687 = vpack.c.b16 %v5647, %v5631
    %v6688 = vpack.c.b16 %v5648, %v5632
    %v6689 = vpack.c.b16 %v5649, %v5633
    %v6690 = vpack.c.b16 %v5650, %v5634
    %v6691 = vpack.c.b16 %v5651, %v5635
    %v6692 = vpack.c.b16 %v5652, %v5636
    %v6693 = vpack.c.b16 %v5653, %v5637
    %v6694 = vpack.c.b16 %v5654, %v5638
    %v6695 = vpack.c.b16 %v5671, %v5655
    %v6696 = vpack.c.b16 %v5672, %v5656
    %v6697 = vpack.c.b16 %v5673, %v5657
    %v6698 = vpack.c.b16 %v5674, %v5658
    %v6699 = vpack.c.b16 %v5675, %v5659
    %v6700 = vpack.c.b16 %v5676, %v5660
    %v6701 = vpack.c.b16 %v5677, %v5661
    %v6702 = vpack.c.b16 %v5678, %v5662
    %v6703 = vpack.c.b16 %v5679, %v5663
    %v6704 = vpack.c.b16 %v5680, %v5664
    %v6705 = vpack.c.b16 %v5681, %v5665
    %v6706 = vpack.c.b16 %v5682, %v5666
    %v6707 = vpack.c.b16 %v5683, %v5667
    %v6708 = vpack.c.b16 %v5684, %v5668
    %v6709 = vpack.c.b16 %v5685, %v5669
    %v6710 = vpack.c.b16 %v5686, %v5670
    %7735 = vmatpush.bf16.msra.mxu0 %v5799
    %7736 = vmatpush.bf16.msra.mxu0 %v5783
    %7737 = vmatpush.bf16.msra.mxu0 %v5767
    %7738 = vmatpush.bf16.msra.mxu0 %v5751
    %7739 = vmatpush.bf16.msra.mxu0 %v5735
    %7740 = vmatpush.bf16.msra.mxu0 %v5719
    %7741 = vmatpush.bf16.msra.mxu0 %v5703
    %7742 = vmatpush.bf16.msra.mxu0 %v5687
    %7743 = vmatmul.bf16.gmra.mxu0 %v1541
    %v7744 = vpop.f32.mrf.mxu0
    %v7745 = vadd.f32 %v2583, %v7744
    %v7746 = vpop.f32.mrf.mxu0
    %7747 = vdwg.mxu0
    %7748 = vmatpush.bf16.msra.mxu0 %v5927
    %7749 = vmatpush.bf16.msra.mxu0 %v5911
    %7750 = vmatpush.bf16.msra.mxu0 %v5895
    %7751 = vmatpush.bf16.msra.mxu0 %v5879
    %7752 = vmatpush.bf16.msra.mxu0 %v5863
    %7753 = vmatpush.bf16.msra.mxu0 %v5847
    %7754 = vmatpush.bf16.msra.mxu0 %v5831
    %7755 = vmatpush.bf16.msra.mxu0 %v5815
    %7756 = vmatmul.bf16.gmra.mxu0 %v1542
    %v7757 = vpop.f32.mrf.mxu0
    %v7758 = vadd.f32 %v7745, %v7757
    %v7759 = vpop.f32.mrf.mxu0
    %7760 = vdwg.mxu0
    %7761 = vmatpush.bf16.msra.mxu0 %v6055
    %7762 = vmatpush.bf16.msra.mxu0 %v6039
    %7763 = vmatpush.bf16.msra.mxu0 %v6023
    %7764 = vmatpush.bf16.msra.mxu0 %v6007
    %7765 = vmatpush.bf16.msra.mxu0 %v5991
    %7766 = vmatpush.bf16.msra.mxu0 %v5975
    %7767 = vmatpush.bf16.msra.mxu0 %v5959
    %7768 = vmatpush.bf16.msra.mxu0 %v5943
    %7769 = vmatmul.bf16.gmra.mxu0 %v1543
    %v7770 = vpop.f32.mrf.mxu0
    %v7771 = vadd.f32 %v7758, %v7770
    %v7772 = vpop.f32.mrf.mxu0
    %7773 = vdwg.mxu0
    %7774 = vmatpush.bf16.msra.mxu0 %v6183
    %7775 = vmatpush.bf16.msra.mxu0 %v6167
    %7776 = vmatpush.bf16.msra.mxu0 %v6151
    %7777 = vmatpush.bf16.msra.mxu0 %v6135
    %7778 = vmatpush.bf16.msra.mxu0 %v6119
    %7779 = vmatpush.bf16.msra.mxu0 %v6103
    %7780 = vmatpush.bf16.msra.mxu0 %v6087
    %7781 = vmatpush.bf16.msra.mxu0 %v6071
    %7782 = vmatmul.bf16.gmra.mxu0 %v1544
    %v7783 = vpop.f32.mrf.mxu0
    %v7784 = vadd.f32 %v7771, %v7783
    %v7785 = vpop.f32.mrf.mxu0
    %7786 = vdwg.mxu0
    %7787 = vmatpush.bf16.msra.mxu0 %v6311
    %7788 = vmatpush.bf16.msra.mxu0 %v6295
    %7789 = vmatpush.bf16.msra.mxu0 %v6279
    %7790 = vmatpush.bf16.msra.mxu0 %v6263
    %7791 = vmatpush.bf16.msra.mxu0 %v6247
    %7792 = vmatpush.bf16.msra.mxu0 %v6231
    %7793 = vmatpush.bf16.msra.mxu0 %v6215
    %7794 = vmatpush.bf16.msra.mxu0 %v6199
    %7795 = vmatmul.bf16.gmra.mxu0 %v1545
    %v7796 = vpop.f32.mrf.mxu0
    %v7797 = vadd.f32 %v7784, %v7796
    %v7798 = vpop.f32.mrf.mxu0
    %7799 = vdwg.mxu0
    %7800 = vmatpush.bf16.msra.mxu0 %v6439
    %7801 = vmatpush.bf16.msra.mxu0 %v6423
    %7802 = vmatpush.bf16.msra.mxu0 %v6407
    %7803 = vmatpush.bf16.msra.mxu0 %v6391
    %7804 = vmatpush.bf16.msra.mxu0 %v6375
    %7805 = vmatpush.bf16.msra.mxu0 %v6359
    %7806 = vmatpush.bf16.msra.mxu0 %v6343
    %7807 = vmatpush.bf16.msra.mxu0 %v6327
    %7808 = vmatmul.bf16.gmra.mxu0 %v1546
    %v7809 = vpop.f32.mrf.mxu0
    %v7810 = vadd.f32 %v7797, %v7809
    %v7811 = vpop.f32.mrf.mxu0
    %7812 = vdwg.mxu0
    %7813 = vmatpush.bf16.msra.mxu0 %v6567
    %7814 = vmatpush.bf16.msra.mxu0 %v6551
    %7815 = vmatpush.bf16.msra.mxu0 %v6535
    %7816 = vmatpush.bf16.msra.mxu0 %v6519
    %7817 = vmatpush.bf16.msra.mxu0 %v6503
    %7818 = vmatpush.bf16.msra.mxu0 %v6487
    %7819 = vmatpush.bf16.msra.mxu0 %v6471
    %7820 = vmatpush.bf16.msra.mxu0 %v6455
    %7821 = vmatmul.bf16.gmra.mxu0 %v1547
    %v7822 = vpop.f32.mrf.mxu0
    %v7823 = vadd.f32 %v7810, %v7822
    %v7824 = vpop.f32.mrf.mxu0
    %7825 = vdwg.mxu0
    %7826 = vmatpush.bf16.msra.mxu0 %v6695
    %7827 = vmatpush.bf16.msra.mxu0 %v6679
    %7828 = vmatpush.bf16.msra.mxu0 %v6663
    %7829 = vmatpush.bf16.msra.mxu0 %v6647
    %7830 = vmatpush.bf16.msra.mxu0 %v6631
    %7831 = vmatpush.bf16.msra.mxu0 %v6615
    %7832 = vmatpush.bf16.msra.mxu0 %v6599
    %7833 = vmatpush.bf16.msra.mxu0 %v6583
    %7834 = vmatmul.bf16.gmra.mxu0 %v1548
    %v7835 = vpop.f32.mrf.mxu0
    %v7836 = vadd.f32 %v7823, %v7835
    %v7837 = vpop.f32.mrf.mxu0
    %7838 = vdwg.mxu0
    %7839 = vmatpush.bf16.msra.mxu0 %v5800
    %7840 = vmatpush.bf16.msra.mxu0 %v5784
    %7841 = vmatpush.bf16.msra.mxu0 %v5768
    %7842 = vmatpush.bf16.msra.mxu0 %v5752
    %7843 = vmatpush.bf16.msra.mxu0 %v5736
    %7844 = vmatpush.bf16.msra.mxu0 %v5720
    %7845 = vmatpush.bf16.msra.mxu0 %v5704
    %7846 = vmatpush.bf16.msra.mxu0 %v5688
    %7847 = vmatmul.bf16.gmra.mxu0 %v1541
    %v7848 = vpop.f32.mrf.mxu0
    %v7849 = vadd.f32 %v2584, %v7848
    %v7850 = vpop.f32.mrf.mxu0
    %7851 = vdwg.mxu0
    %7852 = vmatpush.bf16.msra.mxu0 %v5928
    %7853 = vmatpush.bf16.msra.mxu0 %v5912
    %7854 = vmatpush.bf16.msra.mxu0 %v5896
    %7855 = vmatpush.bf16.msra.mxu0 %v5880
    %7856 = vmatpush.bf16.msra.mxu0 %v5864
    %7857 = vmatpush.bf16.msra.mxu0 %v5848
    %7858 = vmatpush.bf16.msra.mxu0 %v5832
    %7859 = vmatpush.bf16.msra.mxu0 %v5816
    %7860 = vmatmul.bf16.gmra.mxu0 %v1542
    %v7861 = vpop.f32.mrf.mxu0
    %v7862 = vadd.f32 %v7849, %v7861
    %v7863 = vpop.f32.mrf.mxu0
    %7864 = vdwg.mxu0
    %7865 = vmatpush.bf16.msra.mxu0 %v6056
    %7866 = vmatpush.bf16.msra.mxu0 %v6040
    %7867 = vmatpush.bf16.msra.mxu0 %v6024
    %7868 = vmatpush.bf16.msra.mxu0 %v6008
    %7869 = vmatpush.bf16.msra.mxu0 %v5992
    %7870 = vmatpush.bf16.msra.mxu0 %v5976
    %7871 = vmatpush.bf16.msra.mxu0 %v5960
    %7872 = vmatpush.bf16.msra.mxu0 %v5944
    %7873 = vmatmul.bf16.gmra.mxu0 %v1543
    %v7874 = vpop.f32.mrf.mxu0
    %v7875 = vadd.f32 %v7862, %v7874
    %v7876 = vpop.f32.mrf.mxu0
    %7877 = vdwg.mxu0
    %7878 = vmatpush.bf16.msra.mxu0 %v6184
    %7879 = vmatpush.bf16.msra.mxu0 %v6168
    %7880 = vmatpush.bf16.msra.mxu0 %v6152
    %7881 = vmatpush.bf16.msra.mxu0 %v6136
    %7882 = vmatpush.bf16.msra.mxu0 %v6120
    %7883 = vmatpush.bf16.msra.mxu0 %v6104
    %7884 = vmatpush.bf16.msra.mxu0 %v6088
    %7885 = vmatpush.bf16.msra.mxu0 %v6072
    %7886 = vmatmul.bf16.gmra.mxu0 %v1544
    %v7887 = vpop.f32.mrf.mxu0
    %v7888 = vadd.f32 %v7875, %v7887
    %v7889 = vpop.f32.mrf.mxu0
    %7890 = vdwg.mxu0
    %7891 = vmatpush.bf16.msra.mxu0 %v6312
    %7892 = vmatpush.bf16.msra.mxu0 %v6296
    %7893 = vmatpush.bf16.msra.mxu0 %v6280
    %7894 = vmatpush.bf16.msra.mxu0 %v6264
    %7895 = vmatpush.bf16.msra.mxu0 %v6248
    %7896 = vmatpush.bf16.msra.mxu0 %v6232
    %7897 = vmatpush.bf16.msra.mxu0 %v6216
    %7898 = vmatpush.bf16.msra.mxu0 %v6200
    %7899 = vmatmul.bf16.gmra.mxu0 %v1545
    %v7900 = vpop.f32.mrf.mxu0
    %v7901 = vadd.f32 %v7888, %v7900
    %v7902 = vpop.f32.mrf.mxu0
    %7903 = vdwg.mxu0
    %7904 = vmatpush.bf16.msra.mxu0 %v6440
    %7905 = vmatpush.bf16.msra.mxu0 %v6424
    %7906 = vmatpush.bf16.msra.mxu0 %v6408
    %7907 = vmatpush.bf16.msra.mxu0 %v6392
    %7908 = vmatpush.bf16.msra.mxu0 %v6376
    %7909 = vmatpush.bf16.msra.mxu0 %v6360
    %7910 = vmatpush.bf16.msra.mxu0 %v6344
    %7911 = vmatpush.bf16.msra.mxu0 %v6328
    %7912 = vmatmul.bf16.gmra.mxu0 %v1546
    %v7913 = vpop.f32.mrf.mxu0
    %v7914 = vadd.f32 %v7901, %v7913
    %v7915 = vpop.f32.mrf.mxu0
    %7916 = vdwg.mxu0
    %7917 = vmatpush.bf16.msra.mxu0 %v6568
    %7918 = vmatpush.bf16.msra.mxu0 %v6552
    %7919 = vmatpush.bf16.msra.mxu0 %v6536
    %7920 = vmatpush.bf16.msra.mxu0 %v6520
    %7921 = vmatpush.bf16.msra.mxu0 %v6504
    %7922 = vmatpush.bf16.msra.mxu0 %v6488
    %7923 = vmatpush.bf16.msra.mxu0 %v6472
    %7924 = vmatpush.bf16.msra.mxu0 %v6456
    %7925 = vmatmul.bf16.gmra.mxu0 %v1547
    %v7926 = vpop.f32.mrf.mxu0
    %v7927 = vadd.f32 %v7914, %v7926
    %v7928 = vpop.f32.mrf.mxu0
    %7929 = vdwg.mxu0
    %7930 = vmatpush.bf16.msra.mxu0 %v6696
    %7931 = vmatpush.bf16.msra.mxu0 %v6680
    %7932 = vmatpush.bf16.msra.mxu0 %v6664
    %7933 = vmatpush.bf16.msra.mxu0 %v6648
    %7934 = vmatpush.bf16.msra.mxu0 %v6632
    %7935 = vmatpush.bf16.msra.mxu0 %v6616
    %7936 = vmatpush.bf16.msra.mxu0 %v6600
    %7937 = vmatpush.bf16.msra.mxu0 %v6584
    %7938 = vmatmul.bf16.gmra.mxu0 %v1548
    %v7939 = vpop.f32.mrf.mxu0
    %v7940 = vadd.f32 %v7927, %v7939
    %v7941 = vpop.f32.mrf.mxu0
    %7942 = vdwg.mxu0
    %7943 = vmatpush.bf16.msra.mxu0 %v5801
    %7944 = vmatpush.bf16.msra.mxu0 %v5785
    %7945 = vmatpush.bf16.msra.mxu0 %v5769
    %7946 = vmatpush.bf16.msra.mxu0 %v5753
    %7947 = vmatpush.bf16.msra.mxu0 %v5737
    %7948 = vmatpush.bf16.msra.mxu0 %v5721
    %7949 = vmatpush.bf16.msra.mxu0 %v5705
    %7950 = vmatpush.bf16.msra.mxu0 %v5689
    %7951 = vmatmul.bf16.gmra.mxu0 %v1541
    %v7952 = vpop.f32.mrf.mxu0
    %v7953 = vadd.f32 %v2585, %v7952
    %v7954 = vpop.f32.mrf.mxu0
    %7955 = vdwg.mxu0
    %7956 = vmatpush.bf16.msra.mxu0 %v5929
    %7957 = vmatpush.bf16.msra.mxu0 %v5913
    %7958 = vmatpush.bf16.msra.mxu0 %v5897
    %7959 = vmatpush.bf16.msra.mxu0 %v5881
    %7960 = vmatpush.bf16.msra.mxu0 %v5865
    %7961 = vmatpush.bf16.msra.mxu0 %v5849
    %7962 = vmatpush.bf16.msra.mxu0 %v5833
    %7963 = vmatpush.bf16.msra.mxu0 %v5817
    %7964 = vmatmul.bf16.gmra.mxu0 %v1542
    %v7965 = vpop.f32.mrf.mxu0
    %v7966 = vadd.f32 %v7953, %v7965
    %v7967 = vpop.f32.mrf.mxu0
    %7968 = vdwg.mxu0
    %7969 = vmatpush.bf16.msra.mxu0 %v6057
    %7970 = vmatpush.bf16.msra.mxu0 %v6041
    %7971 = vmatpush.bf16.msra.mxu0 %v6025
    %7972 = vmatpush.bf16.msra.mxu0 %v6009
    %7973 = vmatpush.bf16.msra.mxu0 %v5993
    %7974 = vmatpush.bf16.msra.mxu0 %v5977
    %7975 = vmatpush.bf16.msra.mxu0 %v5961
    %7976 = vmatpush.bf16.msra.mxu0 %v5945
    %7977 = vmatmul.bf16.gmra.mxu0 %v1543
    %v7978 = vpop.f32.mrf.mxu0
    %v7979 = vadd.f32 %v7966, %v7978
    %v7980 = vpop.f32.mrf.mxu0
    %7981 = vdwg.mxu0
    %7982 = vmatpush.bf16.msra.mxu0 %v6185
    %7983 = vmatpush.bf16.msra.mxu0 %v6169
    %7984 = vmatpush.bf16.msra.mxu0 %v6153
    %7985 = vmatpush.bf16.msra.mxu0 %v6137
    %7986 = vmatpush.bf16.msra.mxu0 %v6121
    %7987 = vmatpush.bf16.msra.mxu0 %v6105
    %7988 = vmatpush.bf16.msra.mxu0 %v6089
    %7989 = vmatpush.bf16.msra.mxu0 %v6073
    %7990 = vmatmul.bf16.gmra.mxu0 %v1544
    %v7991 = vpop.f32.mrf.mxu0
    %v7992 = vadd.f32 %v7979, %v7991
    %v7993 = vpop.f32.mrf.mxu0
    %7994 = vdwg.mxu0
    %7995 = vmatpush.bf16.msra.mxu0 %v6313
    %7996 = vmatpush.bf16.msra.mxu0 %v6297
    %7997 = vmatpush.bf16.msra.mxu0 %v6281
    %7998 = vmatpush.bf16.msra.mxu0 %v6265
    %7999 = vmatpush.bf16.msra.mxu0 %v6249
    %8000 = vmatpush.bf16.msra.mxu0 %v6233
    %8001 = vmatpush.bf16.msra.mxu0 %v6217
    %8002 = vmatpush.bf16.msra.mxu0 %v6201
    %8003 = vmatmul.bf16.gmra.mxu0 %v1545
    %v8004 = vpop.f32.mrf.mxu0
    %v8005 = vadd.f32 %v7992, %v8004
    %v8006 = vpop.f32.mrf.mxu0
    %8007 = vdwg.mxu0
    %8008 = vmatpush.bf16.msra.mxu0 %v6441
    %8009 = vmatpush.bf16.msra.mxu0 %v6425
    %8010 = vmatpush.bf16.msra.mxu0 %v6409
    %8011 = vmatpush.bf16.msra.mxu0 %v6393
    %8012 = vmatpush.bf16.msra.mxu0 %v6377
    %8013 = vmatpush.bf16.msra.mxu0 %v6361
    %8014 = vmatpush.bf16.msra.mxu0 %v6345
    %8015 = vmatpush.bf16.msra.mxu0 %v6329
    %8016 = vmatmul.bf16.gmra.mxu0 %v1546
    %v8017 = vpop.f32.mrf.mxu0
    %v8018 = vadd.f32 %v8005, %v8017
    %v8019 = vpop.f32.mrf.mxu0
    %8020 = vdwg.mxu0
    %8021 = vmatpush.bf16.msra.mxu0 %v6569
    %8022 = vmatpush.bf16.msra.mxu0 %v6553
    %8023 = vmatpush.bf16.msra.mxu0 %v6537
    %8024 = vmatpush.bf16.msra.mxu0 %v6521
    %8025 = vmatpush.bf16.msra.mxu0 %v6505
    %8026 = vmatpush.bf16.msra.mxu0 %v6489
    %8027 = vmatpush.bf16.msra.mxu0 %v6473
    %8028 = vmatpush.bf16.msra.mxu0 %v6457
    %8029 = vmatmul.bf16.gmra.mxu0 %v1547
    %v8030 = vpop.f32.mrf.mxu0
    %v8031 = vadd.f32 %v8018, %v8030
    %v8032 = vpop.f32.mrf.mxu0
    %8033 = vdwg.mxu0
    %8034 = vmatpush.bf16.msra.mxu0 %v6697
    %8035 = vmatpush.bf16.msra.mxu0 %v6681
    %8036 = vmatpush.bf16.msra.mxu0 %v6665
    %8037 = vmatpush.bf16.msra.mxu0 %v6649
    %8038 = vmatpush.bf16.msra.mxu0 %v6633
    %8039 = vmatpush.bf16.msra.mxu0 %v6617
    %8040 = vmatpush.bf16.msra.mxu0 %v6601
    %8041 = vmatpush.bf16.msra.mxu0 %v6585
    %8042 = vmatmul.bf16.gmra.mxu0 %v1548
    %v8043 = vpop.f32.mrf.mxu0
    %v8044 = vadd.f32 %v8031, %v8043
    %v8045 = vpop.f32.mrf.mxu0
    %8046 = vdwg.mxu0
    %8047 = vmatpush.bf16.msra.mxu0 %v5802
    %8048 = vmatpush.bf16.msra.mxu0 %v5786
    %8049 = vmatpush.bf16.msra.mxu0 %v5770
    %8050 = vmatpush.bf16.msra.mxu0 %v5754
    %8051 = vmatpush.bf16.msra.mxu0 %v5738
    %8052 = vmatpush.bf16.msra.mxu0 %v5722
    %8053 = vmatpush.bf16.msra.mxu0 %v5706
    %8054 = vmatpush.bf16.msra.mxu0 %v5690
    %8055 = vmatmul.bf16.gmra.mxu0 %v1541
    %v8056 = vpop.f32.mrf.mxu0
    %v8057 = vadd.f32 %v2586, %v8056
    %v8058 = vpop.f32.mrf.mxu0
    %8059 = vdwg.mxu0
    %8060 = vmatpush.bf16.msra.mxu0 %v5930
    %8061 = vmatpush.bf16.msra.mxu0 %v5914
    %8062 = vmatpush.bf16.msra.mxu0 %v5898
    %8063 = vmatpush.bf16.msra.mxu0 %v5882
    %8064 = vmatpush.bf16.msra.mxu0 %v5866
    %8065 = vmatpush.bf16.msra.mxu0 %v5850
    %8066 = vmatpush.bf16.msra.mxu0 %v5834
    %8067 = vmatpush.bf16.msra.mxu0 %v5818
    %8068 = vmatmul.bf16.gmra.mxu0 %v1542
    %v8069 = vpop.f32.mrf.mxu0
    %v8070 = vadd.f32 %v8057, %v8069
    %v8071 = vpop.f32.mrf.mxu0
    %8072 = vdwg.mxu0
    %8073 = vmatpush.bf16.msra.mxu0 %v6058
    %8074 = vmatpush.bf16.msra.mxu0 %v6042
    %8075 = vmatpush.bf16.msra.mxu0 %v6026
    %8076 = vmatpush.bf16.msra.mxu0 %v6010
    %8077 = vmatpush.bf16.msra.mxu0 %v5994
    %8078 = vmatpush.bf16.msra.mxu0 %v5978
    %8079 = vmatpush.bf16.msra.mxu0 %v5962
    %8080 = vmatpush.bf16.msra.mxu0 %v5946
    %8081 = vmatmul.bf16.gmra.mxu0 %v1543
    %v8082 = vpop.f32.mrf.mxu0
    %v8083 = vadd.f32 %v8070, %v8082
    %v8084 = vpop.f32.mrf.mxu0
    %8085 = vdwg.mxu0
    %8086 = vmatpush.bf16.msra.mxu0 %v6186
    %8087 = vmatpush.bf16.msra.mxu0 %v6170
    %8088 = vmatpush.bf16.msra.mxu0 %v6154
    %8089 = vmatpush.bf16.msra.mxu0 %v6138
    %8090 = vmatpush.bf16.msra.mxu0 %v6122
    %8091 = vmatpush.bf16.msra.mxu0 %v6106
    %8092 = vmatpush.bf16.msra.mxu0 %v6090
    %8093 = vmatpush.bf16.msra.mxu0 %v6074
    %8094 = vmatmul.bf16.gmra.mxu0 %v1544
    %v8095 = vpop.f32.mrf.mxu0
    %v8096 = vadd.f32 %v8083, %v8095
    %v8097 = vpop.f32.mrf.mxu0
    %8098 = vdwg.mxu0
    %8099 = vmatpush.bf16.msra.mxu0 %v6314
    %8100 = vmatpush.bf16.msra.mxu0 %v6298
    %8101 = vmatpush.bf16.msra.mxu0 %v6282
    %8102 = vmatpush.bf16.msra.mxu0 %v6266
    %8103 = vmatpush.bf16.msra.mxu0 %v6250
    %8104 = vmatpush.bf16.msra.mxu0 %v6234
    %8105 = vmatpush.bf16.msra.mxu0 %v6218
    %8106 = vmatpush.bf16.msra.mxu0 %v6202
    %8107 = vmatmul.bf16.gmra.mxu0 %v1545
    %v8108 = vpop.f32.mrf.mxu0
    %v8109 = vadd.f32 %v8096, %v8108
    %v8110 = vpop.f32.mrf.mxu0
    %8111 = vdwg.mxu0
    %8112 = vmatpush.bf16.msra.mxu0 %v6442
    %8113 = vmatpush.bf16.msra.mxu0 %v6426
    %8114 = vmatpush.bf16.msra.mxu0 %v6410
    %8115 = vmatpush.bf16.msra.mxu0 %v6394
    %8116 = vmatpush.bf16.msra.mxu0 %v6378
    %8117 = vmatpush.bf16.msra.mxu0 %v6362
    %8118 = vmatpush.bf16.msra.mxu0 %v6346
    %8119 = vmatpush.bf16.msra.mxu0 %v6330
    %8120 = vmatmul.bf16.gmra.mxu0 %v1546
    %v8121 = vpop.f32.mrf.mxu0
    %v8122 = vadd.f32 %v8109, %v8121
    %v8123 = vpop.f32.mrf.mxu0
    %8124 = vdwg.mxu0
    %8125 = vmatpush.bf16.msra.mxu0 %v6570
    %8126 = vmatpush.bf16.msra.mxu0 %v6554
    %8127 = vmatpush.bf16.msra.mxu0 %v6538
    %8128 = vmatpush.bf16.msra.mxu0 %v6522
    %8129 = vmatpush.bf16.msra.mxu0 %v6506
    %8130 = vmatpush.bf16.msra.mxu0 %v6490
    %8131 = vmatpush.bf16.msra.mxu0 %v6474
    %8132 = vmatpush.bf16.msra.mxu0 %v6458
    %8133 = vmatmul.bf16.gmra.mxu0 %v1547
    %v8134 = vpop.f32.mrf.mxu0
    %v8135 = vadd.f32 %v8122, %v8134
    %v8136 = vpop.f32.mrf.mxu0
    %8137 = vdwg.mxu0
    %8138 = vmatpush.bf16.msra.mxu0 %v6698
    %8139 = vmatpush.bf16.msra.mxu0 %v6682
    %8140 = vmatpush.bf16.msra.mxu0 %v6666
    %8141 = vmatpush.bf16.msra.mxu0 %v6650
    %8142 = vmatpush.bf16.msra.mxu0 %v6634
    %8143 = vmatpush.bf16.msra.mxu0 %v6618
    %8144 = vmatpush.bf16.msra.mxu0 %v6602
    %8145 = vmatpush.bf16.msra.mxu0 %v6586
    %8146 = vmatmul.bf16.gmra.mxu0 %v1548
    %v8147 = vpop.f32.mrf.mxu0
    %v8148 = vadd.f32 %v8135, %v8147
    %v8149 = vpop.f32.mrf.mxu0
    %8150 = vdwg.mxu0
    %8151 = vmatpush.bf16.msra.mxu0 %v5803
    %8152 = vmatpush.bf16.msra.mxu0 %v5787
    %8153 = vmatpush.bf16.msra.mxu0 %v5771
    %8154 = vmatpush.bf16.msra.mxu0 %v5755
    %8155 = vmatpush.bf16.msra.mxu0 %v5739
    %8156 = vmatpush.bf16.msra.mxu0 %v5723
    %8157 = vmatpush.bf16.msra.mxu0 %v5707
    %8158 = vmatpush.bf16.msra.mxu0 %v5691
    %8159 = vmatmul.bf16.gmra.mxu0 %v1541
    %v8160 = vpop.f32.mrf.mxu0
    %v8161 = vadd.f32 %v2587, %v8160
    %v8162 = vpop.f32.mrf.mxu0
    %8163 = vdwg.mxu0
    %8164 = vmatpush.bf16.msra.mxu0 %v5931
    %8165 = vmatpush.bf16.msra.mxu0 %v5915
    %8166 = vmatpush.bf16.msra.mxu0 %v5899
    %8167 = vmatpush.bf16.msra.mxu0 %v5883
    %8168 = vmatpush.bf16.msra.mxu0 %v5867
    %8169 = vmatpush.bf16.msra.mxu0 %v5851
    %8170 = vmatpush.bf16.msra.mxu0 %v5835
    %8171 = vmatpush.bf16.msra.mxu0 %v5819
    %8172 = vmatmul.bf16.gmra.mxu0 %v1542
    %v8173 = vpop.f32.mrf.mxu0
    %v8174 = vadd.f32 %v8161, %v8173
    %v8175 = vpop.f32.mrf.mxu0
    %8176 = vdwg.mxu0
    %8177 = vmatpush.bf16.msra.mxu0 %v6059
    %8178 = vmatpush.bf16.msra.mxu0 %v6043
    %8179 = vmatpush.bf16.msra.mxu0 %v6027
    %8180 = vmatpush.bf16.msra.mxu0 %v6011
    %8181 = vmatpush.bf16.msra.mxu0 %v5995
    %8182 = vmatpush.bf16.msra.mxu0 %v5979
    %8183 = vmatpush.bf16.msra.mxu0 %v5963
    %8184 = vmatpush.bf16.msra.mxu0 %v5947
    %8185 = vmatmul.bf16.gmra.mxu0 %v1543
    %v8186 = vpop.f32.mrf.mxu0
    %v8187 = vadd.f32 %v8174, %v8186
    %v8188 = vpop.f32.mrf.mxu0
    %8189 = vdwg.mxu0
    %8190 = vmatpush.bf16.msra.mxu0 %v6187
    %8191 = vmatpush.bf16.msra.mxu0 %v6171
    %8192 = vmatpush.bf16.msra.mxu0 %v6155
    %8193 = vmatpush.bf16.msra.mxu0 %v6139
    %8194 = vmatpush.bf16.msra.mxu0 %v6123
    %8195 = vmatpush.bf16.msra.mxu0 %v6107
    %8196 = vmatpush.bf16.msra.mxu0 %v6091
    %8197 = vmatpush.bf16.msra.mxu0 %v6075
    %8198 = vmatmul.bf16.gmra.mxu0 %v1544
    %v8199 = vpop.f32.mrf.mxu0
    %v8200 = vadd.f32 %v8187, %v8199
    %v8201 = vpop.f32.mrf.mxu0
    %8202 = vdwg.mxu0
    %8203 = vmatpush.bf16.msra.mxu0 %v6315
    %8204 = vmatpush.bf16.msra.mxu0 %v6299
    %8205 = vmatpush.bf16.msra.mxu0 %v6283
    %8206 = vmatpush.bf16.msra.mxu0 %v6267
    %8207 = vmatpush.bf16.msra.mxu0 %v6251
    %8208 = vmatpush.bf16.msra.mxu0 %v6235
    %8209 = vmatpush.bf16.msra.mxu0 %v6219
    %8210 = vmatpush.bf16.msra.mxu0 %v6203
    %8211 = vmatmul.bf16.gmra.mxu0 %v1545
    %v8212 = vpop.f32.mrf.mxu0
    %v8213 = vadd.f32 %v8200, %v8212
    %v8214 = vpop.f32.mrf.mxu0
    %8215 = vdwg.mxu0
    %8216 = vmatpush.bf16.msra.mxu0 %v6443
    %8217 = vmatpush.bf16.msra.mxu0 %v6427
    %8218 = vmatpush.bf16.msra.mxu0 %v6411
    %8219 = vmatpush.bf16.msra.mxu0 %v6395
    %8220 = vmatpush.bf16.msra.mxu0 %v6379
    %8221 = vmatpush.bf16.msra.mxu0 %v6363
    %8222 = vmatpush.bf16.msra.mxu0 %v6347
    %8223 = vmatpush.bf16.msra.mxu0 %v6331
    %8224 = vmatmul.bf16.gmra.mxu0 %v1546
    %v8225 = vpop.f32.mrf.mxu0
    %v8226 = vadd.f32 %v8213, %v8225
    %v8227 = vpop.f32.mrf.mxu0
    %8228 = vdwg.mxu0
    %8229 = vmatpush.bf16.msra.mxu0 %v6571
    %8230 = vmatpush.bf16.msra.mxu0 %v6555
    %8231 = vmatpush.bf16.msra.mxu0 %v6539
    %8232 = vmatpush.bf16.msra.mxu0 %v6523
    %8233 = vmatpush.bf16.msra.mxu0 %v6507
    %8234 = vmatpush.bf16.msra.mxu0 %v6491
    %8235 = vmatpush.bf16.msra.mxu0 %v6475
    %8236 = vmatpush.bf16.msra.mxu0 %v6459
    %8237 = vmatmul.bf16.gmra.mxu0 %v1547
    %v8238 = vpop.f32.mrf.mxu0
    %v8239 = vadd.f32 %v8226, %v8238
    %v8240 = vpop.f32.mrf.mxu0
    %8241 = vdwg.mxu0
    %8242 = vmatpush.bf16.msra.mxu0 %v6699
    %8243 = vmatpush.bf16.msra.mxu0 %v6683
    %8244 = vmatpush.bf16.msra.mxu0 %v6667
    %8245 = vmatpush.bf16.msra.mxu0 %v6651
    %8246 = vmatpush.bf16.msra.mxu0 %v6635
    %8247 = vmatpush.bf16.msra.mxu0 %v6619
    %8248 = vmatpush.bf16.msra.mxu0 %v6603
    %8249 = vmatpush.bf16.msra.mxu0 %v6587
    %8250 = vmatmul.bf16.gmra.mxu0 %v1548
    %v8251 = vpop.f32.mrf.mxu0
    %v8252 = vadd.f32 %v8239, %v8251
    %v8253 = vpop.f32.mrf.mxu0
    %8254 = vdwg.mxu0
    %8255 = vmatpush.bf16.msra.mxu0 %v5804
    %8256 = vmatpush.bf16.msra.mxu0 %v5788
    %8257 = vmatpush.bf16.msra.mxu0 %v5772
    %8258 = vmatpush.bf16.msra.mxu0 %v5756
    %8259 = vmatpush.bf16.msra.mxu0 %v5740
    %8260 = vmatpush.bf16.msra.mxu0 %v5724
    %8261 = vmatpush.bf16.msra.mxu0 %v5708
    %8262 = vmatpush.bf16.msra.mxu0 %v5692
    %8263 = vmatmul.bf16.gmra.mxu0 %v1541
    %v8264 = vpop.f32.mrf.mxu0
    %v8265 = vadd.f32 %v2588, %v8264
    %v8266 = vpop.f32.mrf.mxu0
    %8267 = vdwg.mxu0
    %8268 = vmatpush.bf16.msra.mxu0 %v5932
    %8269 = vmatpush.bf16.msra.mxu0 %v5916
    %8270 = vmatpush.bf16.msra.mxu0 %v5900
    %8271 = vmatpush.bf16.msra.mxu0 %v5884
    %8272 = vmatpush.bf16.msra.mxu0 %v5868
    %8273 = vmatpush.bf16.msra.mxu0 %v5852
    %8274 = vmatpush.bf16.msra.mxu0 %v5836
    %8275 = vmatpush.bf16.msra.mxu0 %v5820
    %8276 = vmatmul.bf16.gmra.mxu0 %v1542
    %v8277 = vpop.f32.mrf.mxu0
    %v8278 = vadd.f32 %v8265, %v8277
    %v8279 = vpop.f32.mrf.mxu0
    %8280 = vdwg.mxu0
    %8281 = vmatpush.bf16.msra.mxu0 %v6060
    %8282 = vmatpush.bf16.msra.mxu0 %v6044
    %8283 = vmatpush.bf16.msra.mxu0 %v6028
    %8284 = vmatpush.bf16.msra.mxu0 %v6012
    %8285 = vmatpush.bf16.msra.mxu0 %v5996
    %8286 = vmatpush.bf16.msra.mxu0 %v5980
    %8287 = vmatpush.bf16.msra.mxu0 %v5964
    %8288 = vmatpush.bf16.msra.mxu0 %v5948
    %8289 = vmatmul.bf16.gmra.mxu0 %v1543
    %v8290 = vpop.f32.mrf.mxu0
    %v8291 = vadd.f32 %v8278, %v8290
    %v8292 = vpop.f32.mrf.mxu0
    %8293 = vdwg.mxu0
    %8294 = vmatpush.bf16.msra.mxu0 %v6188
    %8295 = vmatpush.bf16.msra.mxu0 %v6172
    %8296 = vmatpush.bf16.msra.mxu0 %v6156
    %8297 = vmatpush.bf16.msra.mxu0 %v6140
    %8298 = vmatpush.bf16.msra.mxu0 %v6124
    %8299 = vmatpush.bf16.msra.mxu0 %v6108
    %8300 = vmatpush.bf16.msra.mxu0 %v6092
    %8301 = vmatpush.bf16.msra.mxu0 %v6076
    %8302 = vmatmul.bf16.gmra.mxu0 %v1544
    %v8303 = vpop.f32.mrf.mxu0
    %v8304 = vadd.f32 %v8291, %v8303
    %v8305 = vpop.f32.mrf.mxu0
    %8306 = vdwg.mxu0
    %8307 = vmatpush.bf16.msra.mxu0 %v6316
    %8308 = vmatpush.bf16.msra.mxu0 %v6300
    %8309 = vmatpush.bf16.msra.mxu0 %v6284
    %8310 = vmatpush.bf16.msra.mxu0 %v6268
    %8311 = vmatpush.bf16.msra.mxu0 %v6252
    %8312 = vmatpush.bf16.msra.mxu0 %v6236
    %8313 = vmatpush.bf16.msra.mxu0 %v6220
    %8314 = vmatpush.bf16.msra.mxu0 %v6204
    %8315 = vmatmul.bf16.gmra.mxu0 %v1545
    %v8316 = vpop.f32.mrf.mxu0
    %v8317 = vadd.f32 %v8304, %v8316
    %v8318 = vpop.f32.mrf.mxu0
    %8319 = vdwg.mxu0
    %8320 = vmatpush.bf16.msra.mxu0 %v6444
    %8321 = vmatpush.bf16.msra.mxu0 %v6428
    %8322 = vmatpush.bf16.msra.mxu0 %v6412
    %8323 = vmatpush.bf16.msra.mxu0 %v6396
    %8324 = vmatpush.bf16.msra.mxu0 %v6380
    %8325 = vmatpush.bf16.msra.mxu0 %v6364
    %8326 = vmatpush.bf16.msra.mxu0 %v6348
    %8327 = vmatpush.bf16.msra.mxu0 %v6332
    %8328 = vmatmul.bf16.gmra.mxu0 %v1546
    %v8329 = vpop.f32.mrf.mxu0
    %v8330 = vadd.f32 %v8317, %v8329
    %v8331 = vpop.f32.mrf.mxu0
    %8332 = vdwg.mxu0
    %8333 = vmatpush.bf16.msra.mxu0 %v6572
    %8334 = vmatpush.bf16.msra.mxu0 %v6556
    %8335 = vmatpush.bf16.msra.mxu0 %v6540
    %8336 = vmatpush.bf16.msra.mxu0 %v6524
    %8337 = vmatpush.bf16.msra.mxu0 %v6508
    %8338 = vmatpush.bf16.msra.mxu0 %v6492
    %8339 = vmatpush.bf16.msra.mxu0 %v6476
    %8340 = vmatpush.bf16.msra.mxu0 %v6460
    %8341 = vmatmul.bf16.gmra.mxu0 %v1547
    %v8342 = vpop.f32.mrf.mxu0
    %v8343 = vadd.f32 %v8330, %v8342
    %v8344 = vpop.f32.mrf.mxu0
    %8345 = vdwg.mxu0
    %8346 = vmatpush.bf16.msra.mxu0 %v6700
    %8347 = vmatpush.bf16.msra.mxu0 %v6684
    %8348 = vmatpush.bf16.msra.mxu0 %v6668
    %8349 = vmatpush.bf16.msra.mxu0 %v6652
    %8350 = vmatpush.bf16.msra.mxu0 %v6636
    %8351 = vmatpush.bf16.msra.mxu0 %v6620
    %8352 = vmatpush.bf16.msra.mxu0 %v6604
    %8353 = vmatpush.bf16.msra.mxu0 %v6588
    %8354 = vmatmul.bf16.gmra.mxu0 %v1548
    %v8355 = vpop.f32.mrf.mxu0
    %v8356 = vadd.f32 %v8343, %v8355
    %v8357 = vpop.f32.mrf.mxu0
    %8358 = vdwg.mxu0
    %8359 = vmatpush.bf16.msra.mxu0 %v5805
    %8360 = vmatpush.bf16.msra.mxu0 %v5789
    %8361 = vmatpush.bf16.msra.mxu0 %v5773
    %8362 = vmatpush.bf16.msra.mxu0 %v5757
    %8363 = vmatpush.bf16.msra.mxu0 %v5741
    %8364 = vmatpush.bf16.msra.mxu0 %v5725
    %8365 = vmatpush.bf16.msra.mxu0 %v5709
    %8366 = vmatpush.bf16.msra.mxu0 %v5693
    %8367 = vmatmul.bf16.gmra.mxu0 %v1541
    %v8368 = vpop.f32.mrf.mxu0
    %v8369 = vadd.f32 %v2589, %v8368
    %v8370 = vpop.f32.mrf.mxu0
    %8371 = vdwg.mxu0
    %8372 = vmatpush.bf16.msra.mxu0 %v5933
    %8373 = vmatpush.bf16.msra.mxu0 %v5917
    %8374 = vmatpush.bf16.msra.mxu0 %v5901
    %8375 = vmatpush.bf16.msra.mxu0 %v5885
    %8376 = vmatpush.bf16.msra.mxu0 %v5869
    %8377 = vmatpush.bf16.msra.mxu0 %v5853
    %8378 = vmatpush.bf16.msra.mxu0 %v5837
    %8379 = vmatpush.bf16.msra.mxu0 %v5821
    %8380 = vmatmul.bf16.gmra.mxu0 %v1542
    %v8381 = vpop.f32.mrf.mxu0
    %v8382 = vadd.f32 %v8369, %v8381
    %v8383 = vpop.f32.mrf.mxu0
    %8384 = vdwg.mxu0
    %8385 = vmatpush.bf16.msra.mxu0 %v6061
    %8386 = vmatpush.bf16.msra.mxu0 %v6045
    %8387 = vmatpush.bf16.msra.mxu0 %v6029
    %8388 = vmatpush.bf16.msra.mxu0 %v6013
    %8389 = vmatpush.bf16.msra.mxu0 %v5997
    %8390 = vmatpush.bf16.msra.mxu0 %v5981
    %8391 = vmatpush.bf16.msra.mxu0 %v5965
    %8392 = vmatpush.bf16.msra.mxu0 %v5949
    %8393 = vmatmul.bf16.gmra.mxu0 %v1543
    %v8394 = vpop.f32.mrf.mxu0
    %v8395 = vadd.f32 %v8382, %v8394
    %v8396 = vpop.f32.mrf.mxu0
    %8397 = vdwg.mxu0
    %8398 = vmatpush.bf16.msra.mxu0 %v6189
    %8399 = vmatpush.bf16.msra.mxu0 %v6173
    %8400 = vmatpush.bf16.msra.mxu0 %v6157
    %8401 = vmatpush.bf16.msra.mxu0 %v6141
    %8402 = vmatpush.bf16.msra.mxu0 %v6125
    %8403 = vmatpush.bf16.msra.mxu0 %v6109
    %8404 = vmatpush.bf16.msra.mxu0 %v6093
    %8405 = vmatpush.bf16.msra.mxu0 %v6077
    %8406 = vmatmul.bf16.gmra.mxu0 %v1544
    %v8407 = vpop.f32.mrf.mxu0
    %v8408 = vadd.f32 %v8395, %v8407
    %v8409 = vpop.f32.mrf.mxu0
    %8410 = vdwg.mxu0
    %8411 = vmatpush.bf16.msra.mxu0 %v6317
    %8412 = vmatpush.bf16.msra.mxu0 %v6301
    %8413 = vmatpush.bf16.msra.mxu0 %v6285
    %8414 = vmatpush.bf16.msra.mxu0 %v6269
    %8415 = vmatpush.bf16.msra.mxu0 %v6253
    %8416 = vmatpush.bf16.msra.mxu0 %v6237
    %8417 = vmatpush.bf16.msra.mxu0 %v6221
    %8418 = vmatpush.bf16.msra.mxu0 %v6205
    %8419 = vmatmul.bf16.gmra.mxu0 %v1545
    %v8420 = vpop.f32.mrf.mxu0
    %v8421 = vadd.f32 %v8408, %v8420
    %v8422 = vpop.f32.mrf.mxu0
    %8423 = vdwg.mxu0
    %8424 = vmatpush.bf16.msra.mxu0 %v6445
    %8425 = vmatpush.bf16.msra.mxu0 %v6429
    %8426 = vmatpush.bf16.msra.mxu0 %v6413
    %8427 = vmatpush.bf16.msra.mxu0 %v6397
    %8428 = vmatpush.bf16.msra.mxu0 %v6381
    %8429 = vmatpush.bf16.msra.mxu0 %v6365
    %8430 = vmatpush.bf16.msra.mxu0 %v6349
    %8431 = vmatpush.bf16.msra.mxu0 %v6333
    %8432 = vmatmul.bf16.gmra.mxu0 %v1546
    %v8433 = vpop.f32.mrf.mxu0
    %v8434 = vadd.f32 %v8421, %v8433
    %v8435 = vpop.f32.mrf.mxu0
    %8436 = vdwg.mxu0
    %8437 = vmatpush.bf16.msra.mxu0 %v6573
    %8438 = vmatpush.bf16.msra.mxu0 %v6557
    %8439 = vmatpush.bf16.msra.mxu0 %v6541
    %8440 = vmatpush.bf16.msra.mxu0 %v6525
    %8441 = vmatpush.bf16.msra.mxu0 %v6509
    %8442 = vmatpush.bf16.msra.mxu0 %v6493
    %8443 = vmatpush.bf16.msra.mxu0 %v6477
    %8444 = vmatpush.bf16.msra.mxu0 %v6461
    %8445 = vmatmul.bf16.gmra.mxu0 %v1547
    %v8446 = vpop.f32.mrf.mxu0
    %v8447 = vadd.f32 %v8434, %v8446
    %v8448 = vpop.f32.mrf.mxu0
    %8449 = vdwg.mxu0
    %8450 = vmatpush.bf16.msra.mxu0 %v6701
    %8451 = vmatpush.bf16.msra.mxu0 %v6685
    %8452 = vmatpush.bf16.msra.mxu0 %v6669
    %8453 = vmatpush.bf16.msra.mxu0 %v6653
    %8454 = vmatpush.bf16.msra.mxu0 %v6637
    %8455 = vmatpush.bf16.msra.mxu0 %v6621
    %8456 = vmatpush.bf16.msra.mxu0 %v6605
    %8457 = vmatpush.bf16.msra.mxu0 %v6589
    %8458 = vmatmul.bf16.gmra.mxu0 %v1548
    %v8459 = vpop.f32.mrf.mxu0
    %v8460 = vadd.f32 %v8447, %v8459
    %v8461 = vpop.f32.mrf.mxu0
    %8462 = vdwg.mxu0
    %8463 = vmatpush.bf16.msra.mxu0 %v5806
    %8464 = vmatpush.bf16.msra.mxu0 %v5790
    %8465 = vmatpush.bf16.msra.mxu0 %v5774
    %8466 = vmatpush.bf16.msra.mxu0 %v5758
    %8467 = vmatpush.bf16.msra.mxu0 %v5742
    %8468 = vmatpush.bf16.msra.mxu0 %v5726
    %8469 = vmatpush.bf16.msra.mxu0 %v5710
    %8470 = vmatpush.bf16.msra.mxu0 %v5694
    %8471 = vmatmul.bf16.gmra.mxu0 %v1541
    %v8472 = vpop.f32.mrf.mxu0
    %v8473 = vadd.f32 %v2590, %v8472
    %v8474 = vpop.f32.mrf.mxu0
    %8475 = vdwg.mxu0
    %8476 = vmatpush.bf16.msra.mxu0 %v5934
    %8477 = vmatpush.bf16.msra.mxu0 %v5918
    %8478 = vmatpush.bf16.msra.mxu0 %v5902
    %8479 = vmatpush.bf16.msra.mxu0 %v5886
    %8480 = vmatpush.bf16.msra.mxu0 %v5870
    %8481 = vmatpush.bf16.msra.mxu0 %v5854
    %8482 = vmatpush.bf16.msra.mxu0 %v5838
    %8483 = vmatpush.bf16.msra.mxu0 %v5822
    %8484 = vmatmul.bf16.gmra.mxu0 %v1542
    %v8485 = vpop.f32.mrf.mxu0
    %v8486 = vadd.f32 %v8473, %v8485
    %v8487 = vpop.f32.mrf.mxu0
    %8488 = vdwg.mxu0
    %8489 = vmatpush.bf16.msra.mxu0 %v6062
    %8490 = vmatpush.bf16.msra.mxu0 %v6046
    %8491 = vmatpush.bf16.msra.mxu0 %v6030
    %8492 = vmatpush.bf16.msra.mxu0 %v6014
    %8493 = vmatpush.bf16.msra.mxu0 %v5998
    %8494 = vmatpush.bf16.msra.mxu0 %v5982
    %8495 = vmatpush.bf16.msra.mxu0 %v5966
    %8496 = vmatpush.bf16.msra.mxu0 %v5950
    %8497 = vmatmul.bf16.gmra.mxu0 %v1543
    %v8498 = vpop.f32.mrf.mxu0
    %v8499 = vadd.f32 %v8486, %v8498
    %v8500 = vpop.f32.mrf.mxu0
    %8501 = vdwg.mxu0
    %8502 = vmatpush.bf16.msra.mxu0 %v6190
    %8503 = vmatpush.bf16.msra.mxu0 %v6174
    %8504 = vmatpush.bf16.msra.mxu0 %v6158
    %8505 = vmatpush.bf16.msra.mxu0 %v6142
    %8506 = vmatpush.bf16.msra.mxu0 %v6126
    %8507 = vmatpush.bf16.msra.mxu0 %v6110
    %8508 = vmatpush.bf16.msra.mxu0 %v6094
    %8509 = vmatpush.bf16.msra.mxu0 %v6078
    %8510 = vmatmul.bf16.gmra.mxu0 %v1544
    %v8511 = vpop.f32.mrf.mxu0
    %v8512 = vadd.f32 %v8499, %v8511
    %v8513 = vpop.f32.mrf.mxu0
    %8514 = vdwg.mxu0
    %8515 = vmatpush.bf16.msra.mxu0 %v6318
    %8516 = vmatpush.bf16.msra.mxu0 %v6302
    %8517 = vmatpush.bf16.msra.mxu0 %v6286
    %8518 = vmatpush.bf16.msra.mxu0 %v6270
    %8519 = vmatpush.bf16.msra.mxu0 %v6254
    %8520 = vmatpush.bf16.msra.mxu0 %v6238
    %8521 = vmatpush.bf16.msra.mxu0 %v6222
    %8522 = vmatpush.bf16.msra.mxu0 %v6206
    %8523 = vmatmul.bf16.gmra.mxu0 %v1545
    %v8524 = vpop.f32.mrf.mxu0
    %v8525 = vadd.f32 %v8512, %v8524
    %v8526 = vpop.f32.mrf.mxu0
    %8527 = vdwg.mxu0
    %8528 = vmatpush.bf16.msra.mxu0 %v6446
    %8529 = vmatpush.bf16.msra.mxu0 %v6430
    %8530 = vmatpush.bf16.msra.mxu0 %v6414
    %8531 = vmatpush.bf16.msra.mxu0 %v6398
    %8532 = vmatpush.bf16.msra.mxu0 %v6382
    %8533 = vmatpush.bf16.msra.mxu0 %v6366
    %8534 = vmatpush.bf16.msra.mxu0 %v6350
    %8535 = vmatpush.bf16.msra.mxu0 %v6334
    %8536 = vmatmul.bf16.gmra.mxu0 %v1546
    %v8537 = vpop.f32.mrf.mxu0
    %v8538 = vadd.f32 %v8525, %v8537
    %v8539 = vpop.f32.mrf.mxu0
    %8540 = vdwg.mxu0
    %8541 = vmatpush.bf16.msra.mxu0 %v6574
    %8542 = vmatpush.bf16.msra.mxu0 %v6558
    %8543 = vmatpush.bf16.msra.mxu0 %v6542
    %8544 = vmatpush.bf16.msra.mxu0 %v6526
    %8545 = vmatpush.bf16.msra.mxu0 %v6510
    %8546 = vmatpush.bf16.msra.mxu0 %v6494
    %8547 = vmatpush.bf16.msra.mxu0 %v6478
    %8548 = vmatpush.bf16.msra.mxu0 %v6462
    %8549 = vmatmul.bf16.gmra.mxu0 %v1547
    %v8550 = vpop.f32.mrf.mxu0
    %v8551 = vadd.f32 %v8538, %v8550
    %v8552 = vpop.f32.mrf.mxu0
    %8553 = vdwg.mxu0
    %8554 = vmatpush.bf16.msra.mxu0 %v6702
    %8555 = vmatpush.bf16.msra.mxu0 %v6686
    %8556 = vmatpush.bf16.msra.mxu0 %v6670
    %8557 = vmatpush.bf16.msra.mxu0 %v6654
    %8558 = vmatpush.bf16.msra.mxu0 %v6638
    %8559 = vmatpush.bf16.msra.mxu0 %v6622
    %8560 = vmatpush.bf16.msra.mxu0 %v6606
    %8561 = vmatpush.bf16.msra.mxu0 %v6590
    %8562 = vmatmul.bf16.gmra.mxu0 %v1548
    %v8563 = vpop.f32.mrf.mxu0
    %v8564 = vadd.f32 %v8551, %v8563
    %v8565 = vpop.f32.mrf.mxu0
    %8566 = vdwg.mxu0
    %8567 = vmatpush.bf16.msra.mxu0 %v5807
    %8568 = vmatpush.bf16.msra.mxu0 %v5791
    %8569 = vmatpush.bf16.msra.mxu0 %v5775
    %8570 = vmatpush.bf16.msra.mxu0 %v5759
    %8571 = vmatpush.bf16.msra.mxu0 %v5743
    %8572 = vmatpush.bf16.msra.mxu0 %v5727
    %8573 = vmatpush.bf16.msra.mxu0 %v5711
    %8574 = vmatpush.bf16.msra.mxu0 %v5695
    %8575 = vmatmul.bf16.gmra.mxu0 %v1541
    %v8576 = vpop.f32.mrf.mxu0
    %v8577 = vadd.f32 %v2591, %v8576
    %v8578 = vpop.f32.mrf.mxu0
    %8579 = vdwg.mxu0
    %8580 = vmatpush.bf16.msra.mxu0 %v5935
    %8581 = vmatpush.bf16.msra.mxu0 %v5919
    %8582 = vmatpush.bf16.msra.mxu0 %v5903
    %8583 = vmatpush.bf16.msra.mxu0 %v5887
    %8584 = vmatpush.bf16.msra.mxu0 %v5871
    %8585 = vmatpush.bf16.msra.mxu0 %v5855
    %8586 = vmatpush.bf16.msra.mxu0 %v5839
    %8587 = vmatpush.bf16.msra.mxu0 %v5823
    %8588 = vmatmul.bf16.gmra.mxu0 %v1542
    %v8589 = vpop.f32.mrf.mxu0
    %v8590 = vadd.f32 %v8577, %v8589
    %v8591 = vpop.f32.mrf.mxu0
    %8592 = vdwg.mxu0
    %8593 = vmatpush.bf16.msra.mxu0 %v6063
    %8594 = vmatpush.bf16.msra.mxu0 %v6047
    %8595 = vmatpush.bf16.msra.mxu0 %v6031
    %8596 = vmatpush.bf16.msra.mxu0 %v6015
    %8597 = vmatpush.bf16.msra.mxu0 %v5999
    %8598 = vmatpush.bf16.msra.mxu0 %v5983
    %8599 = vmatpush.bf16.msra.mxu0 %v5967
    %8600 = vmatpush.bf16.msra.mxu0 %v5951
    %8601 = vmatmul.bf16.gmra.mxu0 %v1543
    %v8602 = vpop.f32.mrf.mxu0
    %v8603 = vadd.f32 %v8590, %v8602
    %v8604 = vpop.f32.mrf.mxu0
    %8605 = vdwg.mxu0
    %8606 = vmatpush.bf16.msra.mxu0 %v6191
    %8607 = vmatpush.bf16.msra.mxu0 %v6175
    %8608 = vmatpush.bf16.msra.mxu0 %v6159
    %8609 = vmatpush.bf16.msra.mxu0 %v6143
    %8610 = vmatpush.bf16.msra.mxu0 %v6127
    %8611 = vmatpush.bf16.msra.mxu0 %v6111
    %8612 = vmatpush.bf16.msra.mxu0 %v6095
    %8613 = vmatpush.bf16.msra.mxu0 %v6079
    %8614 = vmatmul.bf16.gmra.mxu0 %v1544
    %v8615 = vpop.f32.mrf.mxu0
    %v8616 = vadd.f32 %v8603, %v8615
    %v8617 = vpop.f32.mrf.mxu0
    %8618 = vdwg.mxu0
    %8619 = vmatpush.bf16.msra.mxu0 %v6319
    %8620 = vmatpush.bf16.msra.mxu0 %v6303
    %8621 = vmatpush.bf16.msra.mxu0 %v6287
    %8622 = vmatpush.bf16.msra.mxu0 %v6271
    %8623 = vmatpush.bf16.msra.mxu0 %v6255
    %8624 = vmatpush.bf16.msra.mxu0 %v6239
    %8625 = vmatpush.bf16.msra.mxu0 %v6223
    %8626 = vmatpush.bf16.msra.mxu0 %v6207
    %8627 = vmatmul.bf16.gmra.mxu0 %v1545
    %v8628 = vpop.f32.mrf.mxu0
    %v8629 = vadd.f32 %v8616, %v8628
    %v8630 = vpop.f32.mrf.mxu0
    %8631 = vdwg.mxu0
    %8632 = vmatpush.bf16.msra.mxu0 %v6447
    %8633 = vmatpush.bf16.msra.mxu0 %v6431
    %8634 = vmatpush.bf16.msra.mxu0 %v6415
    %8635 = vmatpush.bf16.msra.mxu0 %v6399
    %8636 = vmatpush.bf16.msra.mxu0 %v6383
    %8637 = vmatpush.bf16.msra.mxu0 %v6367
    %8638 = vmatpush.bf16.msra.mxu0 %v6351
    %8639 = vmatpush.bf16.msra.mxu0 %v6335
    %8640 = vmatmul.bf16.gmra.mxu0 %v1546
    %v8641 = vpop.f32.mrf.mxu0
    %v8642 = vadd.f32 %v8629, %v8641
    %v8643 = vpop.f32.mrf.mxu0
    %8644 = vdwg.mxu0
    %8645 = vmatpush.bf16.msra.mxu0 %v6575
    %8646 = vmatpush.bf16.msra.mxu0 %v6559
    %8647 = vmatpush.bf16.msra.mxu0 %v6543
    %8648 = vmatpush.bf16.msra.mxu0 %v6527
    %8649 = vmatpush.bf16.msra.mxu0 %v6511
    %8650 = vmatpush.bf16.msra.mxu0 %v6495
    %8651 = vmatpush.bf16.msra.mxu0 %v6479
    %8652 = vmatpush.bf16.msra.mxu0 %v6463
    %8653 = vmatmul.bf16.gmra.mxu0 %v1547
    %v8654 = vpop.f32.mrf.mxu0
    %v8655 = vadd.f32 %v8642, %v8654
    %v8656 = vpop.f32.mrf.mxu0
    %8657 = vdwg.mxu0
    %8658 = vmatpush.bf16.msra.mxu0 %v6703
    %8659 = vmatpush.bf16.msra.mxu0 %v6687
    %8660 = vmatpush.bf16.msra.mxu0 %v6671
    %8661 = vmatpush.bf16.msra.mxu0 %v6655
    %8662 = vmatpush.bf16.msra.mxu0 %v6639
    %8663 = vmatpush.bf16.msra.mxu0 %v6623
    %8664 = vmatpush.bf16.msra.mxu0 %v6607
    %8665 = vmatpush.bf16.msra.mxu0 %v6591
    %8666 = vmatmul.bf16.gmra.mxu0 %v1548
    %v8667 = vpop.f32.mrf.mxu0
    %v8668 = vadd.f32 %v8655, %v8667
    %v8669 = vpop.f32.mrf.mxu0
    %8670 = vdwg.mxu0
    %8671 = vmatpush.bf16.msra.mxu0 %v5808
    %8672 = vmatpush.bf16.msra.mxu0 %v5792
    %8673 = vmatpush.bf16.msra.mxu0 %v5776
    %8674 = vmatpush.bf16.msra.mxu0 %v5760
    %8675 = vmatpush.bf16.msra.mxu0 %v5744
    %8676 = vmatpush.bf16.msra.mxu0 %v5728
    %8677 = vmatpush.bf16.msra.mxu0 %v5712
    %8678 = vmatpush.bf16.msra.mxu0 %v5696
    %8679 = vmatmul.bf16.gmra.mxu0 %v1541
    %v8680 = vpop.f32.mrf.mxu0
    %v8681 = vadd.f32 %v2592, %v8680
    %v8682 = vpop.f32.mrf.mxu0
    %8683 = vdwg.mxu0
    %8684 = vmatpush.bf16.msra.mxu0 %v5936
    %8685 = vmatpush.bf16.msra.mxu0 %v5920
    %8686 = vmatpush.bf16.msra.mxu0 %v5904
    %8687 = vmatpush.bf16.msra.mxu0 %v5888
    %8688 = vmatpush.bf16.msra.mxu0 %v5872
    %8689 = vmatpush.bf16.msra.mxu0 %v5856
    %8690 = vmatpush.bf16.msra.mxu0 %v5840
    %8691 = vmatpush.bf16.msra.mxu0 %v5824
    %8692 = vmatmul.bf16.gmra.mxu0 %v1542
    %v8693 = vpop.f32.mrf.mxu0
    %v8694 = vadd.f32 %v8681, %v8693
    %v8695 = vpop.f32.mrf.mxu0
    %8696 = vdwg.mxu0
    %8697 = vmatpush.bf16.msra.mxu0 %v6064
    %8698 = vmatpush.bf16.msra.mxu0 %v6048
    %8699 = vmatpush.bf16.msra.mxu0 %v6032
    %8700 = vmatpush.bf16.msra.mxu0 %v6016
    %8701 = vmatpush.bf16.msra.mxu0 %v6000
    %8702 = vmatpush.bf16.msra.mxu0 %v5984
    %8703 = vmatpush.bf16.msra.mxu0 %v5968
    %8704 = vmatpush.bf16.msra.mxu0 %v5952
    %8705 = vmatmul.bf16.gmra.mxu0 %v1543
    %v8706 = vpop.f32.mrf.mxu0
    %v8707 = vadd.f32 %v8694, %v8706
    %v8708 = vpop.f32.mrf.mxu0
    %8709 = vdwg.mxu0
    %8710 = vmatpush.bf16.msra.mxu0 %v6192
    %8711 = vmatpush.bf16.msra.mxu0 %v6176
    %8712 = vmatpush.bf16.msra.mxu0 %v6160
    %8713 = vmatpush.bf16.msra.mxu0 %v6144
    %8714 = vmatpush.bf16.msra.mxu0 %v6128
    %8715 = vmatpush.bf16.msra.mxu0 %v6112
    %8716 = vmatpush.bf16.msra.mxu0 %v6096
    %8717 = vmatpush.bf16.msra.mxu0 %v6080
    %8718 = vmatmul.bf16.gmra.mxu0 %v1544
    %v8719 = vpop.f32.mrf.mxu0
    %v8720 = vadd.f32 %v8707, %v8719
    %v8721 = vpop.f32.mrf.mxu0
    %8722 = vdwg.mxu0
    %8723 = vmatpush.bf16.msra.mxu0 %v6320
    %8724 = vmatpush.bf16.msra.mxu0 %v6304
    %8725 = vmatpush.bf16.msra.mxu0 %v6288
    %8726 = vmatpush.bf16.msra.mxu0 %v6272
    %8727 = vmatpush.bf16.msra.mxu0 %v6256
    %8728 = vmatpush.bf16.msra.mxu0 %v6240
    %8729 = vmatpush.bf16.msra.mxu0 %v6224
    %8730 = vmatpush.bf16.msra.mxu0 %v6208
    %8731 = vmatmul.bf16.gmra.mxu0 %v1545
    %v8732 = vpop.f32.mrf.mxu0
    %v8733 = vadd.f32 %v8720, %v8732
    %v8734 = vpop.f32.mrf.mxu0
    %8735 = vdwg.mxu0
    %8736 = vmatpush.bf16.msra.mxu0 %v6448
    %8737 = vmatpush.bf16.msra.mxu0 %v6432
    %8738 = vmatpush.bf16.msra.mxu0 %v6416
    %8739 = vmatpush.bf16.msra.mxu0 %v6400
    %8740 = vmatpush.bf16.msra.mxu0 %v6384
    %8741 = vmatpush.bf16.msra.mxu0 %v6368
    %8742 = vmatpush.bf16.msra.mxu0 %v6352
    %8743 = vmatpush.bf16.msra.mxu0 %v6336
    %8744 = vmatmul.bf16.gmra.mxu0 %v1546
    %v8745 = vpop.f32.mrf.mxu0
    %v8746 = vadd.f32 %v8733, %v8745
    %v8747 = vpop.f32.mrf.mxu0
    %8748 = vdwg.mxu0
    %8749 = vmatpush.bf16.msra.mxu0 %v6576
    %8750 = vmatpush.bf16.msra.mxu0 %v6560
    %8751 = vmatpush.bf16.msra.mxu0 %v6544
    %8752 = vmatpush.bf16.msra.mxu0 %v6528
    %8753 = vmatpush.bf16.msra.mxu0 %v6512
    %8754 = vmatpush.bf16.msra.mxu0 %v6496
    %8755 = vmatpush.bf16.msra.mxu0 %v6480
    %8756 = vmatpush.bf16.msra.mxu0 %v6464
    %8757 = vmatmul.bf16.gmra.mxu0 %v1547
    %v8758 = vpop.f32.mrf.mxu0
    %v8759 = vadd.f32 %v8746, %v8758
    %v8760 = vpop.f32.mrf.mxu0
    %8761 = vdwg.mxu0
    %8762 = vmatpush.bf16.msra.mxu0 %v6704
    %8763 = vmatpush.bf16.msra.mxu0 %v6688
    %8764 = vmatpush.bf16.msra.mxu0 %v6672
    %8765 = vmatpush.bf16.msra.mxu0 %v6656
    %8766 = vmatpush.bf16.msra.mxu0 %v6640
    %8767 = vmatpush.bf16.msra.mxu0 %v6624
    %8768 = vmatpush.bf16.msra.mxu0 %v6608
    %8769 = vmatpush.bf16.msra.mxu0 %v6592
    %8770 = vmatmul.bf16.gmra.mxu0 %v1548
    %v8771 = vpop.f32.mrf.mxu0
    %v8772 = vadd.f32 %v8759, %v8771
    %v8773 = vpop.f32.mrf.mxu0
    %8774 = vdwg.mxu0
    %8775 = vmatpush.bf16.msra.mxu0 %v5809
    %8776 = vmatpush.bf16.msra.mxu0 %v5793
    %8777 = vmatpush.bf16.msra.mxu0 %v5777
    %8778 = vmatpush.bf16.msra.mxu0 %v5761
    %8779 = vmatpush.bf16.msra.mxu0 %v5745
    %8780 = vmatpush.bf16.msra.mxu0 %v5729
    %8781 = vmatpush.bf16.msra.mxu0 %v5713
    %8782 = vmatpush.bf16.msra.mxu0 %v5697
    %8783 = vmatmul.bf16.gmra.mxu0 %v1541
    %v8784 = vpop.f32.mrf.mxu0
    %v8785 = vadd.f32 %v2593, %v8784
    %v8786 = vpop.f32.mrf.mxu0
    %8787 = vdwg.mxu0
    %8788 = vmatpush.bf16.msra.mxu0 %v5937
    %8789 = vmatpush.bf16.msra.mxu0 %v5921
    %8790 = vmatpush.bf16.msra.mxu0 %v5905
    %8791 = vmatpush.bf16.msra.mxu0 %v5889
    %8792 = vmatpush.bf16.msra.mxu0 %v5873
    %8793 = vmatpush.bf16.msra.mxu0 %v5857
    %8794 = vmatpush.bf16.msra.mxu0 %v5841
    %8795 = vmatpush.bf16.msra.mxu0 %v5825
    %8796 = vmatmul.bf16.gmra.mxu0 %v1542
    %v8797 = vpop.f32.mrf.mxu0
    %v8798 = vadd.f32 %v8785, %v8797
    %v8799 = vpop.f32.mrf.mxu0
    %8800 = vdwg.mxu0
    %8801 = vmatpush.bf16.msra.mxu0 %v6065
    %8802 = vmatpush.bf16.msra.mxu0 %v6049
    %8803 = vmatpush.bf16.msra.mxu0 %v6033
    %8804 = vmatpush.bf16.msra.mxu0 %v6017
    %8805 = vmatpush.bf16.msra.mxu0 %v6001
    %8806 = vmatpush.bf16.msra.mxu0 %v5985
    %8807 = vmatpush.bf16.msra.mxu0 %v5969
    %8808 = vmatpush.bf16.msra.mxu0 %v5953
    %8809 = vmatmul.bf16.gmra.mxu0 %v1543
    %v8810 = vpop.f32.mrf.mxu0
    %v8811 = vadd.f32 %v8798, %v8810
    %v8812 = vpop.f32.mrf.mxu0
    %8813 = vdwg.mxu0
    %8814 = vmatpush.bf16.msra.mxu0 %v6193
    %8815 = vmatpush.bf16.msra.mxu0 %v6177
    %8816 = vmatpush.bf16.msra.mxu0 %v6161
    %8817 = vmatpush.bf16.msra.mxu0 %v6145
    %8818 = vmatpush.bf16.msra.mxu0 %v6129
    %8819 = vmatpush.bf16.msra.mxu0 %v6113
    %8820 = vmatpush.bf16.msra.mxu0 %v6097
    %8821 = vmatpush.bf16.msra.mxu0 %v6081
    %8822 = vmatmul.bf16.gmra.mxu0 %v1544
    %v8823 = vpop.f32.mrf.mxu0
    %v8824 = vadd.f32 %v8811, %v8823
    %v8825 = vpop.f32.mrf.mxu0
    %8826 = vdwg.mxu0
    %8827 = vmatpush.bf16.msra.mxu0 %v6321
    %8828 = vmatpush.bf16.msra.mxu0 %v6305
    %8829 = vmatpush.bf16.msra.mxu0 %v6289
    %8830 = vmatpush.bf16.msra.mxu0 %v6273
    %8831 = vmatpush.bf16.msra.mxu0 %v6257
    %8832 = vmatpush.bf16.msra.mxu0 %v6241
    %8833 = vmatpush.bf16.msra.mxu0 %v6225
    %8834 = vmatpush.bf16.msra.mxu0 %v6209
    %8835 = vmatmul.bf16.gmra.mxu0 %v1545
    %v8836 = vpop.f32.mrf.mxu0
    %v8837 = vadd.f32 %v8824, %v8836
    %v8838 = vpop.f32.mrf.mxu0
    %8839 = vdwg.mxu0
    %8840 = vmatpush.bf16.msra.mxu0 %v6449
    %8841 = vmatpush.bf16.msra.mxu0 %v6433
    %8842 = vmatpush.bf16.msra.mxu0 %v6417
    %8843 = vmatpush.bf16.msra.mxu0 %v6401
    %8844 = vmatpush.bf16.msra.mxu0 %v6385
    %8845 = vmatpush.bf16.msra.mxu0 %v6369
    %8846 = vmatpush.bf16.msra.mxu0 %v6353
    %8847 = vmatpush.bf16.msra.mxu0 %v6337
    %8848 = vmatmul.bf16.gmra.mxu0 %v1546
    %v8849 = vpop.f32.mrf.mxu0
    %v8850 = vadd.f32 %v8837, %v8849
    %v8851 = vpop.f32.mrf.mxu0
    %8852 = vdwg.mxu0
    %8853 = vmatpush.bf16.msra.mxu0 %v6577
    %8854 = vmatpush.bf16.msra.mxu0 %v6561
    %8855 = vmatpush.bf16.msra.mxu0 %v6545
    %8856 = vmatpush.bf16.msra.mxu0 %v6529
    %8857 = vmatpush.bf16.msra.mxu0 %v6513
    %8858 = vmatpush.bf16.msra.mxu0 %v6497
    %8859 = vmatpush.bf16.msra.mxu0 %v6481
    %8860 = vmatpush.bf16.msra.mxu0 %v6465
    %8861 = vmatmul.bf16.gmra.mxu0 %v1547
    %v8862 = vpop.f32.mrf.mxu0
    %v8863 = vadd.f32 %v8850, %v8862
    %v8864 = vpop.f32.mrf.mxu0
    %8865 = vdwg.mxu0
    %8866 = vmatpush.bf16.msra.mxu0 %v6705
    %8867 = vmatpush.bf16.msra.mxu0 %v6689
    %8868 = vmatpush.bf16.msra.mxu0 %v6673
    %8869 = vmatpush.bf16.msra.mxu0 %v6657
    %8870 = vmatpush.bf16.msra.mxu0 %v6641
    %8871 = vmatpush.bf16.msra.mxu0 %v6625
    %8872 = vmatpush.bf16.msra.mxu0 %v6609
    %8873 = vmatpush.bf16.msra.mxu0 %v6593
    %8874 = vmatmul.bf16.gmra.mxu0 %v1548
    %v8875 = vpop.f32.mrf.mxu0
    %v8876 = vadd.f32 %v8863, %v8875
    %v8877 = vpop.f32.mrf.mxu0
    %8878 = vdwg.mxu0
    %8879 = vmatpush.bf16.msra.mxu0 %v5810
    %8880 = vmatpush.bf16.msra.mxu0 %v5794
    %8881 = vmatpush.bf16.msra.mxu0 %v5778
    %8882 = vmatpush.bf16.msra.mxu0 %v5762
    %8883 = vmatpush.bf16.msra.mxu0 %v5746
    %8884 = vmatpush.bf16.msra.mxu0 %v5730
    %8885 = vmatpush.bf16.msra.mxu0 %v5714
    %8886 = vmatpush.bf16.msra.mxu0 %v5698
    %8887 = vmatmul.bf16.gmra.mxu0 %v1541
    %v8888 = vpop.f32.mrf.mxu0
    %v8889 = vadd.f32 %v2594, %v8888
    %v8890 = vpop.f32.mrf.mxu0
    %8891 = vdwg.mxu0
    %8892 = vmatpush.bf16.msra.mxu0 %v5938
    %8893 = vmatpush.bf16.msra.mxu0 %v5922
    %8894 = vmatpush.bf16.msra.mxu0 %v5906
    %8895 = vmatpush.bf16.msra.mxu0 %v5890
    %8896 = vmatpush.bf16.msra.mxu0 %v5874
    %8897 = vmatpush.bf16.msra.mxu0 %v5858
    %8898 = vmatpush.bf16.msra.mxu0 %v5842
    %8899 = vmatpush.bf16.msra.mxu0 %v5826
    %8900 = vmatmul.bf16.gmra.mxu0 %v1542
    %v8901 = vpop.f32.mrf.mxu0
    %v8902 = vadd.f32 %v8889, %v8901
    %v8903 = vpop.f32.mrf.mxu0
    %8904 = vdwg.mxu0
    %8905 = vmatpush.bf16.msra.mxu0 %v6066
    %8906 = vmatpush.bf16.msra.mxu0 %v6050
    %8907 = vmatpush.bf16.msra.mxu0 %v6034
    %8908 = vmatpush.bf16.msra.mxu0 %v6018
    %8909 = vmatpush.bf16.msra.mxu0 %v6002
    %8910 = vmatpush.bf16.msra.mxu0 %v5986
    %8911 = vmatpush.bf16.msra.mxu0 %v5970
    %8912 = vmatpush.bf16.msra.mxu0 %v5954
    %8913 = vmatmul.bf16.gmra.mxu0 %v1543
    %v8914 = vpop.f32.mrf.mxu0
    %v8915 = vadd.f32 %v8902, %v8914
    %v8916 = vpop.f32.mrf.mxu0
    %8917 = vdwg.mxu0
    %8918 = vmatpush.bf16.msra.mxu0 %v6194
    %8919 = vmatpush.bf16.msra.mxu0 %v6178
    %8920 = vmatpush.bf16.msra.mxu0 %v6162
    %8921 = vmatpush.bf16.msra.mxu0 %v6146
    %8922 = vmatpush.bf16.msra.mxu0 %v6130
    %8923 = vmatpush.bf16.msra.mxu0 %v6114
    %8924 = vmatpush.bf16.msra.mxu0 %v6098
    %8925 = vmatpush.bf16.msra.mxu0 %v6082
    %8926 = vmatmul.bf16.gmra.mxu0 %v1544
    %v8927 = vpop.f32.mrf.mxu0
    %v8928 = vadd.f32 %v8915, %v8927
    %v8929 = vpop.f32.mrf.mxu0
    %8930 = vdwg.mxu0
    %8931 = vmatpush.bf16.msra.mxu0 %v6322
    %8932 = vmatpush.bf16.msra.mxu0 %v6306
    %8933 = vmatpush.bf16.msra.mxu0 %v6290
    %8934 = vmatpush.bf16.msra.mxu0 %v6274
    %8935 = vmatpush.bf16.msra.mxu0 %v6258
    %8936 = vmatpush.bf16.msra.mxu0 %v6242
    %8937 = vmatpush.bf16.msra.mxu0 %v6226
    %8938 = vmatpush.bf16.msra.mxu0 %v6210
    %8939 = vmatmul.bf16.gmra.mxu0 %v1545
    %v8940 = vpop.f32.mrf.mxu0
    %v8941 = vadd.f32 %v8928, %v8940
    %v8942 = vpop.f32.mrf.mxu0
    %8943 = vdwg.mxu0
    %8944 = vmatpush.bf16.msra.mxu0 %v6450
    %8945 = vmatpush.bf16.msra.mxu0 %v6434
    %8946 = vmatpush.bf16.msra.mxu0 %v6418
    %8947 = vmatpush.bf16.msra.mxu0 %v6402
    %8948 = vmatpush.bf16.msra.mxu0 %v6386
    %8949 = vmatpush.bf16.msra.mxu0 %v6370
    %8950 = vmatpush.bf16.msra.mxu0 %v6354
    %8951 = vmatpush.bf16.msra.mxu0 %v6338
    %8952 = vmatmul.bf16.gmra.mxu0 %v1546
    %v8953 = vpop.f32.mrf.mxu0
    %v8954 = vadd.f32 %v8941, %v8953
    %v8955 = vpop.f32.mrf.mxu0
    %8956 = vdwg.mxu0
    %8957 = vmatpush.bf16.msra.mxu0 %v6578
    %8958 = vmatpush.bf16.msra.mxu0 %v6562
    %8959 = vmatpush.bf16.msra.mxu0 %v6546
    %8960 = vmatpush.bf16.msra.mxu0 %v6530
    %8961 = vmatpush.bf16.msra.mxu0 %v6514
    %8962 = vmatpush.bf16.msra.mxu0 %v6498
    %8963 = vmatpush.bf16.msra.mxu0 %v6482
    %8964 = vmatpush.bf16.msra.mxu0 %v6466
    %8965 = vmatmul.bf16.gmra.mxu0 %v1547
    %v8966 = vpop.f32.mrf.mxu0
    %v8967 = vadd.f32 %v8954, %v8966
    %v8968 = vpop.f32.mrf.mxu0
    %8969 = vdwg.mxu0
    %8970 = vmatpush.bf16.msra.mxu0 %v6706
    %8971 = vmatpush.bf16.msra.mxu0 %v6690
    %8972 = vmatpush.bf16.msra.mxu0 %v6674
    %8973 = vmatpush.bf16.msra.mxu0 %v6658
    %8974 = vmatpush.bf16.msra.mxu0 %v6642
    %8975 = vmatpush.bf16.msra.mxu0 %v6626
    %8976 = vmatpush.bf16.msra.mxu0 %v6610
    %8977 = vmatpush.bf16.msra.mxu0 %v6594
    %8978 = vmatmul.bf16.gmra.mxu0 %v1548
    %v8979 = vpop.f32.mrf.mxu0
    %v8980 = vadd.f32 %v8967, %v8979
    %v8981 = vpop.f32.mrf.mxu0
    %8982 = vdwg.mxu0
    %8983 = vmatpush.bf16.msra.mxu0 %v5811
    %8984 = vmatpush.bf16.msra.mxu0 %v5795
    %8985 = vmatpush.bf16.msra.mxu0 %v5779
    %8986 = vmatpush.bf16.msra.mxu0 %v5763
    %8987 = vmatpush.bf16.msra.mxu0 %v5747
    %8988 = vmatpush.bf16.msra.mxu0 %v5731
    %8989 = vmatpush.bf16.msra.mxu0 %v5715
    %8990 = vmatpush.bf16.msra.mxu0 %v5699
    %8991 = vmatmul.bf16.gmra.mxu0 %v1541
    %v8992 = vpop.f32.mrf.mxu0
    %v8993 = vadd.f32 %v2595, %v8992
    %v8994 = vpop.f32.mrf.mxu0
    %8995 = vdwg.mxu0
    %8996 = vmatpush.bf16.msra.mxu0 %v5939
    %8997 = vmatpush.bf16.msra.mxu0 %v5923
    %8998 = vmatpush.bf16.msra.mxu0 %v5907
    %8999 = vmatpush.bf16.msra.mxu0 %v5891
    %9000 = vmatpush.bf16.msra.mxu0 %v5875
    %9001 = vmatpush.bf16.msra.mxu0 %v5859
    %9002 = vmatpush.bf16.msra.mxu0 %v5843
    %9003 = vmatpush.bf16.msra.mxu0 %v5827
    %9004 = vmatmul.bf16.gmra.mxu0 %v1542
    %v9005 = vpop.f32.mrf.mxu0
    %v9006 = vadd.f32 %v8993, %v9005
    %v9007 = vpop.f32.mrf.mxu0
    %9008 = vdwg.mxu0
    %9009 = vmatpush.bf16.msra.mxu0 %v6067
    %9010 = vmatpush.bf16.msra.mxu0 %v6051
    %9011 = vmatpush.bf16.msra.mxu0 %v6035
    %9012 = vmatpush.bf16.msra.mxu0 %v6019
    %9013 = vmatpush.bf16.msra.mxu0 %v6003
    %9014 = vmatpush.bf16.msra.mxu0 %v5987
    %9015 = vmatpush.bf16.msra.mxu0 %v5971
    %9016 = vmatpush.bf16.msra.mxu0 %v5955
    %9017 = vmatmul.bf16.gmra.mxu0 %v1543
    %v9018 = vpop.f32.mrf.mxu0
    %v9019 = vadd.f32 %v9006, %v9018
    %v9020 = vpop.f32.mrf.mxu0
    %9021 = vdwg.mxu0
    %9022 = vmatpush.bf16.msra.mxu0 %v6195
    %9023 = vmatpush.bf16.msra.mxu0 %v6179
    %9024 = vmatpush.bf16.msra.mxu0 %v6163
    %9025 = vmatpush.bf16.msra.mxu0 %v6147
    %9026 = vmatpush.bf16.msra.mxu0 %v6131
    %9027 = vmatpush.bf16.msra.mxu0 %v6115
    %9028 = vmatpush.bf16.msra.mxu0 %v6099
    %9029 = vmatpush.bf16.msra.mxu0 %v6083
    %9030 = vmatmul.bf16.gmra.mxu0 %v1544
    %v9031 = vpop.f32.mrf.mxu0
    %v9032 = vadd.f32 %v9019, %v9031
    %v9033 = vpop.f32.mrf.mxu0
    %9034 = vdwg.mxu0
    %9035 = vmatpush.bf16.msra.mxu0 %v6323
    %9036 = vmatpush.bf16.msra.mxu0 %v6307
    %9037 = vmatpush.bf16.msra.mxu0 %v6291
    %9038 = vmatpush.bf16.msra.mxu0 %v6275
    %9039 = vmatpush.bf16.msra.mxu0 %v6259
    %9040 = vmatpush.bf16.msra.mxu0 %v6243
    %9041 = vmatpush.bf16.msra.mxu0 %v6227
    %9042 = vmatpush.bf16.msra.mxu0 %v6211
    %9043 = vmatmul.bf16.gmra.mxu0 %v1545
    %v9044 = vpop.f32.mrf.mxu0
    %v9045 = vadd.f32 %v9032, %v9044
    %v9046 = vpop.f32.mrf.mxu0
    %9047 = vdwg.mxu0
    %9048 = vmatpush.bf16.msra.mxu0 %v6451
    %9049 = vmatpush.bf16.msra.mxu0 %v6435
    %9050 = vmatpush.bf16.msra.mxu0 %v6419
    %9051 = vmatpush.bf16.msra.mxu0 %v6403
    %9052 = vmatpush.bf16.msra.mxu0 %v6387
    %9053 = vmatpush.bf16.msra.mxu0 %v6371
    %9054 = vmatpush.bf16.msra.mxu0 %v6355
    %9055 = vmatpush.bf16.msra.mxu0 %v6339
    %9056 = vmatmul.bf16.gmra.mxu0 %v1546
    %v9057 = vpop.f32.mrf.mxu0
    %v9058 = vadd.f32 %v9045, %v9057
    %v9059 = vpop.f32.mrf.mxu0
    %9060 = vdwg.mxu0
    %9061 = vmatpush.bf16.msra.mxu0 %v6579
    %9062 = vmatpush.bf16.msra.mxu0 %v6563
    %9063 = vmatpush.bf16.msra.mxu0 %v6547
    %9064 = vmatpush.bf16.msra.mxu0 %v6531
    %9065 = vmatpush.bf16.msra.mxu0 %v6515
    %9066 = vmatpush.bf16.msra.mxu0 %v6499
    %9067 = vmatpush.bf16.msra.mxu0 %v6483
    %9068 = vmatpush.bf16.msra.mxu0 %v6467
    %9069 = vmatmul.bf16.gmra.mxu0 %v1547
    %v9070 = vpop.f32.mrf.mxu0
    %v9071 = vadd.f32 %v9058, %v9070
    %v9072 = vpop.f32.mrf.mxu0
    %9073 = vdwg.mxu0
    %9074 = vmatpush.bf16.msra.mxu0 %v6707
    %9075 = vmatpush.bf16.msra.mxu0 %v6691
    %9076 = vmatpush.bf16.msra.mxu0 %v6675
    %9077 = vmatpush.bf16.msra.mxu0 %v6659
    %9078 = vmatpush.bf16.msra.mxu0 %v6643
    %9079 = vmatpush.bf16.msra.mxu0 %v6627
    %9080 = vmatpush.bf16.msra.mxu0 %v6611
    %9081 = vmatpush.bf16.msra.mxu0 %v6595
    %9082 = vmatmul.bf16.gmra.mxu0 %v1548
    %v9083 = vpop.f32.mrf.mxu0
    %v9084 = vadd.f32 %v9071, %v9083
    %v9085 = vpop.f32.mrf.mxu0
    %9086 = vdwg.mxu0
    %9087 = vmatpush.bf16.msra.mxu0 %v5812
    %9088 = vmatpush.bf16.msra.mxu0 %v5796
    %9089 = vmatpush.bf16.msra.mxu0 %v5780
    %9090 = vmatpush.bf16.msra.mxu0 %v5764
    %9091 = vmatpush.bf16.msra.mxu0 %v5748
    %9092 = vmatpush.bf16.msra.mxu0 %v5732
    %9093 = vmatpush.bf16.msra.mxu0 %v5716
    %9094 = vmatpush.bf16.msra.mxu0 %v5700
    %9095 = vmatmul.bf16.gmra.mxu0 %v1541
    %v9096 = vpop.f32.mrf.mxu0
    %v9097 = vadd.f32 %v2596, %v9096
    %v9098 = vpop.f32.mrf.mxu0
    %9099 = vdwg.mxu0
    %9100 = vmatpush.bf16.msra.mxu0 %v5940
    %9101 = vmatpush.bf16.msra.mxu0 %v5924
    %9102 = vmatpush.bf16.msra.mxu0 %v5908
    %9103 = vmatpush.bf16.msra.mxu0 %v5892
    %9104 = vmatpush.bf16.msra.mxu0 %v5876
    %9105 = vmatpush.bf16.msra.mxu0 %v5860
    %9106 = vmatpush.bf16.msra.mxu0 %v5844
    %9107 = vmatpush.bf16.msra.mxu0 %v5828
    %9108 = vmatmul.bf16.gmra.mxu0 %v1542
    %v9109 = vpop.f32.mrf.mxu0
    %v9110 = vadd.f32 %v9097, %v9109
    %v9111 = vpop.f32.mrf.mxu0
    %9112 = vdwg.mxu0
    %9113 = vmatpush.bf16.msra.mxu0 %v6068
    %9114 = vmatpush.bf16.msra.mxu0 %v6052
    %9115 = vmatpush.bf16.msra.mxu0 %v6036
    %9116 = vmatpush.bf16.msra.mxu0 %v6020
    %9117 = vmatpush.bf16.msra.mxu0 %v6004
    %9118 = vmatpush.bf16.msra.mxu0 %v5988
    %9119 = vmatpush.bf16.msra.mxu0 %v5972
    %9120 = vmatpush.bf16.msra.mxu0 %v5956
    %9121 = vmatmul.bf16.gmra.mxu0 %v1543
    %v9122 = vpop.f32.mrf.mxu0
    %v9123 = vadd.f32 %v9110, %v9122
    %v9124 = vpop.f32.mrf.mxu0
    %9125 = vdwg.mxu0
    %9126 = vmatpush.bf16.msra.mxu0 %v6196
    %9127 = vmatpush.bf16.msra.mxu0 %v6180
    %9128 = vmatpush.bf16.msra.mxu0 %v6164
    %9129 = vmatpush.bf16.msra.mxu0 %v6148
    %9130 = vmatpush.bf16.msra.mxu0 %v6132
    %9131 = vmatpush.bf16.msra.mxu0 %v6116
    %9132 = vmatpush.bf16.msra.mxu0 %v6100
    %9133 = vmatpush.bf16.msra.mxu0 %v6084
    %9134 = vmatmul.bf16.gmra.mxu0 %v1544
    %v9135 = vpop.f32.mrf.mxu0
    %v9136 = vadd.f32 %v9123, %v9135
    %v9137 = vpop.f32.mrf.mxu0
    %9138 = vdwg.mxu0
    %9139 = vmatpush.bf16.msra.mxu0 %v6324
    %9140 = vmatpush.bf16.msra.mxu0 %v6308
    %9141 = vmatpush.bf16.msra.mxu0 %v6292
    %9142 = vmatpush.bf16.msra.mxu0 %v6276
    %9143 = vmatpush.bf16.msra.mxu0 %v6260
    %9144 = vmatpush.bf16.msra.mxu0 %v6244
    %9145 = vmatpush.bf16.msra.mxu0 %v6228
    %9146 = vmatpush.bf16.msra.mxu0 %v6212
    %9147 = vmatmul.bf16.gmra.mxu0 %v1545
    %v9148 = vpop.f32.mrf.mxu0
    %v9149 = vadd.f32 %v9136, %v9148
    %v9150 = vpop.f32.mrf.mxu0
    %9151 = vdwg.mxu0
    %9152 = vmatpush.bf16.msra.mxu0 %v6452
    %9153 = vmatpush.bf16.msra.mxu0 %v6436
    %9154 = vmatpush.bf16.msra.mxu0 %v6420
    %9155 = vmatpush.bf16.msra.mxu0 %v6404
    %9156 = vmatpush.bf16.msra.mxu0 %v6388
    %9157 = vmatpush.bf16.msra.mxu0 %v6372
    %9158 = vmatpush.bf16.msra.mxu0 %v6356
    %9159 = vmatpush.bf16.msra.mxu0 %v6340
    %9160 = vmatmul.bf16.gmra.mxu0 %v1546
    %v9161 = vpop.f32.mrf.mxu0
    %v9162 = vadd.f32 %v9149, %v9161
    %v9163 = vpop.f32.mrf.mxu0
    %9164 = vdwg.mxu0
    %9165 = vmatpush.bf16.msra.mxu0 %v6580
    %9166 = vmatpush.bf16.msra.mxu0 %v6564
    %9167 = vmatpush.bf16.msra.mxu0 %v6548
    %9168 = vmatpush.bf16.msra.mxu0 %v6532
    %9169 = vmatpush.bf16.msra.mxu0 %v6516
    %9170 = vmatpush.bf16.msra.mxu0 %v6500
    %9171 = vmatpush.bf16.msra.mxu0 %v6484
    %9172 = vmatpush.bf16.msra.mxu0 %v6468
    %9173 = vmatmul.bf16.gmra.mxu0 %v1547
    %v9174 = vpop.f32.mrf.mxu0
    %v9175 = vadd.f32 %v9162, %v9174
    %v9176 = vpop.f32.mrf.mxu0
    %9177 = vdwg.mxu0
    %9178 = vmatpush.bf16.msra.mxu0 %v6708
    %9179 = vmatpush.bf16.msra.mxu0 %v6692
    %9180 = vmatpush.bf16.msra.mxu0 %v6676
    %9181 = vmatpush.bf16.msra.mxu0 %v6660
    %9182 = vmatpush.bf16.msra.mxu0 %v6644
    %9183 = vmatpush.bf16.msra.mxu0 %v6628
    %9184 = vmatpush.bf16.msra.mxu0 %v6612
    %9185 = vmatpush.bf16.msra.mxu0 %v6596
    %9186 = vmatmul.bf16.gmra.mxu0 %v1548
    %v9187 = vpop.f32.mrf.mxu0
    %v9188 = vadd.f32 %v9175, %v9187
    %v9189 = vpop.f32.mrf.mxu0
    %9190 = vdwg.mxu0
    %9191 = vmatpush.bf16.msra.mxu0 %v5813
    %9192 = vmatpush.bf16.msra.mxu0 %v5797
    %9193 = vmatpush.bf16.msra.mxu0 %v5781
    %9194 = vmatpush.bf16.msra.mxu0 %v5765
    %9195 = vmatpush.bf16.msra.mxu0 %v5749
    %9196 = vmatpush.bf16.msra.mxu0 %v5733
    %9197 = vmatpush.bf16.msra.mxu0 %v5717
    %9198 = vmatpush.bf16.msra.mxu0 %v5701
    %9199 = vmatmul.bf16.gmra.mxu0 %v1541
    %v9200 = vpop.f32.mrf.mxu0
    %v9201 = vadd.f32 %v2597, %v9200
    %v9202 = vpop.f32.mrf.mxu0
    %9203 = vdwg.mxu0
    %9204 = vmatpush.bf16.msra.mxu0 %v5941
    %9205 = vmatpush.bf16.msra.mxu0 %v5925
    %9206 = vmatpush.bf16.msra.mxu0 %v5909
    %9207 = vmatpush.bf16.msra.mxu0 %v5893
    %9208 = vmatpush.bf16.msra.mxu0 %v5877
    %9209 = vmatpush.bf16.msra.mxu0 %v5861
    %9210 = vmatpush.bf16.msra.mxu0 %v5845
    %9211 = vmatpush.bf16.msra.mxu0 %v5829
    %9212 = vmatmul.bf16.gmra.mxu0 %v1542
    %v9213 = vpop.f32.mrf.mxu0
    %v9214 = vadd.f32 %v9201, %v9213
    %v9215 = vpop.f32.mrf.mxu0
    %9216 = vdwg.mxu0
    %9217 = vmatpush.bf16.msra.mxu0 %v6069
    %9218 = vmatpush.bf16.msra.mxu0 %v6053
    %9219 = vmatpush.bf16.msra.mxu0 %v6037
    %9220 = vmatpush.bf16.msra.mxu0 %v6021
    %9221 = vmatpush.bf16.msra.mxu0 %v6005
    %9222 = vmatpush.bf16.msra.mxu0 %v5989
    %9223 = vmatpush.bf16.msra.mxu0 %v5973
    %9224 = vmatpush.bf16.msra.mxu0 %v5957
    %9225 = vmatmul.bf16.gmra.mxu0 %v1543
    %v9226 = vpop.f32.mrf.mxu0
    %v9227 = vadd.f32 %v9214, %v9226
    %v9228 = vpop.f32.mrf.mxu0
    %9229 = vdwg.mxu0
    %9230 = vmatpush.bf16.msra.mxu0 %v6197
    %9231 = vmatpush.bf16.msra.mxu0 %v6181
    %9232 = vmatpush.bf16.msra.mxu0 %v6165
    %9233 = vmatpush.bf16.msra.mxu0 %v6149
    %9234 = vmatpush.bf16.msra.mxu0 %v6133
    %9235 = vmatpush.bf16.msra.mxu0 %v6117
    %9236 = vmatpush.bf16.msra.mxu0 %v6101
    %9237 = vmatpush.bf16.msra.mxu0 %v6085
    %9238 = vmatmul.bf16.gmra.mxu0 %v1544
    %v9239 = vpop.f32.mrf.mxu0
    %v9240 = vadd.f32 %v9227, %v9239
    %v9241 = vpop.f32.mrf.mxu0
    %9242 = vdwg.mxu0
    %9243 = vmatpush.bf16.msra.mxu0 %v6325
    %9244 = vmatpush.bf16.msra.mxu0 %v6309
    %9245 = vmatpush.bf16.msra.mxu0 %v6293
    %9246 = vmatpush.bf16.msra.mxu0 %v6277
    %9247 = vmatpush.bf16.msra.mxu0 %v6261
    %9248 = vmatpush.bf16.msra.mxu0 %v6245
    %9249 = vmatpush.bf16.msra.mxu0 %v6229
    %9250 = vmatpush.bf16.msra.mxu0 %v6213
    %9251 = vmatmul.bf16.gmra.mxu0 %v1545
    %v9252 = vpop.f32.mrf.mxu0
    %v9253 = vadd.f32 %v9240, %v9252
    %v9254 = vpop.f32.mrf.mxu0
    %9255 = vdwg.mxu0
    %9256 = vmatpush.bf16.msra.mxu0 %v6453
    %9257 = vmatpush.bf16.msra.mxu0 %v6437
    %9258 = vmatpush.bf16.msra.mxu0 %v6421
    %9259 = vmatpush.bf16.msra.mxu0 %v6405
    %9260 = vmatpush.bf16.msra.mxu0 %v6389
    %9261 = vmatpush.bf16.msra.mxu0 %v6373
    %9262 = vmatpush.bf16.msra.mxu0 %v6357
    %9263 = vmatpush.bf16.msra.mxu0 %v6341
    %9264 = vmatmul.bf16.gmra.mxu0 %v1546
    %v9265 = vpop.f32.mrf.mxu0
    %v9266 = vadd.f32 %v9253, %v9265
    %v9267 = vpop.f32.mrf.mxu0
    %9268 = vdwg.mxu0
    %9269 = vmatpush.bf16.msra.mxu0 %v6581
    %9270 = vmatpush.bf16.msra.mxu0 %v6565
    %9271 = vmatpush.bf16.msra.mxu0 %v6549
    %9272 = vmatpush.bf16.msra.mxu0 %v6533
    %9273 = vmatpush.bf16.msra.mxu0 %v6517
    %9274 = vmatpush.bf16.msra.mxu0 %v6501
    %9275 = vmatpush.bf16.msra.mxu0 %v6485
    %9276 = vmatpush.bf16.msra.mxu0 %v6469
    %9277 = vmatmul.bf16.gmra.mxu0 %v1547
    %v9278 = vpop.f32.mrf.mxu0
    %v9279 = vadd.f32 %v9266, %v9278
    %v9280 = vpop.f32.mrf.mxu0
    %9281 = vdwg.mxu0
    %9282 = vmatpush.bf16.msra.mxu0 %v6709
    %9283 = vmatpush.bf16.msra.mxu0 %v6693
    %9284 = vmatpush.bf16.msra.mxu0 %v6677
    %9285 = vmatpush.bf16.msra.mxu0 %v6661
    %9286 = vmatpush.bf16.msra.mxu0 %v6645
    %9287 = vmatpush.bf16.msra.mxu0 %v6629
    %9288 = vmatpush.bf16.msra.mxu0 %v6613
    %9289 = vmatpush.bf16.msra.mxu0 %v6597
    %9290 = vmatmul.bf16.gmra.mxu0 %v1548
    %v9291 = vpop.f32.mrf.mxu0
    %v9292 = vadd.f32 %v9279, %v9291
    %v9293 = vpop.f32.mrf.mxu0
    %9294 = vdwg.mxu0
    %9295 = vmatpush.bf16.msra.mxu0 %v5814
    %9296 = vmatpush.bf16.msra.mxu0 %v5798
    %9297 = vmatpush.bf16.msra.mxu0 %v5782
    %9298 = vmatpush.bf16.msra.mxu0 %v5766
    %9299 = vmatpush.bf16.msra.mxu0 %v5750
    %9300 = vmatpush.bf16.msra.mxu0 %v5734
    %9301 = vmatpush.bf16.msra.mxu0 %v5718
    %9302 = vmatpush.bf16.msra.mxu0 %v5702
    %9303 = vmatmul.bf16.gmra.mxu0 %v1541
    %v9304 = vpop.f32.mrf.mxu0
    %v9305 = vadd.f32 %v2598, %v9304
    %v9306 = vpop.f32.mrf.mxu0
    %9307 = vdwg.mxu0
    %9308 = vmatpush.bf16.msra.mxu0 %v5942
    %9309 = vmatpush.bf16.msra.mxu0 %v5926
    %9310 = vmatpush.bf16.msra.mxu0 %v5910
    %9311 = vmatpush.bf16.msra.mxu0 %v5894
    %9312 = vmatpush.bf16.msra.mxu0 %v5878
    %9313 = vmatpush.bf16.msra.mxu0 %v5862
    %9314 = vmatpush.bf16.msra.mxu0 %v5846
    %9315 = vmatpush.bf16.msra.mxu0 %v5830
    %9316 = vmatmul.bf16.gmra.mxu0 %v1542
    %v9317 = vpop.f32.mrf.mxu0
    %v9318 = vadd.f32 %v9305, %v9317
    %v9319 = vpop.f32.mrf.mxu0
    %9320 = vdwg.mxu0
    %9321 = vmatpush.bf16.msra.mxu0 %v6070
    %9322 = vmatpush.bf16.msra.mxu0 %v6054
    %9323 = vmatpush.bf16.msra.mxu0 %v6038
    %9324 = vmatpush.bf16.msra.mxu0 %v6022
    %9325 = vmatpush.bf16.msra.mxu0 %v6006
    %9326 = vmatpush.bf16.msra.mxu0 %v5990
    %9327 = vmatpush.bf16.msra.mxu0 %v5974
    %9328 = vmatpush.bf16.msra.mxu0 %v5958
    %9329 = vmatmul.bf16.gmra.mxu0 %v1543
    %v9330 = vpop.f32.mrf.mxu0
    %v9331 = vadd.f32 %v9318, %v9330
    %v9332 = vpop.f32.mrf.mxu0
    %9333 = vdwg.mxu0
    %9334 = vmatpush.bf16.msra.mxu0 %v6198
    %9335 = vmatpush.bf16.msra.mxu0 %v6182
    %9336 = vmatpush.bf16.msra.mxu0 %v6166
    %9337 = vmatpush.bf16.msra.mxu0 %v6150
    %9338 = vmatpush.bf16.msra.mxu0 %v6134
    %9339 = vmatpush.bf16.msra.mxu0 %v6118
    %9340 = vmatpush.bf16.msra.mxu0 %v6102
    %9341 = vmatpush.bf16.msra.mxu0 %v6086
    %9342 = vmatmul.bf16.gmra.mxu0 %v1544
    %v9343 = vpop.f32.mrf.mxu0
    %v9344 = vadd.f32 %v9331, %v9343
    %v9345 = vpop.f32.mrf.mxu0
    %9346 = vdwg.mxu0
    %9347 = vmatpush.bf16.msra.mxu0 %v6326
    %9348 = vmatpush.bf16.msra.mxu0 %v6310
    %9349 = vmatpush.bf16.msra.mxu0 %v6294
    %9350 = vmatpush.bf16.msra.mxu0 %v6278
    %9351 = vmatpush.bf16.msra.mxu0 %v6262
    %9352 = vmatpush.bf16.msra.mxu0 %v6246
    %9353 = vmatpush.bf16.msra.mxu0 %v6230
    %9354 = vmatpush.bf16.msra.mxu0 %v6214
    %9355 = vmatmul.bf16.gmra.mxu0 %v1545
    %v9356 = vpop.f32.mrf.mxu0
    %v9357 = vadd.f32 %v9344, %v9356
    %v9358 = vpop.f32.mrf.mxu0
    %9359 = vdwg.mxu0
    %9360 = vmatpush.bf16.msra.mxu0 %v6454
    %9361 = vmatpush.bf16.msra.mxu0 %v6438
    %9362 = vmatpush.bf16.msra.mxu0 %v6422
    %9363 = vmatpush.bf16.msra.mxu0 %v6406
    %9364 = vmatpush.bf16.msra.mxu0 %v6390
    %9365 = vmatpush.bf16.msra.mxu0 %v6374
    %9366 = vmatpush.bf16.msra.mxu0 %v6358
    %9367 = vmatpush.bf16.msra.mxu0 %v6342
    %9368 = vmatmul.bf16.gmra.mxu0 %v1546
    %v9369 = vpop.f32.mrf.mxu0
    %v9370 = vadd.f32 %v9357, %v9369
    %v9371 = vpop.f32.mrf.mxu0
    %9372 = vdwg.mxu0
    %9373 = vmatpush.bf16.msra.mxu0 %v6582
    %9374 = vmatpush.bf16.msra.mxu0 %v6566
    %9375 = vmatpush.bf16.msra.mxu0 %v6550
    %9376 = vmatpush.bf16.msra.mxu0 %v6534
    %9377 = vmatpush.bf16.msra.mxu0 %v6518
    %9378 = vmatpush.bf16.msra.mxu0 %v6502
    %9379 = vmatpush.bf16.msra.mxu0 %v6486
    %9380 = vmatpush.bf16.msra.mxu0 %v6470
    %9381 = vmatmul.bf16.gmra.mxu0 %v1547
    %v9382 = vpop.f32.mrf.mxu0
    %v9383 = vadd.f32 %v9370, %v9382
    %v9384 = vpop.f32.mrf.mxu0
    %9385 = vdwg.mxu0
    %9386 = vmatpush.bf16.msra.mxu0 %v6710
    %9387 = vmatpush.bf16.msra.mxu0 %v6694
    %9388 = vmatpush.bf16.msra.mxu0 %v6678
    %9389 = vmatpush.bf16.msra.mxu0 %v6662
    %9390 = vmatpush.bf16.msra.mxu0 %v6646
    %9391 = vmatpush.bf16.msra.mxu0 %v6630
    %9392 = vmatpush.bf16.msra.mxu0 %v6614
    %9393 = vmatpush.bf16.msra.mxu0 %v6598
    %9394 = vmatmul.bf16.gmra.mxu0 %v1548
    %v9395 = vpop.f32.mrf.mxu0
    %v9396 = vadd.f32 %v9383, %v9395
    %v9397 = vpop.f32.mrf.mxu0
    %9398 = vdwg.mxu0
    %v9399 = vmax.f32 %v7836, 0.0
    %v9400 = vmax.f32 %v7940, 0.0
    %v9401 = vmax.f32 %v8044, 0.0
    %v9402 = vmax.f32 %v8148, 0.0
    %v9403 = vmax.f32 %v8252, 0.0
    %v9404 = vmax.f32 %v8356, 0.0
    %v9405 = vmax.f32 %v8460, 0.0
    %v9406 = vmax.f32 %v8564, 0.0
    %v9407 = vmax.f32 %v8668, 0.0
    %v9408 = vmax.f32 %v8772, 0.0
    %v9409 = vmax.f32 %v8876, 0.0
    %v9410 = vmax.f32 %v8980, 0.0
    %v9411 = vmax.f32 %v9084, 0.0
    %v9412 = vmax.f32 %v9188, 0.0
    %v9413 = vmax.f32 %v9292, 0.0
    %v9414 = vmax.f32 %v9396, 0.0
    %v9415 = vld [vmem:[#allocation27] sm:$0xff]
    %v9416 = vld [vmem:[#allocation27 + $0x8] sm:$0xff]
    %v9419 = vperm.slane %v9415, 0
    %v9420 = vperm.slane %v9415, 1
    %v9421 = vperm.slane %v9415, 2
    %v9422 = vperm.slane %v9415, 3
    %v9423 = vperm.slane %v9415, 4
    %v9424 = vperm.slane %v9415, 5
    %v9425 = vperm.slane %v9415, 6
    %v9426 = vperm.slane %v9415, 7
    %v9427 = vperm.slane %v9416, 0
    %v9428 = vperm.slane %v9416, 1
    %v9429 = vperm.slane %v9416, 2
    %v9430 = vperm.slane %v9416, 3
    %v9431 = vperm.slane %v9416, 4
    %v9432 = vperm.slane %v9416, 5
    %v9433 = vperm.slane %v9416, 6
    %v9434 = vperm.slane %v9416, 7
    %v9451 = vmul.f32 %v9399, %v9419
    %v9452 = vmul.f32 %v9400, %v9420
    %v9453 = vmul.f32 %v9401, %v9421
    %v9454 = vmul.f32 %v9402, %v9422
    %v9455 = vmul.f32 %v9403, %v9423
    %v9456 = vmul.f32 %v9404, %v9424
    %v9457 = vmul.f32 %v9405, %v9425
    %v9458 = vmul.f32 %v9406, %v9426
    %v9459 = vmul.f32 %v9407, %v9427
    %v9460 = vmul.f32 %v9408, %v9428
    %v9461 = vmul.f32 %v9409, %v9429
    %v9462 = vmul.f32 %v9410, %v9430
    %v9463 = vmul.f32 %v9411, %v9431
    %v9464 = vmul.f32 %v9412, %v9432
    %v9465 = vmul.f32 %v9413, %v9433
    %v9466 = vmul.f32 %v9414, %v9434
    %vm9467 = vcmask 1041408
    %v9468 = vsel %vm9467, %v9451, 0.0
    %v9469 = vsel %vm9467, %v9452, 0.0
    %v9470 = vadd.f32 %v9468, %v9469
    %v9471 = vsel %vm9467, %v9453, 0.0
    %v9472 = vadd.f32 %v9470, %v9471
    %v9473 = vsel %vm9467, %v9454, 0.0
    %v9474 = vadd.f32 %v9472, %v9473
    %v9475 = vsel %vm9467, %v9455, 0.0
    %v9476 = vadd.f32 %v9474, %v9475
    %v9477 = vsel %vm9467, %v9456, 0.0
    %v9478 = vadd.f32 %v9476, %v9477
    %v9479 = vsel %vm9467, %v9457, 0.0
    %v9480 = vadd.f32 %v9478, %v9479
    %v9481 = vsel %vm9467, %v9458, 0.0
    %v9482 = vadd.f32 %v9480, %v9481
    %v9483 = vsel %vm9467, %v9459, 0.0
    %v9484 = vadd.f32 %v9482, %v9483
    %v9485 = vsel %vm9467, %v9460, 0.0
    %v9486 = vadd.f32 %v9484, %v9485
    %v9487 = vsel %vm9467, %v9461, 0.0
    %v9488 = vadd.f32 %v9486, %v9487
    %v9489 = vsel %vm9467, %v9462, 0.0
    %v9490 = vadd.f32 %v9488, %v9489
    %v9491 = vsel %vm9467, %v9463, 0.0
    %v9492 = vadd.f32 %v9490, %v9491
    %v9493 = vsel %vm9467, %v9464, 0.0
    %v9494 = vadd.f32 %v9492, %v9493
    %v9495 = vsel %vm9467, %v9465, 0.0
    %v9496 = vadd.f32 %v9494, %v9495
    %v9497 = vsel %vm9467, %v9466, 0.0
    %v9498 = vadd.f32 %v9496, %v9497
    %9499 = vadd.xlane.f32.xlu0 %v9498
    %v9500 = vpop.xlane.xlu0 %9499
    %v9501 = vld [vmem:[#allocation7] sm:$0x1]
    %v9503 = vperm.slane %v9501, 0
    %v9505 = vadd.f32 %v9500, %v9503
    %v9506 = vsub.f32 0.0, %v9505
    %v9507 = vmul.f32 %v9506, 1.442695
    %v9508 = vpow.pop %v9507
    %v9509 = vadd.f32 %v9508, 1.0
    %v9510 = vrcp.pop %v9509
    %v9511 = vmul.f32 %v9509, %v9510
    %v9512 = vsub.f32 1.0, %v9511
    %v9513 = vmul.f32 %v9510, %v9512
    %v9514 = vadd.f32 %v9510, %v9513
    %vm9515 = vweird.f32 %v9509
    %vm9516 = vweird.f32 %v9510
    %vm9517 = vmor %vm9515, %vm9516
    %v9518 = vsel %vm9517, %v9510, %v9514
    %v9519 = vand.u32 2147483647, %v9509
    %vm9520 = vcmp.eq.f32.partialorder %v9519, 8.507059e+37
    %v9521 = vand.u32 %v9509, 2147483648
    %v9522 = vor.u32 1.1754944e-38, %v9521
    %v9523 = vsel %vm9520, %v9522, %v9518
    %v9524 = vmul.f32 1.0, %v9523
    %vm9525 = vcmask 1024
    %9526 = vst.msk [vmem:[%s17] sm:$0x3] %vm9525, %v9524
    // Predicated region
    $region126: #{discriminator_forward.1} parent=1 // pred_check
      _
    $region127: #{discriminator_forward.1} parent=1 // pred_check_branch
      %9528 = sbr.rel (0) target = $region129
    $region128: #{discriminator_forward.1} parent=1 // pred_region
      _
    $region129: #{discriminator_forward.1} parent=1 // pred_fallthru
      _
    // Predicated region
    $region130: #{discriminator_forward.1} parent=1 // pred_check
      _
    $region131: #{discriminator_forward.1} parent=1 // pred_check_branch
      %9530 = sbr.rel (0) target = $region133
    $region132: #{discriminator_forward.1} parent=1 // pred_region
      _
    $region133: #{discriminator_forward.1} parent=1 // pred_fallthru
      _
    %9531 = vsyncpa [#allocation9], 1
    %9532 = vsyncpa [#allocation11], 1
    %9533 = vsyncpa [#allocation14], 1
    %9534 = vsyncpa [#allocation17], 1
    %9535 = vsyncpa [#allocation20], 1
    %9536 = vsyncpa [#allocation23], 1
    %9537 = vsyncpa [#allocation26], 1
  %9538 = vsyncmov [#allocation6]
  %s9539 = vpop.sfrf %9538
  %p9540 = scmp.eq.s32.totalorder %s9539, 0
  %p9541 = pneg %p9540
  %9543 = shalt.err (%p9541)
  %s9544 = scalar_lea.sflag [#allocation6], 1
  %9545 = vsyncmov %s9544
  %s9546 = vpop.sfrf %9545
  %p9547 = scmp.eq.s32.totalorder %s9546, 0
  %p9548 = pneg %p9547
  %9550 = shalt.err (%p9548)

</llo_original>
